<compile_context>
chip_gen: v6e
topology: v6e:2x2x1
jax: 0.10.0
libtpu: 0.0.40
codegen_flags: <defaults>
</compile_context>

<pallas_src>
import jax
import jax.numpy as jnp
import numpy as np
from jax.experimental import pallas as pl
from jax.experimental.pallas import tpu as pltpu

NEG_SLOPE = 0.01  # nn.LeakyReLU() default negative_slope


def _leaky(x):
    return jnp.where(x > 0, x, NEG_SLOPE * x)


# ----------------------------------------------------------------------------
# Fused Pallas kernel: 2 x ResidualConvUnit + ConvTranspose2d (pixel shuffle fused)
# ----------------------------------------------------------------------------
def fused_res_upsample_kernel(x_ref, wc_ref, bc_ref, g_ref, wup_ref, bup_ref,
                              o_ref, xp_s):
    # x_ref  : (1, H, W, C)           input block (f32)
    # wc_ref : (NL*2, 9C, C)          im2col conv weights, bf16, row order (dy, dx, ci)
    # bc_ref : (NL*2, C)              conv biases, f32
    # g_ref  : (NL, C)                layer-scale gammas, f32
    # wup_ref: (2, C, 2*Co)           ConvTranspose halves (a, ci, (c, co)), bf16
    # bup_ref: (1, 2*Co)              ConvTranspose bias tiled per c, f32
    # o_ref  : (1, H, 2*W, 2*Co)      output, rows a*W+w, cols c*Co+co (pixel shuffle
    #                                 already interleaved; wrapper reshape is metadata)
    # xp_s   : (H+2, W+2, C) bf16     zero-padded activation scratch (VMEM)
    H, W, C = x_ref.shape[1], x_ref.shape[2], x_ref.shape[3]
    HW = H * W
    num_layers = g_ref.shape[0]
    Co2 = wup_ref.shape[-1]                                   # 2 * Co

    # Zero the pad scratch ONCE: it persists across grid iterations, the interior is
    # fully overwritten before every conv, and the 1-pixel border is never written,
    # so it stays zero (exact 'zeros' padding_mode, leaky_relu(0) == 0).
    @pl.when(pl.program_id(0) == 0)
    def _():
        xp_s[...] = jnp.zeros(xp_s.shape, xp_s.dtype)

    def conv3x3(conv_idx):
        """3x3 'SAME' conv on the activated, zero-padded bf16 scratch as ONE matmul.

        im2col column order is (dy, dx, ci), matching the host-side weight reshape.
        The 3 dx-shifted slabs are built once and reused by all dy taps (dy shifts
        are sublane-aligned row slices, W is a multiple of 8).
        """
        ap = xp_s[...]                                        # (H+2, W+2, C) bf16
        cols = jnp.concatenate(
            [ap[:, dx:dx + W, :].reshape((H + 2) * W, C) for dx in range(3)],
            axis=-1)                                          # ((H+2)*W, 3C)
        im2col = jnp.concatenate(
            [cols[dy * W:dy * W + HW, :] for dy in range(3)],
            axis=-1)                                          # (HW, 9C) bf16
        return jnp.dot(im2col, wc_ref[conv_idx],
                       preferred_element_type=jnp.float32)    # (HW, C) f32

    x = x_ref[0].astype(jnp.float32)                          # (H, W, C) residual state
    for u in range(num_layers):
        # h = conv1(leaky(x)) + b1
        xp_s[1:H + 1, 1:W + 1, :] = _leaky(x).astype(xp_s.dtype)
        h = conv3x3(2 * u) + bc_ref[2 * u][None, :]           # (HW, C) f32
        # x = gamma * (conv2(leaky(h)) + b2) + x
        xp_s[1:H + 1, 1:W + 1, :] = _leaky(h).reshape(H, W, C).astype(xp_s.dtype)
        y = conv3x3(2 * u + 1) + bc_ref[2 * u + 1][None, :]   # (HW, C) f32
        x = g_ref[u][None, None, :] * y.reshape(H, W, C) + x

    # ConvTranspose2d(C, Co, k=2, s=2): out[2y+a, 2x+c, co] = x[y,x,:] @ w[:, a, c, co].
    # Two matmuls (one per kernel row a); each result is stored into the W-interleaved
    # half of the output so no transpose is needed afterwards.
    xf = x.reshape(HW, C).astype(jnp.bfloat16)
    for a in range(2):
        up = jnp.dot(xf, wup_ref[a], preferred_element_type=jnp.float32)
        up = up + bup_ref[0][None, :]                         # (HW, 2*Co) f32
        o_ref[0, :, a * W:(a + 1) * W, :] = up.reshape(H, W, Co2).astype(o_ref.dtype)


# ----------------------------------------------------------------------------
# One-time parameter prepacking (hoisted out of the per-call jitted forward)
# ----------------------------------------------------------------------------
def prepack_params(params):
    C = params["units"][0]["w1"].shape[-1]
    Co = params["w_up_4d"].shape[-1]
    # im2col weights: (3,3,C,C) HWIO -> (9C, C), row order (dy, dx, ci); bf16 for MXU.
    wc = jnp.stack([u[wk].reshape(9 * C, C)
                    for u in params["units"] for wk in ("w1", "w2")]
                   ).astype(jnp.bfloat16)                          # (NL*2, 9C, C)
    bc = jnp.stack([u[bk].reshape(C)
                    for u in params["units"] for bk in ("b1", "b2")])  # (NL*2, C) f32
    g = jnp.stack([u["gamma"].reshape(C) for u in params["units"]])    # (NL, C) f32
    # ConvTranspose weight (ci, a, c, co) -> (a, ci, c*Co+co), split by kernel row a.
    wup = (params["w_up_4d"].transpose(1, 0, 2, 3)
           .reshape(2, C, 2 * Co).astype(jnp.bfloat16))               # (2, C, 2*Co)
    bup = jnp.tile(params["b_up_1d"], 2).reshape(1, 2 * Co)           # (1, 2*Co) f32
    return {"wc": wc, "bc": bc, "g": g, "wup": wup, "bup": bup}


# ----------------------------------------------------------------------------
# Wrapper: single pallas_call; pixel shuffle is a pure metadata reshape
# ----------------------------------------------------------------------------
def res_upsample_forward(x, packed):
    B, H, W, C = x.shape
    Co2 = packed["wup"].shape[-1]                                     # 2 * Co
    Co = Co2 // 2

    out = pl.pallas_call(
        fused_res_upsample_kernel,
        out_shape=jax.ShapeDtypeStruct((B, H, 2 * W, Co2), x.dtype),
        grid=(B,),
        in_specs=[
            pl.BlockSpec((1, H, W, C), lambda i: (i, 0, 0, 0)),
            pl.BlockSpec(packed["wc"].shape, lambda i: (0, 0, 0)),
            pl.BlockSpec(packed["bc"].shape, lambda i: (0, 0)),
            pl.BlockSpec(packed["g"].shape, lambda i: (0, 0)),
            pl.BlockSpec(packed["wup"].shape, lambda i: (0, 0, 0)),
            pl.BlockSpec(packed["bup"].shape, lambda i: (0, 0)),
        ],
        out_specs=pl.BlockSpec((1, H, 2 * W, Co2), lambda i: (i, 0, 0, 0)),
        scratch_shapes=[pltpu.VMEM((H + 2, W + 2, C), jnp.bfloat16)],
        compiler_params=pltpu.CompilerParams(dimension_semantics=("parallel",)),
    )(x, packed["wc"], packed["bc"], packed["g"], packed["wup"], packed["bup"])

    # (B, H, a*W+w, c*Co+co) -> (B, 2H, 2W, Co): index order (b, h, a, w, c, co) is
    # already the row-major order of the target, so this is a metadata-only reshape.
    return out.reshape(B, 2 * H, 2 * W, Co)


# ----------------------------------------------------------------------------
# Plain-JAX reference (f32, XLA convs) for correctness checking
# ----------------------------------------------------------------------------
def ref_forward(x, params):
    for unit in params["units"]:
        a = _leaky(x)
        h = jax.lax.conv_general_dilated(
            a, unit["w1"], (1, 1), "SAME",
            dimension_numbers=("NHWC", "HWIO", "NHWC")) + unit["b1"][0]
        a2 = _leaky(h)
        h2 = jax.lax.conv_general_dilated(
            a2, unit["w2"], (1, 1), "SAME",
            dimension_numbers=("NHWC", "HWIO", "NHWC")) + unit["b2"][0]
        x = unit["gamma"][0] * h2 + x
    B, H, W, C = x.shape
    wt = params["w_up_4d"]                                    # (C, 2, 2, Co)
    Co = wt.shape[-1]
    y = jnp.einsum("nhwc,cabo->nhwabo", x, wt)
    y = y + params["b_up_1d"][None, None, None, None, None, :]
    y = y.transpose(0, 1, 3, 2, 4, 5).reshape(B, 2 * H, 2 * W, Co)
    return y


# ----------------------------------------------------------------------------
# Deterministic synthetic parameters (PyTorch-like uniform bounds)
# ----------------------------------------------------------------------------
def init_params(key, dim, num_layers=2, layer_scale=1.0):
    params = {"units": []}
    bound = 1.0 / np.sqrt(dim * 9)
    for _ in range(num_layers):
        key, kw1, kb1, kw2, kb2 = jax.random.split(key, 5)
        params["units"].append({
            "w1": jax.random.uniform(kw1, (3, 3, dim, dim), jnp.float32, -bound, bound),
            "b1": jax.random.uniform(kb1, (1, dim), jnp.float32, -bound, bound),
            "w2": jax.random.uniform(kw2, (3, 3, dim, dim), jnp.float32, -bound, bound),
            "b2": jax.random.uniform(kb2, (1, dim), jnp.float32, -bound, bound),
            "gamma": layer_scale * jnp.ones((1, dim), jnp.float32),
        })
    co = dim // 2
    bound_up = 1.0 / np.sqrt(dim * 4)
    key, kwu, kbu = jax.random.split(key, 3)
    params["w_up_4d"] = jax.random.uniform(kwu, (dim, 2, 2, co), jnp.float32,
                                           -bound_up, bound_up)        # (ci, a, c, co)
    params["b_up_1d"] = jax.random.uniform(kbu, (co,), jnp.float32, -bound_up, bound_up)
    return params


if __name__ == "__main__":
    key = jax.random.PRNGKey(0)
    B, H, W, C = 2, 16, 16, 32          # NHWC; equivalent torch input is (2, 32, 16, 16) NCHW
    kx, kp = jax.random.split(key)
    x = jax.random.normal(kx, (B, H, W, C), jnp.float32)
    params = init_params(kp, C, num_layers=2, layer_scale=1.0)

    packed = prepack_params(params)     # one-time weight packing, outside the jitted forward
    fwd = jax.jit(res_upsample_forward)
    out = jax.block_until_ready(fwd(x, packed))
    assert out.shape == (B, 2 * H, 2 * W, C // 2), out.shape

    ref = jax.block_until_ready(ref_forward(x, params))
    # bf16 MXU operands (f32 accumulation) through a 5-matmul chain -> relaxed tolerance.
    np.testing.assert_allclose(np.asarray(out), np.asarray(ref), rtol=2e-2, atol=2e-2)
    print("KERNEL_OK")
</pallas_src>

<mosaic_0001>
module attributes {stable_mosaic.version = 11 : i64} {
  func.func @fused_res_upsample_kernel(%arg0: i32, %arg1: memref<1x16x16x32xf32, #tpu.memory_space<vmem>>, %arg2: memref<4x288x32xbf16, #tpu.memory_space<vmem>>, %arg3: memref<4x32xf32, #tpu.memory_space<vmem>>, %arg4: memref<2x32xf32, #tpu.memory_space<vmem>>, %arg5: memref<2x32x32xbf16, #tpu.memory_space<vmem>>, %arg6: memref<1x32xf32, #tpu.memory_space<vmem>>, %arg7: memref<1x16x32x32xf32, #tpu.memory_space<vmem>>, %arg8: memref<18x18x32xbf16, #tpu.memory_space<vmem>>) attributes {dimension_semantics = [#tpu.dimension_semantics<parallel>], iteration_bounds = array<i64: 2>, scalar_prefetch = 0 : i64, scratch_operands = 1 : i64, tpu.core_type = #tpu.core_type<tc>, window_params = [{transform_indices = @transform_0, window_bounds = array<i64: 1, 16, 16, 32>}, {pipeline_mode = #tpu.pipeline_mode<synchronous>, transform_indices = @transform_1, window_bounds = array<i64: 4, 288, 32>}, {pipeline_mode = #tpu.pipeline_mode<synchronous>, transform_indices = @transform_2, window_bounds = array<i64: 4, 32>}, {pipeline_mode = #tpu.pipeline_mode<synchronous>, transform_indices = @transform_3, window_bounds = array<i64: 2, 32>}, {pipeline_mode = #tpu.pipeline_mode<synchronous>, transform_indices = @transform_4, window_bounds = array<i64: 2, 32, 32>}, {pipeline_mode = #tpu.pipeline_mode<synchronous>, transform_indices = @transform_5, window_bounds = array<i64: 1, 32>}, {transform_indices = @transform_6, window_bounds = array<i64: 1, 16, 32, 32>}]} {
    %c0_i32 = arith.constant 0 : i32
    %0 = arith.cmpi eq, %arg0, %c0_i32 : i32
    %1 = arith.extui %0 : i1 to i32
    %c0_i32_0 = arith.constant 0 : i32
    %2 = arith.cmpi ne, %1, %c0_i32_0 : i32
    scf.if %2 {
      %cst_79 = arith.constant 0.000000e+00 : bf16
      %155 = vector.broadcast %cst_79 : bf16 to vector<18x18x32xbf16>
      %c0_80 = arith.constant 0 : index
      %c0_81 = arith.constant 0 : index
      %c0_82 = arith.constant 0 : index
      %156 = vector.load %arg8[%c0_80, %c0_81, %c0_82] : memref<18x18x32xbf16, #tpu.memory_space<vmem>>, vector<18x18x32xbf16>
      tpu.vector_store %arg8[%c0_80, %c0_81, %c0_82], %155 {strides = array<i32>} : memref<18x18x32xbf16, #tpu.memory_space<vmem>>, vector<18x18x32xbf16>,
    } else {
    }
    %c0 = arith.constant 0 : index
    %c0_1 = arith.constant 0 : index
    %c0_2 = arith.constant 0 : index
    %c0_3 = arith.constant 0 : index
    %3 = vector.load %arg1[%c0, %c0_1, %c0_2, %c0_3] : memref<1x16x16x32xf32, #tpu.memory_space<vmem>>, vector<1x16x16x32xf32>
    %4 = vector.shape_cast %3 : vector<1x16x16x32xf32> to vector<16x16x32xf32>
    %cst = arith.constant 0.000000e+00 : f32
    %5 = vector.broadcast %cst : f32 to vector<16x16x32xf32>
    %6 = arith.cmpf ogt, %4, %5 : vector<16x16x32xf32>
    %cst_4 = arith.constant 0.00999999977 : f32
    %7 = vector.broadcast %cst_4 : f32 to vector<16x16x32xf32>
    %8 = arith.mulf %7, %4 : vector<16x16x32xf32>
    %9 = arith.select %6, %4, %8 : vector<16x16x32xi1>, vector<16x16x32xf32>
    %10 = arith.truncf %9 : vector<16x16x32xf32> to vector<16x16x32xbf16>
    %c1 = arith.constant 1 : index
    %c1_5 = arith.constant 1 : index
    %c0_6 = arith.constant 0 : index
    %11 = vector.load %arg8[%c1, %c1_5, %c0_6] : memref<18x18x32xbf16, #tpu.memory_space<vmem>>, vector<16x16x32xbf16>
    tpu.vector_store %arg8[%c1, %c1_5, %c0_6], %10 {strides = array<i32>} : memref<18x18x32xbf16, #tpu.memory_space<vmem>>, vector<16x16x32xbf16>,
    %c0_7 = arith.constant 0 : index
    %c0_8 = arith.constant 0 : index
    %c0_9 = arith.constant 0 : index
    %12 = vector.load %arg8[%c0_7, %c0_8, %c0_9] : memref<18x18x32xbf16, #tpu.memory_space<vmem>>, vector<18x18x32xbf16>
    %13 = vector.extract_strided_slice %12 {offsets = [0, 0, 0], sizes = [18, 16, 32], strides = [1, 1, 1]} : vector<18x18x32xbf16> to vector<18x16x32xbf16>
    %14 = vector.shape_cast %13 : vector<18x16x32xbf16> to vector<288x32xbf16>
    %15 = vector.extract_strided_slice %12 {offsets = [0, 1, 0], sizes = [18, 16, 32], strides = [1, 1, 1]} : vector<18x18x32xbf16> to vector<18x16x32xbf16>
    %16 = vector.shape_cast %15 : vector<18x16x32xbf16> to vector<288x32xbf16>
    %17 = vector.extract_strided_slice %12 {offsets = [0, 2, 0], sizes = [18, 16, 32], strides = [1, 1, 1]} : vector<18x18x32xbf16> to vector<18x16x32xbf16>
    %18 = vector.shape_cast %17 : vector<18x16x32xbf16> to vector<288x32xbf16>
    %19 = tpu.concatenate %14, %16, %18 in 1 : vector<288x32xbf16>, vector<288x32xbf16>, vector<288x32xbf16> -> vector<288x96xbf16>
    %20 = vector.extract_strided_slice %19 {offsets = [0, 0], sizes = [256, 96], strides = [1, 1]} : vector<288x96xbf16> to vector<256x96xbf16>
    %21 = vector.extract_strided_slice %19 {offsets = [16, 0], sizes = [256, 96], strides = [1, 1]} : vector<288x96xbf16> to vector<256x96xbf16>
    %22 = vector.extract_strided_slice %19 {offsets = [32, 0], sizes = [256, 96], strides = [1, 1]} : vector<288x96xbf16> to vector<256x96xbf16>
    %23 = tpu.concatenate %20, %21, %22 in 1 : vector<256x96xbf16>, vector<256x96xbf16>, vector<256x96xbf16> -> vector<256x288xbf16>
    %c0_10 = arith.constant 0 : index
    %c0_11 = arith.constant 0 : index
    %c0_12 = arith.constant 0 : index
    %24 = vector.load %arg2[%c0_10, %c0_11, %c0_12] : memref<4x288x32xbf16, #tpu.memory_space<vmem>>, vector<1x288x32xbf16>
    %25 = vector.shape_cast %24 : vector<1x288x32xbf16> to vector<288x32xbf16>
    %cst_13 = arith.constant dense<0.000000e+00> : vector<256x32xf32>
    %26 = tpu.matmul %23, %25, %cst_13 {dimension_numbers = #tpu.dot_dimension_numbers<[1], [0], [0], [1], [0, 0, 1, 1], [], []>} : vector<256x288xbf16>, vector<288x32xbf16>, vector<256x32xf32> -> vector<256x32xf32>
    %c0_14 = arith.constant 0 : index
    %c0_15 = arith.constant 0 : index
    %27 = vector.load %arg3[%c0_14, %c0_15] : memref<4x32xf32, #tpu.memory_space<vmem>>, vector<1x32xf32>
    %28 = vector.shape_cast %27 : vector<1x32xf32> to vector<32xf32>
    %29 = vector.shape_cast %28 : vector<32xf32> to vector<1x32xf32>
    %30 = vector.broadcast %29 : vector<1x32xf32> to vector<256x32xf32>
    %31 = arith.addf %26, %30 : vector<256x32xf32>
    %cst_16 = arith.constant 0.000000e+00 : f32
    %32 = vector.broadcast %cst_16 : f32 to vector<256x32xf32>
    %33 = arith.cmpf ogt, %31, %32 : vector<256x32xf32>
    %cst_17 = arith.constant 0.00999999977 : f32
    %34 = vector.broadcast %cst_17 : f32 to vector<256x32xf32>
    %35 = arith.mulf %34, %31 : vector<256x32xf32>
    %36 = arith.select %33, %31, %35 : vector<256x32xi1>, vector<256x32xf32>
    %37 = vector.shape_cast %36 : vector<256x32xf32> to vector<16x16x32xf32>
    %38 = arith.truncf %37 : vector<16x16x32xf32> to vector<16x16x32xbf16>
    %c1_18 = arith.constant 1 : index
    %c1_19 = arith.constant 1 : index
    %c0_20 = arith.constant 0 : index
    %39 = vector.load %arg8[%c1_18, %c1_19, %c0_20] : memref<18x18x32xbf16, #tpu.memory_space<vmem>>, vector<16x16x32xbf16>
    tpu.vector_store %arg8[%c1_18, %c1_19, %c0_20], %38 {strides = array<i32>} : memref<18x18x32xbf16, #tpu.memory_space<vmem>>, vector<16x16x32xbf16>,
    %c0_21 = arith.constant 0 : index
    %c0_22 = arith.constant 0 : index
    %c0_23 = arith.constant 0 : index
    %40 = vector.load %arg8[%c0_21, %c0_22, %c0_23] : memref<18x18x32xbf16, #tpu.memory_space<vmem>>, vector<18x18x32xbf16>
    %41 = vector.extract_strided_slice %40 {offsets = [0, 0, 0], sizes = [18, 16, 32], strides = [1, 1, 1]} : vector<18x18x32xbf16> to vector<18x16x32xbf16>
    %42 = vector.shape_cast %41 : vector<18x16x32xbf16> to vector<288x32xbf16>
    %43 = vector.extract_strided_slice %40 {offsets = [0, 1, 0], sizes = [18, 16, 32], strides = [1, 1, 1]} : vector<18x18x32xbf16> to vector<18x16x32xbf16>
    %44 = vector.shape_cast %43 : vector<18x16x32xbf16> to vector<288x32xbf16>
    %45 = vector.extract_strided_slice %40 {offsets = [0, 2, 0], sizes = [18, 16, 32], strides = [1, 1, 1]} : vector<18x18x32xbf16> to vector<18x16x32xbf16>
    %46 = vector.shape_cast %45 : vector<18x16x32xbf16> to vector<288x32xbf16>
    %47 = tpu.concatenate %42, %44, %46 in 1 : vector<288x32xbf16>, vector<288x32xbf16>, vector<288x32xbf16> -> vector<288x96xbf16>
    %48 = vector.extract_strided_slice %47 {offsets = [0, 0], sizes = [256, 96], strides = [1, 1]} : vector<288x96xbf16> to vector<256x96xbf16>
    %49 = vector.extract_strided_slice %47 {offsets = [16, 0], sizes = [256, 96], strides = [1, 1]} : vector<288x96xbf16> to vector<256x96xbf16>
    %50 = vector.extract_strided_slice %47 {offsets = [32, 0], sizes = [256, 96], strides = [1, 1]} : vector<288x96xbf16> to vector<256x96xbf16>
    %51 = tpu.concatenate %48, %49, %50 in 1 : vector<256x96xbf16>, vector<256x96xbf16>, vector<256x96xbf16> -> vector<256x288xbf16>
    %c1_24 = arith.constant 1 : index
    %c0_25 = arith.constant 0 : index
    %c0_26 = arith.constant 0 : index
    %52 = vector.load %arg2[%c1_24, %c0_25, %c0_26] : memref<4x288x32xbf16, #tpu.memory_space<vmem>>, vector<1x288x32xbf16>
    %53 = vector.shape_cast %52 : vector<1x288x32xbf16> to vector<288x32xbf16>
    %cst_27 = arith.constant dense<0.000000e+00> : vector<256x32xf32>
    %54 = tpu.matmul %51, %53, %cst_27 {dimension_numbers = #tpu.dot_dimension_numbers<[1], [0], [0], [1], [0, 0, 1, 1], [], []>} : vector<256x288xbf16>, vector<288x32xbf16>, vector<256x32xf32> -> vector<256x32xf32>
    %c1_28 = arith.constant 1 : index
    %c0_29 = arith.constant 0 : index
    %55 = vector.load %arg3[%c1_28, %c0_29] : memref<4x32xf32, #tpu.memory_space<vmem>>, vector<1x32xf32>
    %56 = vector.shape_cast %55 : vector<1x32xf32> to vector<32xf32>
    %57 = vector.shape_cast %56 : vector<32xf32> to vector<1x32xf32>
    %58 = vector.broadcast %57 : vector<1x32xf32> to vector<256x32xf32>
    %59 = arith.addf %54, %58 : vector<256x32xf32>
    %c0_30 = arith.constant 0 : index
    %c0_31 = arith.constant 0 : index
    %60 = vector.load %arg4[%c0_30, %c0_31] : memref<2x32xf32, #tpu.memory_space<vmem>>, vector<1x32xf32>
    %61 = vector.shape_cast %60 : vector<1x32xf32> to vector<32xf32>
    %62 = vector.shape_cast %61 : vector<32xf32> to vector<1x1x32xf32>
    %63 = vector.shape_cast %59 : vector<256x32xf32> to vector<16x16x32xf32>
    %64 = vector.broadcast %62 : vector<1x1x32xf32> to vector<16x16x32xf32>
    %65 = arith.mulf %64, %63 : vector<16x16x32xf32>
    %66 = arith.addf %65, %4 : vector<16x16x32xf32>
    %cst_32 = arith.constant 0.000000e+00 : f32
    %67 = vector.broadcast %cst_32 : f32 to vector<16x16x32xf32>
    %68 = arith.cmpf ogt, %66, %67 : vector<16x16x32xf32>
    %cst_33 = arith.constant 0.00999999977 : f32
    %69 = vector.broadcast %cst_33 : f32 to vector<16x16x32xf32>
    %70 = arith.mulf %69, %66 : vector<16x16x32xf32>
    %71 = arith.select %68, %66, %70 : vector<16x16x32xi1>, vector<16x16x32xf32>
    %72 = arith.truncf %71 : vector<16x16x32xf32> to vector<16x16x32xbf16>
    %c1_34 = arith.constant 1 : index
    %c1_35 = arith.constant 1 : index
    %c0_36 = arith.constant 0 : index
    %73 = vector.load %arg8[%c1_34, %c1_35, %c0_36] : memref<18x18x32xbf16, #tpu.memory_space<vmem>>, vector<16x16x32xbf16>
    tpu.vector_store %arg8[%c1_34, %c1_35, %c0_36], %72 {strides = array<i32>} : memref<18x18x32xbf16, #tpu.memory_space<vmem>>, vector<16x16x32xbf16>,
    %c0_37 = arith.constant 0 : index
    %c0_38 = arith.constant 0 : index
    %c0_39 = arith.constant 0 : index
    %74 = vector.load %arg8[%c0_37, %c0_38, %c0_39] : memref<18x18x32xbf16, #tpu.memory_space<vmem>>, vector<18x18x32xbf16>
    %75 = vector.extract_strided_slice %74 {offsets = [0, 0, 0], sizes = [18, 16, 32], strides = [1, 1, 1]} : vector<18x18x32xbf16> to vector<18x16x32xbf16>
    %76 = vector.shape_cast %75 : vector<18x16x32xbf16> to vector<288x32xbf16>
    %77 = vector.extract_strided_slice %74 {offsets = [0, 1, 0], sizes = [18, 16, 32], strides = [1, 1, 1]} : vector<18x18x32xbf16> to vector<18x16x32xbf16>
    %78 = vector.shape_cast %77 : vector<18x16x32xbf16> to vector<288x32xbf16>
    %79 = vector.extract_strided_slice %74 {offsets = [0, 2, 0], sizes = [18, 16, 32], strides = [1, 1, 1]} : vector<18x18x32xbf16> to vector<18x16x32xbf16>
    %80 = vector.shape_cast %79 : vector<18x16x32xbf16> to vector<288x32xbf16>
    %81 = tpu.concatenate %76, %78, %80 in 1 : vector<288x32xbf16>, vector<288x32xbf16>, vector<288x32xbf16> -> vector<288x96xbf16>
    %82 = vector.extract_strided_slice %81 {offsets = [0, 0], sizes = [256, 96], strides = [1, 1]} : vector<288x96xbf16> to vector<256x96xbf16>
    %83 = vector.extract_strided_slice %81 {offsets = [16, 0], sizes = [256, 96], strides = [1, 1]} : vector<288x96xbf16> to vector<256x96xbf16>
    %84 = vector.extract_strided_slice %81 {offsets = [32, 0], sizes = [256, 96], strides = [1, 1]} : vector<288x96xbf16> to vector<256x96xbf16>
    %85 = tpu.concatenate %82, %83, %84 in 1 : vector<256x96xbf16>, vector<256x96xbf16>, vector<256x96xbf16> -> vector<256x288xbf16>
    %c2 = arith.constant 2 : index
    %c0_40 = arith.constant 0 : index
    %c0_41 = arith.constant 0 : index
    %86 = vector.load %arg2[%c2, %c0_40, %c0_41] : memref<4x288x32xbf16, #tpu.memory_space<vmem>>, vector<1x288x32xbf16>
    %87 = vector.shape_cast %86 : vector<1x288x32xbf16> to vector<288x32xbf16>
    %cst_42 = arith.constant dense<0.000000e+00> : vector<256x32xf32>
    %88 = tpu.matmul %85, %87, %cst_42 {dimension_numbers = #tpu.dot_dimension_numbers<[1], [0], [0], [1], [0, 0, 1, 1], [], []>} : vector<256x288xbf16>, vector<288x32xbf16>, vector<256x32xf32> -> vector<256x32xf32>
    %c2_43 = arith.constant 2 : index
    %c0_44 = arith.constant 0 : index
    %89 = vector.load %arg3[%c2_43, %c0_44] : memref<4x32xf32, #tpu.memory_space<vmem>>, vector<1x32xf32>
    %90 = vector.shape_cast %89 : vector<1x32xf32> to vector<32xf32>
    %91 = vector.shape_cast %90 : vector<32xf32> to vector<1x32xf32>
    %92 = vector.broadcast %91 : vector<1x32xf32> to vector<256x32xf32>
    %93 = arith.addf %88, %92 : vector<256x32xf32>
    %cst_45 = arith.constant 0.000000e+00 : f32
    %94 = vector.broadcast %cst_45 : f32 to vector<256x32xf32>
    %95 = arith.cmpf ogt, %93, %94 : vector<256x32xf32>
    %cst_46 = arith.constant 0.00999999977 : f32
    %96 = vector.broadcast %cst_46 : f32 to vector<256x32xf32>
    %97 = arith.mulf %96, %93 : vector<256x32xf32>
    %98 = arith.select %95, %93, %97 : vector<256x32xi1>, vector<256x32xf32>
    %99 = vector.shape_cast %98 : vector<256x32xf32> to vector<16x16x32xf32>
    %100 = arith.truncf %99 : vector<16x16x32xf32> to vector<16x16x32xbf16>
    %c1_47 = arith.constant 1 : index
    %c1_48 = arith.constant 1 : index
    %c0_49 = arith.constant 0 : index
    %101 = vector.load %arg8[%c1_47, %c1_48, %c0_49] : memref<18x18x32xbf16, #tpu.memory_space<vmem>>, vector<16x16x32xbf16>
    tpu.vector_store %arg8[%c1_47, %c1_48, %c0_49], %100 {strides = array<i32>} : memref<18x18x32xbf16, #tpu.memory_space<vmem>>, vector<16x16x32xbf16>,
    %c0_50 = arith.constant 0 : index
    %c0_51 = arith.constant 0 : index
    %c0_52 = arith.constant 0 : index
    %102 = vector.load %arg8[%c0_50, %c0_51, %c0_52] : memref<18x18x32xbf16, #tpu.memory_space<vmem>>, vector<18x18x32xbf16>
    %103 = vector.extract_strided_slice %102 {offsets = [0, 0, 0], sizes = [18, 16, 32], strides = [1, 1, 1]} : vector<18x18x32xbf16> to vector<18x16x32xbf16>
    %104 = vector.shape_cast %103 : vector<18x16x32xbf16> to vector<288x32xbf16>
    %105 = vector.extract_strided_slice %102 {offsets = [0, 1, 0], sizes = [18, 16, 32], strides = [1, 1, 1]} : vector<18x18x32xbf16> to vector<18x16x32xbf16>
    %106 = vector.shape_cast %105 : vector<18x16x32xbf16> to vector<288x32xbf16>
    %107 = vector.extract_strided_slice %102 {offsets = [0, 2, 0], sizes = [18, 16, 32], strides = [1, 1, 1]} : vector<18x18x32xbf16> to vector<18x16x32xbf16>
    %108 = vector.shape_cast %107 : vector<18x16x32xbf16> to vector<288x32xbf16>
    %109 = tpu.concatenate %104, %106, %108 in 1 : vector<288x32xbf16>, vector<288x32xbf16>, vector<288x32xbf16> -> vector<288x96xbf16>
    %110 = vector.extract_strided_slice %109 {offsets = [0, 0], sizes = [256, 96], strides = [1, 1]} : vector<288x96xbf16> to vector<256x96xbf16>
    %111 = vector.extract_strided_slice %109 {offsets = [16, 0], sizes = [256, 96], strides = [1, 1]} : vector<288x96xbf16> to vector<256x96xbf16>
    %112 = vector.extract_strided_slice %109 {offsets = [32, 0], sizes = [256, 96], strides = [1, 1]} : vector<288x96xbf16> to vector<256x96xbf16>
    %113 = tpu.concatenate %110, %111, %112 in 1 : vector<256x96xbf16>, vector<256x96xbf16>, vector<256x96xbf16> -> vector<256x288xbf16>
    %c3 = arith.constant 3 : index
    %c0_53 = arith.constant 0 : index
    %c0_54 = arith.constant 0 : index
    %114 = vector.load %arg2[%c3, %c0_53, %c0_54] : memref<4x288x32xbf16, #tpu.memory_space<vmem>>, vector<1x288x32xbf16>
    %115 = vector.shape_cast %114 : vector<1x288x32xbf16> to vector<288x32xbf16>
    %cst_55 = arith.constant dense<0.000000e+00> : vector<256x32xf32>
    %116 = tpu.matmul %113, %115, %cst_55 {dimension_numbers = #tpu.dot_dimension_numbers<[1], [0], [0], [1], [0, 0, 1, 1], [], []>} : vector<256x288xbf16>, vector<288x32xbf16>, vector<256x32xf32> -> vector<256x32xf32>
    %c3_56 = arith.constant 3 : index
    %c0_57 = arith.constant 0 : index
    %117 = vector.load %arg3[%c3_56, %c0_57] : memref<4x32xf32, #tpu.memory_space<vmem>>, vector<1x32xf32>
    %118 = vector.shape_cast %117 : vector<1x32xf32> to vector<32xf32>
    %119 = vector.shape_cast %118 : vector<32xf32> to vector<1x32xf32>
    %120 = vector.broadcast %119 : vector<1x32xf32> to vector<256x32xf32>
    %121 = arith.addf %116, %120 : vector<256x32xf32>
    %c1_58 = arith.constant 1 : index
    %c0_59 = arith.constant 0 : index
    %122 = vector.load %arg4[%c1_58, %c0_59] : memref<2x32xf32, #tpu.memory_space<vmem>>, vector<1x32xf32>
    %123 = vector.shape_cast %122 : vector<1x32xf32> to vector<32xf32>
    %124 = vector.shape_cast %123 : vector<32xf32> to vector<1x1x32xf32>
    %125 = vector.shape_cast %121 : vector<256x32xf32> to vector<16x16x32xf32>
    %126 = vector.broadcast %124 : vector<1x1x32xf32> to vector<16x16x32xf32>
    %127 = arith.mulf %126, %125 : vector<16x16x32xf32>
    %128 = arith.addf %127, %66 : vector<16x16x32xf32>
    %129 = vector.shape_cast %128 : vector<16x16x32xf32> to vector<256x32xf32>
    %130 = arith.truncf %129 : vector<256x32xf32> to vector<256x32xbf16>
    %c0_60 = arith.constant 0 : index
    %c0_61 = arith.constant 0 : index
    %c0_62 = arith.constant 0 : index
    %131 = vector.load %arg5[%c0_60, %c0_61, %c0_62] : memref<2x32x32xbf16, #tpu.memory_space<vmem>>, vector<1x32x32xbf16>
    %132 = vector.shape_cast %131 : vector<1x32x32xbf16> to vector<32x32xbf16>
    %cst_63 = arith.constant dense<0.000000e+00> : vector<256x32xf32>
    %133 = tpu.matmul %130, %132, %cst_63 {dimension_numbers = #tpu.dot_dimension_numbers<[1], [0], [0], [1], [0, 0, 1, 1], [], []>} : vector<256x32xbf16>, vector<32x32xbf16>, vector<256x32xf32> -> vector<256x32xf32>
    %c0_64 = arith.constant 0 : index
    %c0_65 = arith.constant 0 : index
    %134 = vector.load %arg6[%c0_64, %c0_65] : memref<1x32xf32, #tpu.memory_space<vmem>>, vector<1x32xf32>
    %135 = vector.shape_cast %134 : vector<1x32xf32> to vector<32xf32>
    %136 = vector.shape_cast %135 : vector<32xf32> to vector<1x32xf32>
    %137 = vector.broadcast %136 : vector<1x32xf32> to vector<256x32xf32>
    %138 = arith.addf %133, %137 : vector<256x32xf32>
    %139 = vector.shape_cast %138 : vector<256x32xf32> to vector<16x16x32xf32>
    %c0_66 = arith.constant 0 : index
    %c0_67 = arith.constant 0 : index
    %c0_68 = arith.constant 0 : index
    %c0_69 = arith.constant 0 : index
    %140 = vector.load %arg7[%c0_66, %c0_67, %c0_68, %c0_69] : memref<1x16x32x32xf32, #tpu.memory_space<vmem>>, vector<1x16x16x32xf32>
    %141 = vector.shape_cast %140 : vector<1x16x16x32xf32> to vector<16x16x32xf32>
    %142 = vector.shape_cast %139 : vector<16x16x32xf32> to vector<1x16x16x32xf32>
    tpu.vector_store %arg7[%c0_66, %c0_67, %c0_68, %c0_69], %142 {strides = array<i32>} : memref<1x16x32x32xf32, #tpu.memory_space<vmem>>, vector<1x16x16x32xf32>,
    %c1_70 = arith.constant 1 : index
    %c0_71 = arith.constant 0 : index
    %c0_72 = arith.constant 0 : index
    %143 = vector.load %arg5[%c1_70, %c0_71, %c0_72] : memref<2x32x32xbf16, #tpu.memory_space<vmem>>, vector<1x32x32xbf16>
    %144 = vector.shape_cast %143 : vector<1x32x32xbf16> to vector<32x32xbf16>
    %cst_73 = arith.constant dense<0.000000e+00> : vector<256x32xf32>
    %145 = tpu.matmul %130, %144, %cst_73 {dimension_numbers = #tpu.dot_dimension_numbers<[1], [0], [0], [1], [0, 0, 1, 1], [], []>} : vector<256x32xbf16>, vector<32x32xbf16>, vector<256x32xf32> -> vector<256x32xf32>
    %c0_74 = arith.constant 0 : index
    %c0_75 = arith.constant 0 : index
    %146 = vector.load %arg6[%c0_74, %c0_75] : memref<1x32xf32, #tpu.memory_space<vmem>>, vector<1x32xf32>
    %147 = vector.shape_cast %146 : vector<1x32xf32> to vector<32xf32>
    %148 = vector.shape_cast %147 : vector<32xf32> to vector<1x32xf32>
    %149 = vector.broadcast %148 : vector<1x32xf32> to vector<256x32xf32>
    %150 = arith.addf %145, %149 : vector<256x32xf32>
    %151 = vector.shape_cast %150 : vector<256x32xf32> to vector<16x16x32xf32>
    %c0_76 = arith.constant 0 : index
    %c0_77 = arith.constant 0 : index
    %c16 = arith.constant 16 : index
    %c0_78 = arith.constant 0 : index
    %152 = vector.load %arg7[%c0_76, %c0_77, %c16, %c0_78] : memref<1x16x32x32xf32, #tpu.memory_space<vmem>>, vector<1x16x16x32xf32>
    %153 = vector.shape_cast %152 : vector<1x16x16x32xf32> to vector<16x16x32xf32>
    %154 = vector.shape_cast %151 : vector<16x16x32xf32> to vector<1x16x16x32xf32>
    tpu.vector_store %arg7[%c0_76, %c0_77, %c16, %c0_78], %154 {strides = array<i32>} : memref<1x16x32x32xf32, #tpu.memory_space<vmem>>, vector<1x16x16x32xf32>,
    return
  }
  func.func @transform_0(%arg0: i32) -> (i32, i32, i32, i32) {
    %c0_i32 = arith.constant 0 : i32
    %c0_i32_0 = arith.constant 0 : i32
    %c0_i32_1 = arith.constant 0 : i32
    %c0_i32_2 = arith.constant 0 : i32
    return %arg0, %c0_i32, %c0_i32_0, %c0_i32_1 : i32, i32, i32, i32
  }
  func.func @transform_1(%arg0: i32) -> (i32, i32, i32) {
    %c0_i32 = arith.constant 0 : i32
    %c0_i32_0 = arith.constant 0 : i32
    %c0_i32_1 = arith.constant 0 : i32
    %c0_i32_2 = arith.constant 0 : i32
    return %c0_i32, %c0_i32_0, %c0_i32_1 : i32, i32, i32
  }
  func.func @transform_2(%arg0: i32) -> (i32, i32) {
    %c0_i32 = arith.constant 0 : i32
    %c0_i32_0 = arith.constant 0 : i32
    %c0_i32_1 = arith.constant 0 : i32
    return %c0_i32, %c0_i32_0 : i32, i32
  }
  func.func @transform_3(%arg0: i32) -> (i32, i32) {
    %c0_i32 = arith.constant 0 : i32
    %c0_i32_0 = arith.constant 0 : i32
    %c0_i32_1 = arith.constant 0 : i32
    return %c0_i32, %c0_i32_0 : i32, i32
  }
  func.func @transform_4(%arg0: i32) -> (i32, i32, i32) {
    %c0_i32 = arith.constant 0 : i32
    %c0_i32_0 = arith.constant 0 : i32
    %c0_i32_1 = arith.constant 0 : i32
    %c0_i32_2 = arith.constant 0 : i32
    return %c0_i32, %c0_i32_0, %c0_i32_1 : i32, i32, i32
  }
  func.func @transform_5(%arg0: i32) -> (i32, i32) {
    %c0_i32 = arith.constant 0 : i32
    %c0_i32_0 = arith.constant 0 : i32
    %c0_i32_1 = arith.constant 0 : i32
    return %c0_i32, %c0_i32_0 : i32, i32
  }
  func.func @transform_6(%arg0: i32) -> (i32, i32, i32, i32) {
    %c0_i32 = arith.constant 0 : i32
    %c0_i32_0 = arith.constant 0 : i32
    %c0_i32_1 = arith.constant 0 : i32
    %c0_i32_2 = arith.constant 0 : i32
    return %arg0, %c0_i32, %c0_i32_0, %c0_i32_1 : i32, i32, i32, i32
  }
}

</mosaic_0001>

<llo_original>
// kernel: res_upsample_forward.1
$region0: #{res_upsample_forward.1}
  #allocation0 [shape = 'u32[]', space=smem, size = 0x4, offset = 0x4, fixed_abs, tag = 'smem constant byte address 0x4 - core index']
  #allocation1 [shape = 'u32[144,128]{1,0:T(1,128)}', space=vmem, size = 0x12000, scoped, tag = 'internal scratch']
  #allocation2 [shape = 'bf16[18,18,32]{2,1,0:T(8,128)(2,1)}', space=vmem, size = 0x1b000, scoped, tag = 'scratch operand']
  %s0 = inlined_call_operand.vmem [shape: f32[2,16,16,32], index: 0, kind: input, shape index: {}]
  %s1 = inlined_call_operand.vmem [shape: bf16[4,288,32], index: 1, kind: input, shape index: {}]
  %s2 = inlined_call_operand.vmem [shape: f32[4,32], index: 2, kind: input, shape index: {}]
  %s3 = inlined_call_operand.vmem [shape: f32[2,32], index: 3, kind: input, shape index: {}]
  %s4 = inlined_call_operand.vmem [shape: bf16[2,32,32], index: 4, kind: input, shape index: {}]
  %s5 = inlined_call_operand.vmem [shape: f32[1,32], index: 5, kind: input, shape index: {}]
  %s6 = inlined_call_operand.vmem [shape: f32[2,16,32,32], index: 6, kind: output, shape index: {}]
  %s7 = sld [smem:[#allocation0]]
  $region61: #{res_upsample_forward.1} parent=0
    _
  %s9 = ssub.s32 1, %s7
  %s10 = scalar_select 0, %s9, %s7
  loop: start=0, step=1, limit=4
  $region2: #{res_upsample_forward.1} parent=0 // loop_pre_header
    _
  $region3: #{res_upsample_forward.1} parent=0 // loop_header
    %s12 = sphi 0, %s16
    %p13 = scmp.ge.s32.totalorder %s12, 4
    %s22 = sphi 0, %s24
    %s25 = sphi 0, %s22
    %s26 = sphi 0, %s25
    %s42 = sphi 0, %s26
    %s46 = sphi 0, %s46
    %s48 = sphi 0, %s46
    %s49 = sphi 0, %s48
    %s63 = sphi 0, %s49
    %s67 = sphi 0, %s67
    %s69 = sphi 0, %s67
    %s70 = sphi 0, %s69
    %s84 = sphi 0, %s70
    %s88 = sphi 0, %s88
    %s90 = sphi 0, %s88
    %s91 = sphi 0, %s90
    %s105 = sphi 0, %s91
    %s109 = sphi 0, %s109
    %s111 = sphi 0, %s109
    %s112 = sphi 0, %s111
    %s126 = sphi 0, %s112
    %s130 = sphi 0, %s130
    %s132 = sphi 0, %s130
    %s133 = sphi 0, %s132
    %s147 = sphi 0, %s133
    %s153 = sphi 0, %s155
    %s156 = sphi 0, %s153
    %s157 = sphi 0, %s156
    %s173 = sphi 0, %s157
  $region4: #{res_upsample_forward.1} parent=0 // loop_header_branch
    %15 = sbr.rel (%p13) target = $region8
  $region5: #{res_upsample_forward.1} parent=0 // loop_body
    %s17 = ssub.s32 %s12, 1
    %s18 = ssub.s32 %s12, 2
    %s19 = sadd.s32 %s12, 1
    %s20 = ssub.s32 %s12, %s19
    %p21 = scmp.eq.s32.totalorder %s20, 0
    %s23 = sadd.s32 %s22, 1
    %s24 = scalar_select %p21, %s22, %s23
    %p27 = pneg %p21
    %p28 = scmp.eq.s32.totalorder %s12, 1
    %p29 = por %p27, %p28
    %p30 = scmp.ne.s32.totalorder %s22, %s25
    %p31 = scmp.eq.s32.totalorder %s12, 0
    %p32 = por %p30, %p31
    %p33 = scmp.ne.s32.totalorder %s22, %s25
    %p34 = scmp.eq.s32.totalorder %s17, 1
    %p35 = por %p33, %p34
    %p36 = scmp.ne.s32.totalorder %s25, %s26
    %p37 = scmp.eq.s32.totalorder %s17, 0
    %p38 = por %p36, %p37
    %p39 = scmp.ne.s32.totalorder %s25, %s26
    %p40 = scmp.eq.s32.totalorder %s18, 1
    %p41 = por %p39, %p40
    %p43 = scmp.ne.s32.totalorder %s26, %s42
    %p44 = scmp.eq.s32.totalorder %s18, 0
    %p45 = por %p43, %p44
    %s47 = sadd.s32 %s46, 1
    %p50 = scmp.eq.s32.totalorder %s12, 1
    %p51 = scmp.ne.s32.totalorder %s46, %s48
    %p52 = scmp.eq.s32.totalorder %s12, 0
    %p53 = por %p51, %p52
    %p54 = scmp.ne.s32.totalorder %s46, %s48
    %p55 = scmp.eq.s32.totalorder %s17, 1
    %p56 = por %p54, %p55
    %p57 = scmp.ne.s32.totalorder %s48, %s49
    %p58 = scmp.eq.s32.totalorder %s17, 0
    %p59 = por %p57, %p58
    %p60 = scmp.ne.s32.totalorder %s48, %s49
    %p61 = scmp.eq.s32.totalorder %s18, 1
    %p62 = por %p60, %p61
    %p64 = scmp.ne.s32.totalorder %s49, %s63
    %p65 = scmp.eq.s32.totalorder %s18, 0
    %p66 = por %p64, %p65
    %s68 = sadd.s32 %s67, 1
    %p71 = scmp.eq.s32.totalorder %s12, 1
    %p72 = scmp.ne.s32.totalorder %s67, %s69
    %p73 = scmp.eq.s32.totalorder %s12, 0
    %p74 = por %p72, %p73
    %p75 = scmp.ne.s32.totalorder %s67, %s69
    %p76 = scmp.eq.s32.totalorder %s17, 1
    %p77 = por %p75, %p76
    %p78 = scmp.ne.s32.totalorder %s69, %s70
    %p79 = scmp.eq.s32.totalorder %s17, 0
    %p80 = por %p78, %p79
    %p81 = scmp.ne.s32.totalorder %s69, %s70
    %p82 = scmp.eq.s32.totalorder %s18, 1
    %p83 = por %p81, %p82
    %p85 = scmp.ne.s32.totalorder %s70, %s84
    %p86 = scmp.eq.s32.totalorder %s18, 0
    %p87 = por %p85, %p86
    %s89 = sadd.s32 %s88, 1
    %p92 = scmp.eq.s32.totalorder %s12, 1
    %p93 = scmp.ne.s32.totalorder %s88, %s90
    %p94 = scmp.eq.s32.totalorder %s12, 0
    %p95 = por %p93, %p94
    %p96 = scmp.ne.s32.totalorder %s88, %s90
    %p97 = scmp.eq.s32.totalorder %s17, 1
    %p98 = por %p96, %p97
    %p99 = scmp.ne.s32.totalorder %s90, %s91
    %p100 = scmp.eq.s32.totalorder %s17, 0
    %p101 = por %p99, %p100
    %p102 = scmp.ne.s32.totalorder %s90, %s91
    %p103 = scmp.eq.s32.totalorder %s18, 1
    %p104 = por %p102, %p103
    %p106 = scmp.ne.s32.totalorder %s91, %s105
    %p107 = scmp.eq.s32.totalorder %s18, 0
    %p108 = por %p106, %p107
    %s110 = sadd.s32 %s109, 1
    %p113 = scmp.eq.s32.totalorder %s12, 1
    %p114 = scmp.ne.s32.totalorder %s109, %s111
    %p115 = scmp.eq.s32.totalorder %s12, 0
    %p116 = por %p114, %p115
    %p117 = scmp.ne.s32.totalorder %s109, %s111
    %p118 = scmp.eq.s32.totalorder %s17, 1
    %p119 = por %p117, %p118
    %p120 = scmp.ne.s32.totalorder %s111, %s112
    %p121 = scmp.eq.s32.totalorder %s17, 0
    %p122 = por %p120, %p121
    %p123 = scmp.ne.s32.totalorder %s111, %s112
    %p124 = scmp.eq.s32.totalorder %s18, 1
    %p125 = por %p123, %p124
    %p127 = scmp.ne.s32.totalorder %s112, %s126
    %p128 = scmp.eq.s32.totalorder %s18, 0
    %p129 = por %p127, %p128
    %s131 = sadd.s32 %s130, 1
    %p134 = scmp.eq.s32.totalorder %s12, 1
    %p135 = scmp.ne.s32.totalorder %s130, %s132
    %p136 = scmp.eq.s32.totalorder %s12, 0
    %p137 = por %p135, %p136
    %p138 = scmp.ne.s32.totalorder %s130, %s132
    %p139 = scmp.eq.s32.totalorder %s17, 1
    %p140 = por %p138, %p139
    %p141 = scmp.ne.s32.totalorder %s132, %s133
    %p142 = scmp.eq.s32.totalorder %s17, 0
    %p143 = por %p141, %p142
    %p144 = scmp.ne.s32.totalorder %s132, %s133
    %p145 = scmp.eq.s32.totalorder %s18, 1
    %p146 = por %p144, %p145
    %p148 = scmp.ne.s32.totalorder %s133, %s147
    %p149 = scmp.eq.s32.totalorder %s18, 0
    %p150 = por %p148, %p149
    %s151 = ssub.s32 %s12, %s19
    %p152 = scmp.eq.s32.totalorder %s151, 0
    %s154 = sadd.s32 %s153, 1
    %s155 = scalar_select %p152, %s153, %s154
    %p158 = pneg %p152
    %p159 = scmp.eq.s32.totalorder %s12, 1
    %p160 = por %p158, %p159
    %p161 = scmp.ne.s32.totalorder %s153, %s156
    %p162 = scmp.eq.s32.totalorder %s12, 0
    %p163 = por %p161, %p162
    %p164 = scmp.ne.s32.totalorder %s153, %s156
    %p165 = scmp.eq.s32.totalorder %s17, 1
    %p166 = por %p164, %p165
    %p167 = scmp.ne.s32.totalorder %s156, %s157
    %p168 = scmp.eq.s32.totalorder %s17, 0
    %p169 = por %p167, %p168
    %p170 = scmp.ne.s32.totalorder %s156, %s157
    %p171 = scmp.eq.s32.totalorder %s18, 1
    %p172 = por %p170, %p171
    %p174 = scmp.ne.s32.totalorder %s157, %s173
    %p175 = scmp.eq.s32.totalorder %s18, 0
    %p176 = por %p174, %p175
    %p177 = scmp.le.s32.totalorder 1, %s12
    %p178 = scmp.lt.s32.totalorder %s12, 3
    %p179 = pnand %p177, %p178
    %p180 = pneg %p179
    // Predicated region
    $region9: #{res_upsample_forward.1} parent=5 // pred_check
      _
    $region10: #{res_upsample_forward.1} parent=5 // pred_check_branch
      %182 = sbr.rel (%p179) target = $region12
    $region11: #{res_upsample_forward.1} parent=5 // pred_region
      %s183 = ssub.s32 %s12, 1
      // Predicated region
      $region13: #{res_upsample_forward.1} parent=11 // pred_check
        %p184 = pneg %p59
      $region14: #{res_upsample_forward.1} parent=11 // pred_check_branch
        %186 = sbr.rel (%p184) target = $region16
      $region15: #{res_upsample_forward.1} parent=11 // pred_region
        _
      $region16: #{res_upsample_forward.1} parent=11 // pred_fallthru
        _
      // Predicated region
      $region17: #{res_upsample_forward.1} parent=11 // pred_check
        %p187 = pneg %p80
      $region18: #{res_upsample_forward.1} parent=11 // pred_check_branch
        %189 = sbr.rel (%p187) target = $region20
      $region19: #{res_upsample_forward.1} parent=11 // pred_region
        _
      $region20: #{res_upsample_forward.1} parent=11 // pred_fallthru
        _
      // Predicated region
      $region21: #{res_upsample_forward.1} parent=11 // pred_check
        %p190 = pneg %p101
      $region22: #{res_upsample_forward.1} parent=11 // pred_check_branch
        %192 = sbr.rel (%p190) target = $region24
      $region23: #{res_upsample_forward.1} parent=11 // pred_region
        _
      $region24: #{res_upsample_forward.1} parent=11 // pred_fallthru
        _
      // Predicated region
      $region25: #{res_upsample_forward.1} parent=11 // pred_check
        %p193 = pneg %p122
      $region26: #{res_upsample_forward.1} parent=11 // pred_check_branch
        %195 = sbr.rel (%p193) target = $region28
      $region27: #{res_upsample_forward.1} parent=11 // pred_region
        _
      $region28: #{res_upsample_forward.1} parent=11 // pred_fallthru
        _
      // Predicated region
      $region29: #{res_upsample_forward.1} parent=11 // pred_check
        %p196 = pneg %p143
      $region30: #{res_upsample_forward.1} parent=11 // pred_check_branch
        %198 = sbr.rel (%p196) target = $region32
      $region31: #{res_upsample_forward.1} parent=11 // pred_region
        _
      $region32: #{res_upsample_forward.1} parent=11 // pred_fallthru
        _
    $region12: #{res_upsample_forward.1} parent=5 // pred_fallthru
      _
    %p199 = scmp.lt.s32.totalorder %s12, 2
    // Predicated region
    $region33: #{res_upsample_forward.1} parent=5 // pred_check
      %p200 = pneg %p199
    $region34: #{res_upsample_forward.1} parent=5 // pred_check_branch
      %202 = sbr.rel (%p200) target = $region36
    $region35: #{res_upsample_forward.1} parent=5 // pred_region
      // Predicated region
      $region37: #{res_upsample_forward.1} parent=35 // pred_check
        %p203 = pneg %p32
      $region38: #{res_upsample_forward.1} parent=35 // pred_check_branch
        %205 = sbr.rel (%p203) target = $region40
      $region39: #{res_upsample_forward.1} parent=35 // pred_region
        %p206 = scmp.lt.s32.totalorder %s12, 1
        %s207 = scalar_select %p206, %s12, 1
        %s208 = smul.addr %s207, 32
        %s209 = smul.addr %s208, 8
        %s210 = scalar_lea.vmem %s0, %s209
      $region40: #{res_upsample_forward.1} parent=35 // pred_fallthru
        _
    $region36: #{res_upsample_forward.1} parent=5 // pred_fallthru
      _
    %p211 = scmp.le.s32.totalorder 1, %s12
    %p212 = scmp.lt.s32.totalorder %s12, 3
    %p213 = pnand %p211, %p212
    %p214 = pneg %p213
    // Predicated region
    $region41: #{res_upsample_forward.1} parent=5 // pred_check
      _
    $region42: #{res_upsample_forward.1} parent=5 // pred_check_branch
      %216 = sbr.rel (%p213) target = $region44
    $region43: #{res_upsample_forward.1} parent=5 // pred_region
      %s217 = ssub.s32 %s12, 1
      %p218 = scmp.lt.s32.totalorder %s17, 1
      %s219 = scalar_select %p218, %s17, 1
      %s220 = smul.addr %s219, 32
      %s221 = smul.addr %s220, 8
      %s222 = scalar_lea.vmem %s0, %s221
      %p223 = pneg %p38
      %p224 = pneg %p35
      %p225 = pneg %p59
      %p226 = pneg %p56
      %p227 = pneg %p80
      %p228 = pneg %p77
      %p229 = pneg %p101
      %p230 = pneg %p98
      %p231 = pneg %p122
      %p232 = pneg %p119
      %p233 = pneg %p143
      %p234 = pneg %p140
      %p235 = pneg %p169
      %p236 = pneg %p166
      %p237 = scmp.lt.s32.totalorder %s17, 1
      %s238 = scalar_select %p237, %s17, 1
      %s239 = smul.addr %s238, 64
      %s240 = smul.addr %s239, 8
      %s241 = scalar_lea.vmem %s6, %s240
      %p242 = scmp.lt.s32.totalorder %s17, 1
      %s243 = scalar_select %p242, %s17, 1
      %s244 = smul.addr %s243, 32
      %s245 = smul.addr %s244, 8
      %s246 = scalar_lea.vmem %s0, %s245
      %p247 = scmp.lt.s32.totalorder %s17, 1
      %s248 = scalar_select %p247, %s17, 1
      %s249 = smul.addr %s248, 64
      %s250 = smul.addr %s249, 8
      %s251 = scalar_lea.vmem %s6, %s250
      %p253 = scmp.eq.s32.totalorder %s17, 0
      // Predicated region
      $region45: #{res_upsample_forward.1} parent=43 // pred_check
        %p254 = pneg %p253
      $region46: #{res_upsample_forward.1} parent=43 // pred_check_branch
        %256 = sbr.rel (%p254) target = $region48
      $region47: #{res_upsample_forward.1} parent=43 // pred_region
        %vm257 = vcmask 257024
        %258 = vst.msk [vmem:[#allocation2] sm:$0xf] %vm257, 0
        %259 = vst.msk [vmem:[#allocation2 + $0x4] sm:$0xf] %vm257, 0
        %vm260 = vcmask 253952
        %261 = vst.msk [vmem:[#allocation2 + $0x8] sm:$0x1] %vm260, 0
        %262 = vst.msk [vmem:[#allocation2 + $0xc] sm:$0xf] %vm257, 0
        %263 = vst.msk [vmem:[#allocation2 + $0x10] sm:$0xf] %vm257, 0
        %264 = vst.msk [vmem:[#allocation2 + $0x14] sm:$0x1] %vm260, 0
        %265 = vst.msk [vmem:[#allocation2 + $0x18] sm:$0xf] %vm257, 0
        %266 = vst.msk [vmem:[#allocation2 + $0x1c] sm:$0xf] %vm257, 0
        %267 = vst.msk [vmem:[#allocation2 + $0x20] sm:$0x1] %vm260, 0
        %268 = vst.msk [vmem:[#allocation2 + $0x24] sm:$0xf] %vm257, 0
        %269 = vst.msk [vmem:[#allocation2 + $0x28] sm:$0xf] %vm257, 0
        %270 = vst.msk [vmem:[#allocation2 + $0x2c] sm:$0x1] %vm260, 0
        %271 = vst.msk [vmem:[#allocation2 + $0x30] sm:$0xf] %vm257, 0
        %272 = vst.msk [vmem:[#allocation2 + $0x34] sm:$0xf] %vm257, 0
        %273 = vst.msk [vmem:[#allocation2 + $0x38] sm:$0x1] %vm260, 0
        %274 = vst.msk [vmem:[#allocation2 + $0x3c] sm:$0xf] %vm257, 0
        %275 = vst.msk [vmem:[#allocation2 + $0x40] sm:$0xf] %vm257, 0
        %276 = vst.msk [vmem:[#allocation2 + $0x44] sm:$0x1] %vm260, 0
        %277 = vst.msk [vmem:[#allocation2 + $0x48] sm:$0xf] %vm257, 0
        %278 = vst.msk [vmem:[#allocation2 + $0x4c] sm:$0xf] %vm257, 0
        %279 = vst.msk [vmem:[#allocation2 + $0x50] sm:$0x1] %vm260, 0
        %280 = vst.msk [vmem:[#allocation2 + $0x54] sm:$0xf] %vm257, 0
        %281 = vst.msk [vmem:[#allocation2 + $0x58] sm:$0xf] %vm257, 0
        %282 = vst.msk [vmem:[#allocation2 + $0x5c] sm:$0x1] %vm260, 0
        %283 = vst.msk [vmem:[#allocation2 + $0x60] sm:$0xf] %vm257, 0
        %284 = vst.msk [vmem:[#allocation2 + $0x64] sm:$0xf] %vm257, 0
        %285 = vst.msk [vmem:[#allocation2 + $0x68] sm:$0x1] %vm260, 0
        %286 = vst.msk [vmem:[#allocation2 + $0x6c] sm:$0xf] %vm257, 0
        %287 = vst.msk [vmem:[#allocation2 + $0x70] sm:$0xf] %vm257, 0
        %288 = vst.msk [vmem:[#allocation2 + $0x74] sm:$0x1] %vm260, 0
        %289 = vst.msk [vmem:[#allocation2 + $0x78] sm:$0xf] %vm257, 0
        %290 = vst.msk [vmem:[#allocation2 + $0x7c] sm:$0xf] %vm257, 0
        %291 = vst.msk [vmem:[#allocation2 + $0x80] sm:$0x1] %vm260, 0
        %292 = vst.msk [vmem:[#allocation2 + $0x84] sm:$0xf] %vm257, 0
        %293 = vst.msk [vmem:[#allocation2 + $0x88] sm:$0xf] %vm257, 0
        %294 = vst.msk [vmem:[#allocation2 + $0x8c] sm:$0x1] %vm260, 0
        %295 = vst.msk [vmem:[#allocation2 + $0x90] sm:$0xf] %vm257, 0
        %296 = vst.msk [vmem:[#allocation2 + $0x94] sm:$0xf] %vm257, 0
        %297 = vst.msk [vmem:[#allocation2 + $0x98] sm:$0x1] %vm260, 0
        %298 = vst.msk [vmem:[#allocation2 + $0x9c] sm:$0xf] %vm257, 0
        %299 = vst.msk [vmem:[#allocation2 + $0xa0] sm:$0xf] %vm257, 0
        %300 = vst.msk [vmem:[#allocation2 + $0xa4] sm:$0x1] %vm260, 0
        %301 = vst.msk [vmem:[#allocation2 + $0xa8] sm:$0xf] %vm257, 0
        %302 = vst.msk [vmem:[#allocation2 + $0xac] sm:$0xf] %vm257, 0
        %303 = vst.msk [vmem:[#allocation2 + $0xb0] sm:$0x1] %vm260, 0
        %304 = vst.msk [vmem:[#allocation2 + $0xb4] sm:$0xf] %vm257, 0
        %305 = vst.msk [vmem:[#allocation2 + $0xb8] sm:$0xf] %vm257, 0
        %306 = vst.msk [vmem:[#allocation2 + $0xbc] sm:$0x1] %vm260, 0
        %307 = vst.msk [vmem:[#allocation2 + $0xc0] sm:$0xf] %vm257, 0
        %308 = vst.msk [vmem:[#allocation2 + $0xc4] sm:$0xf] %vm257, 0
        %309 = vst.msk [vmem:[#allocation2 + $0xc8] sm:$0x1] %vm260, 0
        %310 = vst.msk [vmem:[#allocation2 + $0xcc] sm:$0xf] %vm257, 0
        %311 = vst.msk [vmem:[#allocation2 + $0xd0] sm:$0xf] %vm257, 0
        %312 = vst.msk [vmem:[#allocation2 + $0xd4] sm:$0x1] %vm260, 0
      $region48: #{res_upsample_forward.1} parent=43 // pred_fallthru
        _
      %v313 = vld [vmem:[%s246] sm:$0xff]
      %v314 = vld [vmem:[%s246 + $0x8] sm:$0xff]
      %v315 = vld [vmem:[%s246 + $0x10] sm:$0xff]
      %v316 = vld [vmem:[%s246 + $0x18] sm:$0xff]
      %v317 = vld [vmem:[%s246 + $0x20] sm:$0xff]
      %v318 = vld [vmem:[%s246 + $0x28] sm:$0xff]
      %v319 = vld [vmem:[%s246 + $0x30] sm:$0xff]
      %v320 = vld [vmem:[%s246 + $0x38] sm:$0xff]
      %v321 = vld [vmem:[%s246 + $0x40] sm:$0xff]
      %v322 = vld [vmem:[%s246 + $0x48] sm:$0xff]
      %v323 = vld [vmem:[%s246 + $0x50] sm:$0xff]
      %v324 = vld [vmem:[%s246 + $0x58] sm:$0xff]
      %v325 = vld [vmem:[%s246 + $0x60] sm:$0xff]
      %v326 = vld [vmem:[%s246 + $0x68] sm:$0xff]
      %v327 = vld [vmem:[%s246 + $0x70] sm:$0xff]
      %v328 = vld [vmem:[%s246 + $0x78] sm:$0xff]
      %v329 = vld [vmem:[%s246 + $0x80] sm:$0xff]
      %v330 = vld [vmem:[%s246 + $0x88] sm:$0xff]
      %v331 = vld [vmem:[%s246 + $0x90] sm:$0xff]
      %v332 = vld [vmem:[%s246 + $0x98] sm:$0xff]
      %v333 = vld [vmem:[%s246 + $0xa0] sm:$0xff]
      %v334 = vld [vmem:[%s246 + $0xa8] sm:$0xff]
      %v335 = vld [vmem:[%s246 + $0xb0] sm:$0xff]
      %v336 = vld [vmem:[%s246 + $0xb8] sm:$0xff]
      %v337 = vld [vmem:[%s246 + $0xc0] sm:$0xff]
      %v338 = vld [vmem:[%s246 + $0xc8] sm:$0xff]
      %v339 = vld [vmem:[%s246 + $0xd0] sm:$0xff]
      %v340 = vld [vmem:[%s246 + $0xd8] sm:$0xff]
      %v341 = vld [vmem:[%s246 + $0xe0] sm:$0xff]
      %v342 = vld [vmem:[%s246 + $0xe8] sm:$0xff]
      %v343 = vld [vmem:[%s246 + $0xf0] sm:$0xff]
      %v344 = vld [vmem:[%s246 + $0xf8] sm:$0xff]
      %vm345 = vcmp.gt.f32.partialorder %v313, 0.0
      %vm346 = vcmp.gt.f32.partialorder %v314, 0.0
      %vm347 = vcmp.gt.f32.partialorder %v315, 0.0
      %vm348 = vcmp.gt.f32.partialorder %v316, 0.0
      %vm349 = vcmp.gt.f32.partialorder %v317, 0.0
      %vm350 = vcmp.gt.f32.partialorder %v318, 0.0
      %vm351 = vcmp.gt.f32.partialorder %v319, 0.0
      %vm352 = vcmp.gt.f32.partialorder %v320, 0.0
      %vm353 = vcmp.gt.f32.partialorder %v321, 0.0
      %vm354 = vcmp.gt.f32.partialorder %v322, 0.0
      %vm355 = vcmp.gt.f32.partialorder %v323, 0.0
      %vm356 = vcmp.gt.f32.partialorder %v324, 0.0
      %vm357 = vcmp.gt.f32.partialorder %v325, 0.0
      %vm358 = vcmp.gt.f32.partialorder %v326, 0.0
      %vm359 = vcmp.gt.f32.partialorder %v327, 0.0
      %vm360 = vcmp.gt.f32.partialorder %v328, 0.0
      %vm361 = vcmp.gt.f32.partialorder %v329, 0.0
      %vm362 = vcmp.gt.f32.partialorder %v330, 0.0
      %vm363 = vcmp.gt.f32.partialorder %v331, 0.0
      %vm364 = vcmp.gt.f32.partialorder %v332, 0.0
      %vm365 = vcmp.gt.f32.partialorder %v333, 0.0
      %vm366 = vcmp.gt.f32.partialorder %v334, 0.0
      %vm367 = vcmp.gt.f32.partialorder %v335, 0.0
      %vm368 = vcmp.gt.f32.partialorder %v336, 0.0
      %vm369 = vcmp.gt.f32.partialorder %v337, 0.0
      %vm370 = vcmp.gt.f32.partialorder %v338, 0.0
      %vm371 = vcmp.gt.f32.partialorder %v339, 0.0
      %vm372 = vcmp.gt.f32.partialorder %v340, 0.0
      %vm373 = vcmp.gt.f32.partialorder %v341, 0.0
      %vm374 = vcmp.gt.f32.partialorder %v342, 0.0
      %vm375 = vcmp.gt.f32.partialorder %v343, 0.0
      %vm376 = vcmp.gt.f32.partialorder %v344, 0.0
      %v377 = vmul.f32 %v313, 0.01
      %v378 = vmul.f32 %v314, 0.01
      %v379 = vmul.f32 %v315, 0.01
      %v380 = vmul.f32 %v316, 0.01
      %v381 = vmul.f32 %v317, 0.01
      %v382 = vmul.f32 %v318, 0.01
      %v383 = vmul.f32 %v319, 0.01
      %v384 = vmul.f32 %v320, 0.01
      %v385 = vmul.f32 %v321, 0.01
      %v386 = vmul.f32 %v322, 0.01
      %v387 = vmul.f32 %v323, 0.01
      %v388 = vmul.f32 %v324, 0.01
      %v389 = vmul.f32 %v325, 0.01
      %v390 = vmul.f32 %v326, 0.01
      %v391 = vmul.f32 %v327, 0.01
      %v392 = vmul.f32 %v328, 0.01
      %v393 = vmul.f32 %v329, 0.01
      %v394 = vmul.f32 %v330, 0.01
      %v395 = vmul.f32 %v331, 0.01
      %v396 = vmul.f32 %v332, 0.01
      %v397 = vmul.f32 %v333, 0.01
      %v398 = vmul.f32 %v334, 0.01
      %v399 = vmul.f32 %v335, 0.01
      %v400 = vmul.f32 %v336, 0.01
      %v401 = vmul.f32 %v337, 0.01
      %v402 = vmul.f32 %v338, 0.01
      %v403 = vmul.f32 %v339, 0.01
      %v404 = vmul.f32 %v340, 0.01
      %v405 = vmul.f32 %v341, 0.01
      %v406 = vmul.f32 %v342, 0.01
      %v407 = vmul.f32 %v343, 0.01
      %v408 = vmul.f32 %v344, 0.01
      %v409 = vsel %vm345, %v313, %v377
      %v410 = vsel %vm346, %v314, %v378
      %v411 = vsel %vm347, %v315, %v379
      %v412 = vsel %vm348, %v316, %v380
      %v413 = vsel %vm349, %v317, %v381
      %v414 = vsel %vm350, %v318, %v382
      %v415 = vsel %vm351, %v319, %v383
      %v416 = vsel %vm352, %v320, %v384
      %v417 = vsel %vm353, %v321, %v385
      %v418 = vsel %vm354, %v322, %v386
      %v419 = vsel %vm355, %v323, %v387
      %v420 = vsel %vm356, %v324, %v388
      %v421 = vsel %vm357, %v325, %v389
      %v422 = vsel %vm358, %v326, %v390
      %v423 = vsel %vm359, %v327, %v391
      %v424 = vsel %vm360, %v328, %v392
      %v425 = vsel %vm361, %v329, %v393
      %v426 = vsel %vm362, %v330, %v394
      %v427 = vsel %vm363, %v331, %v395
      %v428 = vsel %vm364, %v332, %v396
      %v429 = vsel %vm365, %v333, %v397
      %v430 = vsel %vm366, %v334, %v398
      %v431 = vsel %vm367, %v335, %v399
      %v432 = vsel %vm368, %v336, %v400
      %v433 = vsel %vm369, %v337, %v401
      %v434 = vsel %vm370, %v338, %v402
      %v435 = vsel %vm371, %v339, %v403
      %v436 = vsel %vm372, %v340, %v404
      %v437 = vsel %vm373, %v341, %v405
      %v438 = vsel %vm374, %v342, %v406
      %v439 = vsel %vm375, %v343, %v407
      %v440 = vsel %vm376, %v344, %v408
      %v441 = vpack.c.bf16 %v410, %v409
      %v442 = vpack.c.bf16 %v412, %v411
      %v443 = vpack.c.bf16 %v414, %v413
      %v444 = vpack.c.bf16 %v416, %v415
      %v445 = vpack.c.bf16 %v418, %v417
      %v446 = vpack.c.bf16 %v420, %v419
      %v447 = vpack.c.bf16 %v422, %v421
      %v448 = vpack.c.bf16 %v424, %v423
      %v449 = vpack.c.bf16 %v426, %v425
      %v450 = vpack.c.bf16 %v428, %v427
      %v451 = vpack.c.bf16 %v430, %v429
      %v452 = vpack.c.bf16 %v432, %v431
      %v453 = vpack.c.bf16 %v434, %v433
      %v454 = vpack.c.bf16 %v436, %v435
      %v455 = vpack.c.bf16 %v438, %v437
      %v456 = vpack.c.bf16 %v440, %v439
      %v473 = vunpack.c.l.b16 %v441
      %v474 = vunpack.c.h.b16 %v441
      %v475 = vunpack.c.l.b16 %v442
      %v476 = vunpack.c.h.b16 %v442
      %v477 = vunpack.c.l.b16 %v443
      %v478 = vunpack.c.h.b16 %v443
      %v479 = vunpack.c.l.b16 %v444
      %v480 = vunpack.c.h.b16 %v444
      %v481 = vunpack.c.l.b16 %v445
      %v482 = vunpack.c.h.b16 %v445
      %v483 = vunpack.c.l.b16 %v446
      %v484 = vunpack.c.h.b16 %v446
      %v485 = vunpack.c.l.b16 %v447
      %v486 = vunpack.c.h.b16 %v447
      %v487 = vunpack.c.l.b16 %v448
      %v488 = vunpack.c.h.b16 %v448
      %v489 = vunpack.c.l.b16 %v449
      %v490 = vunpack.c.h.b16 %v449
      %v491 = vunpack.c.l.b16 %v450
      %v492 = vunpack.c.h.b16 %v450
      %v493 = vunpack.c.l.b16 %v451
      %v494 = vunpack.c.h.b16 %v451
      %v495 = vunpack.c.l.b16 %v452
      %v496 = vunpack.c.h.b16 %v452
      %v497 = vunpack.c.l.b16 %v453
      %v498 = vunpack.c.h.b16 %v453
      %v499 = vunpack.c.l.b16 %v454
      %v500 = vunpack.c.h.b16 %v454
      %v501 = vunpack.c.l.b16 %v455
      %v502 = vunpack.c.h.b16 %v455
      %v503 = vunpack.c.l.b16 %v456
      %v504 = vunpack.c.h.b16 %v456
      %v505 = vpack.c.b16 %v473, %v473
      %v506 = vpack.c.b16 %v474, %v474
      %v507 = vpack.c.b16 %v475, %v475
      %v508 = vpack.c.b16 %v476, %v476
      %v509 = vpack.c.b16 %v477, %v477
      %v510 = vpack.c.b16 %v478, %v478
      %v511 = vpack.c.b16 %v479, %v479
      %v512 = vpack.c.b16 %v480, %v480
      %v513 = vpack.c.b16 %v481, %v481
      %v514 = vpack.c.b16 %v482, %v482
      %v515 = vpack.c.b16 %v483, %v483
      %v516 = vpack.c.b16 %v484, %v484
      %v517 = vpack.c.b16 %v485, %v485
      %v518 = vpack.c.b16 %v486, %v486
      %v519 = vpack.c.b16 %v487, %v487
      %v520 = vpack.c.b16 %v488, %v488
      %v521 = vpack.c.b16 %v489, %v489
      %v522 = vpack.c.b16 %v490, %v490
      %v523 = vpack.c.b16 %v491, %v491
      %v524 = vpack.c.b16 %v492, %v492
      %v525 = vpack.c.b16 %v493, %v493
      %v526 = vpack.c.b16 %v494, %v494
      %v527 = vpack.c.b16 %v495, %v495
      %v528 = vpack.c.b16 %v496, %v496
      %v529 = vpack.c.b16 %v497, %v497
      %v530 = vpack.c.b16 %v498, %v498
      %v531 = vpack.c.b16 %v499, %v499
      %v532 = vpack.c.b16 %v500, %v500
      %v533 = vpack.c.b16 %v501, %v501
      %v534 = vpack.c.b16 %v502, %v502
      %v535 = vpack.c.b16 %v503, %v503
      %v536 = vpack.c.b16 %v504, %v504
      %vm537 = vsmask.f32 256
      %vm538 = vsmask.f32 4368
      %vm539 = vmor %vm537, %vm538
      %v541 = vshrl.u32 %v505, 16
      %v543 = vrot.slane %v541, 7
      %v544 = vshll.u32 %v505, 16
      %v546 = vor.u32 %v543, %v544
      %v547 = vrot.slane %v543, 4
      %v549 = vshrl.u32 %v506, 16
      %v551 = vrot.slane %v549, 7
      %v552 = vshll.u32 %v506, 16
      %v554 = vor.u32 %v551, %v552
      %v555 = vsel %vm539, %v547, %v554
      %v556 = vrot.slane %v551, 4
      %v558 = vshrl.u32 %v507, 16
      %v560 = vrot.slane %v558, 7
      %v561 = vshll.u32 %v507, 16
      %v563 = vor.u32 %v560, %v561
      %v564 = vrot.slane %v560, 4
      %v566 = vshrl.u32 %v508, 16
      %v568 = vrot.slane %v566, 7
      %v569 = vshll.u32 %v508, 16
      %v571 = vor.u32 %v568, %v569
      %v572 = vsel %vm539, %v564, %v571
      %v573 = vrot.slane %v568, 4
      %v575 = vshrl.u32 %v509, 16
      %v577 = vrot.slane %v575, 7
      %v578 = vshll.u32 %v509, 16
      %v580 = vor.u32 %v577, %v578
      %v581 = vrot.slane %v577, 4
      %v583 = vshrl.u32 %v510, 16
      %v585 = vrot.slane %v583, 7
      %v586 = vshll.u32 %v510, 16
      %v588 = vor.u32 %v585, %v586
      %v589 = vsel %vm539, %v581, %v588
      %v590 = vrot.slane %v585, 4
      %v592 = vshrl.u32 %v511, 16
      %v594 = vrot.slane %v592, 7
      %v595 = vshll.u32 %v511, 16
      %v597 = vor.u32 %v594, %v595
      %v598 = vrot.slane %v594, 4
      %v600 = vshrl.u32 %v512, 16
      %v602 = vrot.slane %v600, 7
      %v603 = vshll.u32 %v512, 16
      %v605 = vor.u32 %v602, %v603
      %v606 = vsel %vm539, %v598, %v605
      %v607 = vrot.slane %v602, 4
      %v609 = vshrl.u32 %v513, 16
      %v611 = vrot.slane %v609, 7
      %v612 = vshll.u32 %v513, 16
      %v614 = vor.u32 %v611, %v612
      %v615 = vrot.slane %v611, 4
      %v617 = vshrl.u32 %v514, 16
      %v619 = vrot.slane %v617, 7
      %v620 = vshll.u32 %v514, 16
      %v622 = vor.u32 %v619, %v620
      %v623 = vsel %vm539, %v615, %v622
      %v624 = vrot.slane %v619, 4
      %v626 = vshrl.u32 %v515, 16
      %v628 = vrot.slane %v626, 7
      %v629 = vshll.u32 %v515, 16
      %v631 = vor.u32 %v628, %v629
      %v632 = vrot.slane %v628, 4
      %v634 = vshrl.u32 %v516, 16
      %v636 = vrot.slane %v634, 7
      %v637 = vshll.u32 %v516, 16
      %v639 = vor.u32 %v636, %v637
      %v640 = vsel %vm539, %v632, %v639
      %v641 = vrot.slane %v636, 4
      %v643 = vshrl.u32 %v517, 16
      %v645 = vrot.slane %v643, 7
      %v646 = vshll.u32 %v517, 16
      %v648 = vor.u32 %v645, %v646
      %v649 = vrot.slane %v645, 4
      %v651 = vshrl.u32 %v518, 16
      %v653 = vrot.slane %v651, 7
      %v654 = vshll.u32 %v518, 16
      %v656 = vor.u32 %v653, %v654
      %v657 = vsel %vm539, %v649, %v656
      %v658 = vrot.slane %v653, 4
      %v660 = vshrl.u32 %v519, 16
      %v662 = vrot.slane %v660, 7
      %v663 = vshll.u32 %v519, 16
      %v665 = vor.u32 %v662, %v663
      %v666 = vrot.slane %v662, 4
      %v668 = vshrl.u32 %v520, 16
      %v670 = vrot.slane %v668, 7
      %v671 = vshll.u32 %v520, 16
      %v673 = vor.u32 %v670, %v671
      %v674 = vsel %vm539, %v666, %v673
      %v675 = vrot.slane %v670, 4
      %v677 = vshrl.u32 %v521, 16
      %v679 = vrot.slane %v677, 7
      %v680 = vshll.u32 %v521, 16
      %v682 = vor.u32 %v679, %v680
      %v683 = vrot.slane %v679, 4
      %v685 = vshrl.u32 %v522, 16
      %v687 = vrot.slane %v685, 7
      %v688 = vshll.u32 %v522, 16
      %v690 = vor.u32 %v687, %v688
      %v691 = vsel %vm539, %v683, %v690
      %v692 = vrot.slane %v687, 4
      %v694 = vshrl.u32 %v523, 16
      %v696 = vrot.slane %v694, 7
      %v697 = vshll.u32 %v523, 16
      %v699 = vor.u32 %v696, %v697
      %v700 = vrot.slane %v696, 4
      %v702 = vshrl.u32 %v524, 16
      %v704 = vrot.slane %v702, 7
      %v705 = vshll.u32 %v524, 16
      %v707 = vor.u32 %v704, %v705
      %v708 = vsel %vm539, %v700, %v707
      %v709 = vrot.slane %v704, 4
      %v711 = vshrl.u32 %v525, 16
      %v713 = vrot.slane %v711, 7
      %v714 = vshll.u32 %v525, 16
      %v716 = vor.u32 %v713, %v714
      %v717 = vrot.slane %v713, 4
      %v719 = vshrl.u32 %v526, 16
      %v721 = vrot.slane %v719, 7
      %v722 = vshll.u32 %v526, 16
      %v724 = vor.u32 %v721, %v722
      %v725 = vsel %vm539, %v717, %v724
      %v726 = vrot.slane %v721, 4
      %v728 = vshrl.u32 %v527, 16
      %v730 = vrot.slane %v728, 7
      %v731 = vshll.u32 %v527, 16
      %v733 = vor.u32 %v730, %v731
      %v734 = vrot.slane %v730, 4
      %v736 = vshrl.u32 %v528, 16
      %v738 = vrot.slane %v736, 7
      %v739 = vshll.u32 %v528, 16
      %v741 = vor.u32 %v738, %v739
      %v742 = vsel %vm539, %v734, %v741
      %v743 = vrot.slane %v738, 4
      %v745 = vshrl.u32 %v529, 16
      %v747 = vrot.slane %v745, 7
      %v748 = vshll.u32 %v529, 16
      %v750 = vor.u32 %v747, %v748
      %v751 = vrot.slane %v747, 4
      %v753 = vshrl.u32 %v530, 16
      %v755 = vrot.slane %v753, 7
      %v756 = vshll.u32 %v530, 16
      %v758 = vor.u32 %v755, %v756
      %v759 = vsel %vm539, %v751, %v758
      %v760 = vrot.slane %v755, 4
      %v762 = vshrl.u32 %v531, 16
      %v764 = vrot.slane %v762, 7
      %v765 = vshll.u32 %v531, 16
      %v767 = vor.u32 %v764, %v765
      %v768 = vrot.slane %v764, 4
      %v770 = vshrl.u32 %v532, 16
      %v772 = vrot.slane %v770, 7
      %v773 = vshll.u32 %v532, 16
      %v775 = vor.u32 %v772, %v773
      %v776 = vsel %vm539, %v768, %v775
      %v777 = vrot.slane %v772, 4
      %v779 = vshrl.u32 %v533, 16
      %v781 = vrot.slane %v779, 7
      %v782 = vshll.u32 %v533, 16
      %v784 = vor.u32 %v781, %v782
      %v785 = vrot.slane %v781, 4
      %v787 = vshrl.u32 %v534, 16
      %v789 = vrot.slane %v787, 7
      %v790 = vshll.u32 %v534, 16
      %v792 = vor.u32 %v789, %v790
      %v793 = vsel %vm539, %v785, %v792
      %v794 = vrot.slane %v789, 4
      %v796 = vshrl.u32 %v535, 16
      %v798 = vrot.slane %v796, 7
      %v799 = vshll.u32 %v535, 16
      %v801 = vor.u32 %v798, %v799
      %v802 = vrot.slane %v798, 4
      %v804 = vshrl.u32 %v536, 16
      %v806 = vrot.slane %v804, 7
      %v807 = vshll.u32 %v536, 16
      %v809 = vor.u32 %v806, %v807
      %v810 = vsel %vm539, %v802, %v809
      %v811 = vrot.slane %v806, 4
      %s860 = scalar_lea.vmem [#allocation2], 12
      %vm861 = vcmask 257024
      %vm862 = vsmask.f32 7938
      %vm863 = vmand %vm861, %vm862
      %v864 = vld [vmem:[%s860] sm:$0xf]
      %v865 = vsel %vm863, %v546, %v864
      %866 = vst [vmem:[%s860] sm:$0xf] %v865
      %vm867 = vcmask 257024
      %868 = vst.msk [vmem:[%s860 + $0x4] sm:$0xf] %vm867, %v555
      %vm869 = vcmask 253952
      %vm870 = vmand %vm869, %vm537
      %v871 = vld [vmem:[%s860 + $0x8] sm:$0x1]
      %v872 = vsel %vm870, %v556, %v871
      %873 = vst [vmem:[%s860 + $0x8] sm:$0x1] %v872
      %v874 = vld [vmem:[%s860 + $0xc] sm:$0xf]
      %v875 = vsel %vm863, %v563, %v874
      %876 = vst [vmem:[%s860 + $0xc] sm:$0xf] %v875
      %877 = vst.msk [vmem:[%s860 + $0x10] sm:$0xf] %vm867, %v572
      %v878 = vld [vmem:[%s860 + $0x14] sm:$0x1]
      %v879 = vsel %vm870, %v573, %v878
      %880 = vst [vmem:[%s860 + $0x14] sm:$0x1] %v879
      %v881 = vld [vmem:[%s860 + $0x18] sm:$0xf]
      %v882 = vsel %vm863, %v580, %v881
      %883 = vst [vmem:[%s860 + $0x18] sm:$0xf] %v882
      %884 = vst.msk [vmem:[%s860 + $0x1c] sm:$0xf] %vm867, %v589
      %v885 = vld [vmem:[%s860 + $0x20] sm:$0x1]
      %v886 = vsel %vm870, %v590, %v885
      %887 = vst [vmem:[%s860 + $0x20] sm:$0x1] %v886
      %v888 = vld [vmem:[%s860 + $0x24] sm:$0xf]
      %v889 = vsel %vm863, %v597, %v888
      %890 = vst [vmem:[%s860 + $0x24] sm:$0xf] %v889
      %891 = vst.msk [vmem:[%s860 + $0x28] sm:$0xf] %vm867, %v606
      %v892 = vld [vmem:[%s860 + $0x2c] sm:$0x1]
      %v893 = vsel %vm870, %v607, %v892
      %894 = vst [vmem:[%s860 + $0x2c] sm:$0x1] %v893
      %v895 = vld [vmem:[%s860 + $0x30] sm:$0xf]
      %v896 = vsel %vm863, %v614, %v895
      %897 = vst [vmem:[%s860 + $0x30] sm:$0xf] %v896
      %898 = vst.msk [vmem:[%s860 + $0x34] sm:$0xf] %vm867, %v623
      %v899 = vld [vmem:[%s860 + $0x38] sm:$0x1]
      %v900 = vsel %vm870, %v624, %v899
      %901 = vst [vmem:[%s860 + $0x38] sm:$0x1] %v900
      %v902 = vld [vmem:[%s860 + $0x3c] sm:$0xf]
      %v903 = vsel %vm863, %v631, %v902
      %904 = vst [vmem:[%s860 + $0x3c] sm:$0xf] %v903
      %905 = vst.msk [vmem:[%s860 + $0x40] sm:$0xf] %vm867, %v640
      %v906 = vld [vmem:[%s860 + $0x44] sm:$0x1]
      %v907 = vsel %vm870, %v641, %v906
      %908 = vst [vmem:[%s860 + $0x44] sm:$0x1] %v907
      %v909 = vld [vmem:[%s860 + $0x48] sm:$0xf]
      %v910 = vsel %vm863, %v648, %v909
      %911 = vst [vmem:[%s860 + $0x48] sm:$0xf] %v910
      %912 = vst.msk [vmem:[%s860 + $0x4c] sm:$0xf] %vm867, %v657
      %v913 = vld [vmem:[%s860 + $0x50] sm:$0x1]
      %v914 = vsel %vm870, %v658, %v913
      %915 = vst [vmem:[%s860 + $0x50] sm:$0x1] %v914
      %v916 = vld [vmem:[%s860 + $0x54] sm:$0xf]
      %v917 = vsel %vm863, %v665, %v916
      %918 = vst [vmem:[%s860 + $0x54] sm:$0xf] %v917
      %919 = vst.msk [vmem:[%s860 + $0x58] sm:$0xf] %vm867, %v674
      %v920 = vld [vmem:[%s860 + $0x5c] sm:$0x1]
      %v921 = vsel %vm870, %v675, %v920
      %922 = vst [vmem:[%s860 + $0x5c] sm:$0x1] %v921
      %v923 = vld [vmem:[%s860 + $0x60] sm:$0xf]
      %v924 = vsel %vm863, %v682, %v923
      %925 = vst [vmem:[%s860 + $0x60] sm:$0xf] %v924
      %926 = vst.msk [vmem:[%s860 + $0x64] sm:$0xf] %vm867, %v691
      %v927 = vld [vmem:[%s860 + $0x68] sm:$0x1]
      %v928 = vsel %vm870, %v692, %v927
      %929 = vst [vmem:[%s860 + $0x68] sm:$0x1] %v928
      %v930 = vld [vmem:[%s860 + $0x6c] sm:$0xf]
      %v931 = vsel %vm863, %v699, %v930
      %932 = vst [vmem:[%s860 + $0x6c] sm:$0xf] %v931
      %933 = vst.msk [vmem:[%s860 + $0x70] sm:$0xf] %vm867, %v708
      %v934 = vld [vmem:[%s860 + $0x74] sm:$0x1]
      %v935 = vsel %vm870, %v709, %v934
      %936 = vst [vmem:[%s860 + $0x74] sm:$0x1] %v935
      %v937 = vld [vmem:[%s860 + $0x78] sm:$0xf]
      %v938 = vsel %vm863, %v716, %v937
      %939 = vst [vmem:[%s860 + $0x78] sm:$0xf] %v938
      %940 = vst.msk [vmem:[%s860 + $0x7c] sm:$0xf] %vm867, %v725
      %v941 = vld [vmem:[%s860 + $0x80] sm:$0x1]
      %v942 = vsel %vm870, %v726, %v941
      %943 = vst [vmem:[%s860 + $0x80] sm:$0x1] %v942
      %v944 = vld [vmem:[%s860 + $0x84] sm:$0xf]
      %v945 = vsel %vm863, %v733, %v944
      %946 = vst [vmem:[%s860 + $0x84] sm:$0xf] %v945
      %947 = vst.msk [vmem:[%s860 + $0x88] sm:$0xf] %vm867, %v742
      %v948 = vld [vmem:[%s860 + $0x8c] sm:$0x1]
      %v949 = vsel %vm870, %v743, %v948
      %950 = vst [vmem:[%s860 + $0x8c] sm:$0x1] %v949
      %v951 = vld [vmem:[%s860 + $0x90] sm:$0xf]
      %v952 = vsel %vm863, %v750, %v951
      %953 = vst [vmem:[%s860 + $0x90] sm:$0xf] %v952
      %954 = vst.msk [vmem:[%s860 + $0x94] sm:$0xf] %vm867, %v759
      %v955 = vld [vmem:[%s860 + $0x98] sm:$0x1]
      %v956 = vsel %vm870, %v760, %v955
      %957 = vst [vmem:[%s860 + $0x98] sm:$0x1] %v956
      %v958 = vld [vmem:[%s860 + $0x9c] sm:$0xf]
      %v959 = vsel %vm863, %v767, %v958
      %960 = vst [vmem:[%s860 + $0x9c] sm:$0xf] %v959
      %961 = vst.msk [vmem:[%s860 + $0xa0] sm:$0xf] %vm867, %v776
      %v962 = vld [vmem:[%s860 + $0xa4] sm:$0x1]
      %v963 = vsel %vm870, %v777, %v962
      %964 = vst [vmem:[%s860 + $0xa4] sm:$0x1] %v963
      %v965 = vld [vmem:[%s860 + $0xa8] sm:$0xf]
      %v966 = vsel %vm863, %v784, %v965
      %967 = vst [vmem:[%s860 + $0xa8] sm:$0xf] %v966
      %968 = vst.msk [vmem:[%s860 + $0xac] sm:$0xf] %vm867, %v793
      %v969 = vld [vmem:[%s860 + $0xb0] sm:$0x1]
      %v970 = vsel %vm870, %v794, %v969
      %971 = vst [vmem:[%s860 + $0xb0] sm:$0x1] %v970
      %v972 = vld [vmem:[%s860 + $0xb4] sm:$0xf]
      %v973 = vsel %vm863, %v801, %v972
      %974 = vst [vmem:[%s860 + $0xb4] sm:$0xf] %v973
      %975 = vst.msk [vmem:[%s860 + $0xb8] sm:$0xf] %vm867, %v810
      %v976 = vld [vmem:[%s860 + $0xbc] sm:$0x1]
      %v977 = vsel %vm870, %v811, %v976
      %978 = vst [vmem:[%s860 + $0xbc] sm:$0x1] %v977
      %v979 = vld [vmem:[#allocation2] sm:$0xf]
      %v980 = vld [vmem:[#allocation2 + $0x4] sm:$0xf]
      %v981 = vld [vmem:[#allocation2 + $0x8] sm:$0x1]
      %v982 = vld [vmem:[#allocation2 + $0xc] sm:$0xf]
      %v983 = vld [vmem:[#allocation2 + $0x10] sm:$0xf]
      %v984 = vld [vmem:[#allocation2 + $0x14] sm:$0x1]
      %v985 = vld [vmem:[#allocation2 + $0x18] sm:$0xf]
      %v986 = vld [vmem:[#allocation2 + $0x1c] sm:$0xf]
      %v987 = vld [vmem:[#allocation2 + $0x20] sm:$0x1]
      %v988 = vld [vmem:[#allocation2 + $0x24] sm:$0xf]
      %v989 = vld [vmem:[#allocation2 + $0x28] sm:$0xf]
      %v990 = vld [vmem:[#allocation2 + $0x2c] sm:$0x1]
      %v991 = vld [vmem:[#allocation2 + $0x30] sm:$0xf]
      %v992 = vld [vmem:[#allocation2 + $0x34] sm:$0xf]
      %v993 = vld [vmem:[#allocation2 + $0x38] sm:$0x1]
      %v994 = vld [vmem:[#allocation2 + $0x3c] sm:$0xf]
      %v995 = vld [vmem:[#allocation2 + $0x40] sm:$0xf]
      %v996 = vld [vmem:[#allocation2 + $0x44] sm:$0x1]
      %v997 = vld [vmem:[#allocation2 + $0x48] sm:$0xf]
      %v998 = vld [vmem:[#allocation2 + $0x4c] sm:$0xf]
      %v999 = vld [vmem:[#allocation2 + $0x50] sm:$0x1]
      %v1000 = vld [vmem:[#allocation2 + $0x54] sm:$0xf]
      %v1001 = vld [vmem:[#allocation2 + $0x58] sm:$0xf]
      %v1002 = vld [vmem:[#allocation2 + $0x5c] sm:$0x1]
      %v1003 = vld [vmem:[#allocation2 + $0x60] sm:$0xf]
      %v1004 = vld [vmem:[#allocation2 + $0x64] sm:$0xf]
      %v1005 = vld [vmem:[#allocation2 + $0x68] sm:$0x1]
      %v1006 = vld [vmem:[#allocation2 + $0x6c] sm:$0xf]
      %v1007 = vld [vmem:[#allocation2 + $0x70] sm:$0xf]
      %v1008 = vld [vmem:[#allocation2 + $0x74] sm:$0x1]
      %v1009 = vld [vmem:[#allocation2 + $0x78] sm:$0xf]
      %v1010 = vld [vmem:[#allocation2 + $0x7c] sm:$0xf]
      %v1011 = vld [vmem:[#allocation2 + $0x80] sm:$0x1]
      %v1012 = vld [vmem:[#allocation2 + $0x84] sm:$0xf]
      %v1013 = vld [vmem:[#allocation2 + $0x88] sm:$0xf]
      %v1014 = vld [vmem:[#allocation2 + $0x8c] sm:$0x1]
      %v1015 = vld [vmem:[#allocation2 + $0x90] sm:$0xf]
      %v1016 = vld [vmem:[#allocation2 + $0x94] sm:$0xf]
      %v1017 = vld [vmem:[#allocation2 + $0x98] sm:$0x1]
      %v1018 = vld [vmem:[#allocation2 + $0x9c] sm:$0xf]
      %v1019 = vld [vmem:[#allocation2 + $0xa0] sm:$0xf]
      %v1020 = vld [vmem:[#allocation2 + $0xa4] sm:$0x1]
      %v1021 = vld [vmem:[#allocation2 + $0xa8] sm:$0xf]
      %v1022 = vld [vmem:[#allocation2 + $0xac] sm:$0xf]
      %v1023 = vld [vmem:[#allocation2 + $0xb0] sm:$0x1]
      %v1024 = vld [vmem:[#allocation2 + $0xb4] sm:$0xf]
      %v1025 = vld [vmem:[#allocation2 + $0xb8] sm:$0xf]
      %v1026 = vld [vmem:[#allocation2 + $0xbc] sm:$0x1]
      %v1027 = vld [vmem:[#allocation2 + $0xc0] sm:$0xf]
      %v1028 = vld [vmem:[#allocation2 + $0xc4] sm:$0xf]
      %v1029 = vld [vmem:[#allocation2 + $0xc8] sm:$0x1]
      %v1030 = vld [vmem:[#allocation2 + $0xcc] sm:$0xf]
      %v1031 = vld [vmem:[#allocation2 + $0xd0] sm:$0xf]
      %v1032 = vld [vmem:[#allocation2 + $0xd4] sm:$0x1]
      %vm1033 = vsmask.f32 3328
      %vm1034 = vsmask.f32 7440
      %vm1035 = vmor %vm1033, %vm1034
      %v1037 = vshrl.u32 %v979, 16
      %v1039 = vrot.slane %v1037, 4
      %v1040 = vshll.u32 %v979, 16
      %v1042 = vrot.slane %v1040, 5
      %v1043 = vor.u32 %v1039, %v1042
      %v1044 = vrot.slane %v1043, 4
      %v1046 = vshll.u32 %v980, 16
      %v1048 = vrot.slane %v1046, 5
      %v1049 = vsel %vm1035, %v1044, %v1048
      %v1050 = vshrl.u32 %v980, 16
      %v1052 = vrot.slane %v1050, 4
      %v1053 = vor.u32 %v1052, %v1048
      %v1054 = vrot.slane %v1053, 4
      %v1056 = vshll.u32 %v981, 16
      %v1058 = vrot.slane %v1056, 5
      %v1059 = vsel %vm1035, %v1054, %v1058
      %v1061 = vshrl.u32 %v982, 16
      %v1063 = vrot.slane %v1061, 4
      %v1064 = vshll.u32 %v982, 16
      %v1066 = vrot.slane %v1064, 5
      %v1067 = vor.u32 %v1063, %v1066
      %v1068 = vrot.slane %v1067, 4
      %v1070 = vshll.u32 %v983, 16
      %v1072 = vrot.slane %v1070, 5
      %v1073 = vsel %vm1035, %v1068, %v1072
      %v1074 = vshrl.u32 %v983, 16
      %v1076 = vrot.slane %v1074, 4
      %v1077 = vor.u32 %v1076, %v1072
      %v1078 = vrot.slane %v1077, 4
      %v1080 = vshll.u32 %v984, 16
      %v1082 = vrot.slane %v1080, 5
      %v1083 = vsel %vm1035, %v1078, %v1082
      %v1085 = vshrl.u32 %v985, 16
      %v1087 = vrot.slane %v1085, 4
      %v1088 = vshll.u32 %v985, 16
      %v1090 = vrot.slane %v1088, 5
      %v1091 = vor.u32 %v1087, %v1090
      %v1092 = vrot.slane %v1091, 4
      %v1094 = vshll.u32 %v986, 16
      %v1096 = vrot.slane %v1094, 5
      %v1097 = vsel %vm1035, %v1092, %v1096
      %v1098 = vshrl.u32 %v986, 16
      %v1100 = vrot.slane %v1098, 4
      %v1101 = vor.u32 %v1100, %v1096
      %v1102 = vrot.slane %v1101, 4
      %v1104 = vshll.u32 %v987, 16
      %v1106 = vrot.slane %v1104, 5
      %v1107 = vsel %vm1035, %v1102, %v1106
      %v1109 = vshrl.u32 %v988, 16
      %v1111 = vrot.slane %v1109, 4
      %v1112 = vshll.u32 %v988, 16
      %v1114 = vrot.slane %v1112, 5
      %v1115 = vor.u32 %v1111, %v1114
      %v1116 = vrot.slane %v1115, 4
      %v1118 = vshll.u32 %v989, 16
      %v1120 = vrot.slane %v1118, 5
      %v1121 = vsel %vm1035, %v1116, %v1120
      %v1122 = vshrl.u32 %v989, 16
      %v1124 = vrot.slane %v1122, 4
      %v1125 = vor.u32 %v1124, %v1120
      %v1126 = vrot.slane %v1125, 4
      %v1128 = vshll.u32 %v990, 16
      %v1130 = vrot.slane %v1128, 5
      %v1131 = vsel %vm1035, %v1126, %v1130
      %v1133 = vshrl.u32 %v991, 16
      %v1135 = vrot.slane %v1133, 4
      %v1136 = vshll.u32 %v991, 16
      %v1138 = vrot.slane %v1136, 5
      %v1139 = vor.u32 %v1135, %v1138
      %v1140 = vrot.slane %v1139, 4
      %v1142 = vshll.u32 %v992, 16
      %v1144 = vrot.slane %v1142, 5
      %v1145 = vsel %vm1035, %v1140, %v1144
      %v1146 = vshrl.u32 %v992, 16
      %v1148 = vrot.slane %v1146, 4
      %v1149 = vor.u32 %v1148, %v1144
      %v1150 = vrot.slane %v1149, 4
      %v1152 = vshll.u32 %v993, 16
      %v1154 = vrot.slane %v1152, 5
      %v1155 = vsel %vm1035, %v1150, %v1154
      %v1157 = vshrl.u32 %v994, 16
      %v1159 = vrot.slane %v1157, 4
      %v1160 = vshll.u32 %v994, 16
      %v1162 = vrot.slane %v1160, 5
      %v1163 = vor.u32 %v1159, %v1162
      %v1164 = vrot.slane %v1163, 4
      %v1166 = vshll.u32 %v995, 16
      %v1168 = vrot.slane %v1166, 5
      %v1169 = vsel %vm1035, %v1164, %v1168
      %v1170 = vshrl.u32 %v995, 16
      %v1172 = vrot.slane %v1170, 4
      %v1173 = vor.u32 %v1172, %v1168
      %v1174 = vrot.slane %v1173, 4
      %v1176 = vshll.u32 %v996, 16
      %v1178 = vrot.slane %v1176, 5
      %v1179 = vsel %vm1035, %v1174, %v1178
      %v1181 = vshrl.u32 %v997, 16
      %v1183 = vrot.slane %v1181, 4
      %v1184 = vshll.u32 %v997, 16
      %v1186 = vrot.slane %v1184, 5
      %v1187 = vor.u32 %v1183, %v1186
      %v1188 = vrot.slane %v1187, 4
      %v1190 = vshll.u32 %v998, 16
      %v1192 = vrot.slane %v1190, 5
      %v1193 = vsel %vm1035, %v1188, %v1192
      %v1194 = vshrl.u32 %v998, 16
      %v1196 = vrot.slane %v1194, 4
      %v1197 = vor.u32 %v1196, %v1192
      %v1198 = vrot.slane %v1197, 4
      %v1200 = vshll.u32 %v999, 16
      %v1202 = vrot.slane %v1200, 5
      %v1203 = vsel %vm1035, %v1198, %v1202
      %v1205 = vshrl.u32 %v1000, 16
      %v1207 = vrot.slane %v1205, 4
      %v1208 = vshll.u32 %v1000, 16
      %v1210 = vrot.slane %v1208, 5
      %v1211 = vor.u32 %v1207, %v1210
      %v1212 = vrot.slane %v1211, 4
      %v1214 = vshll.u32 %v1001, 16
      %v1216 = vrot.slane %v1214, 5
      %v1217 = vsel %vm1035, %v1212, %v1216
      %v1218 = vshrl.u32 %v1001, 16
      %v1220 = vrot.slane %v1218, 4
      %v1221 = vor.u32 %v1220, %v1216
      %v1222 = vrot.slane %v1221, 4
      %v1224 = vshll.u32 %v1002, 16
      %v1226 = vrot.slane %v1224, 5
      %v1227 = vsel %vm1035, %v1222, %v1226
      %v1229 = vshrl.u32 %v1003, 16
      %v1231 = vrot.slane %v1229, 4
      %v1232 = vshll.u32 %v1003, 16
      %v1234 = vrot.slane %v1232, 5
      %v1235 = vor.u32 %v1231, %v1234
      %v1236 = vrot.slane %v1235, 4
      %v1238 = vshll.u32 %v1004, 16
      %v1240 = vrot.slane %v1238, 5
      %v1241 = vsel %vm1035, %v1236, %v1240
      %v1242 = vshrl.u32 %v1004, 16
      %v1244 = vrot.slane %v1242, 4
      %v1245 = vor.u32 %v1244, %v1240
      %v1246 = vrot.slane %v1245, 4
      %v1248 = vshll.u32 %v1005, 16
      %v1250 = vrot.slane %v1248, 5
      %v1251 = vsel %vm1035, %v1246, %v1250
      %v1253 = vshrl.u32 %v1006, 16
      %v1255 = vrot.slane %v1253, 4
      %v1256 = vshll.u32 %v1006, 16
      %v1258 = vrot.slane %v1256, 5
      %v1259 = vor.u32 %v1255, %v1258
      %v1260 = vrot.slane %v1259, 4
      %v1262 = vshll.u32 %v1007, 16
      %v1264 = vrot.slane %v1262, 5
      %v1265 = vsel %vm1035, %v1260, %v1264
      %v1266 = vshrl.u32 %v1007, 16
      %v1268 = vrot.slane %v1266, 4
      %v1269 = vor.u32 %v1268, %v1264
      %v1270 = vrot.slane %v1269, 4
      %v1272 = vshll.u32 %v1008, 16
      %v1274 = vrot.slane %v1272, 5
      %v1275 = vsel %vm1035, %v1270, %v1274
      %v1277 = vshrl.u32 %v1009, 16
      %v1279 = vrot.slane %v1277, 4
      %v1280 = vshll.u32 %v1009, 16
      %v1282 = vrot.slane %v1280, 5
      %v1283 = vor.u32 %v1279, %v1282
      %v1284 = vrot.slane %v1283, 4
      %v1286 = vshll.u32 %v1010, 16
      %v1288 = vrot.slane %v1286, 5
      %v1289 = vsel %vm1035, %v1284, %v1288
      %v1290 = vshrl.u32 %v1010, 16
      %v1292 = vrot.slane %v1290, 4
      %v1293 = vor.u32 %v1292, %v1288
      %v1294 = vrot.slane %v1293, 4
      %v1296 = vshll.u32 %v1011, 16
      %v1298 = vrot.slane %v1296, 5
      %v1299 = vsel %vm1035, %v1294, %v1298
      %v1301 = vshrl.u32 %v1012, 16
      %v1303 = vrot.slane %v1301, 4
      %v1304 = vshll.u32 %v1012, 16
      %v1306 = vrot.slane %v1304, 5
      %v1307 = vor.u32 %v1303, %v1306
      %v1308 = vrot.slane %v1307, 4
      %v1310 = vshll.u32 %v1013, 16
      %v1312 = vrot.slane %v1310, 5
      %v1313 = vsel %vm1035, %v1308, %v1312
      %v1314 = vshrl.u32 %v1013, 16
      %v1316 = vrot.slane %v1314, 4
      %v1317 = vor.u32 %v1316, %v1312
      %v1318 = vrot.slane %v1317, 4
      %v1320 = vshll.u32 %v1014, 16
      %v1322 = vrot.slane %v1320, 5
      %v1323 = vsel %vm1035, %v1318, %v1322
      %v1325 = vshrl.u32 %v1015, 16
      %v1327 = vrot.slane %v1325, 4
      %v1328 = vshll.u32 %v1015, 16
      %v1330 = vrot.slane %v1328, 5
      %v1331 = vor.u32 %v1327, %v1330
      %v1332 = vrot.slane %v1331, 4
      %v1334 = vshll.u32 %v1016, 16
      %v1336 = vrot.slane %v1334, 5
      %v1337 = vsel %vm1035, %v1332, %v1336
      %v1338 = vshrl.u32 %v1016, 16
      %v1340 = vrot.slane %v1338, 4
      %v1341 = vor.u32 %v1340, %v1336
      %v1342 = vrot.slane %v1341, 4
      %v1344 = vshll.u32 %v1017, 16
      %v1346 = vrot.slane %v1344, 5
      %v1347 = vsel %vm1035, %v1342, %v1346
      %v1349 = vshrl.u32 %v1018, 16
      %v1351 = vrot.slane %v1349, 4
      %v1352 = vshll.u32 %v1018, 16
      %v1354 = vrot.slane %v1352, 5
      %v1355 = vor.u32 %v1351, %v1354
      %v1356 = vrot.slane %v1355, 4
      %v1358 = vshll.u32 %v1019, 16
      %v1360 = vrot.slane %v1358, 5
      %v1361 = vsel %vm1035, %v1356, %v1360
      %v1362 = vshrl.u32 %v1019, 16
      %v1364 = vrot.slane %v1362, 4
      %v1365 = vor.u32 %v1364, %v1360
      %v1366 = vrot.slane %v1365, 4
      %v1368 = vshll.u32 %v1020, 16
      %v1370 = vrot.slane %v1368, 5
      %v1371 = vsel %vm1035, %v1366, %v1370
      %v1373 = vshrl.u32 %v1021, 16
      %v1375 = vrot.slane %v1373, 4
      %v1376 = vshll.u32 %v1021, 16
      %v1378 = vrot.slane %v1376, 5
      %v1379 = vor.u32 %v1375, %v1378
      %v1380 = vrot.slane %v1379, 4
      %v1382 = vshll.u32 %v1022, 16
      %v1384 = vrot.slane %v1382, 5
      %v1385 = vsel %vm1035, %v1380, %v1384
      %v1386 = vshrl.u32 %v1022, 16
      %v1388 = vrot.slane %v1386, 4
      %v1389 = vor.u32 %v1388, %v1384
      %v1390 = vrot.slane %v1389, 4
      %v1392 = vshll.u32 %v1023, 16
      %v1394 = vrot.slane %v1392, 5
      %v1395 = vsel %vm1035, %v1390, %v1394
      %v1397 = vshrl.u32 %v1024, 16
      %v1399 = vrot.slane %v1397, 4
      %v1400 = vshll.u32 %v1024, 16
      %v1402 = vrot.slane %v1400, 5
      %v1403 = vor.u32 %v1399, %v1402
      %v1404 = vrot.slane %v1403, 4
      %v1406 = vshll.u32 %v1025, 16
      %v1408 = vrot.slane %v1406, 5
      %v1409 = vsel %vm1035, %v1404, %v1408
      %v1410 = vshrl.u32 %v1025, 16
      %v1412 = vrot.slane %v1410, 4
      %v1413 = vor.u32 %v1412, %v1408
      %v1414 = vrot.slane %v1413, 4
      %v1416 = vshll.u32 %v1026, 16
      %v1418 = vrot.slane %v1416, 5
      %v1419 = vsel %vm1035, %v1414, %v1418
      %v1421 = vshrl.u32 %v1027, 16
      %v1423 = vrot.slane %v1421, 4
      %v1424 = vshll.u32 %v1027, 16
      %v1426 = vrot.slane %v1424, 5
      %v1427 = vor.u32 %v1423, %v1426
      %v1428 = vrot.slane %v1427, 4
      %v1430 = vshll.u32 %v1028, 16
      %v1432 = vrot.slane %v1430, 5
      %v1433 = vsel %vm1035, %v1428, %v1432
      %v1434 = vshrl.u32 %v1028, 16
      %v1436 = vrot.slane %v1434, 4
      %v1437 = vor.u32 %v1436, %v1432
      %v1438 = vrot.slane %v1437, 4
      %v1440 = vshll.u32 %v1029, 16
      %v1442 = vrot.slane %v1440, 5
      %v1443 = vsel %vm1035, %v1438, %v1442
      %v1445 = vshrl.u32 %v1030, 16
      %v1447 = vrot.slane %v1445, 4
      %v1448 = vshll.u32 %v1030, 16
      %v1450 = vrot.slane %v1448, 5
      %v1451 = vor.u32 %v1447, %v1450
      %v1452 = vrot.slane %v1451, 4
      %v1454 = vshll.u32 %v1031, 16
      %v1456 = vrot.slane %v1454, 5
      %v1457 = vsel %vm1035, %v1452, %v1456
      %v1458 = vshrl.u32 %v1031, 16
      %v1460 = vrot.slane %v1458, 4
      %v1461 = vor.u32 %v1460, %v1456
      %v1462 = vrot.slane %v1461, 4
      %v1464 = vshll.u32 %v1032, 16
      %v1466 = vrot.slane %v1464, 5
      %v1467 = vsel %vm1035, %v1462, %v1466
      %vm1522 = vcmask 1042432
      %vm1523 = vcmask 1046532
      %vm1524 = vmor %vm1522, %vm1523
      %v1525 = vrot.slane %v979, 5
      %v1526 = vrot.slane %v1525, 4
      %v1527 = vrot.slane %v980, 5
      %v1528 = vsel %vm1524, %v1526, %v1527
      %v1529 = vrot.slane %v1527, 4
      %v1530 = vrot.slane %v981, 5
      %v1531 = vsel %vm1524, %v1529, %v1530
      %v1532 = vrot.slane %v982, 5
      %v1533 = vrot.slane %v1532, 4
      %v1534 = vrot.slane %v983, 5
      %v1535 = vsel %vm1524, %v1533, %v1534
      %v1536 = vrot.slane %v1534, 4
      %v1537 = vrot.slane %v984, 5
      %v1538 = vsel %vm1524, %v1536, %v1537
      %v1539 = vrot.slane %v985, 5
      %v1540 = vrot.slane %v1539, 4
      %v1541 = vrot.slane %v986, 5
      %v1542 = vsel %vm1524, %v1540, %v1541
      %v1543 = vrot.slane %v1541, 4
      %v1544 = vrot.slane %v987, 5
      %v1545 = vsel %vm1524, %v1543, %v1544
      %v1546 = vrot.slane %v988, 5
      %v1547 = vrot.slane %v1546, 4
      %v1548 = vrot.slane %v989, 5
      %v1549 = vsel %vm1524, %v1547, %v1548
      %v1550 = vrot.slane %v1548, 4
      %v1551 = vrot.slane %v990, 5
      %v1552 = vsel %vm1524, %v1550, %v1551
      %v1553 = vrot.slane %v991, 5
      %v1554 = vrot.slane %v1553, 4
      %v1555 = vrot.slane %v992, 5
      %v1556 = vsel %vm1524, %v1554, %v1555
      %v1557 = vrot.slane %v1555, 4
      %v1558 = vrot.slane %v993, 5
      %v1559 = vsel %vm1524, %v1557, %v1558
      %v1560 = vrot.slane %v994, 5
      %v1561 = vrot.slane %v1560, 4
      %v1562 = vrot.slane %v995, 5
      %v1563 = vsel %vm1524, %v1561, %v1562
      %v1564 = vrot.slane %v1562, 4
      %v1565 = vrot.slane %v996, 5
      %v1566 = vsel %vm1524, %v1564, %v1565
      %v1567 = vrot.slane %v997, 5
      %v1568 = vrot.slane %v1567, 4
      %v1569 = vrot.slane %v998, 5
      %v1570 = vsel %vm1524, %v1568, %v1569
      %v1571 = vrot.slane %v1569, 4
      %v1572 = vrot.slane %v999, 5
      %v1573 = vsel %vm1524, %v1571, %v1572
      %v1574 = vrot.slane %v1000, 5
      %v1575 = vrot.slane %v1574, 4
      %v1576 = vrot.slane %v1001, 5
      %v1577 = vsel %vm1524, %v1575, %v1576
      %v1578 = vrot.slane %v1576, 4
      %v1579 = vrot.slane %v1002, 5
      %v1580 = vsel %vm1524, %v1578, %v1579
      %v1581 = vrot.slane %v1003, 5
      %v1582 = vrot.slane %v1581, 4
      %v1583 = vrot.slane %v1004, 5
      %v1584 = vsel %vm1524, %v1582, %v1583
      %v1585 = vrot.slane %v1583, 4
      %v1586 = vrot.slane %v1005, 5
      %v1587 = vsel %vm1524, %v1585, %v1586
      %v1588 = vrot.slane %v1006, 5
      %v1589 = vrot.slane %v1588, 4
      %v1590 = vrot.slane %v1007, 5
      %v1591 = vsel %vm1524, %v1589, %v1590
      %v1592 = vrot.slane %v1590, 4
      %v1593 = vrot.slane %v1008, 5
      %v1594 = vsel %vm1524, %v1592, %v1593
      %v1595 = vrot.slane %v1009, 5
      %v1596 = vrot.slane %v1595, 4
      %v1597 = vrot.slane %v1010, 5
      %v1598 = vsel %vm1524, %v1596, %v1597
      %v1599 = vrot.slane %v1597, 4
      %v1600 = vrot.slane %v1011, 5
      %v1601 = vsel %vm1524, %v1599, %v1600
      %v1602 = vrot.slane %v1012, 5
      %v1603 = vrot.slane %v1602, 4
      %v1604 = vrot.slane %v1013, 5
      %v1605 = vsel %vm1524, %v1603, %v1604
      %v1606 = vrot.slane %v1604, 4
      %v1607 = vrot.slane %v1014, 5
      %v1608 = vsel %vm1524, %v1606, %v1607
      %v1609 = vrot.slane %v1015, 5
      %v1610 = vrot.slane %v1609, 4
      %v1611 = vrot.slane %v1016, 5
      %v1612 = vsel %vm1524, %v1610, %v1611
      %v1613 = vrot.slane %v1611, 4
      %v1614 = vrot.slane %v1017, 5
      %v1615 = vsel %vm1524, %v1613, %v1614
      %v1616 = vrot.slane %v1018, 5
      %v1617 = vrot.slane %v1616, 4
      %v1618 = vrot.slane %v1019, 5
      %v1619 = vsel %vm1524, %v1617, %v1618
      %v1620 = vrot.slane %v1618, 4
      %v1621 = vrot.slane %v1020, 5
      %v1622 = vsel %vm1524, %v1620, %v1621
      %v1623 = vrot.slane %v1021, 5
      %v1624 = vrot.slane %v1623, 4
      %v1625 = vrot.slane %v1022, 5
      %v1626 = vsel %vm1524, %v1624, %v1625
      %v1627 = vrot.slane %v1625, 4
      %v1628 = vrot.slane %v1023, 5
      %v1629 = vsel %vm1524, %v1627, %v1628
      %v1630 = vrot.slane %v1024, 5
      %v1631 = vrot.slane %v1630, 4
      %v1632 = vrot.slane %v1025, 5
      %v1633 = vsel %vm1524, %v1631, %v1632
      %v1634 = vrot.slane %v1632, 4
      %v1635 = vrot.slane %v1026, 5
      %v1636 = vsel %vm1524, %v1634, %v1635
      %v1637 = vrot.slane %v1027, 5
      %v1638 = vrot.slane %v1637, 4
      %v1639 = vrot.slane %v1028, 5
      %v1640 = vsel %vm1524, %v1638, %v1639
      %v1641 = vrot.slane %v1639, 4
      %v1642 = vrot.slane %v1029, 5
      %v1643 = vsel %vm1524, %v1641, %v1642
      %v1644 = vrot.slane %v1030, 5
      %v1645 = vrot.slane %v1644, 4
      %v1646 = vrot.slane %v1031, 5
      %v1647 = vsel %vm1524, %v1645, %v1646
      %v1648 = vrot.slane %v1646, 4
      %v1649 = vrot.slane %v1032, 5
      %v1650 = vsel %vm1524, %v1648, %v1649
      %v1651 = vunpack.c.l.b16 %v979
      %v1652 = vunpack.c.l.b16 %v980
      %v1653 = vunpack.c.l.b16 %v982
      %v1654 = vunpack.c.l.b16 %v983
      %v1655 = vunpack.c.l.b16 %v985
      %v1656 = vunpack.c.l.b16 %v986
      %v1657 = vunpack.c.l.b16 %v988
      %v1658 = vunpack.c.l.b16 %v989
      %v1659 = vunpack.c.l.b16 %v991
      %v1660 = vunpack.c.l.b16 %v992
      %v1661 = vunpack.c.l.b16 %v994
      %v1662 = vunpack.c.l.b16 %v995
      %v1663 = vunpack.c.l.b16 %v997
      %v1664 = vunpack.c.l.b16 %v998
      %v1665 = vunpack.c.l.b16 %v1000
      %v1666 = vunpack.c.l.b16 %v1001
      %v1667 = vunpack.c.l.b16 %v1003
      %v1668 = vunpack.c.l.b16 %v1004
      %v1669 = vunpack.c.l.b16 %v1006
      %v1670 = vunpack.c.l.b16 %v1007
      %v1671 = vunpack.c.l.b16 %v1009
      %v1672 = vunpack.c.l.b16 %v1010
      %v1673 = vunpack.c.l.b16 %v1012
      %v1674 = vunpack.c.l.b16 %v1013
      %v1675 = vunpack.c.l.b16 %v1015
      %v1676 = vunpack.c.l.b16 %v1016
      %v1677 = vunpack.c.l.b16 %v1018
      %v1678 = vunpack.c.l.b16 %v1019
      %v1679 = vunpack.c.l.b16 %v1021
      %v1680 = vunpack.c.l.b16 %v1022
      %v1681 = vunpack.c.l.b16 %v1024
      %v1682 = vunpack.c.l.b16 %v1025
      %v1683 = vunpack.c.l.b16 %v1027
      %v1684 = vunpack.c.l.b16 %v1028
      %v1685 = vunpack.c.l.b16 %v1030
      %v1686 = vunpack.c.l.b16 %v1031
      %v1687 = vpack.c.b16 %v1652, %v1651
      %v1688 = vpack.c.b16 %v1654, %v1653
      %v1689 = vpack.c.b16 %v1656, %v1655
      %v1690 = vpack.c.b16 %v1658, %v1657
      %v1691 = vpack.c.b16 %v1660, %v1659
      %v1692 = vpack.c.b16 %v1662, %v1661
      %v1693 = vpack.c.b16 %v1664, %v1663
      %v1694 = vpack.c.b16 %v1666, %v1665
      %v1695 = vpack.c.b16 %v1668, %v1667
      %v1696 = vpack.c.b16 %v1670, %v1669
      %v1697 = vpack.c.b16 %v1672, %v1671
      %v1698 = vpack.c.b16 %v1674, %v1673
      %v1699 = vpack.c.b16 %v1676, %v1675
      %v1700 = vpack.c.b16 %v1678, %v1677
      %v1701 = vpack.c.b16 %v1680, %v1679
      %v1702 = vpack.c.b16 %v1682, %v1681
      %v1703 = vpack.c.b16 %v1684, %v1683
      %v1704 = vpack.c.b16 %v1686, %v1685
      %v1705 = vunpack.c.l.b16 %v1049
      %v1706 = vunpack.c.l.b16 %v1059
      %v1707 = vunpack.c.l.b16 %v1073
      %v1708 = vunpack.c.l.b16 %v1083
      %v1709 = vunpack.c.l.b16 %v1097
      %v1710 = vunpack.c.l.b16 %v1107
      %v1711 = vunpack.c.l.b16 %v1121
      %v1712 = vunpack.c.l.b16 %v1131
      %v1713 = vunpack.c.l.b16 %v1145
      %v1714 = vunpack.c.l.b16 %v1155
      %v1715 = vunpack.c.l.b16 %v1169
      %v1716 = vunpack.c.l.b16 %v1179
      %v1717 = vunpack.c.l.b16 %v1193
      %v1718 = vunpack.c.l.b16 %v1203
      %v1719 = vunpack.c.l.b16 %v1217
      %v1720 = vunpack.c.l.b16 %v1227
      %v1721 = vunpack.c.l.b16 %v1241
      %v1722 = vunpack.c.l.b16 %v1251
      %v1723 = vunpack.c.l.b16 %v1265
      %v1724 = vunpack.c.l.b16 %v1275
      %v1725 = vunpack.c.l.b16 %v1289
      %v1726 = vunpack.c.l.b16 %v1299
      %v1727 = vunpack.c.l.b16 %v1313
      %v1728 = vunpack.c.l.b16 %v1323
      %v1729 = vunpack.c.l.b16 %v1337
      %v1730 = vunpack.c.l.b16 %v1347
      %v1731 = vunpack.c.l.b16 %v1361
      %v1732 = vunpack.c.l.b16 %v1371
      %v1733 = vunpack.c.l.b16 %v1385
      %v1734 = vunpack.c.l.b16 %v1395
      %v1735 = vunpack.c.l.b16 %v1409
      %v1736 = vunpack.c.l.b16 %v1419
      %v1737 = vunpack.c.l.b16 %v1433
      %v1738 = vunpack.c.l.b16 %v1443
      %v1739 = vunpack.c.l.b16 %v1457
      %v1740 = vunpack.c.l.b16 %v1467
      %v1741 = vpack.c.b16 %v1706, %v1705
      %v1742 = vpack.c.b16 %v1708, %v1707
      %v1743 = vpack.c.b16 %v1710, %v1709
      %v1744 = vpack.c.b16 %v1712, %v1711
      %v1745 = vpack.c.b16 %v1714, %v1713
      %v1746 = vpack.c.b16 %v1716, %v1715
      %v1747 = vpack.c.b16 %v1718, %v1717
      %v1748 = vpack.c.b16 %v1720, %v1719
      %v1749 = vpack.c.b16 %v1722, %v1721
      %v1750 = vpack.c.b16 %v1724, %v1723
      %v1751 = vpack.c.b16 %v1726, %v1725
      %v1752 = vpack.c.b16 %v1728, %v1727
      %v1753 = vpack.c.b16 %v1730, %v1729
      %v1754 = vpack.c.b16 %v1732, %v1731
      %v1755 = vpack.c.b16 %v1734, %v1733
      %v1756 = vpack.c.b16 %v1736, %v1735
      %v1757 = vpack.c.b16 %v1738, %v1737
      %v1758 = vpack.c.b16 %v1740, %v1739
      %1759 = vrot.lane.b32.xlu0 %v1741, 32
      %v1760 = vpop.permute.xlu0 %1759
      %1761 = vrot.lane.b32.xlu0 %v1742, 32
      %v1762 = vpop.permute.xlu0 %1761
      %1763 = vrot.lane.b32.xlu0 %v1743, 32
      %v1764 = vpop.permute.xlu0 %1763
      %1765 = vrot.lane.b32.xlu0 %v1744, 32
      %v1766 = vpop.permute.xlu0 %1765
      %1767 = vrot.lane.b32.xlu0 %v1745, 32
      %v1768 = vpop.permute.xlu0 %1767
      %1769 = vrot.lane.b32.xlu0 %v1746, 32
      %v1770 = vpop.permute.xlu0 %1769
      %1771 = vrot.lane.b32.xlu0 %v1747, 32
      %v1772 = vpop.permute.xlu0 %1771
      %1773 = vrot.lane.b32.xlu0 %v1748, 32
      %v1774 = vpop.permute.xlu0 %1773
      %1775 = vrot.lane.b32.xlu0 %v1749, 32
      %v1776 = vpop.permute.xlu0 %1775
      %1777 = vrot.lane.b32.xlu0 %v1750, 32
      %v1778 = vpop.permute.xlu0 %1777
      %1779 = vrot.lane.b32.xlu0 %v1751, 32
      %v1780 = vpop.permute.xlu0 %1779
      %1781 = vrot.lane.b32.xlu0 %v1752, 32
      %v1782 = vpop.permute.xlu0 %1781
      %1783 = vrot.lane.b32.xlu0 %v1753, 32
      %v1784 = vpop.permute.xlu0 %1783
      %1785 = vrot.lane.b32.xlu0 %v1754, 32
      %v1786 = vpop.permute.xlu0 %1785
      %1787 = vrot.lane.b32.xlu0 %v1755, 32
      %v1788 = vpop.permute.xlu0 %1787
      %1789 = vrot.lane.b32.xlu0 %v1756, 32
      %v1790 = vpop.permute.xlu0 %1789
      %1791 = vrot.lane.b32.xlu0 %v1757, 32
      %v1792 = vpop.permute.xlu0 %1791
      %1793 = vrot.lane.b32.xlu0 %v1758, 32
      %v1794 = vpop.permute.xlu0 %1793
      %v1795 = vunpack.c.l.b16 %v1528
      %v1796 = vunpack.c.l.b16 %v1531
      %v1797 = vunpack.c.l.b16 %v1535
      %v1798 = vunpack.c.l.b16 %v1538
      %v1799 = vunpack.c.l.b16 %v1542
      %v1800 = vunpack.c.l.b16 %v1545
      %v1801 = vunpack.c.l.b16 %v1549
      %v1802 = vunpack.c.l.b16 %v1552
      %v1803 = vunpack.c.l.b16 %v1556
      %v1804 = vunpack.c.l.b16 %v1559
      %v1805 = vunpack.c.l.b16 %v1563
      %v1806 = vunpack.c.l.b16 %v1566
      %v1807 = vunpack.c.l.b16 %v1570
      %v1808 = vunpack.c.l.b16 %v1573
      %v1809 = vunpack.c.l.b16 %v1577
      %v1810 = vunpack.c.l.b16 %v1580
      %v1811 = vunpack.c.l.b16 %v1584
      %v1812 = vunpack.c.l.b16 %v1587
      %v1813 = vunpack.c.l.b16 %v1591
      %v1814 = vunpack.c.l.b16 %v1594
      %v1815 = vunpack.c.l.b16 %v1598
      %v1816 = vunpack.c.l.b16 %v1601
      %v1817 = vunpack.c.l.b16 %v1605
      %v1818 = vunpack.c.l.b16 %v1608
      %v1819 = vunpack.c.l.b16 %v1612
      %v1820 = vunpack.c.l.b16 %v1615
      %v1821 = vunpack.c.l.b16 %v1619
      %v1822 = vunpack.c.l.b16 %v1622
      %v1823 = vunpack.c.l.b16 %v1626
      %v1824 = vunpack.c.l.b16 %v1629
      %v1825 = vunpack.c.l.b16 %v1633
      %v1826 = vunpack.c.l.b16 %v1636
      %v1827 = vunpack.c.l.b16 %v1640
      %v1828 = vunpack.c.l.b16 %v1643
      %v1829 = vunpack.c.l.b16 %v1647
      %v1830 = vunpack.c.l.b16 %v1650
      %v1831 = vpack.c.b16 %v1796, %v1795
      %v1832 = vpack.c.b16 %v1798, %v1797
      %v1833 = vpack.c.b16 %v1800, %v1799
      %v1834 = vpack.c.b16 %v1802, %v1801
      %v1835 = vpack.c.b16 %v1804, %v1803
      %v1836 = vpack.c.b16 %v1806, %v1805
      %v1837 = vpack.c.b16 %v1808, %v1807
      %v1838 = vpack.c.b16 %v1810, %v1809
      %v1839 = vpack.c.b16 %v1812, %v1811
      %v1840 = vpack.c.b16 %v1814, %v1813
      %v1841 = vpack.c.b16 %v1816, %v1815
      %v1842 = vpack.c.b16 %v1818, %v1817
      %v1843 = vpack.c.b16 %v1820, %v1819
      %v1844 = vpack.c.b16 %v1822, %v1821
      %v1845 = vpack.c.b16 %v1824, %v1823
      %v1846 = vpack.c.b16 %v1826, %v1825
      %v1847 = vpack.c.b16 %v1828, %v1827
      %v1848 = vpack.c.b16 %v1830, %v1829
      %1849 = vrot.lane.b32.xlu0 %v1831, 64
      %v1850 = vpop.permute.xlu0 %1849
      %1851 = vrot.lane.b32.xlu0 %v1832, 64
      %v1852 = vpop.permute.xlu0 %1851
      %1853 = vrot.lane.b32.xlu0 %v1833, 64
      %v1854 = vpop.permute.xlu0 %1853
      %1855 = vrot.lane.b32.xlu0 %v1834, 64
      %v1856 = vpop.permute.xlu0 %1855
      %1857 = vrot.lane.b32.xlu0 %v1835, 64
      %v1858 = vpop.permute.xlu0 %1857
      %1859 = vrot.lane.b32.xlu0 %v1836, 64
      %v1860 = vpop.permute.xlu0 %1859
      %1861 = vrot.lane.b32.xlu0 %v1837, 64
      %v1862 = vpop.permute.xlu0 %1861
      %1863 = vrot.lane.b32.xlu0 %v1838, 64
      %v1864 = vpop.permute.xlu0 %1863
      %1865 = vrot.lane.b32.xlu0 %v1839, 64
      %v1866 = vpop.permute.xlu0 %1865
      %1867 = vrot.lane.b32.xlu0 %v1840, 64
      %v1868 = vpop.permute.xlu0 %1867
      %1869 = vrot.lane.b32.xlu0 %v1841, 64
      %v1870 = vpop.permute.xlu0 %1869
      %1871 = vrot.lane.b32.xlu0 %v1842, 64
      %v1872 = vpop.permute.xlu0 %1871
      %1873 = vrot.lane.b32.xlu0 %v1843, 64
      %v1874 = vpop.permute.xlu0 %1873
      %1875 = vrot.lane.b32.xlu0 %v1844, 64
      %v1876 = vpop.permute.xlu0 %1875
      %1877 = vrot.lane.b32.xlu0 %v1845, 64
      %v1878 = vpop.permute.xlu0 %1877
      %1879 = vrot.lane.b32.xlu0 %v1846, 64
      %v1880 = vpop.permute.xlu0 %1879
      %1881 = vrot.lane.b32.xlu0 %v1847, 64
      %v1882 = vpop.permute.xlu0 %1881
      %1883 = vrot.lane.b32.xlu0 %v1848, 64
      %v1884 = vpop.permute.xlu0 %1883
      %vm1885 = vcmask 261120
      %v1888 = vsel %vm1885, %v1687, %v1760
      %v1891 = vsel %vm1885, %v1688, %v1762
      %v1894 = vsel %vm1885, %v1689, %v1764
      %v1897 = vsel %vm1885, %v1690, %v1766
      %v1900 = vsel %vm1885, %v1691, %v1768
      %v1903 = vsel %vm1885, %v1692, %v1770
      %v1906 = vsel %vm1885, %v1693, %v1772
      %v1909 = vsel %vm1885, %v1694, %v1774
      %v1912 = vsel %vm1885, %v1695, %v1776
      %v1915 = vsel %vm1885, %v1696, %v1778
      %v1918 = vsel %vm1885, %v1697, %v1780
      %v1921 = vsel %vm1885, %v1698, %v1782
      %v1924 = vsel %vm1885, %v1699, %v1784
      %v1927 = vsel %vm1885, %v1700, %v1786
      %v1930 = vsel %vm1885, %v1701, %v1788
      %v1933 = vsel %vm1885, %v1702, %v1790
      %v1936 = vsel %vm1885, %v1703, %v1792
      %v1939 = vsel %vm1885, %v1704, %v1794
      %vm1940 = vcmask 523264
      %v1942 = vsel %vm1940, %v1888, %v1850
      %v1944 = vsel %vm1940, %v1891, %v1852
      %v1946 = vsel %vm1940, %v1894, %v1854
      %v1948 = vsel %vm1940, %v1897, %v1856
      %v1950 = vsel %vm1940, %v1900, %v1858
      %v1952 = vsel %vm1940, %v1903, %v1860
      %v1954 = vsel %vm1940, %v1906, %v1862
      %v1956 = vsel %vm1940, %v1909, %v1864
      %v1958 = vsel %vm1940, %v1912, %v1866
      %v1960 = vsel %vm1940, %v1915, %v1868
      %v1962 = vsel %vm1940, %v1918, %v1870
      %v1964 = vsel %vm1940, %v1921, %v1872
      %v1966 = vsel %vm1940, %v1924, %v1874
      %v1968 = vsel %vm1940, %v1927, %v1876
      %v1970 = vsel %vm1940, %v1930, %v1878
      %v1972 = vsel %vm1940, %v1933, %v1880
      %v1974 = vsel %vm1940, %v1936, %v1882
      %v1976 = vsel %vm1940, %v1939, %v1884
      %1993 = vrot.lane.b32.xlu0 %v1944, 96
      %v1994 = vpop.permute.xlu0 %1993
      %1995 = vrot.lane.b32.xlu0 %v1946, 96
      %v1996 = vpop.permute.xlu0 %1995
      %1997 = vrot.lane.b32.xlu0 %v1948, 96
      %v1998 = vpop.permute.xlu0 %1997
      %1999 = vrot.lane.b32.xlu0 %v1950, 96
      %v2000 = vpop.permute.xlu0 %1999
      %2001 = vrot.lane.b32.xlu0 %v1952, 96
      %v2002 = vpop.permute.xlu0 %2001
      %2003 = vrot.lane.b32.xlu0 %v1954, 96
      %v2004 = vpop.permute.xlu0 %2003
      %2005 = vrot.lane.b32.xlu0 %v1956, 96
      %v2006 = vpop.permute.xlu0 %2005
      %2007 = vrot.lane.b32.xlu0 %v1958, 96
      %v2008 = vpop.permute.xlu0 %2007
      %2009 = vrot.lane.b32.xlu0 %v1960, 96
      %v2010 = vpop.permute.xlu0 %2009
      %2011 = vrot.lane.b32.xlu0 %v1962, 96
      %v2012 = vpop.permute.xlu0 %2011
      %2013 = vrot.lane.b32.xlu0 %v1964, 96
      %v2014 = vpop.permute.xlu0 %2013
      %2015 = vrot.lane.b32.xlu0 %v1966, 96
      %v2016 = vpop.permute.xlu0 %2015
      %2017 = vrot.lane.b32.xlu0 %v1968, 96
      %v2018 = vpop.permute.xlu0 %2017
      %2019 = vrot.lane.b32.xlu0 %v1970, 96
      %v2020 = vpop.permute.xlu0 %2019
      %2021 = vrot.lane.b32.xlu0 %v1972, 96
      %v2022 = vpop.permute.xlu0 %2021
      %2023 = vrot.lane.b32.xlu0 %v1974, 96
      %v2024 = vpop.permute.xlu0 %2023
      %2026 = vrot.lane.b32.xlu0 %v1946, 64
      %v2027 = vpop.permute.xlu0 %2026
      %2028 = vrot.lane.b32.xlu0 %v1948, 64
      %v2029 = vpop.permute.xlu0 %2028
      %2030 = vrot.lane.b32.xlu0 %v1950, 64
      %v2031 = vpop.permute.xlu0 %2030
      %2032 = vrot.lane.b32.xlu0 %v1952, 64
      %v2033 = vpop.permute.xlu0 %2032
      %2034 = vrot.lane.b32.xlu0 %v1954, 64
      %v2035 = vpop.permute.xlu0 %2034
      %2036 = vrot.lane.b32.xlu0 %v1956, 64
      %v2037 = vpop.permute.xlu0 %2036
      %2038 = vrot.lane.b32.xlu0 %v1958, 64
      %v2039 = vpop.permute.xlu0 %2038
      %2040 = vrot.lane.b32.xlu0 %v1960, 64
      %v2041 = vpop.permute.xlu0 %2040
      %2042 = vrot.lane.b32.xlu0 %v1962, 64
      %v2043 = vpop.permute.xlu0 %2042
      %2044 = vrot.lane.b32.xlu0 %v1964, 64
      %v2045 = vpop.permute.xlu0 %2044
      %2046 = vrot.lane.b32.xlu0 %v1966, 64
      %v2047 = vpop.permute.xlu0 %2046
      %2048 = vrot.lane.b32.xlu0 %v1968, 64
      %v2049 = vpop.permute.xlu0 %2048
      %2050 = vrot.lane.b32.xlu0 %v1970, 64
      %v2051 = vpop.permute.xlu0 %2050
      %2052 = vrot.lane.b32.xlu0 %v1972, 64
      %v2053 = vpop.permute.xlu0 %2052
      %2054 = vrot.lane.b32.xlu0 %v1974, 64
      %v2055 = vpop.permute.xlu0 %2054
      %2056 = vrot.lane.b32.xlu0 %v1976, 64
      %v2057 = vpop.permute.xlu0 %2056
      %vm2058 = vcmask 785408
      %v2060 = vsel %vm2058, %v1942, %v1994
      %v2063 = vsel %vm2058, %v1944, %v1996
      %v2066 = vsel %vm2058, %v1946, %v1998
      %v2069 = vsel %vm2058, %v1948, %v2000
      %v2072 = vsel %vm2058, %v1950, %v2002
      %v2075 = vsel %vm2058, %v1952, %v2004
      %v2078 = vsel %vm2058, %v1954, %v2006
      %v2081 = vsel %vm2058, %v1956, %v2008
      %v2084 = vsel %vm2058, %v1958, %v2010
      %v2087 = vsel %vm2058, %v1960, %v2012
      %v2090 = vsel %vm2058, %v1962, %v2014
      %v2093 = vsel %vm2058, %v1964, %v2016
      %v2096 = vsel %vm2058, %v1966, %v2018
      %v2099 = vsel %vm2058, %v1968, %v2020
      %v2102 = vsel %vm2058, %v1970, %v2022
      %v2105 = vsel %vm2058, %v1972, %v2024
      %v2108 = vsel %vm1940, %v1994, %v2027
      %v2111 = vsel %vm1940, %v1996, %v2029
      %v2114 = vsel %vm1940, %v1998, %v2031
      %v2117 = vsel %vm1940, %v2000, %v2033
      %v2120 = vsel %vm1940, %v2002, %v2035
      %v2123 = vsel %vm1940, %v2004, %v2037
      %v2126 = vsel %vm1940, %v2006, %v2039
      %v2129 = vsel %vm1940, %v2008, %v2041
      %v2132 = vsel %vm1940, %v2010, %v2043
      %v2135 = vsel %vm1940, %v2012, %v2045
      %v2138 = vsel %vm1940, %v2014, %v2047
      %v2141 = vsel %vm1940, %v2016, %v2049
      %v2144 = vsel %vm1940, %v2018, %v2051
      %v2147 = vsel %vm1940, %v2020, %v2053
      %v2150 = vsel %vm1940, %v2022, %v2055
      %v2153 = vsel %vm1940, %v2024, %v2057
      %v2155 = vld [vmem:[%s1] sm:$0xf]
      %v2156 = vld [vmem:[%s1 + $0x4] sm:$0xf]
      %v2157 = vld [vmem:[%s1 + $0x8] sm:$0xf]
      %v2158 = vld [vmem:[%s1 + $0xc] sm:$0xf]
      %v2159 = vld [vmem:[%s1 + $0x10] sm:$0xf]
      %v2160 = vld [vmem:[%s1 + $0x14] sm:$0xf]
      %v2161 = vld [vmem:[%s1 + $0x18] sm:$0xf]
      %v2162 = vld [vmem:[%s1 + $0x1c] sm:$0xf]
      %v2163 = vld [vmem:[%s1 + $0x20] sm:$0xf]
      %v2164 = vld [vmem:[%s1 + $0x24] sm:$0xf]
      %v2165 = vld [vmem:[%s1 + $0x28] sm:$0xf]
      %v2166 = vld [vmem:[%s1 + $0x2c] sm:$0xf]
      %v2167 = vld [vmem:[%s1 + $0x30] sm:$0xf]
      %v2168 = vld [vmem:[%s1 + $0x34] sm:$0xf]
      %v2169 = vld [vmem:[%s1 + $0x38] sm:$0xf]
      %v2170 = vld [vmem:[%s1 + $0x3c] sm:$0xf]
      %v2171 = vld [vmem:[%s1 + $0x40] sm:$0xf]
      %v2172 = vld [vmem:[%s1 + $0x44] sm:$0xf]
      %v2173 = vld [vmem:[%s1 + $0x48] sm:$0xf]
      %v2174 = vld [vmem:[%s1 + $0x4c] sm:$0xf]
      %v2175 = vld [vmem:[%s1 + $0x50] sm:$0xf]
      %v2176 = vld [vmem:[%s1 + $0x54] sm:$0xf]
      %v2177 = vld [vmem:[%s1 + $0x58] sm:$0xf]
      %v2178 = vld [vmem:[%s1 + $0x5c] sm:$0xf]
      %v2179 = vld [vmem:[%s1 + $0x60] sm:$0xf]
      %v2180 = vld [vmem:[%s1 + $0x64] sm:$0xf]
      %v2181 = vld [vmem:[%s1 + $0x68] sm:$0xf]
      %v2182 = vld [vmem:[%s1 + $0x6c] sm:$0xf]
      %v2183 = vld [vmem:[%s1 + $0x70] sm:$0xf]
      %v2184 = vld [vmem:[%s1 + $0x74] sm:$0xf]
      %v2185 = vld [vmem:[%s1 + $0x78] sm:$0xf]
      %v2186 = vld [vmem:[%s1 + $0x7c] sm:$0xf]
      %v2187 = vld [vmem:[%s1 + $0x80] sm:$0xf]
      %v2188 = vld [vmem:[%s1 + $0x84] sm:$0xf]
      %v2189 = vld [vmem:[%s1 + $0x88] sm:$0xf]
      %v2190 = vld [vmem:[%s1 + $0x8c] sm:$0xf]
      %v2191 = vld [vmem:[%s2] sm:$0x1]
      %v2192 = vlaneseq
      %v2193 = vshrl.u32 %v2192, 7
      %v2194 = vsub.s32 0, %v2193
      %v2195 = vrot.slane %v2191, %v2194
      %v2232 = vunpack.c.l.b16 %v2155
      %v2233 = vunpack.c.l.b16 %v2156
      %v2234 = vunpack.c.l.b16 %v2157
      %v2235 = vunpack.c.l.b16 %v2158
      %v2236 = vunpack.c.l.b16 %v2159
      %v2237 = vunpack.c.l.b16 %v2160
      %v2238 = vunpack.c.l.b16 %v2161
      %v2239 = vunpack.c.l.b16 %v2162
      %v2240 = vunpack.c.l.b16 %v2163
      %v2241 = vunpack.c.l.b16 %v2164
      %v2242 = vunpack.c.l.b16 %v2165
      %v2243 = vunpack.c.l.b16 %v2166
      %v2244 = vunpack.c.l.b16 %v2167
      %v2245 = vunpack.c.l.b16 %v2168
      %v2246 = vunpack.c.l.b16 %v2169
      %v2247 = vunpack.c.l.b16 %v2170
      %v2248 = vunpack.c.l.b16 %v2171
      %v2249 = vunpack.c.l.b16 %v2172
      %v2250 = vunpack.c.l.b16 %v2173
      %v2251 = vunpack.c.l.b16 %v2174
      %v2252 = vunpack.c.l.b16 %v2175
      %v2253 = vunpack.c.l.b16 %v2176
      %v2254 = vunpack.c.l.b16 %v2177
      %v2255 = vunpack.c.l.b16 %v2178
      %v2256 = vunpack.c.l.b16 %v2179
      %v2257 = vunpack.c.l.b16 %v2180
      %v2258 = vunpack.c.l.b16 %v2181
      %v2259 = vunpack.c.l.b16 %v2182
      %v2260 = vunpack.c.l.b16 %v2183
      %v2261 = vunpack.c.l.b16 %v2184
      %v2262 = vunpack.c.l.b16 %v2185
      %v2263 = vunpack.c.l.b16 %v2186
      %v2264 = vunpack.c.l.b16 %v2187
      %v2265 = vunpack.c.l.b16 %v2188
      %v2266 = vunpack.c.l.b16 %v2189
      %v2267 = vunpack.c.l.b16 %v2190
      %v2268 = vpack.c.b16 %v2233, %v2232
      %v2269 = vpack.c.b16 %v2235, %v2234
      %v2270 = vpack.c.b16 %v2237, %v2236
      %v2271 = vpack.c.b16 %v2239, %v2238
      %v2272 = vpack.c.b16 %v2241, %v2240
      %v2273 = vpack.c.b16 %v2243, %v2242
      %v2274 = vpack.c.b16 %v2245, %v2244
      %v2275 = vpack.c.b16 %v2247, %v2246
      %v2276 = vpack.c.b16 %v2249, %v2248
      %v2277 = vpack.c.b16 %v2251, %v2250
      %v2278 = vpack.c.b16 %v2253, %v2252
      %v2279 = vpack.c.b16 %v2255, %v2254
      %v2280 = vpack.c.b16 %v2257, %v2256
      %v2281 = vpack.c.b16 %v2259, %v2258
      %v2282 = vpack.c.b16 %v2261, %v2260
      %v2283 = vpack.c.b16 %v2263, %v2262
      %v2284 = vpack.c.b16 %v2265, %v2264
      %v2285 = vpack.c.b16 %v2267, %v2266
      %v2304 = vsel %vm1885, %v2027, 0
      %v2306 = vsel %vm1885, %v2029, 0
      %v2308 = vsel %vm1885, %v2031, 0
      %v2310 = vsel %vm1885, %v2033, 0
      %v2312 = vsel %vm1885, %v2035, 0
      %v2314 = vsel %vm1885, %v2037, 0
      %v2316 = vsel %vm1885, %v2039, 0
      %v2318 = vsel %vm1885, %v2041, 0
      %v2320 = vsel %vm1885, %v2043, 0
      %v2322 = vsel %vm1885, %v2045, 0
      %v2324 = vsel %vm1885, %v2047, 0
      %v2326 = vsel %vm1885, %v2049, 0
      %v2328 = vsel %vm1885, %v2051, 0
      %v2330 = vsel %vm1885, %v2053, 0
      %v2332 = vsel %vm1885, %v2055, 0
      %v2334 = vsel %vm1885, %v2057, 0
      %2336 = vmatprep.subr.bf16.mxu0 0
      %2337 = vmatpush1.bf16.msra.mxu0 %v2275
      %2338 = vmatprep.subr.bf16.mxu0 0
      %2339 = vmatpush1.bf16.msra.mxu0 %v2274
      %2340 = vmatprep.subr.bf16.mxu0 0
      %2341 = vmatpush1.bf16.msra.mxu0 %v2273
      %2342 = vmatprep.subr.bf16.mxu0 0
      %2343 = vmatpush1.bf16.msra.mxu0 %v2272
      %2344 = vmatprep.subr.bf16.mxu0 0
      %2345 = vmatpush1.bf16.msra.mxu0 %v2271
      %2346 = vmatprep.subr.bf16.mxu0 0
      %2347 = vmatpush1.bf16.msra.mxu0 %v2270
      %2348 = vmatprep.subr.bf16.mxu0 0
      %2349 = vmatpush1.bf16.msra.mxu0 %v2269
      %2350 = vmatprep.subr.bf16.mxu0 0
      %2351 = vmatpush1.bf16.msra.mxu0 %v2268
      %2352 = vmatprep.subr.bf16.mxu0 0
      %2353 = vmatpush2.bf16.msra.mxu0 %v2283
      %2354 = vmatprep.subr.bf16.mxu0 0
      %2355 = vmatpush2.bf16.msra.mxu0 %v2282
      %2356 = vmatprep.subr.bf16.mxu0 0
      %2357 = vmatpush2.bf16.msra.mxu0 %v2281
      %2358 = vmatprep.subr.bf16.mxu0 0
      %2359 = vmatpush2.bf16.msra.mxu0 %v2280
      %2360 = vmatprep.subr.bf16.mxu0 0
      %2361 = vmatpush2.bf16.msra.mxu0 %v2279
      %2362 = vmatprep.subr.bf16.mxu0 0
      %2363 = vmatpush2.bf16.msra.mxu0 %v2278
      %2364 = vmatprep.subr.bf16.mxu0 0
      %2365 = vmatpush2.bf16.msra.mxu0 %v2277
      %2366 = vmatprep.subr.bf16.mxu0 0
      %2367 = vmatpush2.bf16.msra.mxu0 %v2276
      %2368 = vmatprep.mubr.bf16.mxu0 %v2108
      %2369 = vmatmul.mubr.bf16.gmra.mxu0 %v2060
      %v2370 = vpop.f32.mrf.mxu0
      %v2371 = vadd.f32 %v2195, %v2370
      %v2372 = vpop.f32.mrf.mxu0
      %v2373 = vpop.f32.mrf.mxu0
      %v2374 = vadd.f32 %v2195, %v2373
      %v2375 = vpop.f32.mrf.mxu0
      %2376 = vmatprep.mubr.bf16.mxu0 %v2111
      %2377 = vmatmul.mubr.bf16.gmra.mxu0 %v2063
      %v2378 = vpop.f32.mrf.mxu0
      %v2379 = vadd.f32 %v2195, %v2378
      %v2380 = vpop.f32.mrf.mxu0
      %v2381 = vpop.f32.mrf.mxu0
      %v2382 = vadd.f32 %v2195, %v2381
      %v2383 = vpop.f32.mrf.mxu0
      %2384 = vmatprep.mubr.bf16.mxu0 %v2114
      %2385 = vmatmul.mubr.bf16.gmra.mxu0 %v2066
      %v2386 = vpop.f32.mrf.mxu0
      %v2387 = vadd.f32 %v2195, %v2386
      %v2388 = vpop.f32.mrf.mxu0
      %v2389 = vpop.f32.mrf.mxu0
      %v2390 = vadd.f32 %v2195, %v2389
      %v2391 = vpop.f32.mrf.mxu0
      %2392 = vmatprep.mubr.bf16.mxu0 %v2117
      %2393 = vmatmul.mubr.bf16.gmra.mxu0 %v2069
      %v2394 = vpop.f32.mrf.mxu0
      %v2395 = vadd.f32 %v2195, %v2394
      %v2396 = vpop.f32.mrf.mxu0
      %v2397 = vpop.f32.mrf.mxu0
      %v2398 = vadd.f32 %v2195, %v2397
      %v2399 = vpop.f32.mrf.mxu0
      %2400 = vmatprep.mubr.bf16.mxu0 %v2120
      %2401 = vmatmul.mubr.bf16.gmra.mxu0 %v2072
      %v2402 = vpop.f32.mrf.mxu0
      %v2403 = vadd.f32 %v2195, %v2402
      %v2404 = vpop.f32.mrf.mxu0
      %v2405 = vpop.f32.mrf.mxu0
      %v2406 = vadd.f32 %v2195, %v2405
      %v2407 = vpop.f32.mrf.mxu0
      %2408 = vmatprep.mubr.bf16.mxu0 %v2123
      %2409 = vmatmul.mubr.bf16.gmra.mxu0 %v2075
      %v2410 = vpop.f32.mrf.mxu0
      %v2411 = vadd.f32 %v2195, %v2410
      %v2412 = vpop.f32.mrf.mxu0
      %v2413 = vpop.f32.mrf.mxu0
      %v2414 = vadd.f32 %v2195, %v2413
      %v2415 = vpop.f32.mrf.mxu0
      %2416 = vmatprep.mubr.bf16.mxu0 %v2126
      %2417 = vmatmul.mubr.bf16.gmra.mxu0 %v2078
      %v2418 = vpop.f32.mrf.mxu0
      %v2419 = vadd.f32 %v2195, %v2418
      %v2420 = vpop.f32.mrf.mxu0
      %v2421 = vpop.f32.mrf.mxu0
      %v2422 = vadd.f32 %v2195, %v2421
      %v2423 = vpop.f32.mrf.mxu0
      %2424 = vmatprep.mubr.bf16.mxu0 %v2129
      %2425 = vmatmul.mubr.bf16.gmra.mxu0 %v2081
      %v2426 = vpop.f32.mrf.mxu0
      %v2427 = vadd.f32 %v2195, %v2426
      %v2428 = vpop.f32.mrf.mxu0
      %v2429 = vpop.f32.mrf.mxu0
      %v2430 = vadd.f32 %v2195, %v2429
      %v2431 = vpop.f32.mrf.mxu0
      %2432 = vmatprep.mubr.bf16.mxu0 %v2132
      %2433 = vmatmul.mubr.bf16.gmra.mxu0 %v2084
      %v2434 = vpop.f32.mrf.mxu0
      %v2435 = vadd.f32 %v2195, %v2434
      %v2436 = vpop.f32.mrf.mxu0
      %v2437 = vpop.f32.mrf.mxu0
      %v2438 = vadd.f32 %v2195, %v2437
      %v2439 = vpop.f32.mrf.mxu0
      %2440 = vmatprep.mubr.bf16.mxu0 %v2135
      %2441 = vmatmul.mubr.bf16.gmra.mxu0 %v2087
      %v2442 = vpop.f32.mrf.mxu0
      %v2443 = vadd.f32 %v2195, %v2442
      %v2444 = vpop.f32.mrf.mxu0
      %v2445 = vpop.f32.mrf.mxu0
      %v2446 = vadd.f32 %v2195, %v2445
      %v2447 = vpop.f32.mrf.mxu0
      %2448 = vmatprep.mubr.bf16.mxu0 %v2138
      %2449 = vmatmul.mubr.bf16.gmra.mxu0 %v2090
      %v2450 = vpop.f32.mrf.mxu0
      %v2451 = vadd.f32 %v2195, %v2450
      %v2452 = vpop.f32.mrf.mxu0
      %v2453 = vpop.f32.mrf.mxu0
      %v2454 = vadd.f32 %v2195, %v2453
      %v2455 = vpop.f32.mrf.mxu0
      %2456 = vmatprep.mubr.bf16.mxu0 %v2141
      %2457 = vmatmul.mubr.bf16.gmra.mxu0 %v2093
      %v2458 = vpop.f32.mrf.mxu0
      %v2459 = vadd.f32 %v2195, %v2458
      %v2460 = vpop.f32.mrf.mxu0
      %v2461 = vpop.f32.mrf.mxu0
      %v2462 = vadd.f32 %v2195, %v2461
      %v2463 = vpop.f32.mrf.mxu0
      %2464 = vmatprep.mubr.bf16.mxu0 %v2144
      %2465 = vmatmul.mubr.bf16.gmra.mxu0 %v2096
      %v2466 = vpop.f32.mrf.mxu0
      %v2467 = vadd.f32 %v2195, %v2466
      %v2468 = vpop.f32.mrf.mxu0
      %v2469 = vpop.f32.mrf.mxu0
      %v2470 = vadd.f32 %v2195, %v2469
      %v2471 = vpop.f32.mrf.mxu0
      %2472 = vmatprep.mubr.bf16.mxu0 %v2147
      %2473 = vmatmul.mubr.bf16.gmra.mxu0 %v2099
      %v2474 = vpop.f32.mrf.mxu0
      %v2475 = vadd.f32 %v2195, %v2474
      %v2476 = vpop.f32.mrf.mxu0
      %v2477 = vpop.f32.mrf.mxu0
      %v2478 = vadd.f32 %v2195, %v2477
      %v2479 = vpop.f32.mrf.mxu0
      %2480 = vmatprep.mubr.bf16.mxu0 %v2150
      %2481 = vmatmul.mubr.bf16.gmra.mxu0 %v2102
      %v2482 = vpop.f32.mrf.mxu0
      %v2483 = vadd.f32 %v2195, %v2482
      %v2484 = vpop.f32.mrf.mxu0
      %v2485 = vpop.f32.mrf.mxu0
      %v2486 = vadd.f32 %v2195, %v2485
      %v2487 = vpop.f32.mrf.mxu0
      %2488 = vmatprep.mubr.bf16.mxu0 %v2153
      %2489 = vmatmul.mubr.bf16.gmra.mxu0 %v2105
      %v2490 = vpop.f32.mrf.mxu0
      %v2491 = vadd.f32 %v2195, %v2490
      %v2492 = vpop.f32.mrf.mxu0
      %v2493 = vpop.f32.mrf.mxu0
      %v2494 = vadd.f32 %v2195, %v2493
      %v2495 = vpop.f32.mrf.mxu0
      %2496 = vdwg.mxu0
      %2497 = vmatprep.subr.bf16.mxu0 0
      %2498 = vmatpush1.bf16.msra.mxu0 0
      %2499 = vmatprep.subr.bf16.mxu0 0
      %2500 = vmatpush1.bf16.msra.mxu0 0
      %2501 = vmatprep.subr.bf16.mxu0 0
      %2502 = vmatpush1.bf16.msra.mxu0 0
      %2503 = vmatprep.subr.bf16.mxu0 0
      %2504 = vmatpush1.bf16.msra.mxu0 0
      %2505 = vmatprep.subr.bf16.mxu0 0
      %2506 = vmatpush1.bf16.msra.mxu0 0
      %2507 = vmatprep.subr.bf16.mxu0 0
      %2508 = vmatpush1.bf16.msra.mxu0 0
      %2509 = vmatprep.subr.bf16.mxu0 0
      %2510 = vmatpush1.bf16.msra.mxu0 %v2285
      %2511 = vmatprep.subr.bf16.mxu0 0
      %2512 = vmatpush1.bf16.msra.mxu0 %v2284
      %2513 = vmatprep.subr.bf16.mxu0 0
      %2514 = vmatpush2.bf16.msra.mxu0 0
      %2515 = vmatprep.subr.bf16.mxu0 0
      %2516 = vmatpush2.bf16.msra.mxu0 0
      %2517 = vmatprep.subr.bf16.mxu0 0
      %2518 = vmatpush2.bf16.msra.mxu0 0
      %2519 = vmatprep.subr.bf16.mxu0 0
      %2520 = vmatpush2.bf16.msra.mxu0 0
      %2521 = vmatprep.subr.bf16.mxu0 0
      %2522 = vmatpush2.bf16.msra.mxu0 0
      %2523 = vmatprep.subr.bf16.mxu0 0
      %2524 = vmatpush2.bf16.msra.mxu0 0
      %2525 = vmatprep.subr.bf16.mxu0 0
      %2526 = vmatpush2.bf16.msra.mxu0 0
      %2527 = vmatprep.subr.bf16.mxu0 0
      %2528 = vmatpush2.bf16.msra.mxu0 0
      %2529 = vmatprep.mubr.bf16.mxu0 0
      %2530 = vmatmul.mubr.bf16.gmra.mxu0 %v2304
      %v2531 = vpop.f32.mrf.mxu0
      %v2532 = vadd.f32 %v2371, %v2531
      %v2533 = vpop.f32.mrf.mxu0
      %v2534 = vpop.f32.mrf.mxu0
      %v2535 = vadd.f32 %v2374, %v2534
      %v2536 = vpop.f32.mrf.mxu0
      %2537 = vmatprep.mubr.bf16.mxu0 0
      %2538 = vmatmul.mubr.bf16.gmra.mxu0 %v2306
      %v2539 = vpop.f32.mrf.mxu0
      %v2540 = vadd.f32 %v2379, %v2539
      %v2541 = vpop.f32.mrf.mxu0
      %v2542 = vpop.f32.mrf.mxu0
      %v2543 = vadd.f32 %v2382, %v2542
      %v2544 = vpop.f32.mrf.mxu0
      %2545 = vmatprep.mubr.bf16.mxu0 0
      %2546 = vmatmul.mubr.bf16.gmra.mxu0 %v2308
      %v2547 = vpop.f32.mrf.mxu0
      %v2548 = vadd.f32 %v2387, %v2547
      %v2549 = vpop.f32.mrf.mxu0
      %v2550 = vpop.f32.mrf.mxu0
      %v2551 = vadd.f32 %v2390, %v2550
      %v2552 = vpop.f32.mrf.mxu0
      %2553 = vmatprep.mubr.bf16.mxu0 0
      %2554 = vmatmul.mubr.bf16.gmra.mxu0 %v2310
      %v2555 = vpop.f32.mrf.mxu0
      %v2556 = vadd.f32 %v2395, %v2555
      %v2557 = vpop.f32.mrf.mxu0
      %v2558 = vpop.f32.mrf.mxu0
      %v2559 = vadd.f32 %v2398, %v2558
      %v2560 = vpop.f32.mrf.mxu0
      %2561 = vmatprep.mubr.bf16.mxu0 0
      %2562 = vmatmul.mubr.bf16.gmra.mxu0 %v2312
      %v2563 = vpop.f32.mrf.mxu0
      %v2564 = vadd.f32 %v2403, %v2563
      %v2565 = vpop.f32.mrf.mxu0
      %v2566 = vpop.f32.mrf.mxu0
      %v2567 = vadd.f32 %v2406, %v2566
      %v2568 = vpop.f32.mrf.mxu0
      %2569 = vmatprep.mubr.bf16.mxu0 0
      %2570 = vmatmul.mubr.bf16.gmra.mxu0 %v2314
      %v2571 = vpop.f32.mrf.mxu0
      %v2572 = vadd.f32 %v2411, %v2571
      %v2573 = vpop.f32.mrf.mxu0
      %v2574 = vpop.f32.mrf.mxu0
      %v2575 = vadd.f32 %v2414, %v2574
      %v2576 = vpop.f32.mrf.mxu0
      %2577 = vmatprep.mubr.bf16.mxu0 0
      %2578 = vmatmul.mubr.bf16.gmra.mxu0 %v2316
      %v2579 = vpop.f32.mrf.mxu0
      %v2580 = vadd.f32 %v2419, %v2579
      %v2581 = vpop.f32.mrf.mxu0
      %v2582 = vpop.f32.mrf.mxu0
      %v2583 = vadd.f32 %v2422, %v2582
      %v2584 = vpop.f32.mrf.mxu0
      %2585 = vmatprep.mubr.bf16.mxu0 0
      %2586 = vmatmul.mubr.bf16.gmra.mxu0 %v2318
      %v2587 = vpop.f32.mrf.mxu0
      %v2588 = vadd.f32 %v2427, %v2587
      %v2589 = vpop.f32.mrf.mxu0
      %v2590 = vpop.f32.mrf.mxu0
      %v2591 = vadd.f32 %v2430, %v2590
      %v2592 = vpop.f32.mrf.mxu0
      %2593 = vmatprep.mubr.bf16.mxu0 0
      %2594 = vmatmul.mubr.bf16.gmra.mxu0 %v2320
      %v2595 = vpop.f32.mrf.mxu0
      %v2596 = vadd.f32 %v2435, %v2595
      %v2597 = vpop.f32.mrf.mxu0
      %v2598 = vpop.f32.mrf.mxu0
      %v2599 = vadd.f32 %v2438, %v2598
      %v2600 = vpop.f32.mrf.mxu0
      %2601 = vmatprep.mubr.bf16.mxu0 0
      %2602 = vmatmul.mubr.bf16.gmra.mxu0 %v2322
      %v2603 = vpop.f32.mrf.mxu0
      %v2604 = vadd.f32 %v2443, %v2603
      %v2605 = vpop.f32.mrf.mxu0
      %v2606 = vpop.f32.mrf.mxu0
      %v2607 = vadd.f32 %v2446, %v2606
      %v2608 = vpop.f32.mrf.mxu0
      %2609 = vmatprep.mubr.bf16.mxu0 0
      %2610 = vmatmul.mubr.bf16.gmra.mxu0 %v2324
      %v2611 = vpop.f32.mrf.mxu0
      %v2612 = vadd.f32 %v2451, %v2611
      %v2613 = vpop.f32.mrf.mxu0
      %v2614 = vpop.f32.mrf.mxu0
      %v2615 = vadd.f32 %v2454, %v2614
      %v2616 = vpop.f32.mrf.mxu0
      %2617 = vmatprep.mubr.bf16.mxu0 0
      %2618 = vmatmul.mubr.bf16.gmra.mxu0 %v2326
      %v2619 = vpop.f32.mrf.mxu0
      %v2620 = vadd.f32 %v2459, %v2619
      %v2621 = vpop.f32.mrf.mxu0
      %v2622 = vpop.f32.mrf.mxu0
      %v2623 = vadd.f32 %v2462, %v2622
      %v2624 = vpop.f32.mrf.mxu0
      %2625 = vmatprep.mubr.bf16.mxu0 0
      %2626 = vmatmul.mubr.bf16.gmra.mxu0 %v2328
      %v2627 = vpop.f32.mrf.mxu0
      %v2628 = vadd.f32 %v2467, %v2627
      %v2629 = vpop.f32.mrf.mxu0
      %v2630 = vpop.f32.mrf.mxu0
      %v2631 = vadd.f32 %v2470, %v2630
      %v2632 = vpop.f32.mrf.mxu0
      %2633 = vmatprep.mubr.bf16.mxu0 0
      %2634 = vmatmul.mubr.bf16.gmra.mxu0 %v2330
      %v2635 = vpop.f32.mrf.mxu0
      %v2636 = vadd.f32 %v2475, %v2635
      %v2637 = vpop.f32.mrf.mxu0
      %v2638 = vpop.f32.mrf.mxu0
      %v2639 = vadd.f32 %v2478, %v2638
      %v2640 = vpop.f32.mrf.mxu0
      %2641 = vmatprep.mubr.bf16.mxu0 0
      %2642 = vmatmul.mubr.bf16.gmra.mxu0 %v2332
      %v2643 = vpop.f32.mrf.mxu0
      %v2644 = vadd.f32 %v2483, %v2643
      %v2645 = vpop.f32.mrf.mxu0
      %v2646 = vpop.f32.mrf.mxu0
      %v2647 = vadd.f32 %v2486, %v2646
      %v2648 = vpop.f32.mrf.mxu0
      %2649 = vmatprep.mubr.bf16.mxu0 0
      %2650 = vmatmul.mubr.bf16.gmra.mxu0 %v2334
      %v2651 = vpop.f32.mrf.mxu0
      %v2652 = vadd.f32 %v2491, %v2651
      %v2653 = vpop.f32.mrf.mxu0
      %v2654 = vpop.f32.mrf.mxu0
      %v2655 = vadd.f32 %v2494, %v2654
      %v2656 = vpop.f32.mrf.mxu0
      %2657 = vdwg.mxu0
      %vm2658 = vcmp.gt.f32.partialorder %v2532, 0.0
      %vm2659 = vcmp.gt.f32.partialorder %v2535, 0.0
      %vm2660 = vcmp.gt.f32.partialorder %v2540, 0.0
      %vm2661 = vcmp.gt.f32.partialorder %v2543, 0.0
      %vm2662 = vcmp.gt.f32.partialorder %v2548, 0.0
      %vm2663 = vcmp.gt.f32.partialorder %v2551, 0.0
      %vm2664 = vcmp.gt.f32.partialorder %v2556, 0.0
      %vm2665 = vcmp.gt.f32.partialorder %v2559, 0.0
      %vm2666 = vcmp.gt.f32.partialorder %v2564, 0.0
      %vm2667 = vcmp.gt.f32.partialorder %v2567, 0.0
      %vm2668 = vcmp.gt.f32.partialorder %v2572, 0.0
      %vm2669 = vcmp.gt.f32.partialorder %v2575, 0.0
      %vm2670 = vcmp.gt.f32.partialorder %v2580, 0.0
      %vm2671 = vcmp.gt.f32.partialorder %v2583, 0.0
      %vm2672 = vcmp.gt.f32.partialorder %v2588, 0.0
      %vm2673 = vcmp.gt.f32.partialorder %v2591, 0.0
      %vm2674 = vcmp.gt.f32.partialorder %v2596, 0.0
      %vm2675 = vcmp.gt.f32.partialorder %v2599, 0.0
      %vm2676 = vcmp.gt.f32.partialorder %v2604, 0.0
      %vm2677 = vcmp.gt.f32.partialorder %v2607, 0.0
      %vm2678 = vcmp.gt.f32.partialorder %v2612, 0.0
      %vm2679 = vcmp.gt.f32.partialorder %v2615, 0.0
      %vm2680 = vcmp.gt.f32.partialorder %v2620, 0.0
      %vm2681 = vcmp.gt.f32.partialorder %v2623, 0.0
      %vm2682 = vcmp.gt.f32.partialorder %v2628, 0.0
      %vm2683 = vcmp.gt.f32.partialorder %v2631, 0.0
      %vm2684 = vcmp.gt.f32.partialorder %v2636, 0.0
      %vm2685 = vcmp.gt.f32.partialorder %v2639, 0.0
      %vm2686 = vcmp.gt.f32.partialorder %v2644, 0.0
      %vm2687 = vcmp.gt.f32.partialorder %v2647, 0.0
      %vm2688 = vcmp.gt.f32.partialorder %v2652, 0.0
      %vm2689 = vcmp.gt.f32.partialorder %v2655, 0.0
      %v2690 = vmul.f32 %v2532, 0.01
      %v2691 = vmul.f32 %v2535, 0.01
      %v2692 = vmul.f32 %v2540, 0.01
      %v2693 = vmul.f32 %v2543, 0.01
      %v2694 = vmul.f32 %v2548, 0.01
      %v2695 = vmul.f32 %v2551, 0.01
      %v2696 = vmul.f32 %v2556, 0.01
      %v2697 = vmul.f32 %v2559, 0.01
      %v2698 = vmul.f32 %v2564, 0.01
      %v2699 = vmul.f32 %v2567, 0.01
      %v2700 = vmul.f32 %v2572, 0.01
      %v2701 = vmul.f32 %v2575, 0.01
      %v2702 = vmul.f32 %v2580, 0.01
      %v2703 = vmul.f32 %v2583, 0.01
      %v2704 = vmul.f32 %v2588, 0.01
      %v2705 = vmul.f32 %v2591, 0.01
      %v2706 = vmul.f32 %v2596, 0.01
      %v2707 = vmul.f32 %v2599, 0.01
      %v2708 = vmul.f32 %v2604, 0.01
      %v2709 = vmul.f32 %v2607, 0.01
      %v2710 = vmul.f32 %v2612, 0.01
      %v2711 = vmul.f32 %v2615, 0.01
      %v2712 = vmul.f32 %v2620, 0.01
      %v2713 = vmul.f32 %v2623, 0.01
      %v2714 = vmul.f32 %v2628, 0.01
      %v2715 = vmul.f32 %v2631, 0.01
      %v2716 = vmul.f32 %v2636, 0.01
      %v2717 = vmul.f32 %v2639, 0.01
      %v2718 = vmul.f32 %v2644, 0.01
      %v2719 = vmul.f32 %v2647, 0.01
      %v2720 = vmul.f32 %v2652, 0.01
      %v2721 = vmul.f32 %v2655, 0.01
      %v2722 = vsel %vm2658, %v2532, %v2690
      %v2723 = vsel %vm2659, %v2535, %v2691
      %v2724 = vsel %vm2660, %v2540, %v2692
      %v2725 = vsel %vm2661, %v2543, %v2693
      %v2726 = vsel %vm2662, %v2548, %v2694
      %v2727 = vsel %vm2663, %v2551, %v2695
      %v2728 = vsel %vm2664, %v2556, %v2696
      %v2729 = vsel %vm2665, %v2559, %v2697
      %v2730 = vsel %vm2666, %v2564, %v2698
      %v2731 = vsel %vm2667, %v2567, %v2699
      %v2732 = vsel %vm2668, %v2572, %v2700
      %v2733 = vsel %vm2669, %v2575, %v2701
      %v2734 = vsel %vm2670, %v2580, %v2702
      %v2735 = vsel %vm2671, %v2583, %v2703
      %v2736 = vsel %vm2672, %v2588, %v2704
      %v2737 = vsel %vm2673, %v2591, %v2705
      %v2738 = vsel %vm2674, %v2596, %v2706
      %v2739 = vsel %vm2675, %v2599, %v2707
      %v2740 = vsel %vm2676, %v2604, %v2708
      %v2741 = vsel %vm2677, %v2607, %v2709
      %v2742 = vsel %vm2678, %v2612, %v2710
      %v2743 = vsel %vm2679, %v2615, %v2711
      %v2744 = vsel %vm2680, %v2620, %v2712
      %v2745 = vsel %vm2681, %v2623, %v2713
      %v2746 = vsel %vm2682, %v2628, %v2714
      %v2747 = vsel %vm2683, %v2631, %v2715
      %v2748 = vsel %vm2684, %v2636, %v2716
      %v2749 = vsel %vm2685, %v2639, %v2717
      %v2750 = vsel %vm2686, %v2644, %v2718
      %v2751 = vsel %vm2687, %v2647, %v2719
      %v2752 = vsel %vm2688, %v2652, %v2720
      %v2753 = vsel %vm2689, %v2655, %v2721
      %v2754 = vpack.c.bf16 %v2723, %v2722
      %v2755 = vpack.c.bf16 %v2725, %v2724
      %v2756 = vpack.c.bf16 %v2727, %v2726
      %v2757 = vpack.c.bf16 %v2729, %v2728
      %v2758 = vpack.c.bf16 %v2731, %v2730
      %v2759 = vpack.c.bf16 %v2733, %v2732
      %v2760 = vpack.c.bf16 %v2735, %v2734
      %v2761 = vpack.c.bf16 %v2737, %v2736
      %v2762 = vpack.c.bf16 %v2739, %v2738
      %v2763 = vpack.c.bf16 %v2741, %v2740
      %v2764 = vpack.c.bf16 %v2743, %v2742
      %v2765 = vpack.c.bf16 %v2745, %v2744
      %v2766 = vpack.c.bf16 %v2747, %v2746
      %v2767 = vpack.c.bf16 %v2749, %v2748
      %v2768 = vpack.c.bf16 %v2751, %v2750
      %v2769 = vpack.c.bf16 %v2753, %v2752
      %v2786 = vunpack.c.l.b16 %v2754
      %v2787 = vunpack.c.h.b16 %v2754
      %v2788 = vunpack.c.l.b16 %v2755
      %v2789 = vunpack.c.h.b16 %v2755
      %v2790 = vunpack.c.l.b16 %v2756
      %v2791 = vunpack.c.h.b16 %v2756
      %v2792 = vunpack.c.l.b16 %v2757
      %v2793 = vunpack.c.h.b16 %v2757
      %v2794 = vunpack.c.l.b16 %v2758
      %v2795 = vunpack.c.h.b16 %v2758
      %v2796 = vunpack.c.l.b16 %v2759
      %v2797 = vunpack.c.h.b16 %v2759
      %v2798 = vunpack.c.l.b16 %v2760
      %v2799 = vunpack.c.h.b16 %v2760
      %v2800 = vunpack.c.l.b16 %v2761
      %v2801 = vunpack.c.h.b16 %v2761
      %v2802 = vunpack.c.l.b16 %v2762
      %v2803 = vunpack.c.h.b16 %v2762
      %v2804 = vunpack.c.l.b16 %v2763
      %v2805 = vunpack.c.h.b16 %v2763
      %v2806 = vunpack.c.l.b16 %v2764
      %v2807 = vunpack.c.h.b16 %v2764
      %v2808 = vunpack.c.l.b16 %v2765
      %v2809 = vunpack.c.h.b16 %v2765
      %v2810 = vunpack.c.l.b16 %v2766
      %v2811 = vunpack.c.h.b16 %v2766
      %v2812 = vunpack.c.l.b16 %v2767
      %v2813 = vunpack.c.h.b16 %v2767
      %v2814 = vunpack.c.l.b16 %v2768
      %v2815 = vunpack.c.h.b16 %v2768
      %v2816 = vunpack.c.l.b16 %v2769
      %v2817 = vunpack.c.h.b16 %v2769
      %v2818 = vpack.c.b16 %v2786, %v2786
      %v2819 = vpack.c.b16 %v2787, %v2787
      %v2820 = vpack.c.b16 %v2788, %v2788
      %v2821 = vpack.c.b16 %v2789, %v2789
      %v2822 = vpack.c.b16 %v2790, %v2790
      %v2823 = vpack.c.b16 %v2791, %v2791
      %v2824 = vpack.c.b16 %v2792, %v2792
      %v2825 = vpack.c.b16 %v2793, %v2793
      %v2826 = vpack.c.b16 %v2794, %v2794
      %v2827 = vpack.c.b16 %v2795, %v2795
      %v2828 = vpack.c.b16 %v2796, %v2796
      %v2829 = vpack.c.b16 %v2797, %v2797
      %v2830 = vpack.c.b16 %v2798, %v2798
      %v2831 = vpack.c.b16 %v2799, %v2799
      %v2832 = vpack.c.b16 %v2800, %v2800
      %v2833 = vpack.c.b16 %v2801, %v2801
      %v2834 = vpack.c.b16 %v2802, %v2802
      %v2835 = vpack.c.b16 %v2803, %v2803
      %v2836 = vpack.c.b16 %v2804, %v2804
      %v2837 = vpack.c.b16 %v2805, %v2805
      %v2838 = vpack.c.b16 %v2806, %v2806
      %v2839 = vpack.c.b16 %v2807, %v2807
      %v2840 = vpack.c.b16 %v2808, %v2808
      %v2841 = vpack.c.b16 %v2809, %v2809
      %v2842 = vpack.c.b16 %v2810, %v2810
      %v2843 = vpack.c.b16 %v2811, %v2811
      %v2844 = vpack.c.b16 %v2812, %v2812
      %v2845 = vpack.c.b16 %v2813, %v2813
      %v2846 = vpack.c.b16 %v2814, %v2814
      %v2847 = vpack.c.b16 %v2815, %v2815
      %v2848 = vpack.c.b16 %v2816, %v2816
      %v2849 = vpack.c.b16 %v2817, %v2817
      %v2851 = vshrl.u32 %v2818, 16
      %v2853 = vrot.slane %v2851, 7
      %v2854 = vshll.u32 %v2818, 16
      %v2856 = vor.u32 %v2853, %v2854
      %v2857 = vrot.slane %v2853, 4
      %v2859 = vshrl.u32 %v2819, 16
      %v2861 = vrot.slane %v2859, 7
      %v2862 = vshll.u32 %v2819, 16
      %v2864 = vor.u32 %v2861, %v2862
      %v2865 = vsel %vm539, %v2857, %v2864
      %v2866 = vrot.slane %v2861, 4
      %v2868 = vshrl.u32 %v2820, 16
      %v2870 = vrot.slane %v2868, 7
      %v2871 = vshll.u32 %v2820, 16
      %v2873 = vor.u32 %v2870, %v2871
      %v2874 = vrot.slane %v2870, 4
      %v2876 = vshrl.u32 %v2821, 16
      %v2878 = vrot.slane %v2876, 7
      %v2879 = vshll.u32 %v2821, 16
      %v2881 = vor.u32 %v2878, %v2879
      %v2882 = vsel %vm539, %v2874, %v2881
      %v2883 = vrot.slane %v2878, 4
      %v2885 = vshrl.u32 %v2822, 16
      %v2887 = vrot.slane %v2885, 7
      %v2888 = vshll.u32 %v2822, 16
      %v2890 = vor.u32 %v2887, %v2888
      %v2891 = vrot.slane %v2887, 4
      %v2893 = vshrl.u32 %v2823, 16
      %v2895 = vrot.slane %v2893, 7
      %v2896 = vshll.u32 %v2823, 16
      %v2898 = vor.u32 %v2895, %v2896
      %v2899 = vsel %vm539, %v2891, %v2898
      %v2900 = vrot.slane %v2895, 4
      %v2902 = vshrl.u32 %v2824, 16
      %v2904 = vrot.slane %v2902, 7
      %v2905 = vshll.u32 %v2824, 16
      %v2907 = vor.u32 %v2904, %v2905
      %v2908 = vrot.slane %v2904, 4
      %v2910 = vshrl.u32 %v2825, 16
      %v2912 = vrot.slane %v2910, 7
      %v2913 = vshll.u32 %v2825, 16
      %v2915 = vor.u32 %v2912, %v2913
      %v2916 = vsel %vm539, %v2908, %v2915
      %v2917 = vrot.slane %v2912, 4
      %v2919 = vshrl.u32 %v2826, 16
      %v2921 = vrot.slane %v2919, 7
      %v2922 = vshll.u32 %v2826, 16
      %v2924 = vor.u32 %v2921, %v2922
      %v2925 = vrot.slane %v2921, 4
      %v2927 = vshrl.u32 %v2827, 16
      %v2929 = vrot.slane %v2927, 7
      %v2930 = vshll.u32 %v2827, 16
      %v2932 = vor.u32 %v2929, %v2930
      %v2933 = vsel %vm539, %v2925, %v2932
      %v2934 = vrot.slane %v2929, 4
      %v2936 = vshrl.u32 %v2828, 16
      %v2938 = vrot.slane %v2936, 7
      %v2939 = vshll.u32 %v2828, 16
      %v2941 = vor.u32 %v2938, %v2939
      %v2942 = vrot.slane %v2938, 4
      %v2944 = vshrl.u32 %v2829, 16
      %v2946 = vrot.slane %v2944, 7
      %v2947 = vshll.u32 %v2829, 16
      %v2949 = vor.u32 %v2946, %v2947
      %v2950 = vsel %vm539, %v2942, %v2949
      %v2951 = vrot.slane %v2946, 4
      %v2953 = vshrl.u32 %v2830, 16
      %v2955 = vrot.slane %v2953, 7
      %v2956 = vshll.u32 %v2830, 16
      %v2958 = vor.u32 %v2955, %v2956
      %v2959 = vrot.slane %v2955, 4
      %v2961 = vshrl.u32 %v2831, 16
      %v2963 = vrot.slane %v2961, 7
      %v2964 = vshll.u32 %v2831, 16
      %v2966 = vor.u32 %v2963, %v2964
      %v2967 = vsel %vm539, %v2959, %v2966
      %v2968 = vrot.slane %v2963, 4
      %v2970 = vshrl.u32 %v2832, 16
      %v2972 = vrot.slane %v2970, 7
      %v2973 = vshll.u32 %v2832, 16
      %v2975 = vor.u32 %v2972, %v2973
      %v2976 = vrot.slane %v2972, 4
      %v2978 = vshrl.u32 %v2833, 16
      %v2980 = vrot.slane %v2978, 7
      %v2981 = vshll.u32 %v2833, 16
      %v2983 = vor.u32 %v2980, %v2981
      %v2984 = vsel %vm539, %v2976, %v2983
      %v2985 = vrot.slane %v2980, 4
      %v2987 = vshrl.u32 %v2834, 16
      %v2989 = vrot.slane %v2987, 7
      %v2990 = vshll.u32 %v2834, 16
      %v2992 = vor.u32 %v2989, %v2990
      %v2993 = vrot.slane %v2989, 4
      %v2995 = vshrl.u32 %v2835, 16
      %v2997 = vrot.slane %v2995, 7
      %v2998 = vshll.u32 %v2835, 16
      %v3000 = vor.u32 %v2997, %v2998
      %v3001 = vsel %vm539, %v2993, %v3000
      %v3002 = vrot.slane %v2997, 4
      %v3004 = vshrl.u32 %v2836, 16
      %v3006 = vrot.slane %v3004, 7
      %v3007 = vshll.u32 %v2836, 16
      %v3009 = vor.u32 %v3006, %v3007
      %v3010 = vrot.slane %v3006, 4
      %v3012 = vshrl.u32 %v2837, 16
      %v3014 = vrot.slane %v3012, 7
      %v3015 = vshll.u32 %v2837, 16
      %v3017 = vor.u32 %v3014, %v3015
      %v3018 = vsel %vm539, %v3010, %v3017
      %v3019 = vrot.slane %v3014, 4
      %v3021 = vshrl.u32 %v2838, 16
      %v3023 = vrot.slane %v3021, 7
      %v3024 = vshll.u32 %v2838, 16
      %v3026 = vor.u32 %v3023, %v3024
      %v3027 = vrot.slane %v3023, 4
      %v3029 = vshrl.u32 %v2839, 16
      %v3031 = vrot.slane %v3029, 7
      %v3032 = vshll.u32 %v2839, 16
      %v3034 = vor.u32 %v3031, %v3032
      %v3035 = vsel %vm539, %v3027, %v3034
      %v3036 = vrot.slane %v3031, 4
      %v3038 = vshrl.u32 %v2840, 16
      %v3040 = vrot.slane %v3038, 7
      %v3041 = vshll.u32 %v2840, 16
      %v3043 = vor.u32 %v3040, %v3041
      %v3044 = vrot.slane %v3040, 4
      %v3046 = vshrl.u32 %v2841, 16
      %v3048 = vrot.slane %v3046, 7
      %v3049 = vshll.u32 %v2841, 16
      %v3051 = vor.u32 %v3048, %v3049
      %v3052 = vsel %vm539, %v3044, %v3051
      %v3053 = vrot.slane %v3048, 4
      %v3055 = vshrl.u32 %v2842, 16
      %v3057 = vrot.slane %v3055, 7
      %v3058 = vshll.u32 %v2842, 16
      %v3060 = vor.u32 %v3057, %v3058
      %v3061 = vrot.slane %v3057, 4
      %v3063 = vshrl.u32 %v2843, 16
      %v3065 = vrot.slane %v3063, 7
      %v3066 = vshll.u32 %v2843, 16
      %v3068 = vor.u32 %v3065, %v3066
      %v3069 = vsel %vm539, %v3061, %v3068
      %v3070 = vrot.slane %v3065, 4
      %v3072 = vshrl.u32 %v2844, 16
      %v3074 = vrot.slane %v3072, 7
      %v3075 = vshll.u32 %v2844, 16
      %v3077 = vor.u32 %v3074, %v3075
      %v3078 = vrot.slane %v3074, 4
      %v3080 = vshrl.u32 %v2845, 16
      %v3082 = vrot.slane %v3080, 7
      %v3083 = vshll.u32 %v2845, 16
      %v3085 = vor.u32 %v3082, %v3083
      %v3086 = vsel %vm539, %v3078, %v3085
      %v3087 = vrot.slane %v3082, 4
      %v3089 = vshrl.u32 %v2846, 16
      %v3091 = vrot.slane %v3089, 7
      %v3092 = vshll.u32 %v2846, 16
      %v3094 = vor.u32 %v3091, %v3092
      %v3095 = vrot.slane %v3091, 4
      %v3097 = vshrl.u32 %v2847, 16
      %v3099 = vrot.slane %v3097, 7
      %v3100 = vshll.u32 %v2847, 16
      %v3102 = vor.u32 %v3099, %v3100
      %v3103 = vsel %vm539, %v3095, %v3102
      %v3104 = vrot.slane %v3099, 4
      %v3106 = vshrl.u32 %v2848, 16
      %v3108 = vrot.slane %v3106, 7
      %v3109 = vshll.u32 %v2848, 16
      %v3111 = vor.u32 %v3108, %v3109
      %v3112 = vrot.slane %v3108, 4
      %v3114 = vshrl.u32 %v2849, 16
      %v3116 = vrot.slane %v3114, 7
      %v3117 = vshll.u32 %v2849, 16
      %v3119 = vor.u32 %v3116, %v3117
      %v3120 = vsel %vm539, %v3112, %v3119
      %v3121 = vrot.slane %v3116, 4
      %v3170 = vld [vmem:[%s860] sm:$0xf]
      %v3171 = vsel %vm863, %v2856, %v3170
      %3172 = vst [vmem:[%s860] sm:$0xf] %v3171
      %3173 = vst.msk [vmem:[%s860 + $0x4] sm:$0xf] %vm867, %v2865
      %v3174 = vld [vmem:[%s860 + $0x8] sm:$0x1]
      %v3175 = vsel %vm870, %v2866, %v3174
      %3176 = vst [vmem:[%s860 + $0x8] sm:$0x1] %v3175
      %v3177 = vld [vmem:[%s860 + $0xc] sm:$0xf]
      %v3178 = vsel %vm863, %v2873, %v3177
      %3179 = vst [vmem:[%s860 + $0xc] sm:$0xf] %v3178
      %3180 = vst.msk [vmem:[%s860 + $0x10] sm:$0xf] %vm867, %v2882
      %v3181 = vld [vmem:[%s860 + $0x14] sm:$0x1]
      %v3182 = vsel %vm870, %v2883, %v3181
      %3183 = vst [vmem:[%s860 + $0x14] sm:$0x1] %v3182
      %v3184 = vld [vmem:[%s860 + $0x18] sm:$0xf]
      %v3185 = vsel %vm863, %v2890, %v3184
      %3186 = vst [vmem:[%s860 + $0x18] sm:$0xf] %v3185
      %3187 = vst.msk [vmem:[%s860 + $0x1c] sm:$0xf] %vm867, %v2899
      %v3188 = vld [vmem:[%s860 + $0x20] sm:$0x1]
      %v3189 = vsel %vm870, %v2900, %v3188
      %3190 = vst [vmem:[%s860 + $0x20] sm:$0x1] %v3189
      %v3191 = vld [vmem:[%s860 + $0x24] sm:$0xf]
      %v3192 = vsel %vm863, %v2907, %v3191
      %3193 = vst [vmem:[%s860 + $0x24] sm:$0xf] %v3192
      %3194 = vst.msk [vmem:[%s860 + $0x28] sm:$0xf] %vm867, %v2916
      %v3195 = vld [vmem:[%s860 + $0x2c] sm:$0x1]
      %v3196 = vsel %vm870, %v2917, %v3195
      %3197 = vst [vmem:[%s860 + $0x2c] sm:$0x1] %v3196
      %v3198 = vld [vmem:[%s860 + $0x30] sm:$0xf]
      %v3199 = vsel %vm863, %v2924, %v3198
      %3200 = vst [vmem:[%s860 + $0x30] sm:$0xf] %v3199
      %3201 = vst.msk [vmem:[%s860 + $0x34] sm:$0xf] %vm867, %v2933
      %v3202 = vld [vmem:[%s860 + $0x38] sm:$0x1]
      %v3203 = vsel %vm870, %v2934, %v3202
      %3204 = vst [vmem:[%s860 + $0x38] sm:$0x1] %v3203
      %v3205 = vld [vmem:[%s860 + $0x3c] sm:$0xf]
      %v3206 = vsel %vm863, %v2941, %v3205
      %3207 = vst [vmem:[%s860 + $0x3c] sm:$0xf] %v3206
      %3208 = vst.msk [vmem:[%s860 + $0x40] sm:$0xf] %vm867, %v2950
      %v3209 = vld [vmem:[%s860 + $0x44] sm:$0x1]
      %v3210 = vsel %vm870, %v2951, %v3209
      %3211 = vst [vmem:[%s860 + $0x44] sm:$0x1] %v3210
      %v3212 = vld [vmem:[%s860 + $0x48] sm:$0xf]
      %v3213 = vsel %vm863, %v2958, %v3212
      %3214 = vst [vmem:[%s860 + $0x48] sm:$0xf] %v3213
      %3215 = vst.msk [vmem:[%s860 + $0x4c] sm:$0xf] %vm867, %v2967
      %v3216 = vld [vmem:[%s860 + $0x50] sm:$0x1]
      %v3217 = vsel %vm870, %v2968, %v3216
      %3218 = vst [vmem:[%s860 + $0x50] sm:$0x1] %v3217
      %v3219 = vld [vmem:[%s860 + $0x54] sm:$0xf]
      %v3220 = vsel %vm863, %v2975, %v3219
      %3221 = vst [vmem:[%s860 + $0x54] sm:$0xf] %v3220
      %3222 = vst.msk [vmem:[%s860 + $0x58] sm:$0xf] %vm867, %v2984
      %v3223 = vld [vmem:[%s860 + $0x5c] sm:$0x1]
      %v3224 = vsel %vm870, %v2985, %v3223
      %3225 = vst [vmem:[%s860 + $0x5c] sm:$0x1] %v3224
      %v3226 = vld [vmem:[%s860 + $0x60] sm:$0xf]
      %v3227 = vsel %vm863, %v2992, %v3226
      %3228 = vst [vmem:[%s860 + $0x60] sm:$0xf] %v3227
      %3229 = vst.msk [vmem:[%s860 + $0x64] sm:$0xf] %vm867, %v3001
      %v3230 = vld [vmem:[%s860 + $0x68] sm:$0x1]
      %v3231 = vsel %vm870, %v3002, %v3230
      %3232 = vst [vmem:[%s860 + $0x68] sm:$0x1] %v3231
      %v3233 = vld [vmem:[%s860 + $0x6c] sm:$0xf]
      %v3234 = vsel %vm863, %v3009, %v3233
      %3235 = vst [vmem:[%s860 + $0x6c] sm:$0xf] %v3234
      %3236 = vst.msk [vmem:[%s860 + $0x70] sm:$0xf] %vm867, %v3018
      %v3237 = vld [vmem:[%s860 + $0x74] sm:$0x1]
      %v3238 = vsel %vm870, %v3019, %v3237
      %3239 = vst [vmem:[%s860 + $0x74] sm:$0x1] %v3238
      %v3240 = vld [vmem:[%s860 + $0x78] sm:$0xf]
      %v3241 = vsel %vm863, %v3026, %v3240
      %3242 = vst [vmem:[%s860 + $0x78] sm:$0xf] %v3241
      %3243 = vst.msk [vmem:[%s860 + $0x7c] sm:$0xf] %vm867, %v3035
      %v3244 = vld [vmem:[%s860 + $0x80] sm:$0x1]
      %v3245 = vsel %vm870, %v3036, %v3244
      %3246 = vst [vmem:[%s860 + $0x80] sm:$0x1] %v3245
      %v3247 = vld [vmem:[%s860 + $0x84] sm:$0xf]
      %v3248 = vsel %vm863, %v3043, %v3247
      %3249 = vst [vmem:[%s860 + $0x84] sm:$0xf] %v3248
      %3250 = vst.msk [vmem:[%s860 + $0x88] sm:$0xf] %vm867, %v3052
      %v3251 = vld [vmem:[%s860 + $0x8c] sm:$0x1]
      %v3252 = vsel %vm870, %v3053, %v3251
      %3253 = vst [vmem:[%s860 + $0x8c] sm:$0x1] %v3252
      %v3254 = vld [vmem:[%s860 + $0x90] sm:$0xf]
      %v3255 = vsel %vm863, %v3060, %v3254
      %3256 = vst [vmem:[%s860 + $0x90] sm:$0xf] %v3255
      %3257 = vst.msk [vmem:[%s860 + $0x94] sm:$0xf] %vm867, %v3069
      %v3258 = vld [vmem:[%s860 + $0x98] sm:$0x1]
      %v3259 = vsel %vm870, %v3070, %v3258
      %3260 = vst [vmem:[%s860 + $0x98] sm:$0x1] %v3259
      %v3261 = vld [vmem:[%s860 + $0x9c] sm:$0xf]
      %v3262 = vsel %vm863, %v3077, %v3261
      %3263 = vst [vmem:[%s860 + $0x9c] sm:$0xf] %v3262
      %3264 = vst.msk [vmem:[%s860 + $0xa0] sm:$0xf] %vm867, %v3086
      %v3265 = vld [vmem:[%s860 + $0xa4] sm:$0x1]
      %v3266 = vsel %vm870, %v3087, %v3265
      %3267 = vst [vmem:[%s860 + $0xa4] sm:$0x1] %v3266
      %v3268 = vld [vmem:[%s860 + $0xa8] sm:$0xf]
      %v3269 = vsel %vm863, %v3094, %v3268
      %3270 = vst [vmem:[%s860 + $0xa8] sm:$0xf] %v3269
      %3271 = vst.msk [vmem:[%s860 + $0xac] sm:$0xf] %vm867, %v3103
      %v3272 = vld [vmem:[%s860 + $0xb0] sm:$0x1]
      %v3273 = vsel %vm870, %v3104, %v3272
      %3274 = vst [vmem:[%s860 + $0xb0] sm:$0x1] %v3273
      %v3275 = vld [vmem:[%s860 + $0xb4] sm:$0xf]
      %v3276 = vsel %vm863, %v3111, %v3275
      %3277 = vst [vmem:[%s860 + $0xb4] sm:$0xf] %v3276
      %3278 = vst.msk [vmem:[%s860 + $0xb8] sm:$0xf] %vm867, %v3120
      %v3279 = vld [vmem:[%s860 + $0xbc] sm:$0x1]
      %v3280 = vsel %vm870, %v3121, %v3279
      %3281 = vst [vmem:[%s860 + $0xbc] sm:$0x1] %v3280
      %v3282 = vld [vmem:[#allocation2] sm:$0xf]
      %v3283 = vld [vmem:[#allocation2 + $0x4] sm:$0xf]
      %v3284 = vld [vmem:[#allocation2 + $0x8] sm:$0x1]
      %v3285 = vld [vmem:[#allocation2 + $0xc] sm:$0xf]
      %v3286 = vld [vmem:[#allocation2 + $0x10] sm:$0xf]
      %v3287 = vld [vmem:[#allocation2 + $0x14] sm:$0x1]
      %v3288 = vld [vmem:[#allocation2 + $0x18] sm:$0xf]
      %v3289 = vld [vmem:[#allocation2 + $0x1c] sm:$0xf]
      %v3290 = vld [vmem:[#allocation2 + $0x20] sm:$0x1]
      %v3291 = vld [vmem:[#allocation2 + $0x24] sm:$0xf]
      %v3292 = vld [vmem:[#allocation2 + $0x28] sm:$0xf]
      %v3293 = vld [vmem:[#allocation2 + $0x2c] sm:$0x1]
      %v3294 = vld [vmem:[#allocation2 + $0x30] sm:$0xf]
      %v3295 = vld [vmem:[#allocation2 + $0x34] sm:$0xf]
      %v3296 = vld [vmem:[#allocation2 + $0x38] sm:$0x1]
      %v3297 = vld [vmem:[#allocation2 + $0x3c] sm:$0xf]
      %v3298 = vld [vmem:[#allocation2 + $0x40] sm:$0xf]
      %v3299 = vld [vmem:[#allocation2 + $0x44] sm:$0x1]
      %v3300 = vld [vmem:[#allocation2 + $0x48] sm:$0xf]
      %v3301 = vld [vmem:[#allocation2 + $0x4c] sm:$0xf]
      %v3302 = vld [vmem:[#allocation2 + $0x50] sm:$0x1]
      %v3303 = vld [vmem:[#allocation2 + $0x54] sm:$0xf]
      %v3304 = vld [vmem:[#allocation2 + $0x58] sm:$0xf]
      %v3305 = vld [vmem:[#allocation2 + $0x5c] sm:$0x1]
      %v3306 = vld [vmem:[#allocation2 + $0x60] sm:$0xf]
      %v3307 = vld [vmem:[#allocation2 + $0x64] sm:$0xf]
      %v3308 = vld [vmem:[#allocation2 + $0x68] sm:$0x1]
      %v3309 = vld [vmem:[#allocation2 + $0x6c] sm:$0xf]
      %v3310 = vld [vmem:[#allocation2 + $0x70] sm:$0xf]
      %v3311 = vld [vmem:[#allocation2 + $0x74] sm:$0x1]
      %v3312 = vld [vmem:[#allocation2 + $0x78] sm:$0xf]
      %v3313 = vld [vmem:[#allocation2 + $0x7c] sm:$0xf]
      %v3314 = vld [vmem:[#allocation2 + $0x80] sm:$0x1]
      %v3315 = vld [vmem:[#allocation2 + $0x84] sm:$0xf]
      %v3316 = vld [vmem:[#allocation2 + $0x88] sm:$0xf]
      %v3317 = vld [vmem:[#allocation2 + $0x8c] sm:$0x1]
      %v3318 = vld [vmem:[#allocation2 + $0x90] sm:$0xf]
      %v3319 = vld [vmem:[#allocation2 + $0x94] sm:$0xf]
      %v3320 = vld [vmem:[#allocation2 + $0x98] sm:$0x1]
      %v3321 = vld [vmem:[#allocation2 + $0x9c] sm:$0xf]
      %v3322 = vld [vmem:[#allocation2 + $0xa0] sm:$0xf]
      %v3323 = vld [vmem:[#allocation2 + $0xa4] sm:$0x1]
      %v3324 = vld [vmem:[#allocation2 + $0xa8] sm:$0xf]
      %v3325 = vld [vmem:[#allocation2 + $0xac] sm:$0xf]
      %v3326 = vld [vmem:[#allocation2 + $0xb0] sm:$0x1]
      %v3327 = vld [vmem:[#allocation2 + $0xb4] sm:$0xf]
      %v3328 = vld [vmem:[#allocation2 + $0xb8] sm:$0xf]
      %v3329 = vld [vmem:[#allocation2 + $0xbc] sm:$0x1]
      %v3330 = vld [vmem:[#allocation2 + $0xc0] sm:$0xf]
      %v3331 = vld [vmem:[#allocation2 + $0xc4] sm:$0xf]
      %v3332 = vld [vmem:[#allocation2 + $0xc8] sm:$0x1]
      %v3333 = vld [vmem:[#allocation2 + $0xcc] sm:$0xf]
      %v3334 = vld [vmem:[#allocation2 + $0xd0] sm:$0xf]
      %v3335 = vld [vmem:[#allocation2 + $0xd4] sm:$0x1]
      %v3337 = vshrl.u32 %v3282, 16
      %v3339 = vrot.slane %v3337, 4
      %v3340 = vshll.u32 %v3282, 16
      %v3342 = vrot.slane %v3340, 5
      %v3343 = vor.u32 %v3339, %v3342
      %v3344 = vrot.slane %v3343, 4
      %v3346 = vshll.u32 %v3283, 16
      %v3348 = vrot.slane %v3346, 5
      %v3349 = vsel %vm1035, %v3344, %v3348
      %v3350 = vshrl.u32 %v3283, 16
      %v3352 = vrot.slane %v3350, 4
      %v3353 = vor.u32 %v3352, %v3348
      %v3354 = vrot.slane %v3353, 4
      %v3356 = vshll.u32 %v3284, 16
      %v3358 = vrot.slane %v3356, 5
      %v3359 = vsel %vm1035, %v3354, %v3358
      %v3361 = vshrl.u32 %v3285, 16
      %v3363 = vrot.slane %v3361, 4
      %v3364 = vshll.u32 %v3285, 16
      %v3366 = vrot.slane %v3364, 5
      %v3367 = vor.u32 %v3363, %v3366
      %v3368 = vrot.slane %v3367, 4
      %v3370 = vshll.u32 %v3286, 16
      %v3372 = vrot.slane %v3370, 5
      %v3373 = vsel %vm1035, %v3368, %v3372
      %v3374 = vshrl.u32 %v3286, 16
      %v3376 = vrot.slane %v3374, 4
      %v3377 = vor.u32 %v3376, %v3372
      %v3378 = vrot.slane %v3377, 4
      %v3380 = vshll.u32 %v3287, 16
      %v3382 = vrot.slane %v3380, 5
      %v3383 = vsel %vm1035, %v3378, %v3382
      %v3385 = vshrl.u32 %v3288, 16
      %v3387 = vrot.slane %v3385, 4
      %v3388 = vshll.u32 %v3288, 16
      %v3390 = vrot.slane %v3388, 5
      %v3391 = vor.u32 %v3387, %v3390
      %v3392 = vrot.slane %v3391, 4
      %v3394 = vshll.u32 %v3289, 16
      %v3396 = vrot.slane %v3394, 5
      %v3397 = vsel %vm1035, %v3392, %v3396
      %v3398 = vshrl.u32 %v3289, 16
      %v3400 = vrot.slane %v3398, 4
      %v3401 = vor.u32 %v3400, %v3396
      %v3402 = vrot.slane %v3401, 4
      %v3404 = vshll.u32 %v3290, 16
      %v3406 = vrot.slane %v3404, 5
      %v3407 = vsel %vm1035, %v3402, %v3406
      %v3409 = vshrl.u32 %v3291, 16
      %v3411 = vrot.slane %v3409, 4
      %v3412 = vshll.u32 %v3291, 16
      %v3414 = vrot.slane %v3412, 5
      %v3415 = vor.u32 %v3411, %v3414
      %v3416 = vrot.slane %v3415, 4
      %v3418 = vshll.u32 %v3292, 16
      %v3420 = vrot.slane %v3418, 5
      %v3421 = vsel %vm1035, %v3416, %v3420
      %v3422 = vshrl.u32 %v3292, 16
      %v3424 = vrot.slane %v3422, 4
      %v3425 = vor.u32 %v3424, %v3420
      %v3426 = vrot.slane %v3425, 4
      %v3428 = vshll.u32 %v3293, 16
      %v3430 = vrot.slane %v3428, 5
      %v3431 = vsel %vm1035, %v3426, %v3430
      %v3433 = vshrl.u32 %v3294, 16
      %v3435 = vrot.slane %v3433, 4
      %v3436 = vshll.u32 %v3294, 16
      %v3438 = vrot.slane %v3436, 5
      %v3439 = vor.u32 %v3435, %v3438
      %v3440 = vrot.slane %v3439, 4
      %v3442 = vshll.u32 %v3295, 16
      %v3444 = vrot.slane %v3442, 5
      %v3445 = vsel %vm1035, %v3440, %v3444
      %v3446 = vshrl.u32 %v3295, 16
      %v3448 = vrot.slane %v3446, 4
      %v3449 = vor.u32 %v3448, %v3444
      %v3450 = vrot.slane %v3449, 4
      %v3452 = vshll.u32 %v3296, 16
      %v3454 = vrot.slane %v3452, 5
      %v3455 = vsel %vm1035, %v3450, %v3454
      %v3457 = vshrl.u32 %v3297, 16
      %v3459 = vrot.slane %v3457, 4
      %v3460 = vshll.u32 %v3297, 16
      %v3462 = vrot.slane %v3460, 5
      %v3463 = vor.u32 %v3459, %v3462
      %v3464 = vrot.slane %v3463, 4
      %v3466 = vshll.u32 %v3298, 16
      %v3468 = vrot.slane %v3466, 5
      %v3469 = vsel %vm1035, %v3464, %v3468
      %v3470 = vshrl.u32 %v3298, 16
      %v3472 = vrot.slane %v3470, 4
      %v3473 = vor.u32 %v3472, %v3468
      %v3474 = vrot.slane %v3473, 4
      %v3476 = vshll.u32 %v3299, 16
      %v3478 = vrot.slane %v3476, 5
      %v3479 = vsel %vm1035, %v3474, %v3478
      %v3481 = vshrl.u32 %v3300, 16
      %v3483 = vrot.slane %v3481, 4
      %v3484 = vshll.u32 %v3300, 16
      %v3486 = vrot.slane %v3484, 5
      %v3487 = vor.u32 %v3483, %v3486
      %v3488 = vrot.slane %v3487, 4
      %v3490 = vshll.u32 %v3301, 16
      %v3492 = vrot.slane %v3490, 5
      %v3493 = vsel %vm1035, %v3488, %v3492
      %v3494 = vshrl.u32 %v3301, 16
      %v3496 = vrot.slane %v3494, 4
      %v3497 = vor.u32 %v3496, %v3492
      %v3498 = vrot.slane %v3497, 4
      %v3500 = vshll.u32 %v3302, 16
      %v3502 = vrot.slane %v3500, 5
      %v3503 = vsel %vm1035, %v3498, %v3502
      %v3505 = vshrl.u32 %v3303, 16
      %v3507 = vrot.slane %v3505, 4
      %v3508 = vshll.u32 %v3303, 16
      %v3510 = vrot.slane %v3508, 5
      %v3511 = vor.u32 %v3507, %v3510
      %v3512 = vrot.slane %v3511, 4
      %v3514 = vshll.u32 %v3304, 16
      %v3516 = vrot.slane %v3514, 5
      %v3517 = vsel %vm1035, %v3512, %v3516
      %v3518 = vshrl.u32 %v3304, 16
      %v3520 = vrot.slane %v3518, 4
      %v3521 = vor.u32 %v3520, %v3516
      %v3522 = vrot.slane %v3521, 4
      %v3524 = vshll.u32 %v3305, 16
      %v3526 = vrot.slane %v3524, 5
      %v3527 = vsel %vm1035, %v3522, %v3526
      %v3529 = vshrl.u32 %v3306, 16
      %v3531 = vrot.slane %v3529, 4
      %v3532 = vshll.u32 %v3306, 16
      %v3534 = vrot.slane %v3532, 5
      %v3535 = vor.u32 %v3531, %v3534
      %v3536 = vrot.slane %v3535, 4
      %v3538 = vshll.u32 %v3307, 16
      %v3540 = vrot.slane %v3538, 5
      %v3541 = vsel %vm1035, %v3536, %v3540
      %v3542 = vshrl.u32 %v3307, 16
      %v3544 = vrot.slane %v3542, 4
      %v3545 = vor.u32 %v3544, %v3540
      %v3546 = vrot.slane %v3545, 4
      %v3548 = vshll.u32 %v3308, 16
      %v3550 = vrot.slane %v3548, 5
      %v3551 = vsel %vm1035, %v3546, %v3550
      %v3553 = vshrl.u32 %v3309, 16
      %v3555 = vrot.slane %v3553, 4
      %v3556 = vshll.u32 %v3309, 16
      %v3558 = vrot.slane %v3556, 5
      %v3559 = vor.u32 %v3555, %v3558
      %v3560 = vrot.slane %v3559, 4
      %v3562 = vshll.u32 %v3310, 16
      %v3564 = vrot.slane %v3562, 5
      %v3565 = vsel %vm1035, %v3560, %v3564
      %v3566 = vshrl.u32 %v3310, 16
      %v3568 = vrot.slane %v3566, 4
      %v3569 = vor.u32 %v3568, %v3564
      %v3570 = vrot.slane %v3569, 4
      %v3572 = vshll.u32 %v3311, 16
      %v3574 = vrot.slane %v3572, 5
      %v3575 = vsel %vm1035, %v3570, %v3574
      %v3577 = vshrl.u32 %v3312, 16
      %v3579 = vrot.slane %v3577, 4
      %v3580 = vshll.u32 %v3312, 16
      %v3582 = vrot.slane %v3580, 5
      %v3583 = vor.u32 %v3579, %v3582
      %v3584 = vrot.slane %v3583, 4
      %v3586 = vshll.u32 %v3313, 16
      %v3588 = vrot.slane %v3586, 5
      %v3589 = vsel %vm1035, %v3584, %v3588
      %v3590 = vshrl.u32 %v3313, 16
      %v3592 = vrot.slane %v3590, 4
      %v3593 = vor.u32 %v3592, %v3588
      %v3594 = vrot.slane %v3593, 4
      %v3596 = vshll.u32 %v3314, 16
      %v3598 = vrot.slane %v3596, 5
      %v3599 = vsel %vm1035, %v3594, %v3598
      %v3601 = vshrl.u32 %v3315, 16
      %v3603 = vrot.slane %v3601, 4
      %v3604 = vshll.u32 %v3315, 16
      %v3606 = vrot.slane %v3604, 5
      %v3607 = vor.u32 %v3603, %v3606
      %v3608 = vrot.slane %v3607, 4
      %v3610 = vshll.u32 %v3316, 16
      %v3612 = vrot.slane %v3610, 5
      %v3613 = vsel %vm1035, %v3608, %v3612
      %v3614 = vshrl.u32 %v3316, 16
      %v3616 = vrot.slane %v3614, 4
      %v3617 = vor.u32 %v3616, %v3612
      %v3618 = vrot.slane %v3617, 4
      %v3620 = vshll.u32 %v3317, 16
      %v3622 = vrot.slane %v3620, 5
      %v3623 = vsel %vm1035, %v3618, %v3622
      %v3625 = vshrl.u32 %v3318, 16
      %v3627 = vrot.slane %v3625, 4
      %v3628 = vshll.u32 %v3318, 16
      %v3630 = vrot.slane %v3628, 5
      %v3631 = vor.u32 %v3627, %v3630
      %v3632 = vrot.slane %v3631, 4
      %v3634 = vshll.u32 %v3319, 16
      %v3636 = vrot.slane %v3634, 5
      %v3637 = vsel %vm1035, %v3632, %v3636
      %v3638 = vshrl.u32 %v3319, 16
      %v3640 = vrot.slane %v3638, 4
      %v3641 = vor.u32 %v3640, %v3636
      %v3642 = vrot.slane %v3641, 4
      %v3644 = vshll.u32 %v3320, 16
      %v3646 = vrot.slane %v3644, 5
      %v3647 = vsel %vm1035, %v3642, %v3646
      %v3649 = vshrl.u32 %v3321, 16
      %v3651 = vrot.slane %v3649, 4
      %v3652 = vshll.u32 %v3321, 16
      %v3654 = vrot.slane %v3652, 5
      %v3655 = vor.u32 %v3651, %v3654
      %v3656 = vrot.slane %v3655, 4
      %v3658 = vshll.u32 %v3322, 16
      %v3660 = vrot.slane %v3658, 5
      %v3661 = vsel %vm1035, %v3656, %v3660
      %v3662 = vshrl.u32 %v3322, 16
      %v3664 = vrot.slane %v3662, 4
      %v3665 = vor.u32 %v3664, %v3660
      %v3666 = vrot.slane %v3665, 4
      %v3668 = vshll.u32 %v3323, 16
      %v3670 = vrot.slane %v3668, 5
      %v3671 = vsel %vm1035, %v3666, %v3670
      %v3673 = vshrl.u32 %v3324, 16
      %v3675 = vrot.slane %v3673, 4
      %v3676 = vshll.u32 %v3324, 16
      %v3678 = vrot.slane %v3676, 5
      %v3679 = vor.u32 %v3675, %v3678
      %v3680 = vrot.slane %v3679, 4
      %v3682 = vshll.u32 %v3325, 16
      %v3684 = vrot.slane %v3682, 5
      %v3685 = vsel %vm1035, %v3680, %v3684
      %v3686 = vshrl.u32 %v3325, 16
      %v3688 = vrot.slane %v3686, 4
      %v3689 = vor.u32 %v3688, %v3684
      %v3690 = vrot.slane %v3689, 4
      %v3692 = vshll.u32 %v3326, 16
      %v3694 = vrot.slane %v3692, 5
      %v3695 = vsel %vm1035, %v3690, %v3694
      %v3697 = vshrl.u32 %v3327, 16
      %v3699 = vrot.slane %v3697, 4
      %v3700 = vshll.u32 %v3327, 16
      %v3702 = vrot.slane %v3700, 5
      %v3703 = vor.u32 %v3699, %v3702
      %v3704 = vrot.slane %v3703, 4
      %v3706 = vshll.u32 %v3328, 16
      %v3708 = vrot.slane %v3706, 5
      %v3709 = vsel %vm1035, %v3704, %v3708
      %v3710 = vshrl.u32 %v3328, 16
      %v3712 = vrot.slane %v3710, 4
      %v3713 = vor.u32 %v3712, %v3708
      %v3714 = vrot.slane %v3713, 4
      %v3716 = vshll.u32 %v3329, 16
      %v3718 = vrot.slane %v3716, 5
      %v3719 = vsel %vm1035, %v3714, %v3718
      %v3721 = vshrl.u32 %v3330, 16
      %v3723 = vrot.slane %v3721, 4
      %v3724 = vshll.u32 %v3330, 16
      %v3726 = vrot.slane %v3724, 5
      %v3727 = vor.u32 %v3723, %v3726
      %v3728 = vrot.slane %v3727, 4
      %v3730 = vshll.u32 %v3331, 16
      %v3732 = vrot.slane %v3730, 5
      %v3733 = vsel %vm1035, %v3728, %v3732
      %v3734 = vshrl.u32 %v3331, 16
      %v3736 = vrot.slane %v3734, 4
      %v3737 = vor.u32 %v3736, %v3732
      %v3738 = vrot.slane %v3737, 4
      %v3740 = vshll.u32 %v3332, 16
      %v3742 = vrot.slane %v3740, 5
      %v3743 = vsel %vm1035, %v3738, %v3742
      %v3745 = vshrl.u32 %v3333, 16
      %v3747 = vrot.slane %v3745, 4
      %v3748 = vshll.u32 %v3333, 16
      %v3750 = vrot.slane %v3748, 5
      %v3751 = vor.u32 %v3747, %v3750
      %v3752 = vrot.slane %v3751, 4
      %v3754 = vshll.u32 %v3334, 16
      %v3756 = vrot.slane %v3754, 5
      %v3757 = vsel %vm1035, %v3752, %v3756
      %v3758 = vshrl.u32 %v3334, 16
      %v3760 = vrot.slane %v3758, 4
      %v3761 = vor.u32 %v3760, %v3756
      %v3762 = vrot.slane %v3761, 4
      %v3764 = vshll.u32 %v3335, 16
      %v3766 = vrot.slane %v3764, 5
      %v3767 = vsel %vm1035, %v3762, %v3766
      %v3822 = vrot.slane %v3282, 5
      %v3823 = vrot.slane %v3822, 4
      %v3824 = vrot.slane %v3283, 5
      %v3825 = vsel %vm1524, %v3823, %v3824
      %v3826 = vrot.slane %v3824, 4
      %v3827 = vrot.slane %v3284, 5
      %v3828 = vsel %vm1524, %v3826, %v3827
      %v3829 = vrot.slane %v3285, 5
      %v3830 = vrot.slane %v3829, 4
      %v3831 = vrot.slane %v3286, 5
      %v3832 = vsel %vm1524, %v3830, %v3831
      %v3833 = vrot.slane %v3831, 4
      %v3834 = vrot.slane %v3287, 5
      %v3835 = vsel %vm1524, %v3833, %v3834
      %v3836 = vrot.slane %v3288, 5
      %v3837 = vrot.slane %v3836, 4
      %v3838 = vrot.slane %v3289, 5
      %v3839 = vsel %vm1524, %v3837, %v3838
      %v3840 = vrot.slane %v3838, 4
      %v3841 = vrot.slane %v3290, 5
      %v3842 = vsel %vm1524, %v3840, %v3841
      %v3843 = vrot.slane %v3291, 5
      %v3844 = vrot.slane %v3843, 4
      %v3845 = vrot.slane %v3292, 5
      %v3846 = vsel %vm1524, %v3844, %v3845
      %v3847 = vrot.slane %v3845, 4
      %v3848 = vrot.slane %v3293, 5
      %v3849 = vsel %vm1524, %v3847, %v3848
      %v3850 = vrot.slane %v3294, 5
      %v3851 = vrot.slane %v3850, 4
      %v3852 = vrot.slane %v3295, 5
      %v3853 = vsel %vm1524, %v3851, %v3852
      %v3854 = vrot.slane %v3852, 4
      %v3855 = vrot.slane %v3296, 5
      %v3856 = vsel %vm1524, %v3854, %v3855
      %v3857 = vrot.slane %v3297, 5
      %v3858 = vrot.slane %v3857, 4
      %v3859 = vrot.slane %v3298, 5
      %v3860 = vsel %vm1524, %v3858, %v3859
      %v3861 = vrot.slane %v3859, 4
      %v3862 = vrot.slane %v3299, 5
      %v3863 = vsel %vm1524, %v3861, %v3862
      %v3864 = vrot.slane %v3300, 5
      %v3865 = vrot.slane %v3864, 4
      %v3866 = vrot.slane %v3301, 5
      %v3867 = vsel %vm1524, %v3865, %v3866
      %v3868 = vrot.slane %v3866, 4
      %v3869 = vrot.slane %v3302, 5
      %v3870 = vsel %vm1524, %v3868, %v3869
      %v3871 = vrot.slane %v3303, 5
      %v3872 = vrot.slane %v3871, 4
      %v3873 = vrot.slane %v3304, 5
      %v3874 = vsel %vm1524, %v3872, %v3873
      %v3875 = vrot.slane %v3873, 4
      %v3876 = vrot.slane %v3305, 5
      %v3877 = vsel %vm1524, %v3875, %v3876
      %v3878 = vrot.slane %v3306, 5
      %v3879 = vrot.slane %v3878, 4
      %v3880 = vrot.slane %v3307, 5
      %v3881 = vsel %vm1524, %v3879, %v3880
      %v3882 = vrot.slane %v3880, 4
      %v3883 = vrot.slane %v3308, 5
      %v3884 = vsel %vm1524, %v3882, %v3883
      %v3885 = vrot.slane %v3309, 5
      %v3886 = vrot.slane %v3885, 4
      %v3887 = vrot.slane %v3310, 5
      %v3888 = vsel %vm1524, %v3886, %v3887
      %v3889 = vrot.slane %v3887, 4
      %v3890 = vrot.slane %v3311, 5
      %v3891 = vsel %vm1524, %v3889, %v3890
      %v3892 = vrot.slane %v3312, 5
      %v3893 = vrot.slane %v3892, 4
      %v3894 = vrot.slane %v3313, 5
      %v3895 = vsel %vm1524, %v3893, %v3894
      %v3896 = vrot.slane %v3894, 4
      %v3897 = vrot.slane %v3314, 5
      %v3898 = vsel %vm1524, %v3896, %v3897
      %v3899 = vrot.slane %v3315, 5
      %v3900 = vrot.slane %v3899, 4
      %v3901 = vrot.slane %v3316, 5
      %v3902 = vsel %vm1524, %v3900, %v3901
      %v3903 = vrot.slane %v3901, 4
      %v3904 = vrot.slane %v3317, 5
      %v3905 = vsel %vm1524, %v3903, %v3904
      %v3906 = vrot.slane %v3318, 5
      %v3907 = vrot.slane %v3906, 4
      %v3908 = vrot.slane %v3319, 5
      %v3909 = vsel %vm1524, %v3907, %v3908
      %v3910 = vrot.slane %v3908, 4
      %v3911 = vrot.slane %v3320, 5
      %v3912 = vsel %vm1524, %v3910, %v3911
      %v3913 = vrot.slane %v3321, 5
      %v3914 = vrot.slane %v3913, 4
      %v3915 = vrot.slane %v3322, 5
      %v3916 = vsel %vm1524, %v3914, %v3915
      %v3917 = vrot.slane %v3915, 4
      %v3918 = vrot.slane %v3323, 5
      %v3919 = vsel %vm1524, %v3917, %v3918
      %v3920 = vrot.slane %v3324, 5
      %v3921 = vrot.slane %v3920, 4
      %v3922 = vrot.slane %v3325, 5
      %v3923 = vsel %vm1524, %v3921, %v3922
      %v3924 = vrot.slane %v3922, 4
      %v3925 = vrot.slane %v3326, 5
      %v3926 = vsel %vm1524, %v3924, %v3925
      %v3927 = vrot.slane %v3327, 5
      %v3928 = vrot.slane %v3927, 4
      %v3929 = vrot.slane %v3328, 5
      %v3930 = vsel %vm1524, %v3928, %v3929
      %v3931 = vrot.slane %v3929, 4
      %v3932 = vrot.slane %v3329, 5
      %v3933 = vsel %vm1524, %v3931, %v3932
      %v3934 = vrot.slane %v3330, 5
      %v3935 = vrot.slane %v3934, 4
      %v3936 = vrot.slane %v3331, 5
      %v3937 = vsel %vm1524, %v3935, %v3936
      %v3938 = vrot.slane %v3936, 4
      %v3939 = vrot.slane %v3332, 5
      %v3940 = vsel %vm1524, %v3938, %v3939
      %v3941 = vrot.slane %v3333, 5
      %v3942 = vrot.slane %v3941, 4
      %v3943 = vrot.slane %v3334, 5
      %v3944 = vsel %vm1524, %v3942, %v3943
      %v3945 = vrot.slane %v3943, 4
      %v3946 = vrot.slane %v3335, 5
      %v3947 = vsel %vm1524, %v3945, %v3946
      %v3948 = vunpack.c.l.b16 %v3282
      %v3949 = vunpack.c.l.b16 %v3283
      %v3950 = vunpack.c.l.b16 %v3285
      %v3951 = vunpack.c.l.b16 %v3286
      %v3952 = vunpack.c.l.b16 %v3288
      %v3953 = vunpack.c.l.b16 %v3289
      %v3954 = vunpack.c.l.b16 %v3291
      %v3955 = vunpack.c.l.b16 %v3292
      %v3956 = vunpack.c.l.b16 %v3294
      %v3957 = vunpack.c.l.b16 %v3295
      %v3958 = vunpack.c.l.b16 %v3297
      %v3959 = vunpack.c.l.b16 %v3298
      %v3960 = vunpack.c.l.b16 %v3300
      %v3961 = vunpack.c.l.b16 %v3301
      %v3962 = vunpack.c.l.b16 %v3303
      %v3963 = vunpack.c.l.b16 %v3304
      %v3964 = vunpack.c.l.b16 %v3306
      %v3965 = vunpack.c.l.b16 %v3307
      %v3966 = vunpack.c.l.b16 %v3309
      %v3967 = vunpack.c.l.b16 %v3310
      %v3968 = vunpack.c.l.b16 %v3312
      %v3969 = vunpack.c.l.b16 %v3313
      %v3970 = vunpack.c.l.b16 %v3315
      %v3971 = vunpack.c.l.b16 %v3316
      %v3972 = vunpack.c.l.b16 %v3318
      %v3973 = vunpack.c.l.b16 %v3319
      %v3974 = vunpack.c.l.b16 %v3321
      %v3975 = vunpack.c.l.b16 %v3322
      %v3976 = vunpack.c.l.b16 %v3324
      %v3977 = vunpack.c.l.b16 %v3325
      %v3978 = vunpack.c.l.b16 %v3327
      %v3979 = vunpack.c.l.b16 %v3328
      %v3980 = vunpack.c.l.b16 %v3330
      %v3981 = vunpack.c.l.b16 %v3331
      %v3982 = vunpack.c.l.b16 %v3333
      %v3983 = vunpack.c.l.b16 %v3334
      %v3984 = vpack.c.b16 %v3949, %v3948
      %v3985 = vpack.c.b16 %v3951, %v3950
      %v3986 = vpack.c.b16 %v3953, %v3952
      %v3987 = vpack.c.b16 %v3955, %v3954
      %v3988 = vpack.c.b16 %v3957, %v3956
      %v3989 = vpack.c.b16 %v3959, %v3958
      %v3990 = vpack.c.b16 %v3961, %v3960
      %v3991 = vpack.c.b16 %v3963, %v3962
      %v3992 = vpack.c.b16 %v3965, %v3964
      %v3993 = vpack.c.b16 %v3967, %v3966
      %v3994 = vpack.c.b16 %v3969, %v3968
      %v3995 = vpack.c.b16 %v3971, %v3970
      %v3996 = vpack.c.b16 %v3973, %v3972
      %v3997 = vpack.c.b16 %v3975, %v3974
      %v3998 = vpack.c.b16 %v3977, %v3976
      %v3999 = vpack.c.b16 %v3979, %v3978
      %v4000 = vpack.c.b16 %v3981, %v3980
      %v4001 = vpack.c.b16 %v3983, %v3982
      %v4002 = vunpack.c.l.b16 %v3349
      %v4003 = vunpack.c.l.b16 %v3359
      %v4004 = vunpack.c.l.b16 %v3373
      %v4005 = vunpack.c.l.b16 %v3383
      %v4006 = vunpack.c.l.b16 %v3397
      %v4007 = vunpack.c.l.b16 %v3407
      %v4008 = vunpack.c.l.b16 %v3421
      %v4009 = vunpack.c.l.b16 %v3431
      %v4010 = vunpack.c.l.b16 %v3445
      %v4011 = vunpack.c.l.b16 %v3455
      %v4012 = vunpack.c.l.b16 %v3469
      %v4013 = vunpack.c.l.b16 %v3479
      %v4014 = vunpack.c.l.b16 %v3493
      %v4015 = vunpack.c.l.b16 %v3503
      %v4016 = vunpack.c.l.b16 %v3517
      %v4017 = vunpack.c.l.b16 %v3527
      %v4018 = vunpack.c.l.b16 %v3541
      %v4019 = vunpack.c.l.b16 %v3551
      %v4020 = vunpack.c.l.b16 %v3565
      %v4021 = vunpack.c.l.b16 %v3575
      %v4022 = vunpack.c.l.b16 %v3589
      %v4023 = vunpack.c.l.b16 %v3599
      %v4024 = vunpack.c.l.b16 %v3613
      %v4025 = vunpack.c.l.b16 %v3623
      %v4026 = vunpack.c.l.b16 %v3637
      %v4027 = vunpack.c.l.b16 %v3647
      %v4028 = vunpack.c.l.b16 %v3661
      %v4029 = vunpack.c.l.b16 %v3671
      %v4030 = vunpack.c.l.b16 %v3685
      %v4031 = vunpack.c.l.b16 %v3695
      %v4032 = vunpack.c.l.b16 %v3709
      %v4033 = vunpack.c.l.b16 %v3719
      %v4034 = vunpack.c.l.b16 %v3733
      %v4035 = vunpack.c.l.b16 %v3743
      %v4036 = vunpack.c.l.b16 %v3757
      %v4037 = vunpack.c.l.b16 %v3767
      %v4038 = vpack.c.b16 %v4003, %v4002
      %v4039 = vpack.c.b16 %v4005, %v4004
      %v4040 = vpack.c.b16 %v4007, %v4006
      %v4041 = vpack.c.b16 %v4009, %v4008
      %v4042 = vpack.c.b16 %v4011, %v4010
      %v4043 = vpack.c.b16 %v4013, %v4012
      %v4044 = vpack.c.b16 %v4015, %v4014
      %v4045 = vpack.c.b16 %v4017, %v4016
      %v4046 = vpack.c.b16 %v4019, %v4018
      %v4047 = vpack.c.b16 %v4021, %v4020
      %v4048 = vpack.c.b16 %v4023, %v4022
      %v4049 = vpack.c.b16 %v4025, %v4024
      %v4050 = vpack.c.b16 %v4027, %v4026
      %v4051 = vpack.c.b16 %v4029, %v4028
      %v4052 = vpack.c.b16 %v4031, %v4030
      %v4053 = vpack.c.b16 %v4033, %v4032
      %v4054 = vpack.c.b16 %v4035, %v4034
      %v4055 = vpack.c.b16 %v4037, %v4036
      %4056 = vrot.lane.b32.xlu0 %v4038, 32
      %v4057 = vpop.permute.xlu0 %4056
      %4058 = vrot.lane.b32.xlu0 %v4039, 32
      %v4059 = vpop.permute.xlu0 %4058
      %4060 = vrot.lane.b32.xlu0 %v4040, 32
      %v4061 = vpop.permute.xlu0 %4060
      %4062 = vrot.lane.b32.xlu0 %v4041, 32
      %v4063 = vpop.permute.xlu0 %4062
      %4064 = vrot.lane.b32.xlu0 %v4042, 32
      %v4065 = vpop.permute.xlu0 %4064
      %4066 = vrot.lane.b32.xlu0 %v4043, 32
      %v4067 = vpop.permute.xlu0 %4066
      %4068 = vrot.lane.b32.xlu0 %v4044, 32
      %v4069 = vpop.permute.xlu0 %4068
      %4070 = vrot.lane.b32.xlu0 %v4045, 32
      %v4071 = vpop.permute.xlu0 %4070
      %4072 = vrot.lane.b32.xlu0 %v4046, 32
      %v4073 = vpop.permute.xlu0 %4072
      %4074 = vrot.lane.b32.xlu0 %v4047, 32
      %v4075 = vpop.permute.xlu0 %4074
      %4076 = vrot.lane.b32.xlu0 %v4048, 32
      %v4077 = vpop.permute.xlu0 %4076
      %4078 = vrot.lane.b32.xlu0 %v4049, 32
      %v4079 = vpop.permute.xlu0 %4078
      %4080 = vrot.lane.b32.xlu0 %v4050, 32
      %v4081 = vpop.permute.xlu0 %4080
      %4082 = vrot.lane.b32.xlu0 %v4051, 32
      %v4083 = vpop.permute.xlu0 %4082
      %4084 = vrot.lane.b32.xlu0 %v4052, 32
      %v4085 = vpop.permute.xlu0 %4084
      %4086 = vrot.lane.b32.xlu0 %v4053, 32
      %v4087 = vpop.permute.xlu0 %4086
      %4088 = vrot.lane.b32.xlu0 %v4054, 32
      %v4089 = vpop.permute.xlu0 %4088
      %4090 = vrot.lane.b32.xlu0 %v4055, 32
      %v4091 = vpop.permute.xlu0 %4090
      %v4092 = vunpack.c.l.b16 %v3825
      %v4093 = vunpack.c.l.b16 %v3828
      %v4094 = vunpack.c.l.b16 %v3832
      %v4095 = vunpack.c.l.b16 %v3835
      %v4096 = vunpack.c.l.b16 %v3839
      %v4097 = vunpack.c.l.b16 %v3842
      %v4098 = vunpack.c.l.b16 %v3846
      %v4099 = vunpack.c.l.b16 %v3849
      %v4100 = vunpack.c.l.b16 %v3853
      %v4101 = vunpack.c.l.b16 %v3856
      %v4102 = vunpack.c.l.b16 %v3860
      %v4103 = vunpack.c.l.b16 %v3863
      %v4104 = vunpack.c.l.b16 %v3867
      %v4105 = vunpack.c.l.b16 %v3870
      %v4106 = vunpack.c.l.b16 %v3874
      %v4107 = vunpack.c.l.b16 %v3877
      %v4108 = vunpack.c.l.b16 %v3881
      %v4109 = vunpack.c.l.b16 %v3884
      %v4110 = vunpack.c.l.b16 %v3888
      %v4111 = vunpack.c.l.b16 %v3891
      %v4112 = vunpack.c.l.b16 %v3895
      %v4113 = vunpack.c.l.b16 %v3898
      %v4114 = vunpack.c.l.b16 %v3902
      %v4115 = vunpack.c.l.b16 %v3905
      %v4116 = vunpack.c.l.b16 %v3909
      %v4117 = vunpack.c.l.b16 %v3912
      %v4118 = vunpack.c.l.b16 %v3916
      %v4119 = vunpack.c.l.b16 %v3919
      %v4120 = vunpack.c.l.b16 %v3923
      %v4121 = vunpack.c.l.b16 %v3926
      %v4122 = vunpack.c.l.b16 %v3930
      %v4123 = vunpack.c.l.b16 %v3933
      %v4124 = vunpack.c.l.b16 %v3937
      %v4125 = vunpack.c.l.b16 %v3940
      %v4126 = vunpack.c.l.b16 %v3944
      %v4127 = vunpack.c.l.b16 %v3947
      %v4128 = vpack.c.b16 %v4093, %v4092
      %v4129 = vpack.c.b16 %v4095, %v4094
      %v4130 = vpack.c.b16 %v4097, %v4096
      %v4131 = vpack.c.b16 %v4099, %v4098
      %v4132 = vpack.c.b16 %v4101, %v4100
      %v4133 = vpack.c.b16 %v4103, %v4102
      %v4134 = vpack.c.b16 %v4105, %v4104
      %v4135 = vpack.c.b16 %v4107, %v4106
      %v4136 = vpack.c.b16 %v4109, %v4108
      %v4137 = vpack.c.b16 %v4111, %v4110
      %v4138 = vpack.c.b16 %v4113, %v4112
      %v4139 = vpack.c.b16 %v4115, %v4114
      %v4140 = vpack.c.b16 %v4117, %v4116
      %v4141 = vpack.c.b16 %v4119, %v4118
      %v4142 = vpack.c.b16 %v4121, %v4120
      %v4143 = vpack.c.b16 %v4123, %v4122
      %v4144 = vpack.c.b16 %v4125, %v4124
      %v4145 = vpack.c.b16 %v4127, %v4126
      %4146 = vrot.lane.b32.xlu0 %v4128, 64
      %v4147 = vpop.permute.xlu0 %4146
      %4148 = vrot.lane.b32.xlu0 %v4129, 64
      %v4149 = vpop.permute.xlu0 %4148
      %4150 = vrot.lane.b32.xlu0 %v4130, 64
      %v4151 = vpop.permute.xlu0 %4150
      %4152 = vrot.lane.b32.xlu0 %v4131, 64
      %v4153 = vpop.permute.xlu0 %4152
      %4154 = vrot.lane.b32.xlu0 %v4132, 64
      %v4155 = vpop.permute.xlu0 %4154
      %4156 = vrot.lane.b32.xlu0 %v4133, 64
      %v4157 = vpop.permute.xlu0 %4156
      %4158 = vrot.lane.b32.xlu0 %v4134, 64
      %v4159 = vpop.permute.xlu0 %4158
      %4160 = vrot.lane.b32.xlu0 %v4135, 64
      %v4161 = vpop.permute.xlu0 %4160
      %4162 = vrot.lane.b32.xlu0 %v4136, 64
      %v4163 = vpop.permute.xlu0 %4162
      %4164 = vrot.lane.b32.xlu0 %v4137, 64
      %v4165 = vpop.permute.xlu0 %4164
      %4166 = vrot.lane.b32.xlu0 %v4138, 64
      %v4167 = vpop.permute.xlu0 %4166
      %4168 = vrot.lane.b32.xlu0 %v4139, 64
      %v4169 = vpop.permute.xlu0 %4168
      %4170 = vrot.lane.b32.xlu0 %v4140, 64
      %v4171 = vpop.permute.xlu0 %4170
      %4172 = vrot.lane.b32.xlu0 %v4141, 64
      %v4173 = vpop.permute.xlu0 %4172
      %4174 = vrot.lane.b32.xlu0 %v4142, 64
      %v4175 = vpop.permute.xlu0 %4174
      %4176 = vrot.lane.b32.xlu0 %v4143, 64
      %v4177 = vpop.permute.xlu0 %4176
      %4178 = vrot.lane.b32.xlu0 %v4144, 64
      %v4179 = vpop.permute.xlu0 %4178
      %4180 = vrot.lane.b32.xlu0 %v4145, 64
      %v4181 = vpop.permute.xlu0 %4180
      %v4184 = vsel %vm1885, %v3984, %v4057
      %v4187 = vsel %vm1885, %v3985, %v4059
      %v4190 = vsel %vm1885, %v3986, %v4061
      %v4193 = vsel %vm1885, %v3987, %v4063
      %v4196 = vsel %vm1885, %v3988, %v4065
      %v4199 = vsel %vm1885, %v3989, %v4067
      %v4202 = vsel %vm1885, %v3990, %v4069
      %v4205 = vsel %vm1885, %v3991, %v4071
      %v4208 = vsel %vm1885, %v3992, %v4073
      %v4211 = vsel %vm1885, %v3993, %v4075
      %v4214 = vsel %vm1885, %v3994, %v4077
      %v4217 = vsel %vm1885, %v3995, %v4079
      %v4220 = vsel %vm1885, %v3996, %v4081
      %v4223 = vsel %vm1885, %v3997, %v4083
      %v4226 = vsel %vm1885, %v3998, %v4085
      %v4229 = vsel %vm1885, %v3999, %v4087
      %v4232 = vsel %vm1885, %v4000, %v4089
      %v4235 = vsel %vm1885, %v4001, %v4091
      %v4237 = vsel %vm1940, %v4184, %v4147
      %v4239 = vsel %vm1940, %v4187, %v4149
      %v4241 = vsel %vm1940, %v4190, %v4151
      %v4243 = vsel %vm1940, %v4193, %v4153
      %v4245 = vsel %vm1940, %v4196, %v4155
      %v4247 = vsel %vm1940, %v4199, %v4157
      %v4249 = vsel %vm1940, %v4202, %v4159
      %v4251 = vsel %vm1940, %v4205, %v4161
      %v4253 = vsel %vm1940, %v4208, %v4163
      %v4255 = vsel %vm1940, %v4211, %v4165
      %v4257 = vsel %vm1940, %v4214, %v4167
      %v4259 = vsel %vm1940, %v4217, %v4169
      %v4261 = vsel %vm1940, %v4220, %v4171
      %v4263 = vsel %vm1940, %v4223, %v4173
      %v4265 = vsel %vm1940, %v4226, %v4175
      %v4267 = vsel %vm1940, %v4229, %v4177
      %v4269 = vsel %vm1940, %v4232, %v4179
      %v4271 = vsel %vm1940, %v4235, %v4181
      %4288 = vrot.lane.b32.xlu0 %v4239, 96
      %v4289 = vpop.permute.xlu0 %4288
      %4290 = vrot.lane.b32.xlu0 %v4241, 96
      %v4291 = vpop.permute.xlu0 %4290
      %4292 = vrot.lane.b32.xlu0 %v4243, 96
      %v4293 = vpop.permute.xlu0 %4292
      %4294 = vrot.lane.b32.xlu0 %v4245, 96
      %v4295 = vpop.permute.xlu0 %4294
      %4296 = vrot.lane.b32.xlu0 %v4247, 96
      %v4297 = vpop.permute.xlu0 %4296
      %4298 = vrot.lane.b32.xlu0 %v4249, 96
      %v4299 = vpop.permute.xlu0 %4298
      %4300 = vrot.lane.b32.xlu0 %v4251, 96
      %v4301 = vpop.permute.xlu0 %4300
      %4302 = vrot.lane.b32.xlu0 %v4253, 96
      %v4303 = vpop.permute.xlu0 %4302
      %4304 = vrot.lane.b32.xlu0 %v4255, 96
      %v4305 = vpop.permute.xlu0 %4304
      %4306 = vrot.lane.b32.xlu0 %v4257, 96
      %v4307 = vpop.permute.xlu0 %4306
      %4308 = vrot.lane.b32.xlu0 %v4259, 96
      %v4309 = vpop.permute.xlu0 %4308
      %4310 = vrot.lane.b32.xlu0 %v4261, 96
      %v4311 = vpop.permute.xlu0 %4310
      %4312 = vrot.lane.b32.xlu0 %v4263, 96
      %v4313 = vpop.permute.xlu0 %4312
      %4314 = vrot.lane.b32.xlu0 %v4265, 96
      %v4315 = vpop.permute.xlu0 %4314
      %4316 = vrot.lane.b32.xlu0 %v4267, 96
      %v4317 = vpop.permute.xlu0 %4316
      %4318 = vrot.lane.b32.xlu0 %v4269, 96
      %v4319 = vpop.permute.xlu0 %4318
      %4321 = vrot.lane.b32.xlu0 %v4241, 64
      %v4322 = vpop.permute.xlu0 %4321
      %4323 = vrot.lane.b32.xlu0 %v4243, 64
      %v4324 = vpop.permute.xlu0 %4323
      %4325 = vrot.lane.b32.xlu0 %v4245, 64
      %v4326 = vpop.permute.xlu0 %4325
      %4327 = vrot.lane.b32.xlu0 %v4247, 64
      %v4328 = vpop.permute.xlu0 %4327
      %4329 = vrot.lane.b32.xlu0 %v4249, 64
      %v4330 = vpop.permute.xlu0 %4329
      %4331 = vrot.lane.b32.xlu0 %v4251, 64
      %v4332 = vpop.permute.xlu0 %4331
      %4333 = vrot.lane.b32.xlu0 %v4253, 64
      %v4334 = vpop.permute.xlu0 %4333
      %4335 = vrot.lane.b32.xlu0 %v4255, 64
      %v4336 = vpop.permute.xlu0 %4335
      %4337 = vrot.lane.b32.xlu0 %v4257, 64
      %v4338 = vpop.permute.xlu0 %4337
      %4339 = vrot.lane.b32.xlu0 %v4259, 64
      %v4340 = vpop.permute.xlu0 %4339
      %4341 = vrot.lane.b32.xlu0 %v4261, 64
      %v4342 = vpop.permute.xlu0 %4341
      %4343 = vrot.lane.b32.xlu0 %v4263, 64
      %v4344 = vpop.permute.xlu0 %4343
      %4345 = vrot.lane.b32.xlu0 %v4265, 64
      %v4346 = vpop.permute.xlu0 %4345
      %4347 = vrot.lane.b32.xlu0 %v4267, 64
      %v4348 = vpop.permute.xlu0 %4347
      %4349 = vrot.lane.b32.xlu0 %v4269, 64
      %v4350 = vpop.permute.xlu0 %4349
      %4351 = vrot.lane.b32.xlu0 %v4271, 64
      %v4352 = vpop.permute.xlu0 %4351
      %v4354 = vsel %vm2058, %v4237, %v4289
      %v4357 = vsel %vm2058, %v4239, %v4291
      %v4360 = vsel %vm2058, %v4241, %v4293
      %v4363 = vsel %vm2058, %v4243, %v4295
      %v4366 = vsel %vm2058, %v4245, %v4297
      %v4369 = vsel %vm2058, %v4247, %v4299
      %v4372 = vsel %vm2058, %v4249, %v4301
      %v4375 = vsel %vm2058, %v4251, %v4303
      %v4378 = vsel %vm2058, %v4253, %v4305
      %v4381 = vsel %vm2058, %v4255, %v4307
      %v4384 = vsel %vm2058, %v4257, %v4309
      %v4387 = vsel %vm2058, %v4259, %v4311
      %v4390 = vsel %vm2058, %v4261, %v4313
      %v4393 = vsel %vm2058, %v4263, %v4315
      %v4396 = vsel %vm2058, %v4265, %v4317
      %v4399 = vsel %vm2058, %v4267, %v4319
      %v4402 = vsel %vm1940, %v4289, %v4322
      %v4405 = vsel %vm1940, %v4291, %v4324
      %v4408 = vsel %vm1940, %v4293, %v4326
      %v4411 = vsel %vm1940, %v4295, %v4328
      %v4414 = vsel %vm1940, %v4297, %v4330
      %v4417 = vsel %vm1940, %v4299, %v4332
      %v4420 = vsel %vm1940, %v4301, %v4334
      %v4423 = vsel %vm1940, %v4303, %v4336
      %v4426 = vsel %vm1940, %v4305, %v4338
      %v4429 = vsel %vm1940, %v4307, %v4340
      %v4432 = vsel %vm1940, %v4309, %v4342
      %v4435 = vsel %vm1940, %v4311, %v4344
      %v4438 = vsel %vm1940, %v4313, %v4346
      %v4441 = vsel %vm1940, %v4315, %v4348
      %v4444 = vsel %vm1940, %v4317, %v4350
      %v4447 = vsel %vm1940, %v4319, %v4352
      %s4449 = scalar_lea.vmem %s1, 144
      %v4450 = vld [vmem:[%s4449] sm:$0xf]
      %v4451 = vld [vmem:[%s4449 + $0x4] sm:$0xf]
      %v4452 = vld [vmem:[%s4449 + $0x8] sm:$0xf]
      %v4453 = vld [vmem:[%s4449 + $0xc] sm:$0xf]
      %v4454 = vld [vmem:[%s4449 + $0x10] sm:$0xf]
      %v4455 = vld [vmem:[%s4449 + $0x14] sm:$0xf]
      %v4456 = vld [vmem:[%s4449 + $0x18] sm:$0xf]
      %v4457 = vld [vmem:[%s4449 + $0x1c] sm:$0xf]
      %v4458 = vld [vmem:[%s4449 + $0x20] sm:$0xf]
      %v4459 = vld [vmem:[%s4449 + $0x24] sm:$0xf]
      %v4460 = vld [vmem:[%s4449 + $0x28] sm:$0xf]
      %v4461 = vld [vmem:[%s4449 + $0x2c] sm:$0xf]
      %v4462 = vld [vmem:[%s4449 + $0x30] sm:$0xf]
      %v4463 = vld [vmem:[%s4449 + $0x34] sm:$0xf]
      %v4464 = vld [vmem:[%s4449 + $0x38] sm:$0xf]
      %v4465 = vld [vmem:[%s4449 + $0x3c] sm:$0xf]
      %v4466 = vld [vmem:[%s4449 + $0x40] sm:$0xf]
      %v4467 = vld [vmem:[%s4449 + $0x44] sm:$0xf]
      %v4468 = vld [vmem:[%s4449 + $0x48] sm:$0xf]
      %v4469 = vld [vmem:[%s4449 + $0x4c] sm:$0xf]
      %v4470 = vld [vmem:[%s4449 + $0x50] sm:$0xf]
      %v4471 = vld [vmem:[%s4449 + $0x54] sm:$0xf]
      %v4472 = vld [vmem:[%s4449 + $0x58] sm:$0xf]
      %v4473 = vld [vmem:[%s4449 + $0x5c] sm:$0xf]
      %v4474 = vld [vmem:[%s4449 + $0x60] sm:$0xf]
      %v4475 = vld [vmem:[%s4449 + $0x64] sm:$0xf]
      %v4476 = vld [vmem:[%s4449 + $0x68] sm:$0xf]
      %v4477 = vld [vmem:[%s4449 + $0x6c] sm:$0xf]
      %v4478 = vld [vmem:[%s4449 + $0x70] sm:$0xf]
      %v4479 = vld [vmem:[%s4449 + $0x74] sm:$0xf]
      %v4480 = vld [vmem:[%s4449 + $0x78] sm:$0xf]
      %v4481 = vld [vmem:[%s4449 + $0x7c] sm:$0xf]
      %v4482 = vld [vmem:[%s4449 + $0x80] sm:$0xf]
      %v4483 = vld [vmem:[%s4449 + $0x84] sm:$0xf]
      %v4484 = vld [vmem:[%s4449 + $0x88] sm:$0xf]
      %v4485 = vld [vmem:[%s4449 + $0x8c] sm:$0xf]
      %v4486 = vld [vmem:[%s2 + $0x1] sm:$0x1]
      %v4487 = vlaneseq
      %v4488 = vshrl.u32 %v4487, 7
      %v4489 = vsub.s32 0, %v4488
      %v4490 = vrot.slane %v4486, %v4489
      %v4527 = vunpack.c.l.b16 %v4450
      %v4528 = vunpack.c.l.b16 %v4451
      %v4529 = vunpack.c.l.b16 %v4452
      %v4530 = vunpack.c.l.b16 %v4453
      %v4531 = vunpack.c.l.b16 %v4454
      %v4532 = vunpack.c.l.b16 %v4455
      %v4533 = vunpack.c.l.b16 %v4456
      %v4534 = vunpack.c.l.b16 %v4457
      %v4535 = vunpack.c.l.b16 %v4458
      %v4536 = vunpack.c.l.b16 %v4459
      %v4537 = vunpack.c.l.b16 %v4460
      %v4538 = vunpack.c.l.b16 %v4461
      %v4539 = vunpack.c.l.b16 %v4462
      %v4540 = vunpack.c.l.b16 %v4463
      %v4541 = vunpack.c.l.b16 %v4464
      %v4542 = vunpack.c.l.b16 %v4465
      %v4543 = vunpack.c.l.b16 %v4466
      %v4544 = vunpack.c.l.b16 %v4467
      %v4545 = vunpack.c.l.b16 %v4468
      %v4546 = vunpack.c.l.b16 %v4469
      %v4547 = vunpack.c.l.b16 %v4470
      %v4548 = vunpack.c.l.b16 %v4471
      %v4549 = vunpack.c.l.b16 %v4472
      %v4550 = vunpack.c.l.b16 %v4473
      %v4551 = vunpack.c.l.b16 %v4474
      %v4552 = vunpack.c.l.b16 %v4475
      %v4553 = vunpack.c.l.b16 %v4476
      %v4554 = vunpack.c.l.b16 %v4477
      %v4555 = vunpack.c.l.b16 %v4478
      %v4556 = vunpack.c.l.b16 %v4479
      %v4557 = vunpack.c.l.b16 %v4480
      %v4558 = vunpack.c.l.b16 %v4481
      %v4559 = vunpack.c.l.b16 %v4482
      %v4560 = vunpack.c.l.b16 %v4483
      %v4561 = vunpack.c.l.b16 %v4484
      %v4562 = vunpack.c.l.b16 %v4485
      %v4563 = vpack.c.b16 %v4528, %v4527
      %v4564 = vpack.c.b16 %v4530, %v4529
      %v4565 = vpack.c.b16 %v4532, %v4531
      %v4566 = vpack.c.b16 %v4534, %v4533
      %v4567 = vpack.c.b16 %v4536, %v4535
      %v4568 = vpack.c.b16 %v4538, %v4537
      %v4569 = vpack.c.b16 %v4540, %v4539
      %v4570 = vpack.c.b16 %v4542, %v4541
      %v4571 = vpack.c.b16 %v4544, %v4543
      %v4572 = vpack.c.b16 %v4546, %v4545
      %v4573 = vpack.c.b16 %v4548, %v4547
      %v4574 = vpack.c.b16 %v4550, %v4549
      %v4575 = vpack.c.b16 %v4552, %v4551
      %v4576 = vpack.c.b16 %v4554, %v4553
      %v4577 = vpack.c.b16 %v4556, %v4555
      %v4578 = vpack.c.b16 %v4558, %v4557
      %v4579 = vpack.c.b16 %v4560, %v4559
      %v4580 = vpack.c.b16 %v4562, %v4561
      %v4599 = vsel %vm1885, %v4322, 0
      %v4601 = vsel %vm1885, %v4324, 0
      %v4603 = vsel %vm1885, %v4326, 0
      %v4605 = vsel %vm1885, %v4328, 0
      %v4607 = vsel %vm1885, %v4330, 0
      %v4609 = vsel %vm1885, %v4332, 0
      %v4611 = vsel %vm1885, %v4334, 0
      %v4613 = vsel %vm1885, %v4336, 0
      %v4615 = vsel %vm1885, %v4338, 0
      %v4617 = vsel %vm1885, %v4340, 0
      %v4619 = vsel %vm1885, %v4342, 0
      %v4621 = vsel %vm1885, %v4344, 0
      %v4623 = vsel %vm1885, %v4346, 0
      %v4625 = vsel %vm1885, %v4348, 0
      %v4627 = vsel %vm1885, %v4350, 0
      %v4629 = vsel %vm1885, %v4352, 0
      %4631 = vmatprep.subr.bf16.mxu0 0
      %4632 = vmatpush1.bf16.msra.mxu0 %v4570
      %4633 = vmatprep.subr.bf16.mxu0 0
      %4634 = vmatpush1.bf16.msra.mxu0 %v4569
      %4635 = vmatprep.subr.bf16.mxu0 0
      %4636 = vmatpush1.bf16.msra.mxu0 %v4568
      %4637 = vmatprep.subr.bf16.mxu0 0
      %4638 = vmatpush1.bf16.msra.mxu0 %v4567
      %4639 = vmatprep.subr.bf16.mxu0 0
      %4640 = vmatpush1.bf16.msra.mxu0 %v4566
      %4641 = vmatprep.subr.bf16.mxu0 0
      %4642 = vmatpush1.bf16.msra.mxu0 %v4565
      %4643 = vmatprep.subr.bf16.mxu0 0
      %4644 = vmatpush1.bf16.msra.mxu0 %v4564
      %4645 = vmatprep.subr.bf16.mxu0 0
      %4646 = vmatpush1.bf16.msra.mxu0 %v4563
      %4647 = vmatprep.subr.bf16.mxu0 0
      %4648 = vmatpush2.bf16.msra.mxu0 %v4578
      %4649 = vmatprep.subr.bf16.mxu0 0
      %4650 = vmatpush2.bf16.msra.mxu0 %v4577
      %4651 = vmatprep.subr.bf16.mxu0 0
      %4652 = vmatpush2.bf16.msra.mxu0 %v4576
      %4653 = vmatprep.subr.bf16.mxu0 0
      %4654 = vmatpush2.bf16.msra.mxu0 %v4575
      %4655 = vmatprep.subr.bf16.mxu0 0
      %4656 = vmatpush2.bf16.msra.mxu0 %v4574
      %4657 = vmatprep.subr.bf16.mxu0 0
      %4658 = vmatpush2.bf16.msra.mxu0 %v4573
      %4659 = vmatprep.subr.bf16.mxu0 0
      %4660 = vmatpush2.bf16.msra.mxu0 %v4572
      %4661 = vmatprep.subr.bf16.mxu0 0
      %4662 = vmatpush2.bf16.msra.mxu0 %v4571
      %4663 = vmatprep.mubr.bf16.mxu0 %v4402
      %4664 = vmatmul.mubr.bf16.gmra.mxu0 %v4354
      %v4665 = vpop.f32.mrf.mxu0
      %v4666 = vadd.f32 %v4490, %v4665
      %v4667 = vpop.f32.mrf.mxu0
      %v4668 = vpop.f32.mrf.mxu0
      %v4669 = vadd.f32 %v4490, %v4668
      %v4670 = vpop.f32.mrf.mxu0
      %4671 = vmatprep.mubr.bf16.mxu0 %v4405
      %4672 = vmatmul.mubr.bf16.gmra.mxu0 %v4357
      %v4673 = vpop.f32.mrf.mxu0
      %v4674 = vadd.f32 %v4490, %v4673
      %v4675 = vpop.f32.mrf.mxu0
      %v4676 = vpop.f32.mrf.mxu0
      %v4677 = vadd.f32 %v4490, %v4676
      %v4678 = vpop.f32.mrf.mxu0
      %4679 = vmatprep.mubr.bf16.mxu0 %v4408
      %4680 = vmatmul.mubr.bf16.gmra.mxu0 %v4360
      %v4681 = vpop.f32.mrf.mxu0
      %v4682 = vadd.f32 %v4490, %v4681
      %v4683 = vpop.f32.mrf.mxu0
      %v4684 = vpop.f32.mrf.mxu0
      %v4685 = vadd.f32 %v4490, %v4684
      %v4686 = vpop.f32.mrf.mxu0
      %4687 = vmatprep.mubr.bf16.mxu0 %v4411
      %4688 = vmatmul.mubr.bf16.gmra.mxu0 %v4363
      %v4689 = vpop.f32.mrf.mxu0
      %v4690 = vadd.f32 %v4490, %v4689
      %v4691 = vpop.f32.mrf.mxu0
      %v4692 = vpop.f32.mrf.mxu0
      %v4693 = vadd.f32 %v4490, %v4692
      %v4694 = vpop.f32.mrf.mxu0
      %4695 = vmatprep.mubr.bf16.mxu0 %v4414
      %4696 = vmatmul.mubr.bf16.gmra.mxu0 %v4366
      %v4697 = vpop.f32.mrf.mxu0
      %v4698 = vadd.f32 %v4490, %v4697
      %v4699 = vpop.f32.mrf.mxu0
      %v4700 = vpop.f32.mrf.mxu0
      %v4701 = vadd.f32 %v4490, %v4700
      %v4702 = vpop.f32.mrf.mxu0
      %4703 = vmatprep.mubr.bf16.mxu0 %v4417
      %4704 = vmatmul.mubr.bf16.gmra.mxu0 %v4369
      %v4705 = vpop.f32.mrf.mxu0
      %v4706 = vadd.f32 %v4490, %v4705
      %v4707 = vpop.f32.mrf.mxu0
      %v4708 = vpop.f32.mrf.mxu0
      %v4709 = vadd.f32 %v4490, %v4708
      %v4710 = vpop.f32.mrf.mxu0
      %4711 = vmatprep.mubr.bf16.mxu0 %v4420
      %4712 = vmatmul.mubr.bf16.gmra.mxu0 %v4372
      %v4713 = vpop.f32.mrf.mxu0
      %v4714 = vadd.f32 %v4490, %v4713
      %v4715 = vpop.f32.mrf.mxu0
      %v4716 = vpop.f32.mrf.mxu0
      %v4717 = vadd.f32 %v4490, %v4716
      %v4718 = vpop.f32.mrf.mxu0
      %4719 = vmatprep.mubr.bf16.mxu0 %v4423
      %4720 = vmatmul.mubr.bf16.gmra.mxu0 %v4375
      %v4721 = vpop.f32.mrf.mxu0
      %v4722 = vadd.f32 %v4490, %v4721
      %v4723 = vpop.f32.mrf.mxu0
      %v4724 = vpop.f32.mrf.mxu0
      %v4725 = vadd.f32 %v4490, %v4724
      %v4726 = vpop.f32.mrf.mxu0
      %4727 = vmatprep.mubr.bf16.mxu0 %v4426
      %4728 = vmatmul.mubr.bf16.gmra.mxu0 %v4378
      %v4729 = vpop.f32.mrf.mxu0
      %v4730 = vadd.f32 %v4490, %v4729
      %v4731 = vpop.f32.mrf.mxu0
      %v4732 = vpop.f32.mrf.mxu0
      %v4733 = vadd.f32 %v4490, %v4732
      %v4734 = vpop.f32.mrf.mxu0
      %4735 = vmatprep.mubr.bf16.mxu0 %v4429
      %4736 = vmatmul.mubr.bf16.gmra.mxu0 %v4381
      %v4737 = vpop.f32.mrf.mxu0
      %v4738 = vadd.f32 %v4490, %v4737
      %v4739 = vpop.f32.mrf.mxu0
      %v4740 = vpop.f32.mrf.mxu0
      %v4741 = vadd.f32 %v4490, %v4740
      %v4742 = vpop.f32.mrf.mxu0
      %4743 = vmatprep.mubr.bf16.mxu0 %v4432
      %4744 = vmatmul.mubr.bf16.gmra.mxu0 %v4384
      %v4745 = vpop.f32.mrf.mxu0
      %v4746 = vadd.f32 %v4490, %v4745
      %v4747 = vpop.f32.mrf.mxu0
      %v4748 = vpop.f32.mrf.mxu0
      %v4749 = vadd.f32 %v4490, %v4748
      %v4750 = vpop.f32.mrf.mxu0
      %4751 = vmatprep.mubr.bf16.mxu0 %v4435
      %4752 = vmatmul.mubr.bf16.gmra.mxu0 %v4387
      %v4753 = vpop.f32.mrf.mxu0
      %v4754 = vadd.f32 %v4490, %v4753
      %v4755 = vpop.f32.mrf.mxu0
      %v4756 = vpop.f32.mrf.mxu0
      %v4757 = vadd.f32 %v4490, %v4756
      %v4758 = vpop.f32.mrf.mxu0
      %4759 = vmatprep.mubr.bf16.mxu0 %v4438
      %4760 = vmatmul.mubr.bf16.gmra.mxu0 %v4390
      %v4761 = vpop.f32.mrf.mxu0
      %v4762 = vadd.f32 %v4490, %v4761
      %v4763 = vpop.f32.mrf.mxu0
      %v4764 = vpop.f32.mrf.mxu0
      %v4765 = vadd.f32 %v4490, %v4764
      %v4766 = vpop.f32.mrf.mxu0
      %4767 = vmatprep.mubr.bf16.mxu0 %v4441
      %4768 = vmatmul.mubr.bf16.gmra.mxu0 %v4393
      %v4769 = vpop.f32.mrf.mxu0
      %v4770 = vadd.f32 %v4490, %v4769
      %v4771 = vpop.f32.mrf.mxu0
      %v4772 = vpop.f32.mrf.mxu0
      %v4773 = vadd.f32 %v4490, %v4772
      %v4774 = vpop.f32.mrf.mxu0
      %4775 = vmatprep.mubr.bf16.mxu0 %v4444
      %4776 = vmatmul.mubr.bf16.gmra.mxu0 %v4396
      %v4777 = vpop.f32.mrf.mxu0
      %v4778 = vadd.f32 %v4490, %v4777
      %v4779 = vpop.f32.mrf.mxu0
      %v4780 = vpop.f32.mrf.mxu0
      %v4781 = vadd.f32 %v4490, %v4780
      %v4782 = vpop.f32.mrf.mxu0
      %4783 = vmatprep.mubr.bf16.mxu0 %v4447
      %4784 = vmatmul.mubr.bf16.gmra.mxu0 %v4399
      %v4785 = vpop.f32.mrf.mxu0
      %v4786 = vadd.f32 %v4490, %v4785
      %v4787 = vpop.f32.mrf.mxu0
      %v4788 = vpop.f32.mrf.mxu0
      %v4789 = vadd.f32 %v4490, %v4788
      %v4790 = vpop.f32.mrf.mxu0
      %4791 = vdwg.mxu0
      %4792 = vmatprep.subr.bf16.mxu0 0
      %4793 = vmatpush1.bf16.msra.mxu0 0
      %4794 = vmatprep.subr.bf16.mxu0 0
      %4795 = vmatpush1.bf16.msra.mxu0 0
      %4796 = vmatprep.subr.bf16.mxu0 0
      %4797 = vmatpush1.bf16.msra.mxu0 0
      %4798 = vmatprep.subr.bf16.mxu0 0
      %4799 = vmatpush1.bf16.msra.mxu0 0
      %4800 = vmatprep.subr.bf16.mxu0 0
      %4801 = vmatpush1.bf16.msra.mxu0 0
      %4802 = vmatprep.subr.bf16.mxu0 0
      %4803 = vmatpush1.bf16.msra.mxu0 0
      %4804 = vmatprep.subr.bf16.mxu0 0
      %4805 = vmatpush1.bf16.msra.mxu0 %v4580
      %4806 = vmatprep.subr.bf16.mxu0 0
      %4807 = vmatpush1.bf16.msra.mxu0 %v4579
      %4808 = vmatprep.subr.bf16.mxu0 0
      %4809 = vmatpush2.bf16.msra.mxu0 0
      %4810 = vmatprep.subr.bf16.mxu0 0
      %4811 = vmatpush2.bf16.msra.mxu0 0
      %4812 = vmatprep.subr.bf16.mxu0 0
      %4813 = vmatpush2.bf16.msra.mxu0 0
      %4814 = vmatprep.subr.bf16.mxu0 0
      %4815 = vmatpush2.bf16.msra.mxu0 0
      %4816 = vmatprep.subr.bf16.mxu0 0
      %4817 = vmatpush2.bf16.msra.mxu0 0
      %4818 = vmatprep.subr.bf16.mxu0 0
      %4819 = vmatpush2.bf16.msra.mxu0 0
      %4820 = vmatprep.subr.bf16.mxu0 0
      %4821 = vmatpush2.bf16.msra.mxu0 0
      %4822 = vmatprep.subr.bf16.mxu0 0
      %4823 = vmatpush2.bf16.msra.mxu0 0
      %4824 = vmatprep.mubr.bf16.mxu0 0
      %4825 = vmatmul.mubr.bf16.gmra.mxu0 %v4599
      %v4826 = vpop.f32.mrf.mxu0
      %v4827 = vadd.f32 %v4666, %v4826
      %v4828 = vpop.f32.mrf.mxu0
      %v4829 = vpop.f32.mrf.mxu0
      %v4830 = vadd.f32 %v4669, %v4829
      %v4831 = vpop.f32.mrf.mxu0
      %4832 = vmatprep.mubr.bf16.mxu0 0
      %4833 = vmatmul.mubr.bf16.gmra.mxu0 %v4601
      %v4834 = vpop.f32.mrf.mxu0
      %v4835 = vadd.f32 %v4674, %v4834
      %v4836 = vpop.f32.mrf.mxu0
      %v4837 = vpop.f32.mrf.mxu0
      %v4838 = vadd.f32 %v4677, %v4837
      %v4839 = vpop.f32.mrf.mxu0
      %4840 = vmatprep.mubr.bf16.mxu0 0
      %4841 = vmatmul.mubr.bf16.gmra.mxu0 %v4603
      %v4842 = vpop.f32.mrf.mxu0
      %v4843 = vadd.f32 %v4682, %v4842
      %v4844 = vpop.f32.mrf.mxu0
      %v4845 = vpop.f32.mrf.mxu0
      %v4846 = vadd.f32 %v4685, %v4845
      %v4847 = vpop.f32.mrf.mxu0
      %4848 = vmatprep.mubr.bf16.mxu0 0
      %4849 = vmatmul.mubr.bf16.gmra.mxu0 %v4605
      %v4850 = vpop.f32.mrf.mxu0
      %v4851 = vadd.f32 %v4690, %v4850
      %v4852 = vpop.f32.mrf.mxu0
      %v4853 = vpop.f32.mrf.mxu0
      %v4854 = vadd.f32 %v4693, %v4853
      %v4855 = vpop.f32.mrf.mxu0
      %4856 = vmatprep.mubr.bf16.mxu0 0
      %4857 = vmatmul.mubr.bf16.gmra.mxu0 %v4607
      %v4858 = vpop.f32.mrf.mxu0
      %v4859 = vadd.f32 %v4698, %v4858
      %v4860 = vpop.f32.mrf.mxu0
      %v4861 = vpop.f32.mrf.mxu0
      %v4862 = vadd.f32 %v4701, %v4861
      %v4863 = vpop.f32.mrf.mxu0
      %4864 = vmatprep.mubr.bf16.mxu0 0
      %4865 = vmatmul.mubr.bf16.gmra.mxu0 %v4609
      %v4866 = vpop.f32.mrf.mxu0
      %v4867 = vadd.f32 %v4706, %v4866
      %v4868 = vpop.f32.mrf.mxu0
      %v4869 = vpop.f32.mrf.mxu0
      %v4870 = vadd.f32 %v4709, %v4869
      %v4871 = vpop.f32.mrf.mxu0
      %4872 = vmatprep.mubr.bf16.mxu0 0
      %4873 = vmatmul.mubr.bf16.gmra.mxu0 %v4611
      %v4874 = vpop.f32.mrf.mxu0
      %v4875 = vadd.f32 %v4714, %v4874
      %v4876 = vpop.f32.mrf.mxu0
      %v4877 = vpop.f32.mrf.mxu0
      %v4878 = vadd.f32 %v4717, %v4877
      %v4879 = vpop.f32.mrf.mxu0
      %4880 = vmatprep.mubr.bf16.mxu0 0
      %4881 = vmatmul.mubr.bf16.gmra.mxu0 %v4613
      %v4882 = vpop.f32.mrf.mxu0
      %v4883 = vadd.f32 %v4722, %v4882
      %v4884 = vpop.f32.mrf.mxu0
      %v4885 = vpop.f32.mrf.mxu0
      %v4886 = vadd.f32 %v4725, %v4885
      %v4887 = vpop.f32.mrf.mxu0
      %4888 = vmatprep.mubr.bf16.mxu0 0
      %4889 = vmatmul.mubr.bf16.gmra.mxu0 %v4615
      %v4890 = vpop.f32.mrf.mxu0
      %v4891 = vadd.f32 %v4730, %v4890
      %v4892 = vpop.f32.mrf.mxu0
      %v4893 = vpop.f32.mrf.mxu0
      %v4894 = vadd.f32 %v4733, %v4893
      %v4895 = vpop.f32.mrf.mxu0
      %4896 = vmatprep.mubr.bf16.mxu0 0
      %4897 = vmatmul.mubr.bf16.gmra.mxu0 %v4617
      %v4898 = vpop.f32.mrf.mxu0
      %v4899 = vadd.f32 %v4738, %v4898
      %v4900 = vpop.f32.mrf.mxu0
      %v4901 = vpop.f32.mrf.mxu0
      %v4902 = vadd.f32 %v4741, %v4901
      %v4903 = vpop.f32.mrf.mxu0
      %4904 = vmatprep.mubr.bf16.mxu0 0
      %4905 = vmatmul.mubr.bf16.gmra.mxu0 %v4619
      %v4906 = vpop.f32.mrf.mxu0
      %v4907 = vadd.f32 %v4746, %v4906
      %v4908 = vpop.f32.mrf.mxu0
      %v4909 = vpop.f32.mrf.mxu0
      %v4910 = vadd.f32 %v4749, %v4909
      %v4911 = vpop.f32.mrf.mxu0
      %4912 = vmatprep.mubr.bf16.mxu0 0
      %4913 = vmatmul.mubr.bf16.gmra.mxu0 %v4621
      %v4914 = vpop.f32.mrf.mxu0
      %v4915 = vadd.f32 %v4754, %v4914
      %v4916 = vpop.f32.mrf.mxu0
      %v4917 = vpop.f32.mrf.mxu0
      %v4918 = vadd.f32 %v4757, %v4917
      %v4919 = vpop.f32.mrf.mxu0
      %4920 = vmatprep.mubr.bf16.mxu0 0
      %4921 = vmatmul.mubr.bf16.gmra.mxu0 %v4623
      %v4922 = vpop.f32.mrf.mxu0
      %v4923 = vadd.f32 %v4762, %v4922
      %v4924 = vpop.f32.mrf.mxu0
      %v4925 = vpop.f32.mrf.mxu0
      %v4926 = vadd.f32 %v4765, %v4925
      %v4927 = vpop.f32.mrf.mxu0
      %4928 = vmatprep.mubr.bf16.mxu0 0
      %4929 = vmatmul.mubr.bf16.gmra.mxu0 %v4625
      %v4930 = vpop.f32.mrf.mxu0
      %v4931 = vadd.f32 %v4770, %v4930
      %v4932 = vpop.f32.mrf.mxu0
      %v4933 = vpop.f32.mrf.mxu0
      %v4934 = vadd.f32 %v4773, %v4933
      %v4935 = vpop.f32.mrf.mxu0
      %4936 = vmatprep.mubr.bf16.mxu0 0
      %4937 = vmatmul.mubr.bf16.gmra.mxu0 %v4627
      %v4938 = vpop.f32.mrf.mxu0
      %v4939 = vadd.f32 %v4778, %v4938
      %v4940 = vpop.f32.mrf.mxu0
      %v4941 = vpop.f32.mrf.mxu0
      %v4942 = vadd.f32 %v4781, %v4941
      %v4943 = vpop.f32.mrf.mxu0
      %4944 = vmatprep.mubr.bf16.mxu0 0
      %4945 = vmatmul.mubr.bf16.gmra.mxu0 %v4629
      %v4946 = vpop.f32.mrf.mxu0
      %v4947 = vadd.f32 %v4786, %v4946
      %v4948 = vpop.f32.mrf.mxu0
      %v4949 = vpop.f32.mrf.mxu0
      %v4950 = vadd.f32 %v4789, %v4949
      %v4951 = vpop.f32.mrf.mxu0
      %4952 = vdwg.mxu0
      %v4953 = vld [vmem:[%s3] sm:$0x1]
      %v4954 = vlaneseq
      %v4955 = vshrl.u32 %v4954, 7
      %v4956 = vsub.s32 0, %v4955
      %v4957 = vrot.slane %v4953, %v4956
      %v4958 = vmul.f32 %v4957, %v4827
      %v4959 = vmul.f32 %v4957, %v4830
      %v4960 = vmul.f32 %v4957, %v4835
      %v4961 = vmul.f32 %v4957, %v4838
      %v4962 = vmul.f32 %v4957, %v4843
      %v4963 = vmul.f32 %v4957, %v4846
      %v4964 = vmul.f32 %v4957, %v4851
      %v4965 = vmul.f32 %v4957, %v4854
      %v4966 = vmul.f32 %v4957, %v4859
      %v4967 = vmul.f32 %v4957, %v4862
      %v4968 = vmul.f32 %v4957, %v4867
      %v4969 = vmul.f32 %v4957, %v4870
      %v4970 = vmul.f32 %v4957, %v4875
      %v4971 = vmul.f32 %v4957, %v4878
      %v4972 = vmul.f32 %v4957, %v4883
      %v4973 = vmul.f32 %v4957, %v4886
      %v4974 = vmul.f32 %v4957, %v4891
      %v4975 = vmul.f32 %v4957, %v4894
      %v4976 = vmul.f32 %v4957, %v4899
      %v4977 = vmul.f32 %v4957, %v4902
      %v4978 = vmul.f32 %v4957, %v4907
      %v4979 = vmul.f32 %v4957, %v4910
      %v4980 = vmul.f32 %v4957, %v4915
      %v4981 = vmul.f32 %v4957, %v4918
      %v4982 = vmul.f32 %v4957, %v4923
      %v4983 = vmul.f32 %v4957, %v4926
      %v4984 = vmul.f32 %v4957, %v4931
      %v4985 = vmul.f32 %v4957, %v4934
      %v4986 = vmul.f32 %v4957, %v4939
      %v4987 = vmul.f32 %v4957, %v4942
      %v4988 = vmul.f32 %v4957, %v4947
      %v4989 = vmul.f32 %v4957, %v4950
      %v4990 = vadd.f32 %v4958, %v313
      %v4991 = vadd.f32 %v4959, %v314
      %v4992 = vadd.f32 %v4960, %v315
      %v4993 = vadd.f32 %v4961, %v316
      %v4994 = vadd.f32 %v4962, %v317
      %v4995 = vadd.f32 %v4963, %v318
      %v4996 = vadd.f32 %v4964, %v319
      %v4997 = vadd.f32 %v4965, %v320
      %v4998 = vadd.f32 %v4966, %v321
      %v4999 = vadd.f32 %v4967, %v322
      %v5000 = vadd.f32 %v4968, %v323
      %v5001 = vadd.f32 %v4969, %v324
      %v5002 = vadd.f32 %v4970, %v325
      %v5003 = vadd.f32 %v4971, %v326
      %v5004 = vadd.f32 %v4972, %v327
      %v5005 = vadd.f32 %v4973, %v328
      %v5006 = vadd.f32 %v4974, %v329
      %v5007 = vadd.f32 %v4975, %v330
      %v5008 = vadd.f32 %v4976, %v331
      %v5009 = vadd.f32 %v4977, %v332
      %v5010 = vadd.f32 %v4978, %v333
      %v5011 = vadd.f32 %v4979, %v334
      %v5012 = vadd.f32 %v4980, %v335
      %v5013 = vadd.f32 %v4981, %v336
      %v5014 = vadd.f32 %v4982, %v337
      %v5015 = vadd.f32 %v4983, %v338
      %v5016 = vadd.f32 %v4984, %v339
      %v5017 = vadd.f32 %v4985, %v340
      %v5018 = vadd.f32 %v4986, %v341
      %v5019 = vadd.f32 %v4987, %v342
      %v5020 = vadd.f32 %v4988, %v343
      %v5021 = vadd.f32 %v4989, %v344
      %vm5022 = vcmp.gt.f32.partialorder %v4990, 0.0
      %vm5023 = vcmp.gt.f32.partialorder %v4991, 0.0
      %vm5024 = vcmp.gt.f32.partialorder %v4992, 0.0
      %vm5025 = vcmp.gt.f32.partialorder %v4993, 0.0
      %vm5026 = vcmp.gt.f32.partialorder %v4994, 0.0
      %vm5027 = vcmp.gt.f32.partialorder %v4995, 0.0
      %vm5028 = vcmp.gt.f32.partialorder %v4996, 0.0
      %vm5029 = vcmp.gt.f32.partialorder %v4997, 0.0
      %vm5030 = vcmp.gt.f32.partialorder %v4998, 0.0
      %vm5031 = vcmp.gt.f32.partialorder %v4999, 0.0
      %vm5032 = vcmp.gt.f32.partialorder %v5000, 0.0
      %vm5033 = vcmp.gt.f32.partialorder %v5001, 0.0
      %vm5034 = vcmp.gt.f32.partialorder %v5002, 0.0
      %vm5035 = vcmp.gt.f32.partialorder %v5003, 0.0
      %vm5036 = vcmp.gt.f32.partialorder %v5004, 0.0
      %vm5037 = vcmp.gt.f32.partialorder %v5005, 0.0
      %vm5038 = vcmp.gt.f32.partialorder %v5006, 0.0
      %vm5039 = vcmp.gt.f32.partialorder %v5007, 0.0
      %vm5040 = vcmp.gt.f32.partialorder %v5008, 0.0
      %vm5041 = vcmp.gt.f32.partialorder %v5009, 0.0
      %vm5042 = vcmp.gt.f32.partialorder %v5010, 0.0
      %vm5043 = vcmp.gt.f32.partialorder %v5011, 0.0
      %vm5044 = vcmp.gt.f32.partialorder %v5012, 0.0
      %vm5045 = vcmp.gt.f32.partialorder %v5013, 0.0
      %vm5046 = vcmp.gt.f32.partialorder %v5014, 0.0
      %vm5047 = vcmp.gt.f32.partialorder %v5015, 0.0
      %vm5048 = vcmp.gt.f32.partialorder %v5016, 0.0
      %vm5049 = vcmp.gt.f32.partialorder %v5017, 0.0
      %vm5050 = vcmp.gt.f32.partialorder %v5018, 0.0
      %vm5051 = vcmp.gt.f32.partialorder %v5019, 0.0
      %vm5052 = vcmp.gt.f32.partialorder %v5020, 0.0
      %vm5053 = vcmp.gt.f32.partialorder %v5021, 0.0
      %v5054 = vmul.f32 %v4990, 0.01
      %v5055 = vmul.f32 %v4991, 0.01
      %v5056 = vmul.f32 %v4992, 0.01
      %v5057 = vmul.f32 %v4993, 0.01
      %v5058 = vmul.f32 %v4994, 0.01
      %v5059 = vmul.f32 %v4995, 0.01
      %v5060 = vmul.f32 %v4996, 0.01
      %v5061 = vmul.f32 %v4997, 0.01
      %v5062 = vmul.f32 %v4998, 0.01
      %v5063 = vmul.f32 %v4999, 0.01
      %v5064 = vmul.f32 %v5000, 0.01
      %v5065 = vmul.f32 %v5001, 0.01
      %v5066 = vmul.f32 %v5002, 0.01
      %v5067 = vmul.f32 %v5003, 0.01
      %v5068 = vmul.f32 %v5004, 0.01
      %v5069 = vmul.f32 %v5005, 0.01
      %v5070 = vmul.f32 %v5006, 0.01
      %v5071 = vmul.f32 %v5007, 0.01
      %v5072 = vmul.f32 %v5008, 0.01
      %v5073 = vmul.f32 %v5009, 0.01
      %v5074 = vmul.f32 %v5010, 0.01
      %v5075 = vmul.f32 %v5011, 0.01
      %v5076 = vmul.f32 %v5012, 0.01
      %v5077 = vmul.f32 %v5013, 0.01
      %v5078 = vmul.f32 %v5014, 0.01
      %v5079 = vmul.f32 %v5015, 0.01
      %v5080 = vmul.f32 %v5016, 0.01
      %v5081 = vmul.f32 %v5017, 0.01
      %v5082 = vmul.f32 %v5018, 0.01
      %v5083 = vmul.f32 %v5019, 0.01
      %v5084 = vmul.f32 %v5020, 0.01
      %v5085 = vmul.f32 %v5021, 0.01
      %v5086 = vsel %vm5022, %v4990, %v5054
      %v5087 = vsel %vm5023, %v4991, %v5055
      %v5088 = vsel %vm5024, %v4992, %v5056
      %v5089 = vsel %vm5025, %v4993, %v5057
      %v5090 = vsel %vm5026, %v4994, %v5058
      %v5091 = vsel %vm5027, %v4995, %v5059
      %v5092 = vsel %vm5028, %v4996, %v5060
      %v5093 = vsel %vm5029, %v4997, %v5061
      %v5094 = vsel %vm5030, %v4998, %v5062
      %v5095 = vsel %vm5031, %v4999, %v5063
      %v5096 = vsel %vm5032, %v5000, %v5064
      %v5097 = vsel %vm5033, %v5001, %v5065
      %v5098 = vsel %vm5034, %v5002, %v5066
      %v5099 = vsel %vm5035, %v5003, %v5067
      %v5100 = vsel %vm5036, %v5004, %v5068
      %v5101 = vsel %vm5037, %v5005, %v5069
      %v5102 = vsel %vm5038, %v5006, %v5070
      %v5103 = vsel %vm5039, %v5007, %v5071
      %v5104 = vsel %vm5040, %v5008, %v5072
      %v5105 = vsel %vm5041, %v5009, %v5073
      %v5106 = vsel %vm5042, %v5010, %v5074
      %v5107 = vsel %vm5043, %v5011, %v5075
      %v5108 = vsel %vm5044, %v5012, %v5076
      %v5109 = vsel %vm5045, %v5013, %v5077
      %v5110 = vsel %vm5046, %v5014, %v5078
      %v5111 = vsel %vm5047, %v5015, %v5079
      %v5112 = vsel %vm5048, %v5016, %v5080
      %v5113 = vsel %vm5049, %v5017, %v5081
      %v5114 = vsel %vm5050, %v5018, %v5082
      %v5115 = vsel %vm5051, %v5019, %v5083
      %v5116 = vsel %vm5052, %v5020, %v5084
      %v5117 = vsel %vm5053, %v5021, %v5085
      %v5118 = vpack.c.bf16 %v5087, %v5086
      %v5119 = vpack.c.bf16 %v5089, %v5088
      %v5120 = vpack.c.bf16 %v5091, %v5090
      %v5121 = vpack.c.bf16 %v5093, %v5092
      %v5122 = vpack.c.bf16 %v5095, %v5094
      %v5123 = vpack.c.bf16 %v5097, %v5096
      %v5124 = vpack.c.bf16 %v5099, %v5098
      %v5125 = vpack.c.bf16 %v5101, %v5100
      %v5126 = vpack.c.bf16 %v5103, %v5102
      %v5127 = vpack.c.bf16 %v5105, %v5104
      %v5128 = vpack.c.bf16 %v5107, %v5106
      %v5129 = vpack.c.bf16 %v5109, %v5108
      %v5130 = vpack.c.bf16 %v5111, %v5110
      %v5131 = vpack.c.bf16 %v5113, %v5112
      %v5132 = vpack.c.bf16 %v5115, %v5114
      %v5133 = vpack.c.bf16 %v5117, %v5116
      %v5150 = vunpack.c.l.b16 %v5118
      %v5151 = vunpack.c.h.b16 %v5118
      %v5152 = vunpack.c.l.b16 %v5119
      %v5153 = vunpack.c.h.b16 %v5119
      %v5154 = vunpack.c.l.b16 %v5120
      %v5155 = vunpack.c.h.b16 %v5120
      %v5156 = vunpack.c.l.b16 %v5121
      %v5157 = vunpack.c.h.b16 %v5121
      %v5158 = vunpack.c.l.b16 %v5122
      %v5159 = vunpack.c.h.b16 %v5122
      %v5160 = vunpack.c.l.b16 %v5123
      %v5161 = vunpack.c.h.b16 %v5123
      %v5162 = vunpack.c.l.b16 %v5124
      %v5163 = vunpack.c.h.b16 %v5124
      %v5164 = vunpack.c.l.b16 %v5125
      %v5165 = vunpack.c.h.b16 %v5125
      %v5166 = vunpack.c.l.b16 %v5126
      %v5167 = vunpack.c.h.b16 %v5126
      %v5168 = vunpack.c.l.b16 %v5127
      %v5169 = vunpack.c.h.b16 %v5127
      %v5170 = vunpack.c.l.b16 %v5128
      %v5171 = vunpack.c.h.b16 %v5128
      %v5172 = vunpack.c.l.b16 %v5129
      %v5173 = vunpack.c.h.b16 %v5129
      %v5174 = vunpack.c.l.b16 %v5130
      %v5175 = vunpack.c.h.b16 %v5130
      %v5176 = vunpack.c.l.b16 %v5131
      %v5177 = vunpack.c.h.b16 %v5131
      %v5178 = vunpack.c.l.b16 %v5132
      %v5179 = vunpack.c.h.b16 %v5132
      %v5180 = vunpack.c.l.b16 %v5133
      %v5181 = vunpack.c.h.b16 %v5133
      %v5182 = vpack.c.b16 %v5150, %v5150
      %v5183 = vpack.c.b16 %v5151, %v5151
      %v5184 = vpack.c.b16 %v5152, %v5152
      %v5185 = vpack.c.b16 %v5153, %v5153
      %v5186 = vpack.c.b16 %v5154, %v5154
      %v5187 = vpack.c.b16 %v5155, %v5155
      %v5188 = vpack.c.b16 %v5156, %v5156
      %v5189 = vpack.c.b16 %v5157, %v5157
      %v5190 = vpack.c.b16 %v5158, %v5158
      %v5191 = vpack.c.b16 %v5159, %v5159
      %v5192 = vpack.c.b16 %v5160, %v5160
      %v5193 = vpack.c.b16 %v5161, %v5161
      %v5194 = vpack.c.b16 %v5162, %v5162
      %v5195 = vpack.c.b16 %v5163, %v5163
      %v5196 = vpack.c.b16 %v5164, %v5164
      %v5197 = vpack.c.b16 %v5165, %v5165
      %v5198 = vpack.c.b16 %v5166, %v5166
      %v5199 = vpack.c.b16 %v5167, %v5167
      %v5200 = vpack.c.b16 %v5168, %v5168
      %v5201 = vpack.c.b16 %v5169, %v5169
      %v5202 = vpack.c.b16 %v5170, %v5170
      %v5203 = vpack.c.b16 %v5171, %v5171
      %v5204 = vpack.c.b16 %v5172, %v5172
      %v5205 = vpack.c.b16 %v5173, %v5173
      %v5206 = vpack.c.b16 %v5174, %v5174
      %v5207 = vpack.c.b16 %v5175, %v5175
      %v5208 = vpack.c.b16 %v5176, %v5176
      %v5209 = vpack.c.b16 %v5177, %v5177
      %v5210 = vpack.c.b16 %v5178, %v5178
      %v5211 = vpack.c.b16 %v5179, %v5179
      %v5212 = vpack.c.b16 %v5180, %v5180
      %v5213 = vpack.c.b16 %v5181, %v5181
      %v5215 = vshrl.u32 %v5182, 16
      %v5217 = vrot.slane %v5215, 7
      %v5218 = vshll.u32 %v5182, 16
      %v5220 = vor.u32 %v5217, %v5218
      %v5221 = vrot.slane %v5217, 4
      %v5223 = vshrl.u32 %v5183, 16
      %v5225 = vrot.slane %v5223, 7
      %v5226 = vshll.u32 %v5183, 16
      %v5228 = vor.u32 %v5225, %v5226
      %v5229 = vsel %vm539, %v5221, %v5228
      %v5230 = vrot.slane %v5225, 4
      %v5232 = vshrl.u32 %v5184, 16
      %v5234 = vrot.slane %v5232, 7
      %v5235 = vshll.u32 %v5184, 16
      %v5237 = vor.u32 %v5234, %v5235
      %v5238 = vrot.slane %v5234, 4
      %v5240 = vshrl.u32 %v5185, 16
      %v5242 = vrot.slane %v5240, 7
      %v5243 = vshll.u32 %v5185, 16
      %v5245 = vor.u32 %v5242, %v5243
      %v5246 = vsel %vm539, %v5238, %v5245
      %v5247 = vrot.slane %v5242, 4
      %v5249 = vshrl.u32 %v5186, 16
      %v5251 = vrot.slane %v5249, 7
      %v5252 = vshll.u32 %v5186, 16
      %v5254 = vor.u32 %v5251, %v5252
      %v5255 = vrot.slane %v5251, 4
      %v5257 = vshrl.u32 %v5187, 16
      %v5259 = vrot.slane %v5257, 7
      %v5260 = vshll.u32 %v5187, 16
      %v5262 = vor.u32 %v5259, %v5260
      %v5263 = vsel %vm539, %v5255, %v5262
      %v5264 = vrot.slane %v5259, 4
      %v5266 = vshrl.u32 %v5188, 16
      %v5268 = vrot.slane %v5266, 7
      %v5269 = vshll.u32 %v5188, 16
      %v5271 = vor.u32 %v5268, %v5269
      %v5272 = vrot.slane %v5268, 4
      %v5274 = vshrl.u32 %v5189, 16
      %v5276 = vrot.slane %v5274, 7
      %v5277 = vshll.u32 %v5189, 16
      %v5279 = vor.u32 %v5276, %v5277
      %v5280 = vsel %vm539, %v5272, %v5279
      %v5281 = vrot.slane %v5276, 4
      %v5283 = vshrl.u32 %v5190, 16
      %v5285 = vrot.slane %v5283, 7
      %v5286 = vshll.u32 %v5190, 16
      %v5288 = vor.u32 %v5285, %v5286
      %v5289 = vrot.slane %v5285, 4
      %v5291 = vshrl.u32 %v5191, 16
      %v5293 = vrot.slane %v5291, 7
      %v5294 = vshll.u32 %v5191, 16
      %v5296 = vor.u32 %v5293, %v5294
      %v5297 = vsel %vm539, %v5289, %v5296
      %v5298 = vrot.slane %v5293, 4
      %v5300 = vshrl.u32 %v5192, 16
      %v5302 = vrot.slane %v5300, 7
      %v5303 = vshll.u32 %v5192, 16
      %v5305 = vor.u32 %v5302, %v5303
      %v5306 = vrot.slane %v5302, 4
      %v5308 = vshrl.u32 %v5193, 16
      %v5310 = vrot.slane %v5308, 7
      %v5311 = vshll.u32 %v5193, 16
      %v5313 = vor.u32 %v5310, %v5311
      %v5314 = vsel %vm539, %v5306, %v5313
      %v5315 = vrot.slane %v5310, 4
      %v5317 = vshrl.u32 %v5194, 16
      %v5319 = vrot.slane %v5317, 7
      %v5320 = vshll.u32 %v5194, 16
      %v5322 = vor.u32 %v5319, %v5320
      %v5323 = vrot.slane %v5319, 4
      %v5325 = vshrl.u32 %v5195, 16
      %v5327 = vrot.slane %v5325, 7
      %v5328 = vshll.u32 %v5195, 16
      %v5330 = vor.u32 %v5327, %v5328
      %v5331 = vsel %vm539, %v5323, %v5330
      %v5332 = vrot.slane %v5327, 4
      %v5334 = vshrl.u32 %v5196, 16
      %v5336 = vrot.slane %v5334, 7
      %v5337 = vshll.u32 %v5196, 16
      %v5339 = vor.u32 %v5336, %v5337
      %v5340 = vrot.slane %v5336, 4
      %v5342 = vshrl.u32 %v5197, 16
      %v5344 = vrot.slane %v5342, 7
      %v5345 = vshll.u32 %v5197, 16
      %v5347 = vor.u32 %v5344, %v5345
      %v5348 = vsel %vm539, %v5340, %v5347
      %v5349 = vrot.slane %v5344, 4
      %v5351 = vshrl.u32 %v5198, 16
      %v5353 = vrot.slane %v5351, 7
      %v5354 = vshll.u32 %v5198, 16
      %v5356 = vor.u32 %v5353, %v5354
      %v5357 = vrot.slane %v5353, 4
      %v5359 = vshrl.u32 %v5199, 16
      %v5361 = vrot.slane %v5359, 7
      %v5362 = vshll.u32 %v5199, 16
      %v5364 = vor.u32 %v5361, %v5362
      %v5365 = vsel %vm539, %v5357, %v5364
      %v5366 = vrot.slane %v5361, 4
      %v5368 = vshrl.u32 %v5200, 16
      %v5370 = vrot.slane %v5368, 7
      %v5371 = vshll.u32 %v5200, 16
      %v5373 = vor.u32 %v5370, %v5371
      %v5374 = vrot.slane %v5370, 4
      %v5376 = vshrl.u32 %v5201, 16
      %v5378 = vrot.slane %v5376, 7
      %v5379 = vshll.u32 %v5201, 16
      %v5381 = vor.u32 %v5378, %v5379
      %v5382 = vsel %vm539, %v5374, %v5381
      %v5383 = vrot.slane %v5378, 4
      %v5385 = vshrl.u32 %v5202, 16
      %v5387 = vrot.slane %v5385, 7
      %v5388 = vshll.u32 %v5202, 16
      %v5390 = vor.u32 %v5387, %v5388
      %v5391 = vrot.slane %v5387, 4
      %v5393 = vshrl.u32 %v5203, 16
      %v5395 = vrot.slane %v5393, 7
      %v5396 = vshll.u32 %v5203, 16
      %v5398 = vor.u32 %v5395, %v5396
      %v5399 = vsel %vm539, %v5391, %v5398
      %v5400 = vrot.slane %v5395, 4
      %v5402 = vshrl.u32 %v5204, 16
      %v5404 = vrot.slane %v5402, 7
      %v5405 = vshll.u32 %v5204, 16
      %v5407 = vor.u32 %v5404, %v5405
      %v5408 = vrot.slane %v5404, 4
      %v5410 = vshrl.u32 %v5205, 16
      %v5412 = vrot.slane %v5410, 7
      %v5413 = vshll.u32 %v5205, 16
      %v5415 = vor.u32 %v5412, %v5413
      %v5416 = vsel %vm539, %v5408, %v5415
      %v5417 = vrot.slane %v5412, 4
      %v5419 = vshrl.u32 %v5206, 16
      %v5421 = vrot.slane %v5419, 7
      %v5422 = vshll.u32 %v5206, 16
      %v5424 = vor.u32 %v5421, %v5422
      %v5425 = vrot.slane %v5421, 4
      %v5427 = vshrl.u32 %v5207, 16
      %v5429 = vrot.slane %v5427, 7
      %v5430 = vshll.u32 %v5207, 16
      %v5432 = vor.u32 %v5429, %v5430
      %v5433 = vsel %vm539, %v5425, %v5432
      %v5434 = vrot.slane %v5429, 4
      %v5436 = vshrl.u32 %v5208, 16
      %v5438 = vrot.slane %v5436, 7
      %v5439 = vshll.u32 %v5208, 16
      %v5441 = vor.u32 %v5438, %v5439
      %v5442 = vrot.slane %v5438, 4
      %v5444 = vshrl.u32 %v5209, 16
      %v5446 = vrot.slane %v5444, 7
      %v5447 = vshll.u32 %v5209, 16
      %v5449 = vor.u32 %v5446, %v5447
      %v5450 = vsel %vm539, %v5442, %v5449
      %v5451 = vrot.slane %v5446, 4
      %v5453 = vshrl.u32 %v5210, 16
      %v5455 = vrot.slane %v5453, 7
      %v5456 = vshll.u32 %v5210, 16
      %v5458 = vor.u32 %v5455, %v5456
      %v5459 = vrot.slane %v5455, 4
      %v5461 = vshrl.u32 %v5211, 16
      %v5463 = vrot.slane %v5461, 7
      %v5464 = vshll.u32 %v5211, 16
      %v5466 = vor.u32 %v5463, %v5464
      %v5467 = vsel %vm539, %v5459, %v5466
      %v5468 = vrot.slane %v5463, 4
      %v5470 = vshrl.u32 %v5212, 16
      %v5472 = vrot.slane %v5470, 7
      %v5473 = vshll.u32 %v5212, 16
      %v5475 = vor.u32 %v5472, %v5473
      %v5476 = vrot.slane %v5472, 4
      %v5478 = vshrl.u32 %v5213, 16
      %v5480 = vrot.slane %v5478, 7
      %v5481 = vshll.u32 %v5213, 16
      %v5483 = vor.u32 %v5480, %v5481
      %v5484 = vsel %vm539, %v5476, %v5483
      %v5485 = vrot.slane %v5480, 4
      %v5534 = vld [vmem:[%s860] sm:$0xf]
      %v5535 = vsel %vm863, %v5220, %v5534
      %5536 = vst [vmem:[%s860] sm:$0xf] %v5535
      %5537 = vst.msk [vmem:[%s860 + $0x4] sm:$0xf] %vm867, %v5229
      %v5538 = vld [vmem:[%s860 + $0x8] sm:$0x1]
      %v5539 = vsel %vm870, %v5230, %v5538
      %5540 = vst [vmem:[%s860 + $0x8] sm:$0x1] %v5539
      %v5541 = vld [vmem:[%s860 + $0xc] sm:$0xf]
      %v5542 = vsel %vm863, %v5237, %v5541
      %5543 = vst [vmem:[%s860 + $0xc] sm:$0xf] %v5542
      %5544 = vst.msk [vmem:[%s860 + $0x10] sm:$0xf] %vm867, %v5246
      %v5545 = vld [vmem:[%s860 + $0x14] sm:$0x1]
      %v5546 = vsel %vm870, %v5247, %v5545
      %5547 = vst [vmem:[%s860 + $0x14] sm:$0x1] %v5546
      %v5548 = vld [vmem:[%s860 + $0x18] sm:$0xf]
      %v5549 = vsel %vm863, %v5254, %v5548
      %5550 = vst [vmem:[%s860 + $0x18] sm:$0xf] %v5549
      %5551 = vst.msk [vmem:[%s860 + $0x1c] sm:$0xf] %vm867, %v5263
      %v5552 = vld [vmem:[%s860 + $0x20] sm:$0x1]
      %v5553 = vsel %vm870, %v5264, %v5552
      %5554 = vst [vmem:[%s860 + $0x20] sm:$0x1] %v5553
      %v5555 = vld [vmem:[%s860 + $0x24] sm:$0xf]
      %v5556 = vsel %vm863, %v5271, %v5555
      %5557 = vst [vmem:[%s860 + $0x24] sm:$0xf] %v5556
      %5558 = vst.msk [vmem:[%s860 + $0x28] sm:$0xf] %vm867, %v5280
      %v5559 = vld [vmem:[%s860 + $0x2c] sm:$0x1]
      %v5560 = vsel %vm870, %v5281, %v5559
      %5561 = vst [vmem:[%s860 + $0x2c] sm:$0x1] %v5560
      %v5562 = vld [vmem:[%s860 + $0x30] sm:$0xf]
      %v5563 = vsel %vm863, %v5288, %v5562
      %5564 = vst [vmem:[%s860 + $0x30] sm:$0xf] %v5563
      %5565 = vst.msk [vmem:[%s860 + $0x34] sm:$0xf] %vm867, %v5297
      %v5566 = vld [vmem:[%s860 + $0x38] sm:$0x1]
      %v5567 = vsel %vm870, %v5298, %v5566
      %5568 = vst [vmem:[%s860 + $0x38] sm:$0x1] %v5567
      %v5569 = vld [vmem:[%s860 + $0x3c] sm:$0xf]
      %v5570 = vsel %vm863, %v5305, %v5569
      %5571 = vst [vmem:[%s860 + $0x3c] sm:$0xf] %v5570
      %5572 = vst.msk [vmem:[%s860 + $0x40] sm:$0xf] %vm867, %v5314
      %v5573 = vld [vmem:[%s860 + $0x44] sm:$0x1]
      %v5574 = vsel %vm870, %v5315, %v5573
      %5575 = vst [vmem:[%s860 + $0x44] sm:$0x1] %v5574
      %v5576 = vld [vmem:[%s860 + $0x48] sm:$0xf]
      %v5577 = vsel %vm863, %v5322, %v5576
      %5578 = vst [vmem:[%s860 + $0x48] sm:$0xf] %v5577
      %5579 = vst.msk [vmem:[%s860 + $0x4c] sm:$0xf] %vm867, %v5331
      %v5580 = vld [vmem:[%s860 + $0x50] sm:$0x1]
      %v5581 = vsel %vm870, %v5332, %v5580
      %5582 = vst [vmem:[%s860 + $0x50] sm:$0x1] %v5581
      %v5583 = vld [vmem:[%s860 + $0x54] sm:$0xf]
      %v5584 = vsel %vm863, %v5339, %v5583
      %5585 = vst [vmem:[%s860 + $0x54] sm:$0xf] %v5584
      %5586 = vst.msk [vmem:[%s860 + $0x58] sm:$0xf] %vm867, %v5348
      %v5587 = vld [vmem:[%s860 + $0x5c] sm:$0x1]
      %v5588 = vsel %vm870, %v5349, %v5587
      %5589 = vst [vmem:[%s860 + $0x5c] sm:$0x1] %v5588
      %v5590 = vld [vmem:[%s860 + $0x60] sm:$0xf]
      %v5591 = vsel %vm863, %v5356, %v5590
      %5592 = vst [vmem:[%s860 + $0x60] sm:$0xf] %v5591
      %5593 = vst.msk [vmem:[%s860 + $0x64] sm:$0xf] %vm867, %v5365
      %v5594 = vld [vmem:[%s860 + $0x68] sm:$0x1]
      %v5595 = vsel %vm870, %v5366, %v5594
      %5596 = vst [vmem:[%s860 + $0x68] sm:$0x1] %v5595
      %v5597 = vld [vmem:[%s860 + $0x6c] sm:$0xf]
      %v5598 = vsel %vm863, %v5373, %v5597
      %5599 = vst [vmem:[%s860 + $0x6c] sm:$0xf] %v5598
      %5600 = vst.msk [vmem:[%s860 + $0x70] sm:$0xf] %vm867, %v5382
      %v5601 = vld [vmem:[%s860 + $0x74] sm:$0x1]
      %v5602 = vsel %vm870, %v5383, %v5601
      %5603 = vst [vmem:[%s860 + $0x74] sm:$0x1] %v5602
      %v5604 = vld [vmem:[%s860 + $0x78] sm:$0xf]
      %v5605 = vsel %vm863, %v5390, %v5604
      %5606 = vst [vmem:[%s860 + $0x78] sm:$0xf] %v5605
      %5607 = vst.msk [vmem:[%s860 + $0x7c] sm:$0xf] %vm867, %v5399
      %v5608 = vld [vmem:[%s860 + $0x80] sm:$0x1]
      %v5609 = vsel %vm870, %v5400, %v5608
      %5610 = vst [vmem:[%s860 + $0x80] sm:$0x1] %v5609
      %v5611 = vld [vmem:[%s860 + $0x84] sm:$0xf]
      %v5612 = vsel %vm863, %v5407, %v5611
      %5613 = vst [vmem:[%s860 + $0x84] sm:$0xf] %v5612
      %5614 = vst.msk [vmem:[%s860 + $0x88] sm:$0xf] %vm867, %v5416
      %v5615 = vld [vmem:[%s860 + $0x8c] sm:$0x1]
      %v5616 = vsel %vm870, %v5417, %v5615
      %5617 = vst [vmem:[%s860 + $0x8c] sm:$0x1] %v5616
      %v5618 = vld [vmem:[%s860 + $0x90] sm:$0xf]
      %v5619 = vsel %vm863, %v5424, %v5618
      %5620 = vst [vmem:[%s860 + $0x90] sm:$0xf] %v5619
      %5621 = vst.msk [vmem:[%s860 + $0x94] sm:$0xf] %vm867, %v5433
      %v5622 = vld [vmem:[%s860 + $0x98] sm:$0x1]
      %v5623 = vsel %vm870, %v5434, %v5622
      %5624 = vst [vmem:[%s860 + $0x98] sm:$0x1] %v5623
      %v5625 = vld [vmem:[%s860 + $0x9c] sm:$0xf]
      %v5626 = vsel %vm863, %v5441, %v5625
      %5627 = vst [vmem:[%s860 + $0x9c] sm:$0xf] %v5626
      %5628 = vst.msk [vmem:[%s860 + $0xa0] sm:$0xf] %vm867, %v5450
      %v5629 = vld [vmem:[%s860 + $0xa4] sm:$0x1]
      %v5630 = vsel %vm870, %v5451, %v5629
      %5631 = vst [vmem:[%s860 + $0xa4] sm:$0x1] %v5630
      %v5632 = vld [vmem:[%s860 + $0xa8] sm:$0xf]
      %v5633 = vsel %vm863, %v5458, %v5632
      %5634 = vst [vmem:[%s860 + $0xa8] sm:$0xf] %v5633
      %5635 = vst.msk [vmem:[%s860 + $0xac] sm:$0xf] %vm867, %v5467
      %v5636 = vld [vmem:[%s860 + $0xb0] sm:$0x1]
      %v5637 = vsel %vm870, %v5468, %v5636
      %5638 = vst [vmem:[%s860 + $0xb0] sm:$0x1] %v5637
      %v5639 = vld [vmem:[%s860 + $0xb4] sm:$0xf]
      %v5640 = vsel %vm863, %v5475, %v5639
      %5641 = vst [vmem:[%s860 + $0xb4] sm:$0xf] %v5640
      %5642 = vst.msk [vmem:[%s860 + $0xb8] sm:$0xf] %vm867, %v5484
      %v5643 = vld [vmem:[%s860 + $0xbc] sm:$0x1]
      %v5644 = vsel %vm870, %v5485, %v5643
      %5645 = vst [vmem:[%s860 + $0xbc] sm:$0x1] %v5644
      %v5646 = vld [vmem:[#allocation2] sm:$0xf]
      %v5647 = vld [vmem:[#allocation2 + $0x4] sm:$0xf]
      %v5648 = vld [vmem:[#allocation2 + $0x8] sm:$0x1]
      %v5649 = vld [vmem:[#allocation2 + $0xc] sm:$0xf]
      %v5650 = vld [vmem:[#allocation2 + $0x10] sm:$0xf]
      %v5651 = vld [vmem:[#allocation2 + $0x14] sm:$0x1]
      %v5652 = vld [vmem:[#allocation2 + $0x18] sm:$0xf]
      %v5653 = vld [vmem:[#allocation2 + $0x1c] sm:$0xf]
      %v5654 = vld [vmem:[#allocation2 + $0x20] sm:$0x1]
      %v5655 = vld [vmem:[#allocation2 + $0x24] sm:$0xf]
      %v5656 = vld [vmem:[#allocation2 + $0x28] sm:$0xf]
      %v5657 = vld [vmem:[#allocation2 + $0x2c] sm:$0x1]
      %v5658 = vld [vmem:[#allocation2 + $0x30] sm:$0xf]
      %v5659 = vld [vmem:[#allocation2 + $0x34] sm:$0xf]
      %v5660 = vld [vmem:[#allocation2 + $0x38] sm:$0x1]
      %v5661 = vld [vmem:[#allocation2 + $0x3c] sm:$0xf]
      %v5662 = vld [vmem:[#allocation2 + $0x40] sm:$0xf]
      %v5663 = vld [vmem:[#allocation2 + $0x44] sm:$0x1]
      %v5664 = vld [vmem:[#allocation2 + $0x48] sm:$0xf]
      %v5665 = vld [vmem:[#allocation2 + $0x4c] sm:$0xf]
      %v5666 = vld [vmem:[#allocation2 + $0x50] sm:$0x1]
      %v5667 = vld [vmem:[#allocation2 + $0x54] sm:$0xf]
      %v5668 = vld [vmem:[#allocation2 + $0x58] sm:$0xf]
      %v5669 = vld [vmem:[#allocation2 + $0x5c] sm:$0x1]
      %v5670 = vld [vmem:[#allocation2 + $0x60] sm:$0xf]
      %v5671 = vld [vmem:[#allocation2 + $0x64] sm:$0xf]
      %v5672 = vld [vmem:[#allocation2 + $0x68] sm:$0x1]
      %v5673 = vld [vmem:[#allocation2 + $0x6c] sm:$0xf]
      %v5674 = vld [vmem:[#allocation2 + $0x70] sm:$0xf]
      %v5675 = vld [vmem:[#allocation2 + $0x74] sm:$0x1]
      %v5676 = vld [vmem:[#allocation2 + $0x78] sm:$0xf]
      %v5677 = vld [vmem:[#allocation2 + $0x7c] sm:$0xf]
      %v5678 = vld [vmem:[#allocation2 + $0x80] sm:$0x1]
      %v5679 = vld [vmem:[#allocation2 + $0x84] sm:$0xf]
      %v5680 = vld [vmem:[#allocation2 + $0x88] sm:$0xf]
      %v5681 = vld [vmem:[#allocation2 + $0x8c] sm:$0x1]
      %v5682 = vld [vmem:[#allocation2 + $0x90] sm:$0xf]
      %v5683 = vld [vmem:[#allocation2 + $0x94] sm:$0xf]
      %v5684 = vld [vmem:[#allocation2 + $0x98] sm:$0x1]
      %v5685 = vld [vmem:[#allocation2 + $0x9c] sm:$0xf]
      %v5686 = vld [vmem:[#allocation2 + $0xa0] sm:$0xf]
      %v5687 = vld [vmem:[#allocation2 + $0xa4] sm:$0x1]
      %v5688 = vld [vmem:[#allocation2 + $0xa8] sm:$0xf]
      %v5689 = vld [vmem:[#allocation2 + $0xac] sm:$0xf]
      %v5690 = vld [vmem:[#allocation2 + $0xb0] sm:$0x1]
      %v5691 = vld [vmem:[#allocation2 + $0xb4] sm:$0xf]
      %v5692 = vld [vmem:[#allocation2 + $0xb8] sm:$0xf]
      %v5693 = vld [vmem:[#allocation2 + $0xbc] sm:$0x1]
      %v5694 = vld [vmem:[#allocation2 + $0xc0] sm:$0xf]
      %v5695 = vld [vmem:[#allocation2 + $0xc4] sm:$0xf]
      %v5696 = vld [vmem:[#allocation2 + $0xc8] sm:$0x1]
      %v5697 = vld [vmem:[#allocation2 + $0xcc] sm:$0xf]
      %v5698 = vld [vmem:[#allocation2 + $0xd0] sm:$0xf]
      %v5699 = vld [vmem:[#allocation2 + $0xd4] sm:$0x1]
      %v5701 = vshrl.u32 %v5646, 16
      %v5703 = vrot.slane %v5701, 4
      %v5704 = vshll.u32 %v5646, 16
      %v5706 = vrot.slane %v5704, 5
      %v5707 = vor.u32 %v5703, %v5706
      %v5708 = vrot.slane %v5707, 4
      %v5710 = vshll.u32 %v5647, 16
      %v5712 = vrot.slane %v5710, 5
      %v5713 = vsel %vm1035, %v5708, %v5712
      %v5714 = vshrl.u32 %v5647, 16
      %v5716 = vrot.slane %v5714, 4
      %v5717 = vor.u32 %v5716, %v5712
      %v5718 = vrot.slane %v5717, 4
      %v5720 = vshll.u32 %v5648, 16
      %v5722 = vrot.slane %v5720, 5
      %v5723 = vsel %vm1035, %v5718, %v5722
      %v5725 = vshrl.u32 %v5649, 16
      %v5727 = vrot.slane %v5725, 4
      %v5728 = vshll.u32 %v5649, 16
      %v5730 = vrot.slane %v5728, 5
      %v5731 = vor.u32 %v5727, %v5730
      %v5732 = vrot.slane %v5731, 4
      %v5734 = vshll.u32 %v5650, 16
      %v5736 = vrot.slane %v5734, 5
      %v5737 = vsel %vm1035, %v5732, %v5736
      %v5738 = vshrl.u32 %v5650, 16
      %v5740 = vrot.slane %v5738, 4
      %v5741 = vor.u32 %v5740, %v5736
      %v5742 = vrot.slane %v5741, 4
      %v5744 = vshll.u32 %v5651, 16
      %v5746 = vrot.slane %v5744, 5
      %v5747 = vsel %vm1035, %v5742, %v5746
      %v5749 = vshrl.u32 %v5652, 16
      %v5751 = vrot.slane %v5749, 4
      %v5752 = vshll.u32 %v5652, 16
      %v5754 = vrot.slane %v5752, 5
      %v5755 = vor.u32 %v5751, %v5754
      %v5756 = vrot.slane %v5755, 4
      %v5758 = vshll.u32 %v5653, 16
      %v5760 = vrot.slane %v5758, 5
      %v5761 = vsel %vm1035, %v5756, %v5760
      %v5762 = vshrl.u32 %v5653, 16
      %v5764 = vrot.slane %v5762, 4
      %v5765 = vor.u32 %v5764, %v5760
      %v5766 = vrot.slane %v5765, 4
      %v5768 = vshll.u32 %v5654, 16
      %v5770 = vrot.slane %v5768, 5
      %v5771 = vsel %vm1035, %v5766, %v5770
      %v5773 = vshrl.u32 %v5655, 16
      %v5775 = vrot.slane %v5773, 4
      %v5776 = vshll.u32 %v5655, 16
      %v5778 = vrot.slane %v5776, 5
      %v5779 = vor.u32 %v5775, %v5778
      %v5780 = vrot.slane %v5779, 4
      %v5782 = vshll.u32 %v5656, 16
      %v5784 = vrot.slane %v5782, 5
      %v5785 = vsel %vm1035, %v5780, %v5784
      %v5786 = vshrl.u32 %v5656, 16
      %v5788 = vrot.slane %v5786, 4
      %v5789 = vor.u32 %v5788, %v5784
      %v5790 = vrot.slane %v5789, 4
      %v5792 = vshll.u32 %v5657, 16
      %v5794 = vrot.slane %v5792, 5
      %v5795 = vsel %vm1035, %v5790, %v5794
      %v5797 = vshrl.u32 %v5658, 16
      %v5799 = vrot.slane %v5797, 4
      %v5800 = vshll.u32 %v5658, 16
      %v5802 = vrot.slane %v5800, 5
      %v5803 = vor.u32 %v5799, %v5802
      %v5804 = vrot.slane %v5803, 4
      %v5806 = vshll.u32 %v5659, 16
      %v5808 = vrot.slane %v5806, 5
      %v5809 = vsel %vm1035, %v5804, %v5808
      %v5810 = vshrl.u32 %v5659, 16
      %v5812 = vrot.slane %v5810, 4
      %v5813 = vor.u32 %v5812, %v5808
      %v5814 = vrot.slane %v5813, 4
      %v5816 = vshll.u32 %v5660, 16
      %v5818 = vrot.slane %v5816, 5
      %v5819 = vsel %vm1035, %v5814, %v5818
      %v5821 = vshrl.u32 %v5661, 16
      %v5823 = vrot.slane %v5821, 4
      %v5824 = vshll.u32 %v5661, 16
      %v5826 = vrot.slane %v5824, 5
      %v5827 = vor.u32 %v5823, %v5826
      %v5828 = vrot.slane %v5827, 4
      %v5830 = vshll.u32 %v5662, 16
      %v5832 = vrot.slane %v5830, 5
      %v5833 = vsel %vm1035, %v5828, %v5832
      %v5834 = vshrl.u32 %v5662, 16
      %v5836 = vrot.slane %v5834, 4
      %v5837 = vor.u32 %v5836, %v5832
      %v5838 = vrot.slane %v5837, 4
      %v5840 = vshll.u32 %v5663, 16
      %v5842 = vrot.slane %v5840, 5
      %v5843 = vsel %vm1035, %v5838, %v5842
      %v5845 = vshrl.u32 %v5664, 16
      %v5847 = vrot.slane %v5845, 4
      %v5848 = vshll.u32 %v5664, 16
      %v5850 = vrot.slane %v5848, 5
      %v5851 = vor.u32 %v5847, %v5850
      %v5852 = vrot.slane %v5851, 4
      %v5854 = vshll.u32 %v5665, 16
      %v5856 = vrot.slane %v5854, 5
      %v5857 = vsel %vm1035, %v5852, %v5856
      %v5858 = vshrl.u32 %v5665, 16
      %v5860 = vrot.slane %v5858, 4
      %v5861 = vor.u32 %v5860, %v5856
      %v5862 = vrot.slane %v5861, 4
      %v5864 = vshll.u32 %v5666, 16
      %v5866 = vrot.slane %v5864, 5
      %v5867 = vsel %vm1035, %v5862, %v5866
      %v5869 = vshrl.u32 %v5667, 16
      %v5871 = vrot.slane %v5869, 4
      %v5872 = vshll.u32 %v5667, 16
      %v5874 = vrot.slane %v5872, 5
      %v5875 = vor.u32 %v5871, %v5874
      %v5876 = vrot.slane %v5875, 4
      %v5878 = vshll.u32 %v5668, 16
      %v5880 = vrot.slane %v5878, 5
      %v5881 = vsel %vm1035, %v5876, %v5880
      %v5882 = vshrl.u32 %v5668, 16
      %v5884 = vrot.slane %v5882, 4
      %v5885 = vor.u32 %v5884, %v5880
      %v5886 = vrot.slane %v5885, 4
      %v5888 = vshll.u32 %v5669, 16
      %v5890 = vrot.slane %v5888, 5
      %v5891 = vsel %vm1035, %v5886, %v5890
      %v5893 = vshrl.u32 %v5670, 16
      %v5895 = vrot.slane %v5893, 4
      %v5896 = vshll.u32 %v5670, 16
      %v5898 = vrot.slane %v5896, 5
      %v5899 = vor.u32 %v5895, %v5898
      %v5900 = vrot.slane %v5899, 4
      %v5902 = vshll.u32 %v5671, 16
      %v5904 = vrot.slane %v5902, 5
      %v5905 = vsel %vm1035, %v5900, %v5904
      %v5906 = vshrl.u32 %v5671, 16
      %v5908 = vrot.slane %v5906, 4
      %v5909 = vor.u32 %v5908, %v5904
      %v5910 = vrot.slane %v5909, 4
      %v5912 = vshll.u32 %v5672, 16
      %v5914 = vrot.slane %v5912, 5
      %v5915 = vsel %vm1035, %v5910, %v5914
      %v5917 = vshrl.u32 %v5673, 16
      %v5919 = vrot.slane %v5917, 4
      %v5920 = vshll.u32 %v5673, 16
      %v5922 = vrot.slane %v5920, 5
      %v5923 = vor.u32 %v5919, %v5922
      %v5924 = vrot.slane %v5923, 4
      %v5926 = vshll.u32 %v5674, 16
      %v5928 = vrot.slane %v5926, 5
      %v5929 = vsel %vm1035, %v5924, %v5928
      %v5930 = vshrl.u32 %v5674, 16
      %v5932 = vrot.slane %v5930, 4
      %v5933 = vor.u32 %v5932, %v5928
      %v5934 = vrot.slane %v5933, 4
      %v5936 = vshll.u32 %v5675, 16
      %v5938 = vrot.slane %v5936, 5
      %v5939 = vsel %vm1035, %v5934, %v5938
      %v5941 = vshrl.u32 %v5676, 16
      %v5943 = vrot.slane %v5941, 4
      %v5944 = vshll.u32 %v5676, 16
      %v5946 = vrot.slane %v5944, 5
      %v5947 = vor.u32 %v5943, %v5946
      %v5948 = vrot.slane %v5947, 4
      %v5950 = vshll.u32 %v5677, 16
      %v5952 = vrot.slane %v5950, 5
      %v5953 = vsel %vm1035, %v5948, %v5952
      %v5954 = vshrl.u32 %v5677, 16
      %v5956 = vrot.slane %v5954, 4
      %v5957 = vor.u32 %v5956, %v5952
      %v5958 = vrot.slane %v5957, 4
      %v5960 = vshll.u32 %v5678, 16
      %v5962 = vrot.slane %v5960, 5
      %v5963 = vsel %vm1035, %v5958, %v5962
      %v5965 = vshrl.u32 %v5679, 16
      %v5967 = vrot.slane %v5965, 4
      %v5968 = vshll.u32 %v5679, 16
      %v5970 = vrot.slane %v5968, 5
      %v5971 = vor.u32 %v5967, %v5970
      %v5972 = vrot.slane %v5971, 4
      %v5974 = vshll.u32 %v5680, 16
      %v5976 = vrot.slane %v5974, 5
      %v5977 = vsel %vm1035, %v5972, %v5976
      %v5978 = vshrl.u32 %v5680, 16
      %v5980 = vrot.slane %v5978, 4
      %v5981 = vor.u32 %v5980, %v5976
      %v5982 = vrot.slane %v5981, 4
      %v5984 = vshll.u32 %v5681, 16
      %v5986 = vrot.slane %v5984, 5
      %v5987 = vsel %vm1035, %v5982, %v5986
      %v5989 = vshrl.u32 %v5682, 16
      %v5991 = vrot.slane %v5989, 4
      %v5992 = vshll.u32 %v5682, 16
      %v5994 = vrot.slane %v5992, 5
      %v5995 = vor.u32 %v5991, %v5994
      %v5996 = vrot.slane %v5995, 4
      %v5998 = vshll.u32 %v5683, 16
      %v6000 = vrot.slane %v5998, 5
      %v6001 = vsel %vm1035, %v5996, %v6000
      %v6002 = vshrl.u32 %v5683, 16
      %v6004 = vrot.slane %v6002, 4
      %v6005 = vor.u32 %v6004, %v6000
      %v6006 = vrot.slane %v6005, 4
      %v6008 = vshll.u32 %v5684, 16
      %v6010 = vrot.slane %v6008, 5
      %v6011 = vsel %vm1035, %v6006, %v6010
      %v6013 = vshrl.u32 %v5685, 16
      %v6015 = vrot.slane %v6013, 4
      %v6016 = vshll.u32 %v5685, 16
      %v6018 = vrot.slane %v6016, 5
      %v6019 = vor.u32 %v6015, %v6018
      %v6020 = vrot.slane %v6019, 4
      %v6022 = vshll.u32 %v5686, 16
      %v6024 = vrot.slane %v6022, 5
      %v6025 = vsel %vm1035, %v6020, %v6024
      %v6026 = vshrl.u32 %v5686, 16
      %v6028 = vrot.slane %v6026, 4
      %v6029 = vor.u32 %v6028, %v6024
      %v6030 = vrot.slane %v6029, 4
      %v6032 = vshll.u32 %v5687, 16
      %v6034 = vrot.slane %v6032, 5
      %v6035 = vsel %vm1035, %v6030, %v6034
      %v6037 = vshrl.u32 %v5688, 16
      %v6039 = vrot.slane %v6037, 4
      %v6040 = vshll.u32 %v5688, 16
      %v6042 = vrot.slane %v6040, 5
      %v6043 = vor.u32 %v6039, %v6042
      %v6044 = vrot.slane %v6043, 4
      %v6046 = vshll.u32 %v5689, 16
      %v6048 = vrot.slane %v6046, 5
      %v6049 = vsel %vm1035, %v6044, %v6048
      %v6050 = vshrl.u32 %v5689, 16
      %v6052 = vrot.slane %v6050, 4
      %v6053 = vor.u32 %v6052, %v6048
      %v6054 = vrot.slane %v6053, 4
      %v6056 = vshll.u32 %v5690, 16
      %v6058 = vrot.slane %v6056, 5
      %v6059 = vsel %vm1035, %v6054, %v6058
      %v6061 = vshrl.u32 %v5691, 16
      %v6063 = vrot.slane %v6061, 4
      %v6064 = vshll.u32 %v5691, 16
      %v6066 = vrot.slane %v6064, 5
      %v6067 = vor.u32 %v6063, %v6066
      %v6068 = vrot.slane %v6067, 4
      %v6070 = vshll.u32 %v5692, 16
      %v6072 = vrot.slane %v6070, 5
      %v6073 = vsel %vm1035, %v6068, %v6072
      %v6074 = vshrl.u32 %v5692, 16
      %v6076 = vrot.slane %v6074, 4
      %v6077 = vor.u32 %v6076, %v6072
      %v6078 = vrot.slane %v6077, 4
      %v6080 = vshll.u32 %v5693, 16
      %v6082 = vrot.slane %v6080, 5
      %v6083 = vsel %vm1035, %v6078, %v6082
      %v6085 = vshrl.u32 %v5694, 16
      %v6087 = vrot.slane %v6085, 4
      %v6088 = vshll.u32 %v5694, 16
      %v6090 = vrot.slane %v6088, 5
      %v6091 = vor.u32 %v6087, %v6090
      %v6092 = vrot.slane %v6091, 4
      %v6094 = vshll.u32 %v5695, 16
      %v6096 = vrot.slane %v6094, 5
      %v6097 = vsel %vm1035, %v6092, %v6096
      %v6098 = vshrl.u32 %v5695, 16
      %v6100 = vrot.slane %v6098, 4
      %v6101 = vor.u32 %v6100, %v6096
      %v6102 = vrot.slane %v6101, 4
      %v6104 = vshll.u32 %v5696, 16
      %v6106 = vrot.slane %v6104, 5
      %v6107 = vsel %vm1035, %v6102, %v6106
      %v6109 = vshrl.u32 %v5697, 16
      %v6111 = vrot.slane %v6109, 4
      %v6112 = vshll.u32 %v5697, 16
      %v6114 = vrot.slane %v6112, 5
      %v6115 = vor.u32 %v6111, %v6114
      %v6116 = vrot.slane %v6115, 4
      %v6118 = vshll.u32 %v5698, 16
      %v6120 = vrot.slane %v6118, 5
      %v6121 = vsel %vm1035, %v6116, %v6120
      %v6122 = vshrl.u32 %v5698, 16
      %v6124 = vrot.slane %v6122, 4
      %v6125 = vor.u32 %v6124, %v6120
      %v6126 = vrot.slane %v6125, 4
      %v6128 = vshll.u32 %v5699, 16
      %v6130 = vrot.slane %v6128, 5
      %v6131 = vsel %vm1035, %v6126, %v6130
      %v6186 = vrot.slane %v5646, 5
      %v6187 = vrot.slane %v6186, 4
      %v6188 = vrot.slane %v5647, 5
      %v6189 = vsel %vm1524, %v6187, %v6188
      %v6190 = vrot.slane %v6188, 4
      %v6191 = vrot.slane %v5648, 5
      %v6192 = vsel %vm1524, %v6190, %v6191
      %v6193 = vrot.slane %v5649, 5
      %v6194 = vrot.slane %v6193, 4
      %v6195 = vrot.slane %v5650, 5
      %v6196 = vsel %vm1524, %v6194, %v6195
      %v6197 = vrot.slane %v6195, 4
      %v6198 = vrot.slane %v5651, 5
      %v6199 = vsel %vm1524, %v6197, %v6198
      %v6200 = vrot.slane %v5652, 5
      %v6201 = vrot.slane %v6200, 4
      %v6202 = vrot.slane %v5653, 5
      %v6203 = vsel %vm1524, %v6201, %v6202
      %v6204 = vrot.slane %v6202, 4
      %v6205 = vrot.slane %v5654, 5
      %v6206 = vsel %vm1524, %v6204, %v6205
      %v6207 = vrot.slane %v5655, 5
      %v6208 = vrot.slane %v6207, 4
      %v6209 = vrot.slane %v5656, 5
      %v6210 = vsel %vm1524, %v6208, %v6209
      %v6211 = vrot.slane %v6209, 4
      %v6212 = vrot.slane %v5657, 5
      %v6213 = vsel %vm1524, %v6211, %v6212
      %v6214 = vrot.slane %v5658, 5
      %v6215 = vrot.slane %v6214, 4
      %v6216 = vrot.slane %v5659, 5
      %v6217 = vsel %vm1524, %v6215, %v6216
      %v6218 = vrot.slane %v6216, 4
      %v6219 = vrot.slane %v5660, 5
      %v6220 = vsel %vm1524, %v6218, %v6219
      %v6221 = vrot.slane %v5661, 5
      %v6222 = vrot.slane %v6221, 4
      %v6223 = vrot.slane %v5662, 5
      %v6224 = vsel %vm1524, %v6222, %v6223
      %v6225 = vrot.slane %v6223, 4
      %v6226 = vrot.slane %v5663, 5
      %v6227 = vsel %vm1524, %v6225, %v6226
      %v6228 = vrot.slane %v5664, 5
      %v6229 = vrot.slane %v6228, 4
      %v6230 = vrot.slane %v5665, 5
      %v6231 = vsel %vm1524, %v6229, %v6230
      %v6232 = vrot.slane %v6230, 4
      %v6233 = vrot.slane %v5666, 5
      %v6234 = vsel %vm1524, %v6232, %v6233
      %v6235 = vrot.slane %v5667, 5
      %v6236 = vrot.slane %v6235, 4
      %v6237 = vrot.slane %v5668, 5
      %v6238 = vsel %vm1524, %v6236, %v6237
      %v6239 = vrot.slane %v6237, 4
      %v6240 = vrot.slane %v5669, 5
      %v6241 = vsel %vm1524, %v6239, %v6240
      %v6242 = vrot.slane %v5670, 5
      %v6243 = vrot.slane %v6242, 4
      %v6244 = vrot.slane %v5671, 5
      %v6245 = vsel %vm1524, %v6243, %v6244
      %v6246 = vrot.slane %v6244, 4
      %v6247 = vrot.slane %v5672, 5
      %v6248 = vsel %vm1524, %v6246, %v6247
      %v6249 = vrot.slane %v5673, 5
      %v6250 = vrot.slane %v6249, 4
      %v6251 = vrot.slane %v5674, 5
      %v6252 = vsel %vm1524, %v6250, %v6251
      %v6253 = vrot.slane %v6251, 4
      %v6254 = vrot.slane %v5675, 5
      %v6255 = vsel %vm1524, %v6253, %v6254
      %v6256 = vrot.slane %v5676, 5
      %v6257 = vrot.slane %v6256, 4
      %v6258 = vrot.slane %v5677, 5
      %v6259 = vsel %vm1524, %v6257, %v6258
      %v6260 = vrot.slane %v6258, 4
      %v6261 = vrot.slane %v5678, 5
      %v6262 = vsel %vm1524, %v6260, %v6261
      %v6263 = vrot.slane %v5679, 5
      %v6264 = vrot.slane %v6263, 4
      %v6265 = vrot.slane %v5680, 5
      %v6266 = vsel %vm1524, %v6264, %v6265
      %v6267 = vrot.slane %v6265, 4
      %v6268 = vrot.slane %v5681, 5
      %v6269 = vsel %vm1524, %v6267, %v6268
      %v6270 = vrot.slane %v5682, 5
      %v6271 = vrot.slane %v6270, 4
      %v6272 = vrot.slane %v5683, 5
      %v6273 = vsel %vm1524, %v6271, %v6272
      %v6274 = vrot.slane %v6272, 4
      %v6275 = vrot.slane %v5684, 5
      %v6276 = vsel %vm1524, %v6274, %v6275
      %v6277 = vrot.slane %v5685, 5
      %v6278 = vrot.slane %v6277, 4
      %v6279 = vrot.slane %v5686, 5
      %v6280 = vsel %vm1524, %v6278, %v6279
      %v6281 = vrot.slane %v6279, 4
      %v6282 = vrot.slane %v5687, 5
      %v6283 = vsel %vm1524, %v6281, %v6282
      %v6284 = vrot.slane %v5688, 5
      %v6285 = vrot.slane %v6284, 4
      %v6286 = vrot.slane %v5689, 5
      %v6287 = vsel %vm1524, %v6285, %v6286
      %v6288 = vrot.slane %v6286, 4
      %v6289 = vrot.slane %v5690, 5
      %v6290 = vsel %vm1524, %v6288, %v6289
      %v6291 = vrot.slane %v5691, 5
      %v6292 = vrot.slane %v6291, 4
      %v6293 = vrot.slane %v5692, 5
      %v6294 = vsel %vm1524, %v6292, %v6293
      %v6295 = vrot.slane %v6293, 4
      %v6296 = vrot.slane %v5693, 5
      %v6297 = vsel %vm1524, %v6295, %v6296
      %v6298 = vrot.slane %v5694, 5
      %v6299 = vrot.slane %v6298, 4
      %v6300 = vrot.slane %v5695, 5
      %v6301 = vsel %vm1524, %v6299, %v6300
      %v6302 = vrot.slane %v6300, 4
      %v6303 = vrot.slane %v5696, 5
      %v6304 = vsel %vm1524, %v6302, %v6303
      %v6305 = vrot.slane %v5697, 5
      %v6306 = vrot.slane %v6305, 4
      %v6307 = vrot.slane %v5698, 5
      %v6308 = vsel %vm1524, %v6306, %v6307
      %v6309 = vrot.slane %v6307, 4
      %v6310 = vrot.slane %v5699, 5
      %v6311 = vsel %vm1524, %v6309, %v6310
      %v6312 = vunpack.c.l.b16 %v5646
      %v6313 = vunpack.c.l.b16 %v5647
      %v6314 = vunpack.c.l.b16 %v5649
      %v6315 = vunpack.c.l.b16 %v5650
      %v6316 = vunpack.c.l.b16 %v5652
      %v6317 = vunpack.c.l.b16 %v5653
      %v6318 = vunpack.c.l.b16 %v5655
      %v6319 = vunpack.c.l.b16 %v5656
      %v6320 = vunpack.c.l.b16 %v5658
      %v6321 = vunpack.c.l.b16 %v5659
      %v6322 = vunpack.c.l.b16 %v5661
      %v6323 = vunpack.c.l.b16 %v5662
      %v6324 = vunpack.c.l.b16 %v5664
      %v6325 = vunpack.c.l.b16 %v5665
      %v6326 = vunpack.c.l.b16 %v5667
      %v6327 = vunpack.c.l.b16 %v5668
      %v6328 = vunpack.c.l.b16 %v5670
      %v6329 = vunpack.c.l.b16 %v5671
      %v6330 = vunpack.c.l.b16 %v5673
      %v6331 = vunpack.c.l.b16 %v5674
      %v6332 = vunpack.c.l.b16 %v5676
      %v6333 = vunpack.c.l.b16 %v5677
      %v6334 = vunpack.c.l.b16 %v5679
      %v6335 = vunpack.c.l.b16 %v5680
      %v6336 = vunpack.c.l.b16 %v5682
      %v6337 = vunpack.c.l.b16 %v5683
      %v6338 = vunpack.c.l.b16 %v5685
      %v6339 = vunpack.c.l.b16 %v5686
      %v6340 = vunpack.c.l.b16 %v5688
      %v6341 = vunpack.c.l.b16 %v5689
      %v6342 = vunpack.c.l.b16 %v5691
      %v6343 = vunpack.c.l.b16 %v5692
      %v6344 = vunpack.c.l.b16 %v5694
      %v6345 = vunpack.c.l.b16 %v5695
      %v6346 = vunpack.c.l.b16 %v5697
      %v6347 = vunpack.c.l.b16 %v5698
      %v6348 = vpack.c.b16 %v6313, %v6312
      %v6349 = vpack.c.b16 %v6315, %v6314
      %v6350 = vpack.c.b16 %v6317, %v6316
      %v6351 = vpack.c.b16 %v6319, %v6318
      %v6352 = vpack.c.b16 %v6321, %v6320
      %v6353 = vpack.c.b16 %v6323, %v6322
      %v6354 = vpack.c.b16 %v6325, %v6324
      %v6355 = vpack.c.b16 %v6327, %v6326
      %v6356 = vpack.c.b16 %v6329, %v6328
      %v6357 = vpack.c.b16 %v6331, %v6330
      %v6358 = vpack.c.b16 %v6333, %v6332
      %v6359 = vpack.c.b16 %v6335, %v6334
      %v6360 = vpack.c.b16 %v6337, %v6336
      %v6361 = vpack.c.b16 %v6339, %v6338
      %v6362 = vpack.c.b16 %v6341, %v6340
      %v6363 = vpack.c.b16 %v6343, %v6342
      %v6364 = vpack.c.b16 %v6345, %v6344
      %v6365 = vpack.c.b16 %v6347, %v6346
      %v6366 = vunpack.c.l.b16 %v5713
      %v6367 = vunpack.c.l.b16 %v5723
      %v6368 = vunpack.c.l.b16 %v5737
      %v6369 = vunpack.c.l.b16 %v5747
      %v6370 = vunpack.c.l.b16 %v5761
      %v6371 = vunpack.c.l.b16 %v5771
      %v6372 = vunpack.c.l.b16 %v5785
      %v6373 = vunpack.c.l.b16 %v5795
      %v6374 = vunpack.c.l.b16 %v5809
      %v6375 = vunpack.c.l.b16 %v5819
      %v6376 = vunpack.c.l.b16 %v5833
      %v6377 = vunpack.c.l.b16 %v5843
      %v6378 = vunpack.c.l.b16 %v5857
      %v6379 = vunpack.c.l.b16 %v5867
      %v6380 = vunpack.c.l.b16 %v5881
      %v6381 = vunpack.c.l.b16 %v5891
      %v6382 = vunpack.c.l.b16 %v5905
      %v6383 = vunpack.c.l.b16 %v5915
      %v6384 = vunpack.c.l.b16 %v5929
      %v6385 = vunpack.c.l.b16 %v5939
      %v6386 = vunpack.c.l.b16 %v5953
      %v6387 = vunpack.c.l.b16 %v5963
      %v6388 = vunpack.c.l.b16 %v5977
      %v6389 = vunpack.c.l.b16 %v5987
      %v6390 = vunpack.c.l.b16 %v6001
      %v6391 = vunpack.c.l.b16 %v6011
      %v6392 = vunpack.c.l.b16 %v6025
      %v6393 = vunpack.c.l.b16 %v6035
      %v6394 = vunpack.c.l.b16 %v6049
      %v6395 = vunpack.c.l.b16 %v6059
      %v6396 = vunpack.c.l.b16 %v6073
      %v6397 = vunpack.c.l.b16 %v6083
      %v6398 = vunpack.c.l.b16 %v6097
      %v6399 = vunpack.c.l.b16 %v6107
      %v6400 = vunpack.c.l.b16 %v6121
      %v6401 = vunpack.c.l.b16 %v6131
      %v6402 = vpack.c.b16 %v6367, %v6366
      %v6403 = vpack.c.b16 %v6369, %v6368
      %v6404 = vpack.c.b16 %v6371, %v6370
      %v6405 = vpack.c.b16 %v6373, %v6372
      %v6406 = vpack.c.b16 %v6375, %v6374
      %v6407 = vpack.c.b16 %v6377, %v6376
      %v6408 = vpack.c.b16 %v6379, %v6378
      %v6409 = vpack.c.b16 %v6381, %v6380
      %v6410 = vpack.c.b16 %v6383, %v6382
      %v6411 = vpack.c.b16 %v6385, %v6384
      %v6412 = vpack.c.b16 %v6387, %v6386
      %v6413 = vpack.c.b16 %v6389, %v6388
      %v6414 = vpack.c.b16 %v6391, %v6390
      %v6415 = vpack.c.b16 %v6393, %v6392
      %v6416 = vpack.c.b16 %v6395, %v6394
      %v6417 = vpack.c.b16 %v6397, %v6396
      %v6418 = vpack.c.b16 %v6399, %v6398
      %v6419 = vpack.c.b16 %v6401, %v6400
      %6420 = vrot.lane.b32.xlu0 %v6402, 32
      %v6421 = vpop.permute.xlu0 %6420
      %6422 = vrot.lane.b32.xlu0 %v6403, 32
      %v6423 = vpop.permute.xlu0 %6422
      %6424 = vrot.lane.b32.xlu0 %v6404, 32
      %v6425 = vpop.permute.xlu0 %6424
      %6426 = vrot.lane.b32.xlu0 %v6405, 32
      %v6427 = vpop.permute.xlu0 %6426
      %6428 = vrot.lane.b32.xlu0 %v6406, 32
      %v6429 = vpop.permute.xlu0 %6428
      %6430 = vrot.lane.b32.xlu0 %v6407, 32
      %v6431 = vpop.permute.xlu0 %6430
      %6432 = vrot.lane.b32.xlu0 %v6408, 32
      %v6433 = vpop.permute.xlu0 %6432
      %6434 = vrot.lane.b32.xlu0 %v6409, 32
      %v6435 = vpop.permute.xlu0 %6434
      %6436 = vrot.lane.b32.xlu0 %v6410, 32
      %v6437 = vpop.permute.xlu0 %6436
      %6438 = vrot.lane.b32.xlu0 %v6411, 32
      %v6439 = vpop.permute.xlu0 %6438
      %6440 = vrot.lane.b32.xlu0 %v6412, 32
      %v6441 = vpop.permute.xlu0 %6440
      %6442 = vrot.lane.b32.xlu0 %v6413, 32
      %v6443 = vpop.permute.xlu0 %6442
      %6444 = vrot.lane.b32.xlu0 %v6414, 32
      %v6445 = vpop.permute.xlu0 %6444
      %6446 = vrot.lane.b32.xlu0 %v6415, 32
      %v6447 = vpop.permute.xlu0 %6446
      %6448 = vrot.lane.b32.xlu0 %v6416, 32
      %v6449 = vpop.permute.xlu0 %6448
      %6450 = vrot.lane.b32.xlu0 %v6417, 32
      %v6451 = vpop.permute.xlu0 %6450
      %6452 = vrot.lane.b32.xlu0 %v6418, 32
      %v6453 = vpop.permute.xlu0 %6452
      %6454 = vrot.lane.b32.xlu0 %v6419, 32
      %v6455 = vpop.permute.xlu0 %6454
      %v6456 = vunpack.c.l.b16 %v6189
      %v6457 = vunpack.c.l.b16 %v6192
      %v6458 = vunpack.c.l.b16 %v6196
      %v6459 = vunpack.c.l.b16 %v6199
      %v6460 = vunpack.c.l.b16 %v6203
      %v6461 = vunpack.c.l.b16 %v6206
      %v6462 = vunpack.c.l.b16 %v6210
      %v6463 = vunpack.c.l.b16 %v6213
      %v6464 = vunpack.c.l.b16 %v6217
      %v6465 = vunpack.c.l.b16 %v6220
      %v6466 = vunpack.c.l.b16 %v6224
      %v6467 = vunpack.c.l.b16 %v6227
      %v6468 = vunpack.c.l.b16 %v6231
      %v6469 = vunpack.c.l.b16 %v6234
      %v6470 = vunpack.c.l.b16 %v6238
      %v6471 = vunpack.c.l.b16 %v6241
      %v6472 = vunpack.c.l.b16 %v6245
      %v6473 = vunpack.c.l.b16 %v6248
      %v6474 = vunpack.c.l.b16 %v6252
      %v6475 = vunpack.c.l.b16 %v6255
      %v6476 = vunpack.c.l.b16 %v6259
      %v6477 = vunpack.c.l.b16 %v6262
      %v6478 = vunpack.c.l.b16 %v6266
      %v6479 = vunpack.c.l.b16 %v6269
      %v6480 = vunpack.c.l.b16 %v6273
      %v6481 = vunpack.c.l.b16 %v6276
      %v6482 = vunpack.c.l.b16 %v6280
      %v6483 = vunpack.c.l.b16 %v6283
      %v6484 = vunpack.c.l.b16 %v6287
      %v6485 = vunpack.c.l.b16 %v6290
      %v6486 = vunpack.c.l.b16 %v6294
      %v6487 = vunpack.c.l.b16 %v6297
      %v6488 = vunpack.c.l.b16 %v6301
      %v6489 = vunpack.c.l.b16 %v6304
      %v6490 = vunpack.c.l.b16 %v6308
      %v6491 = vunpack.c.l.b16 %v6311
      %v6492 = vpack.c.b16 %v6457, %v6456
      %v6493 = vpack.c.b16 %v6459, %v6458
      %v6494 = vpack.c.b16 %v6461, %v6460
      %v6495 = vpack.c.b16 %v6463, %v6462
      %v6496 = vpack.c.b16 %v6465, %v6464
      %v6497 = vpack.c.b16 %v6467, %v6466
      %v6498 = vpack.c.b16 %v6469, %v6468
      %v6499 = vpack.c.b16 %v6471, %v6470
      %v6500 = vpack.c.b16 %v6473, %v6472
      %v6501 = vpack.c.b16 %v6475, %v6474
      %v6502 = vpack.c.b16 %v6477, %v6476
      %v6503 = vpack.c.b16 %v6479, %v6478
      %v6504 = vpack.c.b16 %v6481, %v6480
      %v6505 = vpack.c.b16 %v6483, %v6482
      %v6506 = vpack.c.b16 %v6485, %v6484
      %v6507 = vpack.c.b16 %v6487, %v6486
      %v6508 = vpack.c.b16 %v6489, %v6488
      %v6509 = vpack.c.b16 %v6491, %v6490
      %6510 = vrot.lane.b32.xlu0 %v6492, 64
      %v6511 = vpop.permute.xlu0 %6510
      %6512 = vrot.lane.b32.xlu0 %v6493, 64
      %v6513 = vpop.permute.xlu0 %6512
      %6514 = vrot.lane.b32.xlu0 %v6494, 64
      %v6515 = vpop.permute.xlu0 %6514
      %6516 = vrot.lane.b32.xlu0 %v6495, 64
      %v6517 = vpop.permute.xlu0 %6516
      %6518 = vrot.lane.b32.xlu0 %v6496, 64
      %v6519 = vpop.permute.xlu0 %6518
      %6520 = vrot.lane.b32.xlu0 %v6497, 64
      %v6521 = vpop.permute.xlu0 %6520
      %6522 = vrot.lane.b32.xlu0 %v6498, 64
      %v6523 = vpop.permute.xlu0 %6522
      %6524 = vrot.lane.b32.xlu0 %v6499, 64
      %v6525 = vpop.permute.xlu0 %6524
      %6526 = vrot.lane.b32.xlu0 %v6500, 64
      %v6527 = vpop.permute.xlu0 %6526
      %6528 = vrot.lane.b32.xlu0 %v6501, 64
      %v6529 = vpop.permute.xlu0 %6528
      %6530 = vrot.lane.b32.xlu0 %v6502, 64
      %v6531 = vpop.permute.xlu0 %6530
      %6532 = vrot.lane.b32.xlu0 %v6503, 64
      %v6533 = vpop.permute.xlu0 %6532
      %6534 = vrot.lane.b32.xlu0 %v6504, 64
      %v6535 = vpop.permute.xlu0 %6534
      %6536 = vrot.lane.b32.xlu0 %v6505, 64
      %v6537 = vpop.permute.xlu0 %6536
      %6538 = vrot.lane.b32.xlu0 %v6506, 64
      %v6539 = vpop.permute.xlu0 %6538
      %6540 = vrot.lane.b32.xlu0 %v6507, 64
      %v6541 = vpop.permute.xlu0 %6540
      %6542 = vrot.lane.b32.xlu0 %v6508, 64
      %v6543 = vpop.permute.xlu0 %6542
      %6544 = vrot.lane.b32.xlu0 %v6509, 64
      %v6545 = vpop.permute.xlu0 %6544
      %v6548 = vsel %vm1885, %v6348, %v6421
      %v6551 = vsel %vm1885, %v6349, %v6423
      %v6554 = vsel %vm1885, %v6350, %v6425
      %v6557 = vsel %vm1885, %v6351, %v6427
      %v6560 = vsel %vm1885, %v6352, %v6429
      %v6563 = vsel %vm1885, %v6353, %v6431
      %v6566 = vsel %vm1885, %v6354, %v6433
      %v6569 = vsel %vm1885, %v6355, %v6435
      %v6572 = vsel %vm1885, %v6356, %v6437
      %v6575 = vsel %vm1885, %v6357, %v6439
      %v6578 = vsel %vm1885, %v6358, %v6441
      %v6581 = vsel %vm1885, %v6359, %v6443
      %v6584 = vsel %vm1885, %v6360, %v6445
      %v6587 = vsel %vm1885, %v6361, %v6447
      %v6590 = vsel %vm1885, %v6362, %v6449
      %v6593 = vsel %vm1885, %v6363, %v6451
      %v6596 = vsel %vm1885, %v6364, %v6453
      %v6599 = vsel %vm1885, %v6365, %v6455
      %v6601 = vsel %vm1940, %v6548, %v6511
      %v6603 = vsel %vm1940, %v6551, %v6513
      %v6605 = vsel %vm1940, %v6554, %v6515
      %v6607 = vsel %vm1940, %v6557, %v6517
      %v6609 = vsel %vm1940, %v6560, %v6519
      %v6611 = vsel %vm1940, %v6563, %v6521
      %v6613 = vsel %vm1940, %v6566, %v6523
      %v6615 = vsel %vm1940, %v6569, %v6525
      %v6617 = vsel %vm1940, %v6572, %v6527
      %v6619 = vsel %vm1940, %v6575, %v6529
      %v6621 = vsel %vm1940, %v6578, %v6531
      %v6623 = vsel %vm1940, %v6581, %v6533
      %v6625 = vsel %vm1940, %v6584, %v6535
      %v6627 = vsel %vm1940, %v6587, %v6537
      %v6629 = vsel %vm1940, %v6590, %v6539
      %v6631 = vsel %vm1940, %v6593, %v6541
      %v6633 = vsel %vm1940, %v6596, %v6543
      %v6635 = vsel %vm1940, %v6599, %v6545
      %6652 = vrot.lane.b32.xlu0 %v6603, 96
      %v6653 = vpop.permute.xlu0 %6652
      %6654 = vrot.lane.b32.xlu0 %v6605, 96
      %v6655 = vpop.permute.xlu0 %6654
      %6656 = vrot.lane.b32.xlu0 %v6607, 96
      %v6657 = vpop.permute.xlu0 %6656
      %6658 = vrot.lane.b32.xlu0 %v6609, 96
      %v6659 = vpop.permute.xlu0 %6658
      %6660 = vrot.lane.b32.xlu0 %v6611, 96
      %v6661 = vpop.permute.xlu0 %6660
      %6662 = vrot.lane.b32.xlu0 %v6613, 96
      %v6663 = vpop.permute.xlu0 %6662
      %6664 = vrot.lane.b32.xlu0 %v6615, 96
      %v6665 = vpop.permute.xlu0 %6664
      %6666 = vrot.lane.b32.xlu0 %v6617, 96
      %v6667 = vpop.permute.xlu0 %6666
      %6668 = vrot.lane.b32.xlu0 %v6619, 96
      %v6669 = vpop.permute.xlu0 %6668
      %6670 = vrot.lane.b32.xlu0 %v6621, 96
      %v6671 = vpop.permute.xlu0 %6670
      %6672 = vrot.lane.b32.xlu0 %v6623, 96
      %v6673 = vpop.permute.xlu0 %6672
      %6674 = vrot.lane.b32.xlu0 %v6625, 96
      %v6675 = vpop.permute.xlu0 %6674
      %6676 = vrot.lane.b32.xlu0 %v6627, 96
      %v6677 = vpop.permute.xlu0 %6676
      %6678 = vrot.lane.b32.xlu0 %v6629, 96
      %v6679 = vpop.permute.xlu0 %6678
      %6680 = vrot.lane.b32.xlu0 %v6631, 96
      %v6681 = vpop.permute.xlu0 %6680
      %6682 = vrot.lane.b32.xlu0 %v6633, 96
      %v6683 = vpop.permute.xlu0 %6682
      %6685 = vrot.lane.b32.xlu0 %v6605, 64
      %v6686 = vpop.permute.xlu0 %6685
      %6687 = vrot.lane.b32.xlu0 %v6607, 64
      %v6688 = vpop.permute.xlu0 %6687
      %6689 = vrot.lane.b32.xlu0 %v6609, 64
      %v6690 = vpop.permute.xlu0 %6689
      %6691 = vrot.lane.b32.xlu0 %v6611, 64
      %v6692 = vpop.permute.xlu0 %6691
      %6693 = vrot.lane.b32.xlu0 %v6613, 64
      %v6694 = vpop.permute.xlu0 %6693
      %6695 = vrot.lane.b32.xlu0 %v6615, 64
      %v6696 = vpop.permute.xlu0 %6695
      %6697 = vrot.lane.b32.xlu0 %v6617, 64
      %v6698 = vpop.permute.xlu0 %6697
      %6699 = vrot.lane.b32.xlu0 %v6619, 64
      %v6700 = vpop.permute.xlu0 %6699
      %6701 = vrot.lane.b32.xlu0 %v6621, 64
      %v6702 = vpop.permute.xlu0 %6701
      %6703 = vrot.lane.b32.xlu0 %v6623, 64
      %v6704 = vpop.permute.xlu0 %6703
      %6705 = vrot.lane.b32.xlu0 %v6625, 64
      %v6706 = vpop.permute.xlu0 %6705
      %6707 = vrot.lane.b32.xlu0 %v6627, 64
      %v6708 = vpop.permute.xlu0 %6707
      %6709 = vrot.lane.b32.xlu0 %v6629, 64
      %v6710 = vpop.permute.xlu0 %6709
      %6711 = vrot.lane.b32.xlu0 %v6631, 64
      %v6712 = vpop.permute.xlu0 %6711
      %6713 = vrot.lane.b32.xlu0 %v6633, 64
      %v6714 = vpop.permute.xlu0 %6713
      %6715 = vrot.lane.b32.xlu0 %v6635, 64
      %v6716 = vpop.permute.xlu0 %6715
      %v6718 = vsel %vm2058, %v6601, %v6653
      %v6721 = vsel %vm2058, %v6603, %v6655
      %v6724 = vsel %vm2058, %v6605, %v6657
      %v6727 = vsel %vm2058, %v6607, %v6659
      %v6730 = vsel %vm2058, %v6609, %v6661
      %v6733 = vsel %vm2058, %v6611, %v6663
      %v6736 = vsel %vm2058, %v6613, %v6665
      %v6739 = vsel %vm2058, %v6615, %v6667
      %v6742 = vsel %vm2058, %v6617, %v6669
      %v6745 = vsel %vm2058, %v6619, %v6671
      %v6748 = vsel %vm2058, %v6621, %v6673
      %v6751 = vsel %vm2058, %v6623, %v6675
      %v6754 = vsel %vm2058, %v6625, %v6677
      %v6757 = vsel %vm2058, %v6627, %v6679
      %v6760 = vsel %vm2058, %v6629, %v6681
      %v6763 = vsel %vm2058, %v6631, %v6683
      %v6766 = vsel %vm1940, %v6653, %v6686
      %v6769 = vsel %vm1940, %v6655, %v6688
      %v6772 = vsel %vm1940, %v6657, %v6690
      %v6775 = vsel %vm1940, %v6659, %v6692
      %v6778 = vsel %vm1940, %v6661, %v6694
      %v6781 = vsel %vm1940, %v6663, %v6696
      %v6784 = vsel %vm1940, %v6665, %v6698
      %v6787 = vsel %vm1940, %v6667, %v6700
      %v6790 = vsel %vm1940, %v6669, %v6702
      %v6793 = vsel %vm1940, %v6671, %v6704
      %v6796 = vsel %vm1940, %v6673, %v6706
      %v6799 = vsel %vm1940, %v6675, %v6708
      %v6802 = vsel %vm1940, %v6677, %v6710
      %v6805 = vsel %vm1940, %v6679, %v6712
      %v6808 = vsel %vm1940, %v6681, %v6714
      %v6811 = vsel %vm1940, %v6683, %v6716
      %s6813 = scalar_lea.vmem %s1, 288
      %v6814 = vld [vmem:[%s6813] sm:$0xf]
      %v6815 = vld [vmem:[%s6813 + $0x4] sm:$0xf]
      %v6816 = vld [vmem:[%s6813 + $0x8] sm:$0xf]
      %v6817 = vld [vmem:[%s6813 + $0xc] sm:$0xf]
      %v6818 = vld [vmem:[%s6813 + $0x10] sm:$0xf]
      %v6819 = vld [vmem:[%s6813 + $0x14] sm:$0xf]
      %v6820 = vld [vmem:[%s6813 + $0x18] sm:$0xf]
      %v6821 = vld [vmem:[%s6813 + $0x1c] sm:$0xf]
      %v6822 = vld [vmem:[%s6813 + $0x20] sm:$0xf]
      %v6823 = vld [vmem:[%s6813 + $0x24] sm:$0xf]
      %v6824 = vld [vmem:[%s6813 + $0x28] sm:$0xf]
      %v6825 = vld [vmem:[%s6813 + $0x2c] sm:$0xf]
      %v6826 = vld [vmem:[%s6813 + $0x30] sm:$0xf]
      %v6827 = vld [vmem:[%s6813 + $0x34] sm:$0xf]
      %v6828 = vld [vmem:[%s6813 + $0x38] sm:$0xf]
      %v6829 = vld [vmem:[%s6813 + $0x3c] sm:$0xf]
      %v6830 = vld [vmem:[%s6813 + $0x40] sm:$0xf]
      %v6831 = vld [vmem:[%s6813 + $0x44] sm:$0xf]
      %v6832 = vld [vmem:[%s6813 + $0x48] sm:$0xf]
      %v6833 = vld [vmem:[%s6813 + $0x4c] sm:$0xf]
      %v6834 = vld [vmem:[%s6813 + $0x50] sm:$0xf]
      %v6835 = vld [vmem:[%s6813 + $0x54] sm:$0xf]
      %v6836 = vld [vmem:[%s6813 + $0x58] sm:$0xf]
      %v6837 = vld [vmem:[%s6813 + $0x5c] sm:$0xf]
      %v6838 = vld [vmem:[%s6813 + $0x60] sm:$0xf]
      %v6839 = vld [vmem:[%s6813 + $0x64] sm:$0xf]
      %v6840 = vld [vmem:[%s6813 + $0x68] sm:$0xf]
      %v6841 = vld [vmem:[%s6813 + $0x6c] sm:$0xf]
      %v6842 = vld [vmem:[%s6813 + $0x70] sm:$0xf]
      %v6843 = vld [vmem:[%s6813 + $0x74] sm:$0xf]
      %v6844 = vld [vmem:[%s6813 + $0x78] sm:$0xf]
      %v6845 = vld [vmem:[%s6813 + $0x7c] sm:$0xf]
      %v6846 = vld [vmem:[%s6813 + $0x80] sm:$0xf]
      %v6847 = vld [vmem:[%s6813 + $0x84] sm:$0xf]
      %v6848 = vld [vmem:[%s6813 + $0x88] sm:$0xf]
      %v6849 = vld [vmem:[%s6813 + $0x8c] sm:$0xf]
      %v6850 = vld [vmem:[%s2 + $0x2] sm:$0x1]
      %v6851 = vlaneseq
      %v6852 = vshrl.u32 %v6851, 7
      %v6853 = vsub.s32 0, %v6852
      %v6854 = vrot.slane %v6850, %v6853
      %v6891 = vunpack.c.l.b16 %v6814
      %v6892 = vunpack.c.l.b16 %v6815
      %v6893 = vunpack.c.l.b16 %v6816
      %v6894 = vunpack.c.l.b16 %v6817
      %v6895 = vunpack.c.l.b16 %v6818
      %v6896 = vunpack.c.l.b16 %v6819
      %v6897 = vunpack.c.l.b16 %v6820
      %v6898 = vunpack.c.l.b16 %v6821
      %v6899 = vunpack.c.l.b16 %v6822
      %v6900 = vunpack.c.l.b16 %v6823
      %v6901 = vunpack.c.l.b16 %v6824
      %v6902 = vunpack.c.l.b16 %v6825
      %v6903 = vunpack.c.l.b16 %v6826
      %v6904 = vunpack.c.l.b16 %v6827
      %v6905 = vunpack.c.l.b16 %v6828
      %v6906 = vunpack.c.l.b16 %v6829
      %v6907 = vunpack.c.l.b16 %v6830
      %v6908 = vunpack.c.l.b16 %v6831
      %v6909 = vunpack.c.l.b16 %v6832
      %v6910 = vunpack.c.l.b16 %v6833
      %v6911 = vunpack.c.l.b16 %v6834
      %v6912 = vunpack.c.l.b16 %v6835
      %v6913 = vunpack.c.l.b16 %v6836
      %v6914 = vunpack.c.l.b16 %v6837
      %v6915 = vunpack.c.l.b16 %v6838
      %v6916 = vunpack.c.l.b16 %v6839
      %v6917 = vunpack.c.l.b16 %v6840
      %v6918 = vunpack.c.l.b16 %v6841
      %v6919 = vunpack.c.l.b16 %v6842
      %v6920 = vunpack.c.l.b16 %v6843
      %v6921 = vunpack.c.l.b16 %v6844
      %v6922 = vunpack.c.l.b16 %v6845
      %v6923 = vunpack.c.l.b16 %v6846
      %v6924 = vunpack.c.l.b16 %v6847
      %v6925 = vunpack.c.l.b16 %v6848
      %v6926 = vunpack.c.l.b16 %v6849
      %v6927 = vpack.c.b16 %v6892, %v6891
      %v6928 = vpack.c.b16 %v6894, %v6893
      %v6929 = vpack.c.b16 %v6896, %v6895
      %v6930 = vpack.c.b16 %v6898, %v6897
      %v6931 = vpack.c.b16 %v6900, %v6899
      %v6932 = vpack.c.b16 %v6902, %v6901
      %v6933 = vpack.c.b16 %v6904, %v6903
      %v6934 = vpack.c.b16 %v6906, %v6905
      %v6935 = vpack.c.b16 %v6908, %v6907
      %v6936 = vpack.c.b16 %v6910, %v6909
      %v6937 = vpack.c.b16 %v6912, %v6911
      %v6938 = vpack.c.b16 %v6914, %v6913
      %v6939 = vpack.c.b16 %v6916, %v6915
      %v6940 = vpack.c.b16 %v6918, %v6917
      %v6941 = vpack.c.b16 %v6920, %v6919
      %v6942 = vpack.c.b16 %v6922, %v6921
      %v6943 = vpack.c.b16 %v6924, %v6923
      %v6944 = vpack.c.b16 %v6926, %v6925
      %v6963 = vsel %vm1885, %v6686, 0
      %v6965 = vsel %vm1885, %v6688, 0
      %v6967 = vsel %vm1885, %v6690, 0
      %v6969 = vsel %vm1885, %v6692, 0
      %v6971 = vsel %vm1885, %v6694, 0
      %v6973 = vsel %vm1885, %v6696, 0
      %v6975 = vsel %vm1885, %v6698, 0
      %v6977 = vsel %vm1885, %v6700, 0
      %v6979 = vsel %vm1885, %v6702, 0
      %v6981 = vsel %vm1885, %v6704, 0
      %v6983 = vsel %vm1885, %v6706, 0
      %v6985 = vsel %vm1885, %v6708, 0
      %v6987 = vsel %vm1885, %v6710, 0
      %v6989 = vsel %vm1885, %v6712, 0
      %v6991 = vsel %vm1885, %v6714, 0
      %v6993 = vsel %vm1885, %v6716, 0
      %6995 = vmatprep.subr.bf16.mxu0 0
      %6996 = vmatpush1.bf16.msra.mxu0 %v6934
      %6997 = vmatprep.subr.bf16.mxu0 0
      %6998 = vmatpush1.bf16.msra.mxu0 %v6933
      %6999 = vmatprep.subr.bf16.mxu0 0
      %7000 = vmatpush1.bf16.msra.mxu0 %v6932
      %7001 = vmatprep.subr.bf16.mxu0 0
      %7002 = vmatpush1.bf16.msra.mxu0 %v6931
      %7003 = vmatprep.subr.bf16.mxu0 0
      %7004 = vmatpush1.bf16.msra.mxu0 %v6930
      %7005 = vmatprep.subr.bf16.mxu0 0
      %7006 = vmatpush1.bf16.msra.mxu0 %v6929
      %7007 = vmatprep.subr.bf16.mxu0 0
      %7008 = vmatpush1.bf16.msra.mxu0 %v6928
      %7009 = vmatprep.subr.bf16.mxu0 0
      %7010 = vmatpush1.bf16.msra.mxu0 %v6927
      %7011 = vmatprep.subr.bf16.mxu0 0
      %7012 = vmatpush2.bf16.msra.mxu0 %v6942
      %7013 = vmatprep.subr.bf16.mxu0 0
      %7014 = vmatpush2.bf16.msra.mxu0 %v6941
      %7015 = vmatprep.subr.bf16.mxu0 0
      %7016 = vmatpush2.bf16.msra.mxu0 %v6940
      %7017 = vmatprep.subr.bf16.mxu0 0
      %7018 = vmatpush2.bf16.msra.mxu0 %v6939
      %7019 = vmatprep.subr.bf16.mxu0 0
      %7020 = vmatpush2.bf16.msra.mxu0 %v6938
      %7021 = vmatprep.subr.bf16.mxu0 0
      %7022 = vmatpush2.bf16.msra.mxu0 %v6937
      %7023 = vmatprep.subr.bf16.mxu0 0
      %7024 = vmatpush2.bf16.msra.mxu0 %v6936
      %7025 = vmatprep.subr.bf16.mxu0 0
      %7026 = vmatpush2.bf16.msra.mxu0 %v6935
      %7027 = vmatprep.mubr.bf16.mxu0 %v6766
      %7028 = vmatmul.mubr.bf16.gmra.mxu0 %v6718
      %v7029 = vpop.f32.mrf.mxu0
      %v7030 = vadd.f32 %v6854, %v7029
      %v7031 = vpop.f32.mrf.mxu0
      %v7032 = vpop.f32.mrf.mxu0
      %v7033 = vadd.f32 %v6854, %v7032
      %v7034 = vpop.f32.mrf.mxu0
      %7035 = vmatprep.mubr.bf16.mxu0 %v6769
      %7036 = vmatmul.mubr.bf16.gmra.mxu0 %v6721
      %v7037 = vpop.f32.mrf.mxu0
      %v7038 = vadd.f32 %v6854, %v7037
      %v7039 = vpop.f32.mrf.mxu0
      %v7040 = vpop.f32.mrf.mxu0
      %v7041 = vadd.f32 %v6854, %v7040
      %v7042 = vpop.f32.mrf.mxu0
      %7043 = vmatprep.mubr.bf16.mxu0 %v6772
      %7044 = vmatmul.mubr.bf16.gmra.mxu0 %v6724
      %v7045 = vpop.f32.mrf.mxu0
      %v7046 = vadd.f32 %v6854, %v7045
      %v7047 = vpop.f32.mrf.mxu0
      %v7048 = vpop.f32.mrf.mxu0
      %v7049 = vadd.f32 %v6854, %v7048
      %v7050 = vpop.f32.mrf.mxu0
      %7051 = vmatprep.mubr.bf16.mxu0 %v6775
      %7052 = vmatmul.mubr.bf16.gmra.mxu0 %v6727
      %v7053 = vpop.f32.mrf.mxu0
      %v7054 = vadd.f32 %v6854, %v7053
      %v7055 = vpop.f32.mrf.mxu0
      %v7056 = vpop.f32.mrf.mxu0
      %v7057 = vadd.f32 %v6854, %v7056
      %v7058 = vpop.f32.mrf.mxu0
      %7059 = vmatprep.mubr.bf16.mxu0 %v6778
      %7060 = vmatmul.mubr.bf16.gmra.mxu0 %v6730
      %v7061 = vpop.f32.mrf.mxu0
      %v7062 = vadd.f32 %v6854, %v7061
      %v7063 = vpop.f32.mrf.mxu0
      %v7064 = vpop.f32.mrf.mxu0
      %v7065 = vadd.f32 %v6854, %v7064
      %v7066 = vpop.f32.mrf.mxu0
      %7067 = vmatprep.mubr.bf16.mxu0 %v6781
      %7068 = vmatmul.mubr.bf16.gmra.mxu0 %v6733
      %v7069 = vpop.f32.mrf.mxu0
      %v7070 = vadd.f32 %v6854, %v7069
      %v7071 = vpop.f32.mrf.mxu0
      %v7072 = vpop.f32.mrf.mxu0
      %v7073 = vadd.f32 %v6854, %v7072
      %v7074 = vpop.f32.mrf.mxu0
      %7075 = vmatprep.mubr.bf16.mxu0 %v6784
      %7076 = vmatmul.mubr.bf16.gmra.mxu0 %v6736
      %v7077 = vpop.f32.mrf.mxu0
      %v7078 = vadd.f32 %v6854, %v7077
      %v7079 = vpop.f32.mrf.mxu0
      %v7080 = vpop.f32.mrf.mxu0
      %v7081 = vadd.f32 %v6854, %v7080
      %v7082 = vpop.f32.mrf.mxu0
      %7083 = vmatprep.mubr.bf16.mxu0 %v6787
      %7084 = vmatmul.mubr.bf16.gmra.mxu0 %v6739
      %v7085 = vpop.f32.mrf.mxu0
      %v7086 = vadd.f32 %v6854, %v7085
      %v7087 = vpop.f32.mrf.mxu0
      %v7088 = vpop.f32.mrf.mxu0
      %v7089 = vadd.f32 %v6854, %v7088
      %v7090 = vpop.f32.mrf.mxu0
      %7091 = vmatprep.mubr.bf16.mxu0 %v6790
      %7092 = vmatmul.mubr.bf16.gmra.mxu0 %v6742
      %v7093 = vpop.f32.mrf.mxu0
      %v7094 = vadd.f32 %v6854, %v7093
      %v7095 = vpop.f32.mrf.mxu0
      %v7096 = vpop.f32.mrf.mxu0
      %v7097 = vadd.f32 %v6854, %v7096
      %v7098 = vpop.f32.mrf.mxu0
      %7099 = vmatprep.mubr.bf16.mxu0 %v6793
      %7100 = vmatmul.mubr.bf16.gmra.mxu0 %v6745
      %v7101 = vpop.f32.mrf.mxu0
      %v7102 = vadd.f32 %v6854, %v7101
      %v7103 = vpop.f32.mrf.mxu0
      %v7104 = vpop.f32.mrf.mxu0
      %v7105 = vadd.f32 %v6854, %v7104
      %v7106 = vpop.f32.mrf.mxu0
      %7107 = vmatprep.mubr.bf16.mxu0 %v6796
      %7108 = vmatmul.mubr.bf16.gmra.mxu0 %v6748
      %v7109 = vpop.f32.mrf.mxu0
      %v7110 = vadd.f32 %v6854, %v7109
      %v7111 = vpop.f32.mrf.mxu0
      %v7112 = vpop.f32.mrf.mxu0
      %v7113 = vadd.f32 %v6854, %v7112
      %v7114 = vpop.f32.mrf.mxu0
      %7115 = vmatprep.mubr.bf16.mxu0 %v6799
      %7116 = vmatmul.mubr.bf16.gmra.mxu0 %v6751
      %v7117 = vpop.f32.mrf.mxu0
      %v7118 = vadd.f32 %v6854, %v7117
      %v7119 = vpop.f32.mrf.mxu0
      %v7120 = vpop.f32.mrf.mxu0
      %v7121 = vadd.f32 %v6854, %v7120
      %v7122 = vpop.f32.mrf.mxu0
      %7123 = vmatprep.mubr.bf16.mxu0 %v6802
      %7124 = vmatmul.mubr.bf16.gmra.mxu0 %v6754
      %v7125 = vpop.f32.mrf.mxu0
      %v7126 = vadd.f32 %v6854, %v7125
      %v7127 = vpop.f32.mrf.mxu0
      %v7128 = vpop.f32.mrf.mxu0
      %v7129 = vadd.f32 %v6854, %v7128
      %v7130 = vpop.f32.mrf.mxu0
      %7131 = vmatprep.mubr.bf16.mxu0 %v6805
      %7132 = vmatmul.mubr.bf16.gmra.mxu0 %v6757
      %v7133 = vpop.f32.mrf.mxu0
      %v7134 = vadd.f32 %v6854, %v7133
      %v7135 = vpop.f32.mrf.mxu0
      %v7136 = vpop.f32.mrf.mxu0
      %v7137 = vadd.f32 %v6854, %v7136
      %v7138 = vpop.f32.mrf.mxu0
      %7139 = vmatprep.mubr.bf16.mxu0 %v6808
      %7140 = vmatmul.mubr.bf16.gmra.mxu0 %v6760
      %v7141 = vpop.f32.mrf.mxu0
      %v7142 = vadd.f32 %v6854, %v7141
      %v7143 = vpop.f32.mrf.mxu0
      %v7144 = vpop.f32.mrf.mxu0
      %v7145 = vadd.f32 %v6854, %v7144
      %v7146 = vpop.f32.mrf.mxu0
      %7147 = vmatprep.mubr.bf16.mxu0 %v6811
      %7148 = vmatmul.mubr.bf16.gmra.mxu0 %v6763
      %v7149 = vpop.f32.mrf.mxu0
      %v7150 = vadd.f32 %v6854, %v7149
      %v7151 = vpop.f32.mrf.mxu0
      %v7152 = vpop.f32.mrf.mxu0
      %v7153 = vadd.f32 %v6854, %v7152
      %v7154 = vpop.f32.mrf.mxu0
      %7155 = vdwg.mxu0
      %7156 = vmatprep.subr.bf16.mxu0 0
      %7157 = vmatpush1.bf16.msra.mxu0 0
      %7158 = vmatprep.subr.bf16.mxu0 0
      %7159 = vmatpush1.bf16.msra.mxu0 0
      %7160 = vmatprep.subr.bf16.mxu0 0
      %7161 = vmatpush1.bf16.msra.mxu0 0
      %7162 = vmatprep.subr.bf16.mxu0 0
      %7163 = vmatpush1.bf16.msra.mxu0 0
      %7164 = vmatprep.subr.bf16.mxu0 0
      %7165 = vmatpush1.bf16.msra.mxu0 0
      %7166 = vmatprep.subr.bf16.mxu0 0
      %7167 = vmatpush1.bf16.msra.mxu0 0
      %7168 = vmatprep.subr.bf16.mxu0 0
      %7169 = vmatpush1.bf16.msra.mxu0 %v6944
      %7170 = vmatprep.subr.bf16.mxu0 0
      %7171 = vmatpush1.bf16.msra.mxu0 %v6943
      %7172 = vmatprep.subr.bf16.mxu0 0
      %7173 = vmatpush2.bf16.msra.mxu0 0
      %7174 = vmatprep.subr.bf16.mxu0 0
      %7175 = vmatpush2.bf16.msra.mxu0 0
      %7176 = vmatprep.subr.bf16.mxu0 0
      %7177 = vmatpush2.bf16.msra.mxu0 0
      %7178 = vmatprep.subr.bf16.mxu0 0
      %7179 = vmatpush2.bf16.msra.mxu0 0
      %7180 = vmatprep.subr.bf16.mxu0 0
      %7181 = vmatpush2.bf16.msra.mxu0 0
      %7182 = vmatprep.subr.bf16.mxu0 0
      %7183 = vmatpush2.bf16.msra.mxu0 0
      %7184 = vmatprep.subr.bf16.mxu0 0
      %7185 = vmatpush2.bf16.msra.mxu0 0
      %7186 = vmatprep.subr.bf16.mxu0 0
      %7187 = vmatpush2.bf16.msra.mxu0 0
      %7188 = vmatprep.mubr.bf16.mxu0 0
      %7189 = vmatmul.mubr.bf16.gmra.mxu0 %v6963
      %v7190 = vpop.f32.mrf.mxu0
      %v7191 = vadd.f32 %v7030, %v7190
      %v7192 = vpop.f32.mrf.mxu0
      %v7193 = vpop.f32.mrf.mxu0
      %v7194 = vadd.f32 %v7033, %v7193
      %v7195 = vpop.f32.mrf.mxu0
      %7196 = vmatprep.mubr.bf16.mxu0 0
      %7197 = vmatmul.mubr.bf16.gmra.mxu0 %v6965
      %v7198 = vpop.f32.mrf.mxu0
      %v7199 = vadd.f32 %v7038, %v7198
      %v7200 = vpop.f32.mrf.mxu0
      %v7201 = vpop.f32.mrf.mxu0
      %v7202 = vadd.f32 %v7041, %v7201
      %v7203 = vpop.f32.mrf.mxu0
      %7204 = vmatprep.mubr.bf16.mxu0 0
      %7205 = vmatmul.mubr.bf16.gmra.mxu0 %v6967
      %v7206 = vpop.f32.mrf.mxu0
      %v7207 = vadd.f32 %v7046, %v7206
      %v7208 = vpop.f32.mrf.mxu0
      %v7209 = vpop.f32.mrf.mxu0
      %v7210 = vadd.f32 %v7049, %v7209
      %v7211 = vpop.f32.mrf.mxu0
      %7212 = vmatprep.mubr.bf16.mxu0 0
      %7213 = vmatmul.mubr.bf16.gmra.mxu0 %v6969
      %v7214 = vpop.f32.mrf.mxu0
      %v7215 = vadd.f32 %v7054, %v7214
      %v7216 = vpop.f32.mrf.mxu0
      %v7217 = vpop.f32.mrf.mxu0
      %v7218 = vadd.f32 %v7057, %v7217
      %v7219 = vpop.f32.mrf.mxu0
      %7220 = vmatprep.mubr.bf16.mxu0 0
      %7221 = vmatmul.mubr.bf16.gmra.mxu0 %v6971
      %v7222 = vpop.f32.mrf.mxu0
      %v7223 = vadd.f32 %v7062, %v7222
      %v7224 = vpop.f32.mrf.mxu0
      %v7225 = vpop.f32.mrf.mxu0
      %v7226 = vadd.f32 %v7065, %v7225
      %v7227 = vpop.f32.mrf.mxu0
      %7228 = vmatprep.mubr.bf16.mxu0 0
      %7229 = vmatmul.mubr.bf16.gmra.mxu0 %v6973
      %v7230 = vpop.f32.mrf.mxu0
      %v7231 = vadd.f32 %v7070, %v7230
      %v7232 = vpop.f32.mrf.mxu0
      %v7233 = vpop.f32.mrf.mxu0
      %v7234 = vadd.f32 %v7073, %v7233
      %v7235 = vpop.f32.mrf.mxu0
      %7236 = vmatprep.mubr.bf16.mxu0 0
      %7237 = vmatmul.mubr.bf16.gmra.mxu0 %v6975
      %v7238 = vpop.f32.mrf.mxu0
      %v7239 = vadd.f32 %v7078, %v7238
      %v7240 = vpop.f32.mrf.mxu0
      %v7241 = vpop.f32.mrf.mxu0
      %v7242 = vadd.f32 %v7081, %v7241
      %v7243 = vpop.f32.mrf.mxu0
      %7244 = vmatprep.mubr.bf16.mxu0 0
      %7245 = vmatmul.mubr.bf16.gmra.mxu0 %v6977
      %v7246 = vpop.f32.mrf.mxu0
      %v7247 = vadd.f32 %v7086, %v7246
      %v7248 = vpop.f32.mrf.mxu0
      %v7249 = vpop.f32.mrf.mxu0
      %v7250 = vadd.f32 %v7089, %v7249
      %v7251 = vpop.f32.mrf.mxu0
      %7252 = vmatprep.mubr.bf16.mxu0 0
      %7253 = vmatmul.mubr.bf16.gmra.mxu0 %v6979
      %v7254 = vpop.f32.mrf.mxu0
      %v7255 = vadd.f32 %v7094, %v7254
      %v7256 = vpop.f32.mrf.mxu0
      %v7257 = vpop.f32.mrf.mxu0
      %v7258 = vadd.f32 %v7097, %v7257
      %v7259 = vpop.f32.mrf.mxu0
      %7260 = vmatprep.mubr.bf16.mxu0 0
      %7261 = vmatmul.mubr.bf16.gmra.mxu0 %v6981
      %v7262 = vpop.f32.mrf.mxu0
      %v7263 = vadd.f32 %v7102, %v7262
      %v7264 = vpop.f32.mrf.mxu0
      %v7265 = vpop.f32.mrf.mxu0
      %v7266 = vadd.f32 %v7105, %v7265
      %v7267 = vpop.f32.mrf.mxu0
      %7268 = vmatprep.mubr.bf16.mxu0 0
      %7269 = vmatmul.mubr.bf16.gmra.mxu0 %v6983
      %v7270 = vpop.f32.mrf.mxu0
      %v7271 = vadd.f32 %v7110, %v7270
      %v7272 = vpop.f32.mrf.mxu0
      %v7273 = vpop.f32.mrf.mxu0
      %v7274 = vadd.f32 %v7113, %v7273
      %v7275 = vpop.f32.mrf.mxu0
      %7276 = vmatprep.mubr.bf16.mxu0 0
      %7277 = vmatmul.mubr.bf16.gmra.mxu0 %v6985
      %v7278 = vpop.f32.mrf.mxu0
      %v7279 = vadd.f32 %v7118, %v7278
      %v7280 = vpop.f32.mrf.mxu0
      %v7281 = vpop.f32.mrf.mxu0
      %v7282 = vadd.f32 %v7121, %v7281
      %v7283 = vpop.f32.mrf.mxu0
      %7284 = vmatprep.mubr.bf16.mxu0 0
      %7285 = vmatmul.mubr.bf16.gmra.mxu0 %v6987
      %v7286 = vpop.f32.mrf.mxu0
      %v7287 = vadd.f32 %v7126, %v7286
      %v7288 = vpop.f32.mrf.mxu0
      %v7289 = vpop.f32.mrf.mxu0
      %v7290 = vadd.f32 %v7129, %v7289
      %v7291 = vpop.f32.mrf.mxu0
      %7292 = vmatprep.mubr.bf16.mxu0 0
      %7293 = vmatmul.mubr.bf16.gmra.mxu0 %v6989
      %v7294 = vpop.f32.mrf.mxu0
      %v7295 = vadd.f32 %v7134, %v7294
      %v7296 = vpop.f32.mrf.mxu0
      %v7297 = vpop.f32.mrf.mxu0
      %v7298 = vadd.f32 %v7137, %v7297
      %v7299 = vpop.f32.mrf.mxu0
      %7300 = vmatprep.mubr.bf16.mxu0 0
      %7301 = vmatmul.mubr.bf16.gmra.mxu0 %v6991
      %v7302 = vpop.f32.mrf.mxu0
      %v7303 = vadd.f32 %v7142, %v7302
      %v7304 = vpop.f32.mrf.mxu0
      %v7305 = vpop.f32.mrf.mxu0
      %v7306 = vadd.f32 %v7145, %v7305
      %v7307 = vpop.f32.mrf.mxu0
      %7308 = vmatprep.mubr.bf16.mxu0 0
      %7309 = vmatmul.mubr.bf16.gmra.mxu0 %v6993
      %v7310 = vpop.f32.mrf.mxu0
      %v7311 = vadd.f32 %v7150, %v7310
      %v7312 = vpop.f32.mrf.mxu0
      %v7313 = vpop.f32.mrf.mxu0
      %v7314 = vadd.f32 %v7153, %v7313
      %v7315 = vpop.f32.mrf.mxu0
      %7316 = vdwg.mxu0
      %vm7317 = vcmp.gt.f32.partialorder %v7191, 0.0
      %vm7318 = vcmp.gt.f32.partialorder %v7194, 0.0
      %vm7319 = vcmp.gt.f32.partialorder %v7199, 0.0
      %vm7320 = vcmp.gt.f32.partialorder %v7202, 0.0
      %vm7321 = vcmp.gt.f32.partialorder %v7207, 0.0
      %vm7322 = vcmp.gt.f32.partialorder %v7210, 0.0
      %vm7323 = vcmp.gt.f32.partialorder %v7215, 0.0
      %vm7324 = vcmp.gt.f32.partialorder %v7218, 0.0
      %vm7325 = vcmp.gt.f32.partialorder %v7223, 0.0
      %vm7326 = vcmp.gt.f32.partialorder %v7226, 0.0
      %vm7327 = vcmp.gt.f32.partialorder %v7231, 0.0
      %vm7328 = vcmp.gt.f32.partialorder %v7234, 0.0
      %vm7329 = vcmp.gt.f32.partialorder %v7239, 0.0
      %vm7330 = vcmp.gt.f32.partialorder %v7242, 0.0
      %vm7331 = vcmp.gt.f32.partialorder %v7247, 0.0
      %vm7332 = vcmp.gt.f32.partialorder %v7250, 0.0
      %vm7333 = vcmp.gt.f32.partialorder %v7255, 0.0
      %vm7334 = vcmp.gt.f32.partialorder %v7258, 0.0
      %vm7335 = vcmp.gt.f32.partialorder %v7263, 0.0
      %vm7336 = vcmp.gt.f32.partialorder %v7266, 0.0
      %vm7337 = vcmp.gt.f32.partialorder %v7271, 0.0
      %vm7338 = vcmp.gt.f32.partialorder %v7274, 0.0
      %vm7339 = vcmp.gt.f32.partialorder %v7279, 0.0
      %vm7340 = vcmp.gt.f32.partialorder %v7282, 0.0
      %vm7341 = vcmp.gt.f32.partialorder %v7287, 0.0
      %vm7342 = vcmp.gt.f32.partialorder %v7290, 0.0
      %vm7343 = vcmp.gt.f32.partialorder %v7295, 0.0
      %vm7344 = vcmp.gt.f32.partialorder %v7298, 0.0
      %vm7345 = vcmp.gt.f32.partialorder %v7303, 0.0
      %vm7346 = vcmp.gt.f32.partialorder %v7306, 0.0
      %vm7347 = vcmp.gt.f32.partialorder %v7311, 0.0
      %vm7348 = vcmp.gt.f32.partialorder %v7314, 0.0
      %v7349 = vmul.f32 %v7191, 0.01
      %v7350 = vmul.f32 %v7194, 0.01
      %v7351 = vmul.f32 %v7199, 0.01
      %v7352 = vmul.f32 %v7202, 0.01
      %v7353 = vmul.f32 %v7207, 0.01
      %v7354 = vmul.f32 %v7210, 0.01
      %v7355 = vmul.f32 %v7215, 0.01
      %v7356 = vmul.f32 %v7218, 0.01
      %v7357 = vmul.f32 %v7223, 0.01
      %v7358 = vmul.f32 %v7226, 0.01
      %v7359 = vmul.f32 %v7231, 0.01
      %v7360 = vmul.f32 %v7234, 0.01
      %v7361 = vmul.f32 %v7239, 0.01
      %v7362 = vmul.f32 %v7242, 0.01
      %v7363 = vmul.f32 %v7247, 0.01
      %v7364 = vmul.f32 %v7250, 0.01
      %v7365 = vmul.f32 %v7255, 0.01
      %v7366 = vmul.f32 %v7258, 0.01
      %v7367 = vmul.f32 %v7263, 0.01
      %v7368 = vmul.f32 %v7266, 0.01
      %v7369 = vmul.f32 %v7271, 0.01
      %v7370 = vmul.f32 %v7274, 0.01
      %v7371 = vmul.f32 %v7279, 0.01
      %v7372 = vmul.f32 %v7282, 0.01
      %v7373 = vmul.f32 %v7287, 0.01
      %v7374 = vmul.f32 %v7290, 0.01
      %v7375 = vmul.f32 %v7295, 0.01
      %v7376 = vmul.f32 %v7298, 0.01
      %v7377 = vmul.f32 %v7303, 0.01
      %v7378 = vmul.f32 %v7306, 0.01
      %v7379 = vmul.f32 %v7311, 0.01
      %v7380 = vmul.f32 %v7314, 0.01
      %v7381 = vsel %vm7317, %v7191, %v7349
      %v7382 = vsel %vm7318, %v7194, %v7350
      %v7383 = vsel %vm7319, %v7199, %v7351
      %v7384 = vsel %vm7320, %v7202, %v7352
      %v7385 = vsel %vm7321, %v7207, %v7353
      %v7386 = vsel %vm7322, %v7210, %v7354
      %v7387 = vsel %vm7323, %v7215, %v7355
      %v7388 = vsel %vm7324, %v7218, %v7356
      %v7389 = vsel %vm7325, %v7223, %v7357
      %v7390 = vsel %vm7326, %v7226, %v7358
      %v7391 = vsel %vm7327, %v7231, %v7359
      %v7392 = vsel %vm7328, %v7234, %v7360
      %v7393 = vsel %vm7329, %v7239, %v7361
      %v7394 = vsel %vm7330, %v7242, %v7362
      %v7395 = vsel %vm7331, %v7247, %v7363
      %v7396 = vsel %vm7332, %v7250, %v7364
      %v7397 = vsel %vm7333, %v7255, %v7365
      %v7398 = vsel %vm7334, %v7258, %v7366
      %v7399 = vsel %vm7335, %v7263, %v7367
      %v7400 = vsel %vm7336, %v7266, %v7368
      %v7401 = vsel %vm7337, %v7271, %v7369
      %v7402 = vsel %vm7338, %v7274, %v7370
      %v7403 = vsel %vm7339, %v7279, %v7371
      %v7404 = vsel %vm7340, %v7282, %v7372
      %v7405 = vsel %vm7341, %v7287, %v7373
      %v7406 = vsel %vm7342, %v7290, %v7374
      %v7407 = vsel %vm7343, %v7295, %v7375
      %v7408 = vsel %vm7344, %v7298, %v7376
      %v7409 = vsel %vm7345, %v7303, %v7377
      %v7410 = vsel %vm7346, %v7306, %v7378
      %v7411 = vsel %vm7347, %v7311, %v7379
      %v7412 = vsel %vm7348, %v7314, %v7380
      %v7413 = vpack.c.bf16 %v7382, %v7381
      %v7414 = vpack.c.bf16 %v7384, %v7383
      %v7415 = vpack.c.bf16 %v7386, %v7385
      %v7416 = vpack.c.bf16 %v7388, %v7387
      %v7417 = vpack.c.bf16 %v7390, %v7389
      %v7418 = vpack.c.bf16 %v7392, %v7391
      %v7419 = vpack.c.bf16 %v7394, %v7393
      %v7420 = vpack.c.bf16 %v7396, %v7395
      %v7421 = vpack.c.bf16 %v7398, %v7397
      %v7422 = vpack.c.bf16 %v7400, %v7399
      %v7423 = vpack.c.bf16 %v7402, %v7401
      %v7424 = vpack.c.bf16 %v7404, %v7403
      %v7425 = vpack.c.bf16 %v7406, %v7405
      %v7426 = vpack.c.bf16 %v7408, %v7407
      %v7427 = vpack.c.bf16 %v7410, %v7409
      %v7428 = vpack.c.bf16 %v7412, %v7411
      %v7445 = vunpack.c.l.b16 %v7413
      %v7446 = vunpack.c.h.b16 %v7413
      %v7447 = vunpack.c.l.b16 %v7414
      %v7448 = vunpack.c.h.b16 %v7414
      %v7449 = vunpack.c.l.b16 %v7415
      %v7450 = vunpack.c.h.b16 %v7415
      %v7451 = vunpack.c.l.b16 %v7416
      %v7452 = vunpack.c.h.b16 %v7416
      %v7453 = vunpack.c.l.b16 %v7417
      %v7454 = vunpack.c.h.b16 %v7417
      %v7455 = vunpack.c.l.b16 %v7418
      %v7456 = vunpack.c.h.b16 %v7418
      %v7457 = vunpack.c.l.b16 %v7419
      %v7458 = vunpack.c.h.b16 %v7419
      %v7459 = vunpack.c.l.b16 %v7420
      %v7460 = vunpack.c.h.b16 %v7420
      %v7461 = vunpack.c.l.b16 %v7421
      %v7462 = vunpack.c.h.b16 %v7421
      %v7463 = vunpack.c.l.b16 %v7422
      %v7464 = vunpack.c.h.b16 %v7422
      %v7465 = vunpack.c.l.b16 %v7423
      %v7466 = vunpack.c.h.b16 %v7423
      %v7467 = vunpack.c.l.b16 %v7424
      %v7468 = vunpack.c.h.b16 %v7424
      %v7469 = vunpack.c.l.b16 %v7425
      %v7470 = vunpack.c.h.b16 %v7425
      %v7471 = vunpack.c.l.b16 %v7426
      %v7472 = vunpack.c.h.b16 %v7426
      %v7473 = vunpack.c.l.b16 %v7427
      %v7474 = vunpack.c.h.b16 %v7427
      %v7475 = vunpack.c.l.b16 %v7428
      %v7476 = vunpack.c.h.b16 %v7428
      %v7477 = vpack.c.b16 %v7445, %v7445
      %v7478 = vpack.c.b16 %v7446, %v7446
      %v7479 = vpack.c.b16 %v7447, %v7447
      %v7480 = vpack.c.b16 %v7448, %v7448
      %v7481 = vpack.c.b16 %v7449, %v7449
      %v7482 = vpack.c.b16 %v7450, %v7450
      %v7483 = vpack.c.b16 %v7451, %v7451
      %v7484 = vpack.c.b16 %v7452, %v7452
      %v7485 = vpack.c.b16 %v7453, %v7453
      %v7486 = vpack.c.b16 %v7454, %v7454
      %v7487 = vpack.c.b16 %v7455, %v7455
      %v7488 = vpack.c.b16 %v7456, %v7456
      %v7489 = vpack.c.b16 %v7457, %v7457
      %v7490 = vpack.c.b16 %v7458, %v7458
      %v7491 = vpack.c.b16 %v7459, %v7459
      %v7492 = vpack.c.b16 %v7460, %v7460
      %v7493 = vpack.c.b16 %v7461, %v7461
      %v7494 = vpack.c.b16 %v7462, %v7462
      %v7495 = vpack.c.b16 %v7463, %v7463
      %v7496 = vpack.c.b16 %v7464, %v7464
      %v7497 = vpack.c.b16 %v7465, %v7465
      %v7498 = vpack.c.b16 %v7466, %v7466
      %v7499 = vpack.c.b16 %v7467, %v7467
      %v7500 = vpack.c.b16 %v7468, %v7468
      %v7501 = vpack.c.b16 %v7469, %v7469
      %v7502 = vpack.c.b16 %v7470, %v7470
      %v7503 = vpack.c.b16 %v7471, %v7471
      %v7504 = vpack.c.b16 %v7472, %v7472
      %v7505 = vpack.c.b16 %v7473, %v7473
      %v7506 = vpack.c.b16 %v7474, %v7474
      %v7507 = vpack.c.b16 %v7475, %v7475
      %v7508 = vpack.c.b16 %v7476, %v7476
      %v7510 = vshrl.u32 %v7477, 16
      %v7512 = vrot.slane %v7510, 7
      %v7513 = vshll.u32 %v7477, 16
      %v7515 = vor.u32 %v7512, %v7513
      %v7516 = vrot.slane %v7512, 4
      %v7518 = vshrl.u32 %v7478, 16
      %v7520 = vrot.slane %v7518, 7
      %v7521 = vshll.u32 %v7478, 16
      %v7523 = vor.u32 %v7520, %v7521
      %v7524 = vsel %vm539, %v7516, %v7523
      %v7525 = vrot.slane %v7520, 4
      %v7527 = vshrl.u32 %v7479, 16
      %v7529 = vrot.slane %v7527, 7
      %v7530 = vshll.u32 %v7479, 16
      %v7532 = vor.u32 %v7529, %v7530
      %v7533 = vrot.slane %v7529, 4
      %v7535 = vshrl.u32 %v7480, 16
      %v7537 = vrot.slane %v7535, 7
      %v7538 = vshll.u32 %v7480, 16
      %v7540 = vor.u32 %v7537, %v7538
      %v7541 = vsel %vm539, %v7533, %v7540
      %v7542 = vrot.slane %v7537, 4
      %v7544 = vshrl.u32 %v7481, 16
      %v7546 = vrot.slane %v7544, 7
      %v7547 = vshll.u32 %v7481, 16
      %v7549 = vor.u32 %v7546, %v7547
      %v7550 = vrot.slane %v7546, 4
      %v7552 = vshrl.u32 %v7482, 16
      %v7554 = vrot.slane %v7552, 7
      %v7555 = vshll.u32 %v7482, 16
      %v7557 = vor.u32 %v7554, %v7555
      %v7558 = vsel %vm539, %v7550, %v7557
      %v7559 = vrot.slane %v7554, 4
      %v7561 = vshrl.u32 %v7483, 16
      %v7563 = vrot.slane %v7561, 7
      %v7564 = vshll.u32 %v7483, 16
      %v7566 = vor.u32 %v7563, %v7564
      %v7567 = vrot.slane %v7563, 4
      %v7569 = vshrl.u32 %v7484, 16
      %v7571 = vrot.slane %v7569, 7
      %v7572 = vshll.u32 %v7484, 16
      %v7574 = vor.u32 %v7571, %v7572
      %v7575 = vsel %vm539, %v7567, %v7574
      %v7576 = vrot.slane %v7571, 4
      %v7578 = vshrl.u32 %v7485, 16
      %v7580 = vrot.slane %v7578, 7
      %v7581 = vshll.u32 %v7485, 16
      %v7583 = vor.u32 %v7580, %v7581
      %v7584 = vrot.slane %v7580, 4
      %v7586 = vshrl.u32 %v7486, 16
      %v7588 = vrot.slane %v7586, 7
      %v7589 = vshll.u32 %v7486, 16
      %v7591 = vor.u32 %v7588, %v7589
      %v7592 = vsel %vm539, %v7584, %v7591
      %v7593 = vrot.slane %v7588, 4
      %v7595 = vshrl.u32 %v7487, 16
      %v7597 = vrot.slane %v7595, 7
      %v7598 = vshll.u32 %v7487, 16
      %v7600 = vor.u32 %v7597, %v7598
      %v7601 = vrot.slane %v7597, 4
      %v7603 = vshrl.u32 %v7488, 16
      %v7605 = vrot.slane %v7603, 7
      %v7606 = vshll.u32 %v7488, 16
      %v7608 = vor.u32 %v7605, %v7606
      %v7609 = vsel %vm539, %v7601, %v7608
      %v7610 = vrot.slane %v7605, 4
      %v7612 = vshrl.u32 %v7489, 16
      %v7614 = vrot.slane %v7612, 7
      %v7615 = vshll.u32 %v7489, 16
      %v7617 = vor.u32 %v7614, %v7615
      %v7618 = vrot.slane %v7614, 4
      %v7620 = vshrl.u32 %v7490, 16
      %v7622 = vrot.slane %v7620, 7
      %v7623 = vshll.u32 %v7490, 16
      %v7625 = vor.u32 %v7622, %v7623
      %v7626 = vsel %vm539, %v7618, %v7625
      %v7627 = vrot.slane %v7622, 4
      %v7629 = vshrl.u32 %v7491, 16
      %v7631 = vrot.slane %v7629, 7
      %v7632 = vshll.u32 %v7491, 16
      %v7634 = vor.u32 %v7631, %v7632
      %v7635 = vrot.slane %v7631, 4
      %v7637 = vshrl.u32 %v7492, 16
      %v7639 = vrot.slane %v7637, 7
      %v7640 = vshll.u32 %v7492, 16
      %v7642 = vor.u32 %v7639, %v7640
      %v7643 = vsel %vm539, %v7635, %v7642
      %v7644 = vrot.slane %v7639, 4
      %v7646 = vshrl.u32 %v7493, 16
      %v7648 = vrot.slane %v7646, 7
      %v7649 = vshll.u32 %v7493, 16
      %v7651 = vor.u32 %v7648, %v7649
      %v7652 = vrot.slane %v7648, 4
      %v7654 = vshrl.u32 %v7494, 16
      %v7656 = vrot.slane %v7654, 7
      %v7657 = vshll.u32 %v7494, 16
      %v7659 = vor.u32 %v7656, %v7657
      %v7660 = vsel %vm539, %v7652, %v7659
      %v7661 = vrot.slane %v7656, 4
      %v7663 = vshrl.u32 %v7495, 16
      %v7665 = vrot.slane %v7663, 7
      %v7666 = vshll.u32 %v7495, 16
      %v7668 = vor.u32 %v7665, %v7666
      %v7669 = vrot.slane %v7665, 4
      %v7671 = vshrl.u32 %v7496, 16
      %v7673 = vrot.slane %v7671, 7
      %v7674 = vshll.u32 %v7496, 16
      %v7676 = vor.u32 %v7673, %v7674
      %v7677 = vsel %vm539, %v7669, %v7676
      %v7678 = vrot.slane %v7673, 4
      %v7680 = vshrl.u32 %v7497, 16
      %v7682 = vrot.slane %v7680, 7
      %v7683 = vshll.u32 %v7497, 16
      %v7685 = vor.u32 %v7682, %v7683
      %v7686 = vrot.slane %v7682, 4
      %v7688 = vshrl.u32 %v7498, 16
      %v7690 = vrot.slane %v7688, 7
      %v7691 = vshll.u32 %v7498, 16
      %v7693 = vor.u32 %v7690, %v7691
      %v7694 = vsel %vm539, %v7686, %v7693
      %v7695 = vrot.slane %v7690, 4
      %v7697 = vshrl.u32 %v7499, 16
      %v7699 = vrot.slane %v7697, 7
      %v7700 = vshll.u32 %v7499, 16
      %v7702 = vor.u32 %v7699, %v7700
      %v7703 = vrot.slane %v7699, 4
      %v7705 = vshrl.u32 %v7500, 16
      %v7707 = vrot.slane %v7705, 7
      %v7708 = vshll.u32 %v7500, 16
      %v7710 = vor.u32 %v7707, %v7708
      %v7711 = vsel %vm539, %v7703, %v7710
      %v7712 = vrot.slane %v7707, 4
      %v7714 = vshrl.u32 %v7501, 16
      %v7716 = vrot.slane %v7714, 7
      %v7717 = vshll.u32 %v7501, 16
      %v7719 = vor.u32 %v7716, %v7717
      %v7720 = vrot.slane %v7716, 4
      %v7722 = vshrl.u32 %v7502, 16
      %v7724 = vrot.slane %v7722, 7
      %v7725 = vshll.u32 %v7502, 16
      %v7727 = vor.u32 %v7724, %v7725
      %v7728 = vsel %vm539, %v7720, %v7727
      %v7729 = vrot.slane %v7724, 4
      %v7731 = vshrl.u32 %v7503, 16
      %v7733 = vrot.slane %v7731, 7
      %v7734 = vshll.u32 %v7503, 16
      %v7736 = vor.u32 %v7733, %v7734
      %v7737 = vrot.slane %v7733, 4
      %v7739 = vshrl.u32 %v7504, 16
      %v7741 = vrot.slane %v7739, 7
      %v7742 = vshll.u32 %v7504, 16
      %v7744 = vor.u32 %v7741, %v7742
      %v7745 = vsel %vm539, %v7737, %v7744
      %v7746 = vrot.slane %v7741, 4
      %v7748 = vshrl.u32 %v7505, 16
      %v7750 = vrot.slane %v7748, 7
      %v7751 = vshll.u32 %v7505, 16
      %v7753 = vor.u32 %v7750, %v7751
      %v7754 = vrot.slane %v7750, 4
      %v7756 = vshrl.u32 %v7506, 16
      %v7758 = vrot.slane %v7756, 7
      %v7759 = vshll.u32 %v7506, 16
      %v7761 = vor.u32 %v7758, %v7759
      %v7762 = vsel %vm539, %v7754, %v7761
      %v7763 = vrot.slane %v7758, 4
      %v7765 = vshrl.u32 %v7507, 16
      %v7767 = vrot.slane %v7765, 7
      %v7768 = vshll.u32 %v7507, 16
      %v7770 = vor.u32 %v7767, %v7768
      %v7771 = vrot.slane %v7767, 4
      %v7773 = vshrl.u32 %v7508, 16
      %v7775 = vrot.slane %v7773, 7
      %v7776 = vshll.u32 %v7508, 16
      %v7778 = vor.u32 %v7775, %v7776
      %v7779 = vsel %vm539, %v7771, %v7778
      %v7780 = vrot.slane %v7775, 4
      %v7829 = vld [vmem:[%s860] sm:$0xf]
      %v7830 = vsel %vm863, %v7515, %v7829
      %7831 = vst [vmem:[%s860] sm:$0xf] %v7830
      %7832 = vst.msk [vmem:[%s860 + $0x4] sm:$0xf] %vm867, %v7524
      %v7833 = vld [vmem:[%s860 + $0x8] sm:$0x1]
      %v7834 = vsel %vm870, %v7525, %v7833
      %7835 = vst [vmem:[%s860 + $0x8] sm:$0x1] %v7834
      %v7836 = vld [vmem:[%s860 + $0xc] sm:$0xf]
      %v7837 = vsel %vm863, %v7532, %v7836
      %7838 = vst [vmem:[%s860 + $0xc] sm:$0xf] %v7837
      %7839 = vst.msk [vmem:[%s860 + $0x10] sm:$0xf] %vm867, %v7541
      %v7840 = vld [vmem:[%s860 + $0x14] sm:$0x1]
      %v7841 = vsel %vm870, %v7542, %v7840
      %7842 = vst [vmem:[%s860 + $0x14] sm:$0x1] %v7841
      %v7843 = vld [vmem:[%s860 + $0x18] sm:$0xf]
      %v7844 = vsel %vm863, %v7549, %v7843
      %7845 = vst [vmem:[%s860 + $0x18] sm:$0xf] %v7844
      %7846 = vst.msk [vmem:[%s860 + $0x1c] sm:$0xf] %vm867, %v7558
      %v7847 = vld [vmem:[%s860 + $0x20] sm:$0x1]
      %v7848 = vsel %vm870, %v7559, %v7847
      %7849 = vst [vmem:[%s860 + $0x20] sm:$0x1] %v7848
      %v7850 = vld [vmem:[%s860 + $0x24] sm:$0xf]
      %v7851 = vsel %vm863, %v7566, %v7850
      %7852 = vst [vmem:[%s860 + $0x24] sm:$0xf] %v7851
      %7853 = vst.msk [vmem:[%s860 + $0x28] sm:$0xf] %vm867, %v7575
      %v7854 = vld [vmem:[%s860 + $0x2c] sm:$0x1]
      %v7855 = vsel %vm870, %v7576, %v7854
      %7856 = vst [vmem:[%s860 + $0x2c] sm:$0x1] %v7855
      %v7857 = vld [vmem:[%s860 + $0x30] sm:$0xf]
      %v7858 = vsel %vm863, %v7583, %v7857
      %7859 = vst [vmem:[%s860 + $0x30] sm:$0xf] %v7858
      %7860 = vst.msk [vmem:[%s860 + $0x34] sm:$0xf] %vm867, %v7592
      %v7861 = vld [vmem:[%s860 + $0x38] sm:$0x1]
      %v7862 = vsel %vm870, %v7593, %v7861
      %7863 = vst [vmem:[%s860 + $0x38] sm:$0x1] %v7862
      %v7864 = vld [vmem:[%s860 + $0x3c] sm:$0xf]
      %v7865 = vsel %vm863, %v7600, %v7864
      %7866 = vst [vmem:[%s860 + $0x3c] sm:$0xf] %v7865
      %7867 = vst.msk [vmem:[%s860 + $0x40] sm:$0xf] %vm867, %v7609
      %v7868 = vld [vmem:[%s860 + $0x44] sm:$0x1]
      %v7869 = vsel %vm870, %v7610, %v7868
      %7870 = vst [vmem:[%s860 + $0x44] sm:$0x1] %v7869
      %v7871 = vld [vmem:[%s860 + $0x48] sm:$0xf]
      %v7872 = vsel %vm863, %v7617, %v7871
      %7873 = vst [vmem:[%s860 + $0x48] sm:$0xf] %v7872
      %7874 = vst.msk [vmem:[%s860 + $0x4c] sm:$0xf] %vm867, %v7626
      %v7875 = vld [vmem:[%s860 + $0x50] sm:$0x1]
      %v7876 = vsel %vm870, %v7627, %v7875
      %7877 = vst [vmem:[%s860 + $0x50] sm:$0x1] %v7876
      %v7878 = vld [vmem:[%s860 + $0x54] sm:$0xf]
      %v7879 = vsel %vm863, %v7634, %v7878
      %7880 = vst [vmem:[%s860 + $0x54] sm:$0xf] %v7879
      %7881 = vst.msk [vmem:[%s860 + $0x58] sm:$0xf] %vm867, %v7643
      %v7882 = vld [vmem:[%s860 + $0x5c] sm:$0x1]
      %v7883 = vsel %vm870, %v7644, %v7882
      %7884 = vst [vmem:[%s860 + $0x5c] sm:$0x1] %v7883
      %v7885 = vld [vmem:[%s860 + $0x60] sm:$0xf]
      %v7886 = vsel %vm863, %v7651, %v7885
      %7887 = vst [vmem:[%s860 + $0x60] sm:$0xf] %v7886
      %7888 = vst.msk [vmem:[%s860 + $0x64] sm:$0xf] %vm867, %v7660
      %v7889 = vld [vmem:[%s860 + $0x68] sm:$0x1]
      %v7890 = vsel %vm870, %v7661, %v7889
      %7891 = vst [vmem:[%s860 + $0x68] sm:$0x1] %v7890
      %v7892 = vld [vmem:[%s860 + $0x6c] sm:$0xf]
      %v7893 = vsel %vm863, %v7668, %v7892
      %7894 = vst [vmem:[%s860 + $0x6c] sm:$0xf] %v7893
      %7895 = vst.msk [vmem:[%s860 + $0x70] sm:$0xf] %vm867, %v7677
      %v7896 = vld [vmem:[%s860 + $0x74] sm:$0x1]
      %v7897 = vsel %vm870, %v7678, %v7896
      %7898 = vst [vmem:[%s860 + $0x74] sm:$0x1] %v7897
      %v7899 = vld [vmem:[%s860 + $0x78] sm:$0xf]
      %v7900 = vsel %vm863, %v7685, %v7899
      %7901 = vst [vmem:[%s860 + $0x78] sm:$0xf] %v7900
      %7902 = vst.msk [vmem:[%s860 + $0x7c] sm:$0xf] %vm867, %v7694
      %v7903 = vld [vmem:[%s860 + $0x80] sm:$0x1]
      %v7904 = vsel %vm870, %v7695, %v7903
      %7905 = vst [vmem:[%s860 + $0x80] sm:$0x1] %v7904
      %v7906 = vld [vmem:[%s860 + $0x84] sm:$0xf]
      %v7907 = vsel %vm863, %v7702, %v7906
      %7908 = vst [vmem:[%s860 + $0x84] sm:$0xf] %v7907
      %7909 = vst.msk [vmem:[%s860 + $0x88] sm:$0xf] %vm867, %v7711
      %v7910 = vld [vmem:[%s860 + $0x8c] sm:$0x1]
      %v7911 = vsel %vm870, %v7712, %v7910
      %7912 = vst [vmem:[%s860 + $0x8c] sm:$0x1] %v7911
      %v7913 = vld [vmem:[%s860 + $0x90] sm:$0xf]
      %v7914 = vsel %vm863, %v7719, %v7913
      %7915 = vst [vmem:[%s860 + $0x90] sm:$0xf] %v7914
      %7916 = vst.msk [vmem:[%s860 + $0x94] sm:$0xf] %vm867, %v7728
      %v7917 = vld [vmem:[%s860 + $0x98] sm:$0x1]
      %v7918 = vsel %vm870, %v7729, %v7917
      %7919 = vst [vmem:[%s860 + $0x98] sm:$0x1] %v7918
      %v7920 = vld [vmem:[%s860 + $0x9c] sm:$0xf]
      %v7921 = vsel %vm863, %v7736, %v7920
      %7922 = vst [vmem:[%s860 + $0x9c] sm:$0xf] %v7921
      %7923 = vst.msk [vmem:[%s860 + $0xa0] sm:$0xf] %vm867, %v7745
      %v7924 = vld [vmem:[%s860 + $0xa4] sm:$0x1]
      %v7925 = vsel %vm870, %v7746, %v7924
      %7926 = vst [vmem:[%s860 + $0xa4] sm:$0x1] %v7925
      %v7927 = vld [vmem:[%s860 + $0xa8] sm:$0xf]
      %v7928 = vsel %vm863, %v7753, %v7927
      %7929 = vst [vmem:[%s860 + $0xa8] sm:$0xf] %v7928
      %7930 = vst.msk [vmem:[%s860 + $0xac] sm:$0xf] %vm867, %v7762
      %v7931 = vld [vmem:[%s860 + $0xb0] sm:$0x1]
      %v7932 = vsel %vm870, %v7763, %v7931
      %7933 = vst [vmem:[%s860 + $0xb0] sm:$0x1] %v7932
      %v7934 = vld [vmem:[%s860 + $0xb4] sm:$0xf]
      %v7935 = vsel %vm863, %v7770, %v7934
      %7936 = vst [vmem:[%s860 + $0xb4] sm:$0xf] %v7935
      %7937 = vst.msk [vmem:[%s860 + $0xb8] sm:$0xf] %vm867, %v7779
      %v7938 = vld [vmem:[%s860 + $0xbc] sm:$0x1]
      %v7939 = vsel %vm870, %v7780, %v7938
      %7940 = vst [vmem:[%s860 + $0xbc] sm:$0x1] %v7939
      %v7941 = vld [vmem:[#allocation2] sm:$0xf]
      %v7942 = vld [vmem:[#allocation2 + $0x4] sm:$0xf]
      %v7943 = vld [vmem:[#allocation2 + $0x8] sm:$0x1]
      %v7944 = vld [vmem:[#allocation2 + $0xc] sm:$0xf]
      %v7945 = vld [vmem:[#allocation2 + $0x10] sm:$0xf]
      %v7946 = vld [vmem:[#allocation2 + $0x14] sm:$0x1]
      %v7947 = vld [vmem:[#allocation2 + $0x18] sm:$0xf]
      %v7948 = vld [vmem:[#allocation2 + $0x1c] sm:$0xf]
      %v7949 = vld [vmem:[#allocation2 + $0x20] sm:$0x1]
      %v7950 = vld [vmem:[#allocation2 + $0x24] sm:$0xf]
      %v7951 = vld [vmem:[#allocation2 + $0x28] sm:$0xf]
      %v7952 = vld [vmem:[#allocation2 + $0x2c] sm:$0x1]
      %v7953 = vld [vmem:[#allocation2 + $0x30] sm:$0xf]
      %v7954 = vld [vmem:[#allocation2 + $0x34] sm:$0xf]
      %v7955 = vld [vmem:[#allocation2 + $0x38] sm:$0x1]
      %v7956 = vld [vmem:[#allocation2 + $0x3c] sm:$0xf]
      %v7957 = vld [vmem:[#allocation2 + $0x40] sm:$0xf]
      %v7958 = vld [vmem:[#allocation2 + $0x44] sm:$0x1]
      %v7959 = vld [vmem:[#allocation2 + $0x48] sm:$0xf]
      %v7960 = vld [vmem:[#allocation2 + $0x4c] sm:$0xf]
      %v7961 = vld [vmem:[#allocation2 + $0x50] sm:$0x1]
      %v7962 = vld [vmem:[#allocation2 + $0x54] sm:$0xf]
      %v7963 = vld [vmem:[#allocation2 + $0x58] sm:$0xf]
      %v7964 = vld [vmem:[#allocation2 + $0x5c] sm:$0x1]
      %v7965 = vld [vmem:[#allocation2 + $0x60] sm:$0xf]
      %v7966 = vld [vmem:[#allocation2 + $0x64] sm:$0xf]
      %v7967 = vld [vmem:[#allocation2 + $0x68] sm:$0x1]
      %v7968 = vld [vmem:[#allocation2 + $0x6c] sm:$0xf]
      %v7969 = vld [vmem:[#allocation2 + $0x70] sm:$0xf]
      %v7970 = vld [vmem:[#allocation2 + $0x74] sm:$0x1]
      %v7971 = vld [vmem:[#allocation2 + $0x78] sm:$0xf]
      %v7972 = vld [vmem:[#allocation2 + $0x7c] sm:$0xf]
      %v7973 = vld [vmem:[#allocation2 + $0x80] sm:$0x1]
      %v7974 = vld [vmem:[#allocation2 + $0x84] sm:$0xf]
      %v7975 = vld [vmem:[#allocation2 + $0x88] sm:$0xf]
      %v7976 = vld [vmem:[#allocation2 + $0x8c] sm:$0x1]
      %v7977 = vld [vmem:[#allocation2 + $0x90] sm:$0xf]
      %v7978 = vld [vmem:[#allocation2 + $0x94] sm:$0xf]
      %v7979 = vld [vmem:[#allocation2 + $0x98] sm:$0x1]
      %v7980 = vld [vmem:[#allocation2 + $0x9c] sm:$0xf]
      %v7981 = vld [vmem:[#allocation2 + $0xa0] sm:$0xf]
      %v7982 = vld [vmem:[#allocation2 + $0xa4] sm:$0x1]
      %v7983 = vld [vmem:[#allocation2 + $0xa8] sm:$0xf]
      %v7984 = vld [vmem:[#allocation2 + $0xac] sm:$0xf]
      %v7985 = vld [vmem:[#allocation2 + $0xb0] sm:$0x1]
      %v7986 = vld [vmem:[#allocation2 + $0xb4] sm:$0xf]
      %v7987 = vld [vmem:[#allocation2 + $0xb8] sm:$0xf]
      %v7988 = vld [vmem:[#allocation2 + $0xbc] sm:$0x1]
      %v7989 = vld [vmem:[#allocation2 + $0xc0] sm:$0xf]
      %v7990 = vld [vmem:[#allocation2 + $0xc4] sm:$0xf]
      %v7991 = vld [vmem:[#allocation2 + $0xc8] sm:$0x1]
      %v7992 = vld [vmem:[#allocation2 + $0xcc] sm:$0xf]
      %v7993 = vld [vmem:[#allocation2 + $0xd0] sm:$0xf]
      %v7994 = vld [vmem:[#allocation2 + $0xd4] sm:$0x1]
      %v7996 = vshrl.u32 %v7941, 16
      %v7998 = vrot.slane %v7996, 4
      %v7999 = vshll.u32 %v7941, 16
      %v8001 = vrot.slane %v7999, 5
      %v8002 = vor.u32 %v7998, %v8001
      %v8003 = vrot.slane %v8002, 4
      %v8005 = vshll.u32 %v7942, 16
      %v8007 = vrot.slane %v8005, 5
      %v8008 = vsel %vm1035, %v8003, %v8007
      %v8009 = vshrl.u32 %v7942, 16
      %v8011 = vrot.slane %v8009, 4
      %v8012 = vor.u32 %v8011, %v8007
      %v8013 = vrot.slane %v8012, 4
      %v8015 = vshll.u32 %v7943, 16
      %v8017 = vrot.slane %v8015, 5
      %v8018 = vsel %vm1035, %v8013, %v8017
      %v8020 = vshrl.u32 %v7944, 16
      %v8022 = vrot.slane %v8020, 4
      %v8023 = vshll.u32 %v7944, 16
      %v8025 = vrot.slane %v8023, 5
      %v8026 = vor.u32 %v8022, %v8025
      %v8027 = vrot.slane %v8026, 4
      %v8029 = vshll.u32 %v7945, 16
      %v8031 = vrot.slane %v8029, 5
      %v8032 = vsel %vm1035, %v8027, %v8031
      %v8033 = vshrl.u32 %v7945, 16
      %v8035 = vrot.slane %v8033, 4
      %v8036 = vor.u32 %v8035, %v8031
      %v8037 = vrot.slane %v8036, 4
      %v8039 = vshll.u32 %v7946, 16
      %v8041 = vrot.slane %v8039, 5
      %v8042 = vsel %vm1035, %v8037, %v8041
      %v8044 = vshrl.u32 %v7947, 16
      %v8046 = vrot.slane %v8044, 4
      %v8047 = vshll.u32 %v7947, 16
      %v8049 = vrot.slane %v8047, 5
      %v8050 = vor.u32 %v8046, %v8049
      %v8051 = vrot.slane %v8050, 4
      %v8053 = vshll.u32 %v7948, 16
      %v8055 = vrot.slane %v8053, 5
      %v8056 = vsel %vm1035, %v8051, %v8055
      %v8057 = vshrl.u32 %v7948, 16
      %v8059 = vrot.slane %v8057, 4
      %v8060 = vor.u32 %v8059, %v8055
      %v8061 = vrot.slane %v8060, 4
      %v8063 = vshll.u32 %v7949, 16
      %v8065 = vrot.slane %v8063, 5
      %v8066 = vsel %vm1035, %v8061, %v8065
      %v8068 = vshrl.u32 %v7950, 16
      %v8070 = vrot.slane %v8068, 4
      %v8071 = vshll.u32 %v7950, 16
      %v8073 = vrot.slane %v8071, 5
      %v8074 = vor.u32 %v8070, %v8073
      %v8075 = vrot.slane %v8074, 4
      %v8077 = vshll.u32 %v7951, 16
      %v8079 = vrot.slane %v8077, 5
      %v8080 = vsel %vm1035, %v8075, %v8079
      %v8081 = vshrl.u32 %v7951, 16
      %v8083 = vrot.slane %v8081, 4
      %v8084 = vor.u32 %v8083, %v8079
      %v8085 = vrot.slane %v8084, 4
      %v8087 = vshll.u32 %v7952, 16
      %v8089 = vrot.slane %v8087, 5
      %v8090 = vsel %vm1035, %v8085, %v8089
      %v8092 = vshrl.u32 %v7953, 16
      %v8094 = vrot.slane %v8092, 4
      %v8095 = vshll.u32 %v7953, 16
      %v8097 = vrot.slane %v8095, 5
      %v8098 = vor.u32 %v8094, %v8097
      %v8099 = vrot.slane %v8098, 4
      %v8101 = vshll.u32 %v7954, 16
      %v8103 = vrot.slane %v8101, 5
      %v8104 = vsel %vm1035, %v8099, %v8103
      %v8105 = vshrl.u32 %v7954, 16
      %v8107 = vrot.slane %v8105, 4
      %v8108 = vor.u32 %v8107, %v8103
      %v8109 = vrot.slane %v8108, 4
      %v8111 = vshll.u32 %v7955, 16
      %v8113 = vrot.slane %v8111, 5
      %v8114 = vsel %vm1035, %v8109, %v8113
      %v8116 = vshrl.u32 %v7956, 16
      %v8118 = vrot.slane %v8116, 4
      %v8119 = vshll.u32 %v7956, 16
      %v8121 = vrot.slane %v8119, 5
      %v8122 = vor.u32 %v8118, %v8121
      %v8123 = vrot.slane %v8122, 4
      %v8125 = vshll.u32 %v7957, 16
      %v8127 = vrot.slane %v8125, 5
      %v8128 = vsel %vm1035, %v8123, %v8127
      %v8129 = vshrl.u32 %v7957, 16
      %v8131 = vrot.slane %v8129, 4
      %v8132 = vor.u32 %v8131, %v8127
      %v8133 = vrot.slane %v8132, 4
      %v8135 = vshll.u32 %v7958, 16
      %v8137 = vrot.slane %v8135, 5
      %v8138 = vsel %vm1035, %v8133, %v8137
      %v8140 = vshrl.u32 %v7959, 16
      %v8142 = vrot.slane %v8140, 4
      %v8143 = vshll.u32 %v7959, 16
      %v8145 = vrot.slane %v8143, 5
      %v8146 = vor.u32 %v8142, %v8145
      %v8147 = vrot.slane %v8146, 4
      %v8149 = vshll.u32 %v7960, 16
      %v8151 = vrot.slane %v8149, 5
      %v8152 = vsel %vm1035, %v8147, %v8151
      %v8153 = vshrl.u32 %v7960, 16
      %v8155 = vrot.slane %v8153, 4
      %v8156 = vor.u32 %v8155, %v8151
      %v8157 = vrot.slane %v8156, 4
      %v8159 = vshll.u32 %v7961, 16
      %v8161 = vrot.slane %v8159, 5
      %v8162 = vsel %vm1035, %v8157, %v8161
      %v8164 = vshrl.u32 %v7962, 16
      %v8166 = vrot.slane %v8164, 4
      %v8167 = vshll.u32 %v7962, 16
      %v8169 = vrot.slane %v8167, 5
      %v8170 = vor.u32 %v8166, %v8169
      %v8171 = vrot.slane %v8170, 4
      %v8173 = vshll.u32 %v7963, 16
      %v8175 = vrot.slane %v8173, 5
      %v8176 = vsel %vm1035, %v8171, %v8175
      %v8177 = vshrl.u32 %v7963, 16
      %v8179 = vrot.slane %v8177, 4
      %v8180 = vor.u32 %v8179, %v8175
      %v8181 = vrot.slane %v8180, 4
      %v8183 = vshll.u32 %v7964, 16
      %v8185 = vrot.slane %v8183, 5
      %v8186 = vsel %vm1035, %v8181, %v8185
      %v8188 = vshrl.u32 %v7965, 16
      %v8190 = vrot.slane %v8188, 4
      %v8191 = vshll.u32 %v7965, 16
      %v8193 = vrot.slane %v8191, 5
      %v8194 = vor.u32 %v8190, %v8193
      %v8195 = vrot.slane %v8194, 4
      %v8197 = vshll.u32 %v7966, 16
      %v8199 = vrot.slane %v8197, 5
      %v8200 = vsel %vm1035, %v8195, %v8199
      %v8201 = vshrl.u32 %v7966, 16
      %v8203 = vrot.slane %v8201, 4
      %v8204 = vor.u32 %v8203, %v8199
      %v8205 = vrot.slane %v8204, 4
      %v8207 = vshll.u32 %v7967, 16
      %v8209 = vrot.slane %v8207, 5
      %v8210 = vsel %vm1035, %v8205, %v8209
      %v8212 = vshrl.u32 %v7968, 16
      %v8214 = vrot.slane %v8212, 4
      %v8215 = vshll.u32 %v7968, 16
      %v8217 = vrot.slane %v8215, 5
      %v8218 = vor.u32 %v8214, %v8217
      %v8219 = vrot.slane %v8218, 4
      %v8221 = vshll.u32 %v7969, 16
      %v8223 = vrot.slane %v8221, 5
      %v8224 = vsel %vm1035, %v8219, %v8223
      %v8225 = vshrl.u32 %v7969, 16
      %v8227 = vrot.slane %v8225, 4
      %v8228 = vor.u32 %v8227, %v8223
      %v8229 = vrot.slane %v8228, 4
      %v8231 = vshll.u32 %v7970, 16
      %v8233 = vrot.slane %v8231, 5
      %v8234 = vsel %vm1035, %v8229, %v8233
      %v8236 = vshrl.u32 %v7971, 16
      %v8238 = vrot.slane %v8236, 4
      %v8239 = vshll.u32 %v7971, 16
      %v8241 = vrot.slane %v8239, 5
      %v8242 = vor.u32 %v8238, %v8241
      %v8243 = vrot.slane %v8242, 4
      %v8245 = vshll.u32 %v7972, 16
      %v8247 = vrot.slane %v8245, 5
      %v8248 = vsel %vm1035, %v8243, %v8247
      %v8249 = vshrl.u32 %v7972, 16
      %v8251 = vrot.slane %v8249, 4
      %v8252 = vor.u32 %v8251, %v8247
      %v8253 = vrot.slane %v8252, 4
      %v8255 = vshll.u32 %v7973, 16
      %v8257 = vrot.slane %v8255, 5
      %v8258 = vsel %vm1035, %v8253, %v8257
      %v8260 = vshrl.u32 %v7974, 16
      %v8262 = vrot.slane %v8260, 4
      %v8263 = vshll.u32 %v7974, 16
      %v8265 = vrot.slane %v8263, 5
      %v8266 = vor.u32 %v8262, %v8265
      %v8267 = vrot.slane %v8266, 4
      %v8269 = vshll.u32 %v7975, 16
      %v8271 = vrot.slane %v8269, 5
      %v8272 = vsel %vm1035, %v8267, %v8271
      %v8273 = vshrl.u32 %v7975, 16
      %v8275 = vrot.slane %v8273, 4
      %v8276 = vor.u32 %v8275, %v8271
      %v8277 = vrot.slane %v8276, 4
      %v8279 = vshll.u32 %v7976, 16
      %v8281 = vrot.slane %v8279, 5
      %v8282 = vsel %vm1035, %v8277, %v8281
      %v8284 = vshrl.u32 %v7977, 16
      %v8286 = vrot.slane %v8284, 4
      %v8287 = vshll.u32 %v7977, 16
      %v8289 = vrot.slane %v8287, 5
      %v8290 = vor.u32 %v8286, %v8289
      %v8291 = vrot.slane %v8290, 4
      %v8293 = vshll.u32 %v7978, 16
      %v8295 = vrot.slane %v8293, 5
      %v8296 = vsel %vm1035, %v8291, %v8295
      %v8297 = vshrl.u32 %v7978, 16
      %v8299 = vrot.slane %v8297, 4
      %v8300 = vor.u32 %v8299, %v8295
      %v8301 = vrot.slane %v8300, 4
      %v8303 = vshll.u32 %v7979, 16
      %v8305 = vrot.slane %v8303, 5
      %v8306 = vsel %vm1035, %v8301, %v8305
      %v8308 = vshrl.u32 %v7980, 16
      %v8310 = vrot.slane %v8308, 4
      %v8311 = vshll.u32 %v7980, 16
      %v8313 = vrot.slane %v8311, 5
      %v8314 = vor.u32 %v8310, %v8313
      %v8315 = vrot.slane %v8314, 4
      %v8317 = vshll.u32 %v7981, 16
      %v8319 = vrot.slane %v8317, 5
      %v8320 = vsel %vm1035, %v8315, %v8319
      %v8321 = vshrl.u32 %v7981, 16
      %v8323 = vrot.slane %v8321, 4
      %v8324 = vor.u32 %v8323, %v8319
      %v8325 = vrot.slane %v8324, 4
      %v8327 = vshll.u32 %v7982, 16
      %v8329 = vrot.slane %v8327, 5
      %v8330 = vsel %vm1035, %v8325, %v8329
      %v8332 = vshrl.u32 %v7983, 16
      %v8334 = vrot.slane %v8332, 4
      %v8335 = vshll.u32 %v7983, 16
      %v8337 = vrot.slane %v8335, 5
      %v8338 = vor.u32 %v8334, %v8337
      %v8339 = vrot.slane %v8338, 4
      %v8341 = vshll.u32 %v7984, 16
      %v8343 = vrot.slane %v8341, 5
      %v8344 = vsel %vm1035, %v8339, %v8343
      %v8345 = vshrl.u32 %v7984, 16
      %v8347 = vrot.slane %v8345, 4
      %v8348 = vor.u32 %v8347, %v8343
      %v8349 = vrot.slane %v8348, 4
      %v8351 = vshll.u32 %v7985, 16
      %v8353 = vrot.slane %v8351, 5
      %v8354 = vsel %vm1035, %v8349, %v8353
      %v8356 = vshrl.u32 %v7986, 16
      %v8358 = vrot.slane %v8356, 4
      %v8359 = vshll.u32 %v7986, 16
      %v8361 = vrot.slane %v8359, 5
      %v8362 = vor.u32 %v8358, %v8361
      %v8363 = vrot.slane %v8362, 4
      %v8365 = vshll.u32 %v7987, 16
      %v8367 = vrot.slane %v8365, 5
      %v8368 = vsel %vm1035, %v8363, %v8367
      %v8369 = vshrl.u32 %v7987, 16
      %v8371 = vrot.slane %v8369, 4
      %v8372 = vor.u32 %v8371, %v8367
      %v8373 = vrot.slane %v8372, 4
      %v8375 = vshll.u32 %v7988, 16
      %v8377 = vrot.slane %v8375, 5
      %v8378 = vsel %vm1035, %v8373, %v8377
      %v8380 = vshrl.u32 %v7989, 16
      %v8382 = vrot.slane %v8380, 4
      %v8383 = vshll.u32 %v7989, 16
      %v8385 = vrot.slane %v8383, 5
      %v8386 = vor.u32 %v8382, %v8385
      %v8387 = vrot.slane %v8386, 4
      %v8389 = vshll.u32 %v7990, 16
      %v8391 = vrot.slane %v8389, 5
      %v8392 = vsel %vm1035, %v8387, %v8391
      %v8393 = vshrl.u32 %v7990, 16
      %v8395 = vrot.slane %v8393, 4
      %v8396 = vor.u32 %v8395, %v8391
      %v8397 = vrot.slane %v8396, 4
      %v8399 = vshll.u32 %v7991, 16
      %v8401 = vrot.slane %v8399, 5
      %v8402 = vsel %vm1035, %v8397, %v8401
      %v8404 = vshrl.u32 %v7992, 16
      %v8406 = vrot.slane %v8404, 4
      %v8407 = vshll.u32 %v7992, 16
      %v8409 = vrot.slane %v8407, 5
      %v8410 = vor.u32 %v8406, %v8409
      %v8411 = vrot.slane %v8410, 4
      %v8413 = vshll.u32 %v7993, 16
      %v8415 = vrot.slane %v8413, 5
      %v8416 = vsel %vm1035, %v8411, %v8415
      %v8417 = vshrl.u32 %v7993, 16
      %v8419 = vrot.slane %v8417, 4
      %v8420 = vor.u32 %v8419, %v8415
      %v8421 = vrot.slane %v8420, 4
      %v8423 = vshll.u32 %v7994, 16
      %v8425 = vrot.slane %v8423, 5
      %v8426 = vsel %vm1035, %v8421, %v8425
      %v8481 = vrot.slane %v7941, 5
      %v8482 = vrot.slane %v8481, 4
      %v8483 = vrot.slane %v7942, 5
      %v8484 = vsel %vm1524, %v8482, %v8483
      %v8485 = vrot.slane %v8483, 4
      %v8486 = vrot.slane %v7943, 5
      %v8487 = vsel %vm1524, %v8485, %v8486
      %v8488 = vrot.slane %v7944, 5
      %v8489 = vrot.slane %v8488, 4
      %v8490 = vrot.slane %v7945, 5
      %v8491 = vsel %vm1524, %v8489, %v8490
      %v8492 = vrot.slane %v8490, 4
      %v8493 = vrot.slane %v7946, 5
      %v8494 = vsel %vm1524, %v8492, %v8493
      %v8495 = vrot.slane %v7947, 5
      %v8496 = vrot.slane %v8495, 4
      %v8497 = vrot.slane %v7948, 5
      %v8498 = vsel %vm1524, %v8496, %v8497
      %v8499 = vrot.slane %v8497, 4
      %v8500 = vrot.slane %v7949, 5
      %v8501 = vsel %vm1524, %v8499, %v8500
      %v8502 = vrot.slane %v7950, 5
      %v8503 = vrot.slane %v8502, 4
      %v8504 = vrot.slane %v7951, 5
      %v8505 = vsel %vm1524, %v8503, %v8504
      %v8506 = vrot.slane %v8504, 4
      %v8507 = vrot.slane %v7952, 5
      %v8508 = vsel %vm1524, %v8506, %v8507
      %v8509 = vrot.slane %v7953, 5
      %v8510 = vrot.slane %v8509, 4
      %v8511 = vrot.slane %v7954, 5
      %v8512 = vsel %vm1524, %v8510, %v8511
      %v8513 = vrot.slane %v8511, 4
      %v8514 = vrot.slane %v7955, 5
      %v8515 = vsel %vm1524, %v8513, %v8514
      %v8516 = vrot.slane %v7956, 5
      %v8517 = vrot.slane %v8516, 4
      %v8518 = vrot.slane %v7957, 5
      %v8519 = vsel %vm1524, %v8517, %v8518
      %v8520 = vrot.slane %v8518, 4
      %v8521 = vrot.slane %v7958, 5
      %v8522 = vsel %vm1524, %v8520, %v8521
      %v8523 = vrot.slane %v7959, 5
      %v8524 = vrot.slane %v8523, 4
      %v8525 = vrot.slane %v7960, 5
      %v8526 = vsel %vm1524, %v8524, %v8525
      %v8527 = vrot.slane %v8525, 4
      %v8528 = vrot.slane %v7961, 5
      %v8529 = vsel %vm1524, %v8527, %v8528
      %v8530 = vrot.slane %v7962, 5
      %v8531 = vrot.slane %v8530, 4
      %v8532 = vrot.slane %v7963, 5
      %v8533 = vsel %vm1524, %v8531, %v8532
      %v8534 = vrot.slane %v8532, 4
      %v8535 = vrot.slane %v7964, 5
      %v8536 = vsel %vm1524, %v8534, %v8535
      %v8537 = vrot.slane %v7965, 5
      %v8538 = vrot.slane %v8537, 4
      %v8539 = vrot.slane %v7966, 5
      %v8540 = vsel %vm1524, %v8538, %v8539
      %v8541 = vrot.slane %v8539, 4
      %v8542 = vrot.slane %v7967, 5
      %v8543 = vsel %vm1524, %v8541, %v8542
      %v8544 = vrot.slane %v7968, 5
      %v8545 = vrot.slane %v8544, 4
      %v8546 = vrot.slane %v7969, 5
      %v8547 = vsel %vm1524, %v8545, %v8546
      %v8548 = vrot.slane %v8546, 4
      %v8549 = vrot.slane %v7970, 5
      %v8550 = vsel %vm1524, %v8548, %v8549
      %v8551 = vrot.slane %v7971, 5
      %v8552 = vrot.slane %v8551, 4
      %v8553 = vrot.slane %v7972, 5
      %v8554 = vsel %vm1524, %v8552, %v8553
      %v8555 = vrot.slane %v8553, 4
      %v8556 = vrot.slane %v7973, 5
      %v8557 = vsel %vm1524, %v8555, %v8556
      %v8558 = vrot.slane %v7974, 5
      %v8559 = vrot.slane %v8558, 4
      %v8560 = vrot.slane %v7975, 5
      %v8561 = vsel %vm1524, %v8559, %v8560
      %v8562 = vrot.slane %v8560, 4
      %v8563 = vrot.slane %v7976, 5
      %v8564 = vsel %vm1524, %v8562, %v8563
      %v8565 = vrot.slane %v7977, 5
      %v8566 = vrot.slane %v8565, 4
      %v8567 = vrot.slane %v7978, 5
      %v8568 = vsel %vm1524, %v8566, %v8567
      %v8569 = vrot.slane %v8567, 4
      %v8570 = vrot.slane %v7979, 5
      %v8571 = vsel %vm1524, %v8569, %v8570
      %v8572 = vrot.slane %v7980, 5
      %v8573 = vrot.slane %v8572, 4
      %v8574 = vrot.slane %v7981, 5
      %v8575 = vsel %vm1524, %v8573, %v8574
      %v8576 = vrot.slane %v8574, 4
      %v8577 = vrot.slane %v7982, 5
      %v8578 = vsel %vm1524, %v8576, %v8577
      %v8579 = vrot.slane %v7983, 5
      %v8580 = vrot.slane %v8579, 4
      %v8581 = vrot.slane %v7984, 5
      %v8582 = vsel %vm1524, %v8580, %v8581
      %v8583 = vrot.slane %v8581, 4
      %v8584 = vrot.slane %v7985, 5
      %v8585 = vsel %vm1524, %v8583, %v8584
      %v8586 = vrot.slane %v7986, 5
      %v8587 = vrot.slane %v8586, 4
      %v8588 = vrot.slane %v7987, 5
      %v8589 = vsel %vm1524, %v8587, %v8588
      %v8590 = vrot.slane %v8588, 4
      %v8591 = vrot.slane %v7988, 5
      %v8592 = vsel %vm1524, %v8590, %v8591
      %v8593 = vrot.slane %v7989, 5
      %v8594 = vrot.slane %v8593, 4
      %v8595 = vrot.slane %v7990, 5
      %v8596 = vsel %vm1524, %v8594, %v8595
      %v8597 = vrot.slane %v8595, 4
      %v8598 = vrot.slane %v7991, 5
      %v8599 = vsel %vm1524, %v8597, %v8598
      %v8600 = vrot.slane %v7992, 5
      %v8601 = vrot.slane %v8600, 4
      %v8602 = vrot.slane %v7993, 5
      %v8603 = vsel %vm1524, %v8601, %v8602
      %v8604 = vrot.slane %v8602, 4
      %v8605 = vrot.slane %v7994, 5
      %v8606 = vsel %vm1524, %v8604, %v8605
      %v8607 = vunpack.c.l.b16 %v7941
      %v8608 = vunpack.c.l.b16 %v7942
      %v8609 = vunpack.c.l.b16 %v7944
      %v8610 = vunpack.c.l.b16 %v7945
      %v8611 = vunpack.c.l.b16 %v7947
      %v8612 = vunpack.c.l.b16 %v7948
      %v8613 = vunpack.c.l.b16 %v7950
      %v8614 = vunpack.c.l.b16 %v7951
      %v8615 = vunpack.c.l.b16 %v7953
      %v8616 = vunpack.c.l.b16 %v7954
      %v8617 = vunpack.c.l.b16 %v7956
      %v8618 = vunpack.c.l.b16 %v7957
      %v8619 = vunpack.c.l.b16 %v7959
      %v8620 = vunpack.c.l.b16 %v7960
      %v8621 = vunpack.c.l.b16 %v7962
      %v8622 = vunpack.c.l.b16 %v7963
      %v8623 = vunpack.c.l.b16 %v7965
      %v8624 = vunpack.c.l.b16 %v7966
      %v8625 = vunpack.c.l.b16 %v7968
      %v8626 = vunpack.c.l.b16 %v7969
      %v8627 = vunpack.c.l.b16 %v7971
      %v8628 = vunpack.c.l.b16 %v7972
      %v8629 = vunpack.c.l.b16 %v7974
      %v8630 = vunpack.c.l.b16 %v7975
      %v8631 = vunpack.c.l.b16 %v7977
      %v8632 = vunpack.c.l.b16 %v7978
      %v8633 = vunpack.c.l.b16 %v7980
      %v8634 = vunpack.c.l.b16 %v7981
      %v8635 = vunpack.c.l.b16 %v7983
      %v8636 = vunpack.c.l.b16 %v7984
      %v8637 = vunpack.c.l.b16 %v7986
      %v8638 = vunpack.c.l.b16 %v7987
      %v8639 = vunpack.c.l.b16 %v7989
      %v8640 = vunpack.c.l.b16 %v7990
      %v8641 = vunpack.c.l.b16 %v7992
      %v8642 = vunpack.c.l.b16 %v7993
      %v8643 = vpack.c.b16 %v8608, %v8607
      %v8644 = vpack.c.b16 %v8610, %v8609
      %v8645 = vpack.c.b16 %v8612, %v8611
      %v8646 = vpack.c.b16 %v8614, %v8613
      %v8647 = vpack.c.b16 %v8616, %v8615
      %v8648 = vpack.c.b16 %v8618, %v8617
      %v8649 = vpack.c.b16 %v8620, %v8619
      %v8650 = vpack.c.b16 %v8622, %v8621
      %v8651 = vpack.c.b16 %v8624, %v8623
      %v8652 = vpack.c.b16 %v8626, %v8625
      %v8653 = vpack.c.b16 %v8628, %v8627
      %v8654 = vpack.c.b16 %v8630, %v8629
      %v8655 = vpack.c.b16 %v8632, %v8631
      %v8656 = vpack.c.b16 %v8634, %v8633
      %v8657 = vpack.c.b16 %v8636, %v8635
      %v8658 = vpack.c.b16 %v8638, %v8637
      %v8659 = vpack.c.b16 %v8640, %v8639
      %v8660 = vpack.c.b16 %v8642, %v8641
      %v8661 = vunpack.c.l.b16 %v8008
      %v8662 = vunpack.c.l.b16 %v8018
      %v8663 = vunpack.c.l.b16 %v8032
      %v8664 = vunpack.c.l.b16 %v8042
      %v8665 = vunpack.c.l.b16 %v8056
      %v8666 = vunpack.c.l.b16 %v8066
      %v8667 = vunpack.c.l.b16 %v8080
      %v8668 = vunpack.c.l.b16 %v8090
      %v8669 = vunpack.c.l.b16 %v8104
      %v8670 = vunpack.c.l.b16 %v8114
      %v8671 = vunpack.c.l.b16 %v8128
      %v8672 = vunpack.c.l.b16 %v8138
      %v8673 = vunpack.c.l.b16 %v8152
      %v8674 = vunpack.c.l.b16 %v8162
      %v8675 = vunpack.c.l.b16 %v8176
      %v8676 = vunpack.c.l.b16 %v8186
      %v8677 = vunpack.c.l.b16 %v8200
      %v8678 = vunpack.c.l.b16 %v8210
      %v8679 = vunpack.c.l.b16 %v8224
      %v8680 = vunpack.c.l.b16 %v8234
      %v8681 = vunpack.c.l.b16 %v8248
      %v8682 = vunpack.c.l.b16 %v8258
      %v8683 = vunpack.c.l.b16 %v8272
      %v8684 = vunpack.c.l.b16 %v8282
      %v8685 = vunpack.c.l.b16 %v8296
      %v8686 = vunpack.c.l.b16 %v8306
      %v8687 = vunpack.c.l.b16 %v8320
      %v8688 = vunpack.c.l.b16 %v8330
      %v8689 = vunpack.c.l.b16 %v8344
      %v8690 = vunpack.c.l.b16 %v8354
      %v8691 = vunpack.c.l.b16 %v8368
      %v8692 = vunpack.c.l.b16 %v8378
      %v8693 = vunpack.c.l.b16 %v8392
      %v8694 = vunpack.c.l.b16 %v8402
      %v8695 = vunpack.c.l.b16 %v8416
      %v8696 = vunpack.c.l.b16 %v8426
      %v8697 = vpack.c.b16 %v8662, %v8661
      %v8698 = vpack.c.b16 %v8664, %v8663
      %v8699 = vpack.c.b16 %v8666, %v8665
      %v8700 = vpack.c.b16 %v8668, %v8667
      %v8701 = vpack.c.b16 %v8670, %v8669
      %v8702 = vpack.c.b16 %v8672, %v8671
      %v8703 = vpack.c.b16 %v8674, %v8673
      %v8704 = vpack.c.b16 %v8676, %v8675
      %v8705 = vpack.c.b16 %v8678, %v8677
      %v8706 = vpack.c.b16 %v8680, %v8679
      %v8707 = vpack.c.b16 %v8682, %v8681
      %v8708 = vpack.c.b16 %v8684, %v8683
      %v8709 = vpack.c.b16 %v8686, %v8685
      %v8710 = vpack.c.b16 %v8688, %v8687
      %v8711 = vpack.c.b16 %v8690, %v8689
      %v8712 = vpack.c.b16 %v8692, %v8691
      %v8713 = vpack.c.b16 %v8694, %v8693
      %v8714 = vpack.c.b16 %v8696, %v8695
      %8715 = vrot.lane.b32.xlu0 %v8697, 32
      %v8716 = vpop.permute.xlu0 %8715
      %8717 = vrot.lane.b32.xlu0 %v8698, 32
      %v8718 = vpop.permute.xlu0 %8717
      %8719 = vrot.lane.b32.xlu0 %v8699, 32
      %v8720 = vpop.permute.xlu0 %8719
      %8721 = vrot.lane.b32.xlu0 %v8700, 32
      %v8722 = vpop.permute.xlu0 %8721
      %8723 = vrot.lane.b32.xlu0 %v8701, 32
      %v8724 = vpop.permute.xlu0 %8723
      %8725 = vrot.lane.b32.xlu0 %v8702, 32
      %v8726 = vpop.permute.xlu0 %8725
      %8727 = vrot.lane.b32.xlu0 %v8703, 32
      %v8728 = vpop.permute.xlu0 %8727
      %8729 = vrot.lane.b32.xlu0 %v8704, 32
      %v8730 = vpop.permute.xlu0 %8729
      %8731 = vrot.lane.b32.xlu0 %v8705, 32
      %v8732 = vpop.permute.xlu0 %8731
      %8733 = vrot.lane.b32.xlu0 %v8706, 32
      %v8734 = vpop.permute.xlu0 %8733
      %8735 = vrot.lane.b32.xlu0 %v8707, 32
      %v8736 = vpop.permute.xlu0 %8735
      %8737 = vrot.lane.b32.xlu0 %v8708, 32
      %v8738 = vpop.permute.xlu0 %8737
      %8739 = vrot.lane.b32.xlu0 %v8709, 32
      %v8740 = vpop.permute.xlu0 %8739
      %8741 = vrot.lane.b32.xlu0 %v8710, 32
      %v8742 = vpop.permute.xlu0 %8741
      %8743 = vrot.lane.b32.xlu0 %v8711, 32
      %v8744 = vpop.permute.xlu0 %8743
      %8745 = vrot.lane.b32.xlu0 %v8712, 32
      %v8746 = vpop.permute.xlu0 %8745
      %8747 = vrot.lane.b32.xlu0 %v8713, 32
      %v8748 = vpop.permute.xlu0 %8747
      %8749 = vrot.lane.b32.xlu0 %v8714, 32
      %v8750 = vpop.permute.xlu0 %8749
      %v8751 = vunpack.c.l.b16 %v8484
      %v8752 = vunpack.c.l.b16 %v8487
      %v8753 = vunpack.c.l.b16 %v8491
      %v8754 = vunpack.c.l.b16 %v8494
      %v8755 = vunpack.c.l.b16 %v8498
      %v8756 = vunpack.c.l.b16 %v8501
      %v8757 = vunpack.c.l.b16 %v8505
      %v8758 = vunpack.c.l.b16 %v8508
      %v8759 = vunpack.c.l.b16 %v8512
      %v8760 = vunpack.c.l.b16 %v8515
      %v8761 = vunpack.c.l.b16 %v8519
      %v8762 = vunpack.c.l.b16 %v8522
      %v8763 = vunpack.c.l.b16 %v8526
      %v8764 = vunpack.c.l.b16 %v8529
      %v8765 = vunpack.c.l.b16 %v8533
      %v8766 = vunpack.c.l.b16 %v8536
      %v8767 = vunpack.c.l.b16 %v8540
      %v8768 = vunpack.c.l.b16 %v8543
      %v8769 = vunpack.c.l.b16 %v8547
      %v8770 = vunpack.c.l.b16 %v8550
      %v8771 = vunpack.c.l.b16 %v8554
      %v8772 = vunpack.c.l.b16 %v8557
      %v8773 = vunpack.c.l.b16 %v8561
      %v8774 = vunpack.c.l.b16 %v8564
      %v8775 = vunpack.c.l.b16 %v8568
      %v8776 = vunpack.c.l.b16 %v8571
      %v8777 = vunpack.c.l.b16 %v8575
      %v8778 = vunpack.c.l.b16 %v8578
      %v8779 = vunpack.c.l.b16 %v8582
      %v8780 = vunpack.c.l.b16 %v8585
      %v8781 = vunpack.c.l.b16 %v8589
      %v8782 = vunpack.c.l.b16 %v8592
      %v8783 = vunpack.c.l.b16 %v8596
      %v8784 = vunpack.c.l.b16 %v8599
      %v8785 = vunpack.c.l.b16 %v8603
      %v8786 = vunpack.c.l.b16 %v8606
      %v8787 = vpack.c.b16 %v8752, %v8751
      %v8788 = vpack.c.b16 %v8754, %v8753
      %v8789 = vpack.c.b16 %v8756, %v8755
      %v8790 = vpack.c.b16 %v8758, %v8757
      %v8791 = vpack.c.b16 %v8760, %v8759
      %v8792 = vpack.c.b16 %v8762, %v8761
      %v8793 = vpack.c.b16 %v8764, %v8763
      %v8794 = vpack.c.b16 %v8766, %v8765
      %v8795 = vpack.c.b16 %v8768, %v8767
      %v8796 = vpack.c.b16 %v8770, %v8769
      %v8797 = vpack.c.b16 %v8772, %v8771
      %v8798 = vpack.c.b16 %v8774, %v8773
      %v8799 = vpack.c.b16 %v8776, %v8775
      %v8800 = vpack.c.b16 %v8778, %v8777
      %v8801 = vpack.c.b16 %v8780, %v8779
      %v8802 = vpack.c.b16 %v8782, %v8781
      %v8803 = vpack.c.b16 %v8784, %v8783
      %v8804 = vpack.c.b16 %v8786, %v8785
      %8805 = vrot.lane.b32.xlu0 %v8787, 64
      %v8806 = vpop.permute.xlu0 %8805
      %8807 = vrot.lane.b32.xlu0 %v8788, 64
      %v8808 = vpop.permute.xlu0 %8807
      %8809 = vrot.lane.b32.xlu0 %v8789, 64
      %v8810 = vpop.permute.xlu0 %8809
      %8811 = vrot.lane.b32.xlu0 %v8790, 64
      %v8812 = vpop.permute.xlu0 %8811
      %8813 = vrot.lane.b32.xlu0 %v8791, 64
      %v8814 = vpop.permute.xlu0 %8813
      %8815 = vrot.lane.b32.xlu0 %v8792, 64
      %v8816 = vpop.permute.xlu0 %8815
      %8817 = vrot.lane.b32.xlu0 %v8793, 64
      %v8818 = vpop.permute.xlu0 %8817
      %8819 = vrot.lane.b32.xlu0 %v8794, 64
      %v8820 = vpop.permute.xlu0 %8819
      %8821 = vrot.lane.b32.xlu0 %v8795, 64
      %v8822 = vpop.permute.xlu0 %8821
      %8823 = vrot.lane.b32.xlu0 %v8796, 64
      %v8824 = vpop.permute.xlu0 %8823
      %8825 = vrot.lane.b32.xlu0 %v8797, 64
      %v8826 = vpop.permute.xlu0 %8825
      %8827 = vrot.lane.b32.xlu0 %v8798, 64
      %v8828 = vpop.permute.xlu0 %8827
      %8829 = vrot.lane.b32.xlu0 %v8799, 64
      %v8830 = vpop.permute.xlu0 %8829
      %8831 = vrot.lane.b32.xlu0 %v8800, 64
      %v8832 = vpop.permute.xlu0 %8831
      %8833 = vrot.lane.b32.xlu0 %v8801, 64
      %v8834 = vpop.permute.xlu0 %8833
      %8835 = vrot.lane.b32.xlu0 %v8802, 64
      %v8836 = vpop.permute.xlu0 %8835
      %8837 = vrot.lane.b32.xlu0 %v8803, 64
      %v8838 = vpop.permute.xlu0 %8837
      %8839 = vrot.lane.b32.xlu0 %v8804, 64
      %v8840 = vpop.permute.xlu0 %8839
      %v8843 = vsel %vm1885, %v8643, %v8716
      %v8846 = vsel %vm1885, %v8644, %v8718
      %v8849 = vsel %vm1885, %v8645, %v8720
      %v8852 = vsel %vm1885, %v8646, %v8722
      %v8855 = vsel %vm1885, %v8647, %v8724
      %v8858 = vsel %vm1885, %v8648, %v8726
      %v8861 = vsel %vm1885, %v8649, %v8728
      %v8864 = vsel %vm1885, %v8650, %v8730
      %v8867 = vsel %vm1885, %v8651, %v8732
      %v8870 = vsel %vm1885, %v8652, %v8734
      %v8873 = vsel %vm1885, %v8653, %v8736
      %v8876 = vsel %vm1885, %v8654, %v8738
      %v8879 = vsel %vm1885, %v8655, %v8740
      %v8882 = vsel %vm1885, %v8656, %v8742
      %v8885 = vsel %vm1885, %v8657, %v8744
      %v8888 = vsel %vm1885, %v8658, %v8746
      %v8891 = vsel %vm1885, %v8659, %v8748
      %v8894 = vsel %vm1885, %v8660, %v8750
      %v8896 = vsel %vm1940, %v8843, %v8806
      %v8898 = vsel %vm1940, %v8846, %v8808
      %v8900 = vsel %vm1940, %v8849, %v8810
      %v8902 = vsel %vm1940, %v8852, %v8812
      %v8904 = vsel %vm1940, %v8855, %v8814
      %v8906 = vsel %vm1940, %v8858, %v8816
      %v8908 = vsel %vm1940, %v8861, %v8818
      %v8910 = vsel %vm1940, %v8864, %v8820
      %v8912 = vsel %vm1940, %v8867, %v8822
      %v8914 = vsel %vm1940, %v8870, %v8824
      %v8916 = vsel %vm1940, %v8873, %v8826
      %v8918 = vsel %vm1940, %v8876, %v8828
      %v8920 = vsel %vm1940, %v8879, %v8830
      %v8922 = vsel %vm1940, %v8882, %v8832
      %v8924 = vsel %vm1940, %v8885, %v8834
      %v8926 = vsel %vm1940, %v8888, %v8836
      %v8928 = vsel %vm1940, %v8891, %v8838
      %v8930 = vsel %vm1940, %v8894, %v8840
      %8947 = vrot.lane.b32.xlu0 %v8898, 96
      %v8948 = vpop.permute.xlu0 %8947
      %8949 = vrot.lane.b32.xlu0 %v8900, 96
      %v8950 = vpop.permute.xlu0 %8949
      %8951 = vrot.lane.b32.xlu0 %v8902, 96
      %v8952 = vpop.permute.xlu0 %8951
      %8953 = vrot.lane.b32.xlu0 %v8904, 96
      %v8954 = vpop.permute.xlu0 %8953
      %8955 = vrot.lane.b32.xlu0 %v8906, 96
      %v8956 = vpop.permute.xlu0 %8955
      %8957 = vrot.lane.b32.xlu0 %v8908, 96
      %v8958 = vpop.permute.xlu0 %8957
      %8959 = vrot.lane.b32.xlu0 %v8910, 96
      %v8960 = vpop.permute.xlu0 %8959
      %8961 = vrot.lane.b32.xlu0 %v8912, 96
      %v8962 = vpop.permute.xlu0 %8961
      %8963 = vrot.lane.b32.xlu0 %v8914, 96
      %v8964 = vpop.permute.xlu0 %8963
      %8965 = vrot.lane.b32.xlu0 %v8916, 96
      %v8966 = vpop.permute.xlu0 %8965
      %8967 = vrot.lane.b32.xlu0 %v8918, 96
      %v8968 = vpop.permute.xlu0 %8967
      %8969 = vrot.lane.b32.xlu0 %v8920, 96
      %v8970 = vpop.permute.xlu0 %8969
      %8971 = vrot.lane.b32.xlu0 %v8922, 96
      %v8972 = vpop.permute.xlu0 %8971
      %8973 = vrot.lane.b32.xlu0 %v8924, 96
      %v8974 = vpop.permute.xlu0 %8973
      %8975 = vrot.lane.b32.xlu0 %v8926, 96
      %v8976 = vpop.permute.xlu0 %8975
      %8977 = vrot.lane.b32.xlu0 %v8928, 96
      %v8978 = vpop.permute.xlu0 %8977
      %8980 = vrot.lane.b32.xlu0 %v8900, 64
      %v8981 = vpop.permute.xlu0 %8980
      %8982 = vrot.lane.b32.xlu0 %v8902, 64
      %v8983 = vpop.permute.xlu0 %8982
      %8984 = vrot.lane.b32.xlu0 %v8904, 64
      %v8985 = vpop.permute.xlu0 %8984
      %8986 = vrot.lane.b32.xlu0 %v8906, 64
      %v8987 = vpop.permute.xlu0 %8986
      %8988 = vrot.lane.b32.xlu0 %v8908, 64
      %v8989 = vpop.permute.xlu0 %8988
      %8990 = vrot.lane.b32.xlu0 %v8910, 64
      %v8991 = vpop.permute.xlu0 %8990
      %8992 = vrot.lane.b32.xlu0 %v8912, 64
      %v8993 = vpop.permute.xlu0 %8992
      %8994 = vrot.lane.b32.xlu0 %v8914, 64
      %v8995 = vpop.permute.xlu0 %8994
      %8996 = vrot.lane.b32.xlu0 %v8916, 64
      %v8997 = vpop.permute.xlu0 %8996
      %8998 = vrot.lane.b32.xlu0 %v8918, 64
      %v8999 = vpop.permute.xlu0 %8998
      %9000 = vrot.lane.b32.xlu0 %v8920, 64
      %v9001 = vpop.permute.xlu0 %9000
      %9002 = vrot.lane.b32.xlu0 %v8922, 64
      %v9003 = vpop.permute.xlu0 %9002
      %9004 = vrot.lane.b32.xlu0 %v8924, 64
      %v9005 = vpop.permute.xlu0 %9004
      %9006 = vrot.lane.b32.xlu0 %v8926, 64
      %v9007 = vpop.permute.xlu0 %9006
      %9008 = vrot.lane.b32.xlu0 %v8928, 64
      %v9009 = vpop.permute.xlu0 %9008
      %9010 = vrot.lane.b32.xlu0 %v8930, 64
      %v9011 = vpop.permute.xlu0 %9010
      %v9013 = vsel %vm2058, %v8896, %v8948
      %v9016 = vsel %vm2058, %v8898, %v8950
      %v9019 = vsel %vm2058, %v8900, %v8952
      %v9022 = vsel %vm2058, %v8902, %v8954
      %v9025 = vsel %vm2058, %v8904, %v8956
      %v9028 = vsel %vm2058, %v8906, %v8958
      %v9031 = vsel %vm2058, %v8908, %v8960
      %v9034 = vsel %vm2058, %v8910, %v8962
      %v9037 = vsel %vm2058, %v8912, %v8964
      %v9040 = vsel %vm2058, %v8914, %v8966
      %v9043 = vsel %vm2058, %v8916, %v8968
      %v9046 = vsel %vm2058, %v8918, %v8970
      %v9049 = vsel %vm2058, %v8920, %v8972
      %v9052 = vsel %vm2058, %v8922, %v8974
      %v9055 = vsel %vm2058, %v8924, %v8976
      %v9058 = vsel %vm2058, %v8926, %v8978
      %v9061 = vsel %vm1940, %v8948, %v8981
      %v9064 = vsel %vm1940, %v8950, %v8983
      %v9067 = vsel %vm1940, %v8952, %v8985
      %v9070 = vsel %vm1940, %v8954, %v8987
      %v9073 = vsel %vm1940, %v8956, %v8989
      %v9076 = vsel %vm1940, %v8958, %v8991
      %v9079 = vsel %vm1940, %v8960, %v8993
      %v9082 = vsel %vm1940, %v8962, %v8995
      %v9085 = vsel %vm1940, %v8964, %v8997
      %v9088 = vsel %vm1940, %v8966, %v8999
      %v9091 = vsel %vm1940, %v8968, %v9001
      %v9094 = vsel %vm1940, %v8970, %v9003
      %v9097 = vsel %vm1940, %v8972, %v9005
      %v9100 = vsel %vm1940, %v8974, %v9007
      %v9103 = vsel %vm1940, %v8976, %v9009
      %v9106 = vsel %vm1940, %v8978, %v9011
      %s9108 = scalar_lea.vmem %s1, 432
      %v9109 = vld [vmem:[%s9108] sm:$0xf]
      %v9110 = vld [vmem:[%s9108 + $0x4] sm:$0xf]
      %v9111 = vld [vmem:[%s9108 + $0x8] sm:$0xf]
      %v9112 = vld [vmem:[%s9108 + $0xc] sm:$0xf]
      %v9113 = vld [vmem:[%s9108 + $0x10] sm:$0xf]
      %v9114 = vld [vmem:[%s9108 + $0x14] sm:$0xf]
      %v9115 = vld [vmem:[%s9108 + $0x18] sm:$0xf]
      %v9116 = vld [vmem:[%s9108 + $0x1c] sm:$0xf]
      %v9117 = vld [vmem:[%s9108 + $0x20] sm:$0xf]
      %v9118 = vld [vmem:[%s9108 + $0x24] sm:$0xf]
      %v9119 = vld [vmem:[%s9108 + $0x28] sm:$0xf]
      %v9120 = vld [vmem:[%s9108 + $0x2c] sm:$0xf]
      %v9121 = vld [vmem:[%s9108 + $0x30] sm:$0xf]
      %v9122 = vld [vmem:[%s9108 + $0x34] sm:$0xf]
      %v9123 = vld [vmem:[%s9108 + $0x38] sm:$0xf]
      %v9124 = vld [vmem:[%s9108 + $0x3c] sm:$0xf]
      %v9125 = vld [vmem:[%s9108 + $0x40] sm:$0xf]
      %v9126 = vld [vmem:[%s9108 + $0x44] sm:$0xf]
      %v9127 = vld [vmem:[%s9108 + $0x48] sm:$0xf]
      %v9128 = vld [vmem:[%s9108 + $0x4c] sm:$0xf]
      %v9129 = vld [vmem:[%s9108 + $0x50] sm:$0xf]
      %v9130 = vld [vmem:[%s9108 + $0x54] sm:$0xf]
      %v9131 = vld [vmem:[%s9108 + $0x58] sm:$0xf]
      %v9132 = vld [vmem:[%s9108 + $0x5c] sm:$0xf]
      %v9133 = vld [vmem:[%s9108 + $0x60] sm:$0xf]
      %v9134 = vld [vmem:[%s9108 + $0x64] sm:$0xf]
      %v9135 = vld [vmem:[%s9108 + $0x68] sm:$0xf]
      %v9136 = vld [vmem:[%s9108 + $0x6c] sm:$0xf]
      %v9137 = vld [vmem:[%s9108 + $0x70] sm:$0xf]
      %v9138 = vld [vmem:[%s9108 + $0x74] sm:$0xf]
      %v9139 = vld [vmem:[%s9108 + $0x78] sm:$0xf]
      %v9140 = vld [vmem:[%s9108 + $0x7c] sm:$0xf]
      %v9141 = vld [vmem:[%s9108 + $0x80] sm:$0xf]
      %v9142 = vld [vmem:[%s9108 + $0x84] sm:$0xf]
      %v9143 = vld [vmem:[%s9108 + $0x88] sm:$0xf]
      %v9144 = vld [vmem:[%s9108 + $0x8c] sm:$0xf]
      %v9145 = vld [vmem:[%s2 + $0x3] sm:$0x1]
      %v9146 = vlaneseq
      %v9147 = vshrl.u32 %v9146, 7
      %v9148 = vsub.s32 0, %v9147
      %v9149 = vrot.slane %v9145, %v9148
      %v9186 = vunpack.c.l.b16 %v9109
      %v9187 = vunpack.c.l.b16 %v9110
      %v9188 = vunpack.c.l.b16 %v9111
      %v9189 = vunpack.c.l.b16 %v9112
      %v9190 = vunpack.c.l.b16 %v9113
      %v9191 = vunpack.c.l.b16 %v9114
      %v9192 = vunpack.c.l.b16 %v9115
      %v9193 = vunpack.c.l.b16 %v9116
      %v9194 = vunpack.c.l.b16 %v9117
      %v9195 = vunpack.c.l.b16 %v9118
      %v9196 = vunpack.c.l.b16 %v9119
      %v9197 = vunpack.c.l.b16 %v9120
      %v9198 = vunpack.c.l.b16 %v9121
      %v9199 = vunpack.c.l.b16 %v9122
      %v9200 = vunpack.c.l.b16 %v9123
      %v9201 = vunpack.c.l.b16 %v9124
      %v9202 = vunpack.c.l.b16 %v9125
      %v9203 = vunpack.c.l.b16 %v9126
      %v9204 = vunpack.c.l.b16 %v9127
      %v9205 = vunpack.c.l.b16 %v9128
      %v9206 = vunpack.c.l.b16 %v9129
      %v9207 = vunpack.c.l.b16 %v9130
      %v9208 = vunpack.c.l.b16 %v9131
      %v9209 = vunpack.c.l.b16 %v9132
      %v9210 = vunpack.c.l.b16 %v9133
      %v9211 = vunpack.c.l.b16 %v9134
      %v9212 = vunpack.c.l.b16 %v9135
      %v9213 = vunpack.c.l.b16 %v9136
      %v9214 = vunpack.c.l.b16 %v9137
      %v9215 = vunpack.c.l.b16 %v9138
      %v9216 = vunpack.c.l.b16 %v9139
      %v9217 = vunpack.c.l.b16 %v9140
      %v9218 = vunpack.c.l.b16 %v9141
      %v9219 = vunpack.c.l.b16 %v9142
      %v9220 = vunpack.c.l.b16 %v9143
      %v9221 = vunpack.c.l.b16 %v9144
      %v9222 = vpack.c.b16 %v9187, %v9186
      %v9223 = vpack.c.b16 %v9189, %v9188
      %v9224 = vpack.c.b16 %v9191, %v9190
      %v9225 = vpack.c.b16 %v9193, %v9192
      %v9226 = vpack.c.b16 %v9195, %v9194
      %v9227 = vpack.c.b16 %v9197, %v9196
      %v9228 = vpack.c.b16 %v9199, %v9198
      %v9229 = vpack.c.b16 %v9201, %v9200
      %v9230 = vpack.c.b16 %v9203, %v9202
      %v9231 = vpack.c.b16 %v9205, %v9204
      %v9232 = vpack.c.b16 %v9207, %v9206
      %v9233 = vpack.c.b16 %v9209, %v9208
      %v9234 = vpack.c.b16 %v9211, %v9210
      %v9235 = vpack.c.b16 %v9213, %v9212
      %v9236 = vpack.c.b16 %v9215, %v9214
      %v9237 = vpack.c.b16 %v9217, %v9216
      %v9238 = vpack.c.b16 %v9219, %v9218
      %v9239 = vpack.c.b16 %v9221, %v9220
      %v9258 = vsel %vm1885, %v8981, 0
      %v9260 = vsel %vm1885, %v8983, 0
      %v9262 = vsel %vm1885, %v8985, 0
      %v9264 = vsel %vm1885, %v8987, 0
      %v9266 = vsel %vm1885, %v8989, 0
      %v9268 = vsel %vm1885, %v8991, 0
      %v9270 = vsel %vm1885, %v8993, 0
      %v9272 = vsel %vm1885, %v8995, 0
      %v9274 = vsel %vm1885, %v8997, 0
      %v9276 = vsel %vm1885, %v8999, 0
      %v9278 = vsel %vm1885, %v9001, 0
      %v9280 = vsel %vm1885, %v9003, 0
      %v9282 = vsel %vm1885, %v9005, 0
      %v9284 = vsel %vm1885, %v9007, 0
      %v9286 = vsel %vm1885, %v9009, 0
      %v9288 = vsel %vm1885, %v9011, 0
      %9290 = vmatprep.subr.bf16.mxu0 0
      %9291 = vmatpush1.bf16.msra.mxu0 %v9229
      %9292 = vmatprep.subr.bf16.mxu0 0
      %9293 = vmatpush1.bf16.msra.mxu0 %v9228
      %9294 = vmatprep.subr.bf16.mxu0 0
      %9295 = vmatpush1.bf16.msra.mxu0 %v9227
      %9296 = vmatprep.subr.bf16.mxu0 0
      %9297 = vmatpush1.bf16.msra.mxu0 %v9226
      %9298 = vmatprep.subr.bf16.mxu0 0
      %9299 = vmatpush1.bf16.msra.mxu0 %v9225
      %9300 = vmatprep.subr.bf16.mxu0 0
      %9301 = vmatpush1.bf16.msra.mxu0 %v9224
      %9302 = vmatprep.subr.bf16.mxu0 0
      %9303 = vmatpush1.bf16.msra.mxu0 %v9223
      %9304 = vmatprep.subr.bf16.mxu0 0
      %9305 = vmatpush1.bf16.msra.mxu0 %v9222
      %9306 = vmatprep.subr.bf16.mxu0 0
      %9307 = vmatpush2.bf16.msra.mxu0 %v9237
      %9308 = vmatprep.subr.bf16.mxu0 0
      %9309 = vmatpush2.bf16.msra.mxu0 %v9236
      %9310 = vmatprep.subr.bf16.mxu0 0
      %9311 = vmatpush2.bf16.msra.mxu0 %v9235
      %9312 = vmatprep.subr.bf16.mxu0 0
      %9313 = vmatpush2.bf16.msra.mxu0 %v9234
      %9314 = vmatprep.subr.bf16.mxu0 0
      %9315 = vmatpush2.bf16.msra.mxu0 %v9233
      %9316 = vmatprep.subr.bf16.mxu0 0
      %9317 = vmatpush2.bf16.msra.mxu0 %v9232
      %9318 = vmatprep.subr.bf16.mxu0 0
      %9319 = vmatpush2.bf16.msra.mxu0 %v9231
      %9320 = vmatprep.subr.bf16.mxu0 0
      %9321 = vmatpush2.bf16.msra.mxu0 %v9230
      %9322 = vmatprep.mubr.bf16.mxu0 %v9061
      %9323 = vmatmul.mubr.bf16.gmra.mxu0 %v9013
      %v9324 = vpop.f32.mrf.mxu0
      %v9325 = vadd.f32 %v9149, %v9324
      %v9326 = vpop.f32.mrf.mxu0
      %v9327 = vpop.f32.mrf.mxu0
      %v9328 = vadd.f32 %v9149, %v9327
      %v9329 = vpop.f32.mrf.mxu0
      %9330 = vmatprep.mubr.bf16.mxu0 %v9064
      %9331 = vmatmul.mubr.bf16.gmra.mxu0 %v9016
      %v9332 = vpop.f32.mrf.mxu0
      %v9333 = vadd.f32 %v9149, %v9332
      %v9334 = vpop.f32.mrf.mxu0
      %v9335 = vpop.f32.mrf.mxu0
      %v9336 = vadd.f32 %v9149, %v9335
      %v9337 = vpop.f32.mrf.mxu0
      %9338 = vmatprep.mubr.bf16.mxu0 %v9067
      %9339 = vmatmul.mubr.bf16.gmra.mxu0 %v9019
      %v9340 = vpop.f32.mrf.mxu0
      %v9341 = vadd.f32 %v9149, %v9340
      %v9342 = vpop.f32.mrf.mxu0
      %v9343 = vpop.f32.mrf.mxu0
      %v9344 = vadd.f32 %v9149, %v9343
      %v9345 = vpop.f32.mrf.mxu0
      %9346 = vmatprep.mubr.bf16.mxu0 %v9070
      %9347 = vmatmul.mubr.bf16.gmra.mxu0 %v9022
      %v9348 = vpop.f32.mrf.mxu0
      %v9349 = vadd.f32 %v9149, %v9348
      %v9350 = vpop.f32.mrf.mxu0
      %v9351 = vpop.f32.mrf.mxu0
      %v9352 = vadd.f32 %v9149, %v9351
      %v9353 = vpop.f32.mrf.mxu0
      %9354 = vmatprep.mubr.bf16.mxu0 %v9073
      %9355 = vmatmul.mubr.bf16.gmra.mxu0 %v9025
      %v9356 = vpop.f32.mrf.mxu0
      %v9357 = vadd.f32 %v9149, %v9356
      %v9358 = vpop.f32.mrf.mxu0
      %v9359 = vpop.f32.mrf.mxu0
      %v9360 = vadd.f32 %v9149, %v9359
      %v9361 = vpop.f32.mrf.mxu0
      %9362 = vmatprep.mubr.bf16.mxu0 %v9076
      %9363 = vmatmul.mubr.bf16.gmra.mxu0 %v9028
      %v9364 = vpop.f32.mrf.mxu0
      %v9365 = vadd.f32 %v9149, %v9364
      %v9366 = vpop.f32.mrf.mxu0
      %v9367 = vpop.f32.mrf.mxu0
      %v9368 = vadd.f32 %v9149, %v9367
      %v9369 = vpop.f32.mrf.mxu0
      %9370 = vmatprep.mubr.bf16.mxu0 %v9079
      %9371 = vmatmul.mubr.bf16.gmra.mxu0 %v9031
      %v9372 = vpop.f32.mrf.mxu0
      %v9373 = vadd.f32 %v9149, %v9372
      %v9374 = vpop.f32.mrf.mxu0
      %v9375 = vpop.f32.mrf.mxu0
      %v9376 = vadd.f32 %v9149, %v9375
      %v9377 = vpop.f32.mrf.mxu0
      %9378 = vmatprep.mubr.bf16.mxu0 %v9082
      %9379 = vmatmul.mubr.bf16.gmra.mxu0 %v9034
      %v9380 = vpop.f32.mrf.mxu0
      %v9381 = vadd.f32 %v9149, %v9380
      %v9382 = vpop.f32.mrf.mxu0
      %v9383 = vpop.f32.mrf.mxu0
      %v9384 = vadd.f32 %v9149, %v9383
      %v9385 = vpop.f32.mrf.mxu0
      %9386 = vmatprep.mubr.bf16.mxu0 %v9085
      %9387 = vmatmul.mubr.bf16.gmra.mxu0 %v9037
      %v9388 = vpop.f32.mrf.mxu0
      %v9389 = vadd.f32 %v9149, %v9388
      %v9390 = vpop.f32.mrf.mxu0
      %v9391 = vpop.f32.mrf.mxu0
      %v9392 = vadd.f32 %v9149, %v9391
      %v9393 = vpop.f32.mrf.mxu0
      %9394 = vmatprep.mubr.bf16.mxu0 %v9088
      %9395 = vmatmul.mubr.bf16.gmra.mxu0 %v9040
      %v9396 = vpop.f32.mrf.mxu0
      %v9397 = vadd.f32 %v9149, %v9396
      %v9398 = vpop.f32.mrf.mxu0
      %v9399 = vpop.f32.mrf.mxu0
      %v9400 = vadd.f32 %v9149, %v9399
      %v9401 = vpop.f32.mrf.mxu0
      %9402 = vmatprep.mubr.bf16.mxu0 %v9091
      %9403 = vmatmul.mubr.bf16.gmra.mxu0 %v9043
      %v9404 = vpop.f32.mrf.mxu0
      %v9405 = vadd.f32 %v9149, %v9404
      %v9406 = vpop.f32.mrf.mxu0
      %v9407 = vpop.f32.mrf.mxu0
      %v9408 = vadd.f32 %v9149, %v9407
      %v9409 = vpop.f32.mrf.mxu0
      %9410 = vmatprep.mubr.bf16.mxu0 %v9094
      %9411 = vmatmul.mubr.bf16.gmra.mxu0 %v9046
      %v9412 = vpop.f32.mrf.mxu0
      %v9413 = vadd.f32 %v9149, %v9412
      %v9414 = vpop.f32.mrf.mxu0
      %v9415 = vpop.f32.mrf.mxu0
      %v9416 = vadd.f32 %v9149, %v9415
      %v9417 = vpop.f32.mrf.mxu0
      %9418 = vmatprep.mubr.bf16.mxu0 %v9097
      %9419 = vmatmul.mubr.bf16.gmra.mxu0 %v9049
      %v9420 = vpop.f32.mrf.mxu0
      %v9421 = vadd.f32 %v9149, %v9420
      %v9422 = vpop.f32.mrf.mxu0
      %v9423 = vpop.f32.mrf.mxu0
      %v9424 = vadd.f32 %v9149, %v9423
      %v9425 = vpop.f32.mrf.mxu0
      %9426 = vmatprep.mubr.bf16.mxu0 %v9100
      %9427 = vmatmul.mubr.bf16.gmra.mxu0 %v9052
      %v9428 = vpop.f32.mrf.mxu0
      %v9429 = vadd.f32 %v9149, %v9428
      %v9430 = vpop.f32.mrf.mxu0
      %v9431 = vpop.f32.mrf.mxu0
      %v9432 = vadd.f32 %v9149, %v9431
      %v9433 = vpop.f32.mrf.mxu0
      %9434 = vmatprep.mubr.bf16.mxu0 %v9103
      %9435 = vmatmul.mubr.bf16.gmra.mxu0 %v9055
      %v9436 = vpop.f32.mrf.mxu0
      %v9437 = vadd.f32 %v9149, %v9436
      %v9438 = vpop.f32.mrf.mxu0
      %v9439 = vpop.f32.mrf.mxu0
      %v9440 = vadd.f32 %v9149, %v9439
      %v9441 = vpop.f32.mrf.mxu0
      %9442 = vmatprep.mubr.bf16.mxu0 %v9106
      %9443 = vmatmul.mubr.bf16.gmra.mxu0 %v9058
      %v9444 = vpop.f32.mrf.mxu0
      %v9445 = vadd.f32 %v9149, %v9444
      %v9446 = vpop.f32.mrf.mxu0
      %v9447 = vpop.f32.mrf.mxu0
      %v9448 = vadd.f32 %v9149, %v9447
      %v9449 = vpop.f32.mrf.mxu0
      %9450 = vdwg.mxu0
      %9451 = vmatprep.subr.bf16.mxu0 0
      %9452 = vmatpush1.bf16.msra.mxu0 0
      %9453 = vmatprep.subr.bf16.mxu0 0
      %9454 = vmatpush1.bf16.msra.mxu0 0
      %9455 = vmatprep.subr.bf16.mxu0 0
      %9456 = vmatpush1.bf16.msra.mxu0 0
      %9457 = vmatprep.subr.bf16.mxu0 0
      %9458 = vmatpush1.bf16.msra.mxu0 0
      %9459 = vmatprep.subr.bf16.mxu0 0
      %9460 = vmatpush1.bf16.msra.mxu0 0
      %9461 = vmatprep.subr.bf16.mxu0 0
      %9462 = vmatpush1.bf16.msra.mxu0 0
      %9463 = vmatprep.subr.bf16.mxu0 0
      %9464 = vmatpush1.bf16.msra.mxu0 %v9239
      %9465 = vmatprep.subr.bf16.mxu0 0
      %9466 = vmatpush1.bf16.msra.mxu0 %v9238
      %9467 = vmatprep.subr.bf16.mxu0 0
      %9468 = vmatpush2.bf16.msra.mxu0 0
      %9469 = vmatprep.subr.bf16.mxu0 0
      %9470 = vmatpush2.bf16.msra.mxu0 0
      %9471 = vmatprep.subr.bf16.mxu0 0
      %9472 = vmatpush2.bf16.msra.mxu0 0
      %9473 = vmatprep.subr.bf16.mxu0 0
      %9474 = vmatpush2.bf16.msra.mxu0 0
      %9475 = vmatprep.subr.bf16.mxu0 0
      %9476 = vmatpush2.bf16.msra.mxu0 0
      %9477 = vmatprep.subr.bf16.mxu0 0
      %9478 = vmatpush2.bf16.msra.mxu0 0
      %9479 = vmatprep.subr.bf16.mxu0 0
      %9480 = vmatpush2.bf16.msra.mxu0 0
      %9481 = vmatprep.subr.bf16.mxu0 0
      %9482 = vmatpush2.bf16.msra.mxu0 0
      %9483 = vmatprep.mubr.bf16.mxu0 0
      %9484 = vmatmul.mubr.bf16.gmra.mxu0 %v9258
      %v9485 = vpop.f32.mrf.mxu0
      %v9486 = vadd.f32 %v9325, %v9485
      %v9487 = vpop.f32.mrf.mxu0
      %v9488 = vpop.f32.mrf.mxu0
      %v9489 = vadd.f32 %v9328, %v9488
      %v9490 = vpop.f32.mrf.mxu0
      %9491 = vmatprep.mubr.bf16.mxu0 0
      %9492 = vmatmul.mubr.bf16.gmra.mxu0 %v9260
      %v9493 = vpop.f32.mrf.mxu0
      %v9494 = vadd.f32 %v9333, %v9493
      %v9495 = vpop.f32.mrf.mxu0
      %v9496 = vpop.f32.mrf.mxu0
      %v9497 = vadd.f32 %v9336, %v9496
      %v9498 = vpop.f32.mrf.mxu0
      %9499 = vmatprep.mubr.bf16.mxu0 0
      %9500 = vmatmul.mubr.bf16.gmra.mxu0 %v9262
      %v9501 = vpop.f32.mrf.mxu0
      %v9502 = vadd.f32 %v9341, %v9501
      %v9503 = vpop.f32.mrf.mxu0
      %v9504 = vpop.f32.mrf.mxu0
      %v9505 = vadd.f32 %v9344, %v9504
      %v9506 = vpop.f32.mrf.mxu0
      %9507 = vmatprep.mubr.bf16.mxu0 0
      %9508 = vmatmul.mubr.bf16.gmra.mxu0 %v9264
      %v9509 = vpop.f32.mrf.mxu0
      %v9510 = vadd.f32 %v9349, %v9509
      %v9511 = vpop.f32.mrf.mxu0
      %v9512 = vpop.f32.mrf.mxu0
      %v9513 = vadd.f32 %v9352, %v9512
      %v9514 = vpop.f32.mrf.mxu0
      %9515 = vmatprep.mubr.bf16.mxu0 0
      %9516 = vmatmul.mubr.bf16.gmra.mxu0 %v9266
      %v9517 = vpop.f32.mrf.mxu0
      %v9518 = vadd.f32 %v9357, %v9517
      %v9519 = vpop.f32.mrf.mxu0
      %v9520 = vpop.f32.mrf.mxu0
      %v9521 = vadd.f32 %v9360, %v9520
      %v9522 = vpop.f32.mrf.mxu0
      %9523 = vmatprep.mubr.bf16.mxu0 0
      %9524 = vmatmul.mubr.bf16.gmra.mxu0 %v9268
      %v9525 = vpop.f32.mrf.mxu0
      %v9526 = vadd.f32 %v9365, %v9525
      %v9527 = vpop.f32.mrf.mxu0
      %v9528 = vpop.f32.mrf.mxu0
      %v9529 = vadd.f32 %v9368, %v9528
      %v9530 = vpop.f32.mrf.mxu0
      %9531 = vmatprep.mubr.bf16.mxu0 0
      %9532 = vmatmul.mubr.bf16.gmra.mxu0 %v9270
      %v9533 = vpop.f32.mrf.mxu0
      %v9534 = vadd.f32 %v9373, %v9533
      %v9535 = vpop.f32.mrf.mxu0
      %v9536 = vpop.f32.mrf.mxu0
      %v9537 = vadd.f32 %v9376, %v9536
      %v9538 = vpop.f32.mrf.mxu0
      %9539 = vmatprep.mubr.bf16.mxu0 0
      %9540 = vmatmul.mubr.bf16.gmra.mxu0 %v9272
      %v9541 = vpop.f32.mrf.mxu0
      %v9542 = vadd.f32 %v9381, %v9541
      %v9543 = vpop.f32.mrf.mxu0
      %v9544 = vpop.f32.mrf.mxu0
      %v9545 = vadd.f32 %v9384, %v9544
      %v9546 = vpop.f32.mrf.mxu0
      %9547 = vmatprep.mubr.bf16.mxu0 0
      %9548 = vmatmul.mubr.bf16.gmra.mxu0 %v9274
      %v9549 = vpop.f32.mrf.mxu0
      %v9550 = vadd.f32 %v9389, %v9549
      %v9551 = vpop.f32.mrf.mxu0
      %v9552 = vpop.f32.mrf.mxu0
      %v9553 = vadd.f32 %v9392, %v9552
      %v9554 = vpop.f32.mrf.mxu0
      %9555 = vmatprep.mubr.bf16.mxu0 0
      %9556 = vmatmul.mubr.bf16.gmra.mxu0 %v9276
      %v9557 = vpop.f32.mrf.mxu0
      %v9558 = vadd.f32 %v9397, %v9557
      %v9559 = vpop.f32.mrf.mxu0
      %v9560 = vpop.f32.mrf.mxu0
      %v9561 = vadd.f32 %v9400, %v9560
      %v9562 = vpop.f32.mrf.mxu0
      %9563 = vmatprep.mubr.bf16.mxu0 0
      %9564 = vmatmul.mubr.bf16.gmra.mxu0 %v9278
      %v9565 = vpop.f32.mrf.mxu0
      %v9566 = vadd.f32 %v9405, %v9565
      %v9567 = vpop.f32.mrf.mxu0
      %v9568 = vpop.f32.mrf.mxu0
      %v9569 = vadd.f32 %v9408, %v9568
      %v9570 = vpop.f32.mrf.mxu0
      %9571 = vmatprep.mubr.bf16.mxu0 0
      %9572 = vmatmul.mubr.bf16.gmra.mxu0 %v9280
      %v9573 = vpop.f32.mrf.mxu0
      %v9574 = vadd.f32 %v9413, %v9573
      %v9575 = vpop.f32.mrf.mxu0
      %v9576 = vpop.f32.mrf.mxu0
      %v9577 = vadd.f32 %v9416, %v9576
      %v9578 = vpop.f32.mrf.mxu0
      %9579 = vmatprep.mubr.bf16.mxu0 0
      %9580 = vmatmul.mubr.bf16.gmra.mxu0 %v9282
      %v9581 = vpop.f32.mrf.mxu0
      %v9582 = vadd.f32 %v9421, %v9581
      %v9583 = vpop.f32.mrf.mxu0
      %v9584 = vpop.f32.mrf.mxu0
      %v9585 = vadd.f32 %v9424, %v9584
      %v9586 = vpop.f32.mrf.mxu0
      %9587 = vmatprep.mubr.bf16.mxu0 0
      %9588 = vmatmul.mubr.bf16.gmra.mxu0 %v9284
      %v9589 = vpop.f32.mrf.mxu0
      %v9590 = vadd.f32 %v9429, %v9589
      %v9591 = vpop.f32.mrf.mxu0
      %v9592 = vpop.f32.mrf.mxu0
      %v9593 = vadd.f32 %v9432, %v9592
      %v9594 = vpop.f32.mrf.mxu0
      %9595 = vmatprep.mubr.bf16.mxu0 0
      %9596 = vmatmul.mubr.bf16.gmra.mxu0 %v9286
      %v9597 = vpop.f32.mrf.mxu0
      %v9598 = vadd.f32 %v9437, %v9597
      %v9599 = vpop.f32.mrf.mxu0
      %v9600 = vpop.f32.mrf.mxu0
      %v9601 = vadd.f32 %v9440, %v9600
      %v9602 = vpop.f32.mrf.mxu0
      %9603 = vmatprep.mubr.bf16.mxu0 0
      %9604 = vmatmul.mubr.bf16.gmra.mxu0 %v9288
      %v9605 = vpop.f32.mrf.mxu0
      %v9606 = vadd.f32 %v9445, %v9605
      %v9607 = vpop.f32.mrf.mxu0
      %v9608 = vpop.f32.mrf.mxu0
      %v9609 = vadd.f32 %v9448, %v9608
      %v9610 = vpop.f32.mrf.mxu0
      %9611 = vdwg.mxu0
      %v9612 = vld [vmem:[%s3 + $0x1] sm:$0x1]
      %v9613 = vlaneseq
      %v9614 = vshrl.u32 %v9613, 7
      %v9615 = vsub.s32 0, %v9614
      %v9616 = vrot.slane %v9612, %v9615
      %v9617 = vmul.f32 %v9616, %v9486
      %v9618 = vmul.f32 %v9616, %v9489
      %v9619 = vmul.f32 %v9616, %v9494
      %v9620 = vmul.f32 %v9616, %v9497
      %v9621 = vmul.f32 %v9616, %v9502
      %v9622 = vmul.f32 %v9616, %v9505
      %v9623 = vmul.f32 %v9616, %v9510
      %v9624 = vmul.f32 %v9616, %v9513
      %v9625 = vmul.f32 %v9616, %v9518
      %v9626 = vmul.f32 %v9616, %v9521
      %v9627 = vmul.f32 %v9616, %v9526
      %v9628 = vmul.f32 %v9616, %v9529
      %v9629 = vmul.f32 %v9616, %v9534
      %v9630 = vmul.f32 %v9616, %v9537
      %v9631 = vmul.f32 %v9616, %v9542
      %v9632 = vmul.f32 %v9616, %v9545
      %v9633 = vmul.f32 %v9616, %v9550
      %v9634 = vmul.f32 %v9616, %v9553
      %v9635 = vmul.f32 %v9616, %v9558
      %v9636 = vmul.f32 %v9616, %v9561
      %v9637 = vmul.f32 %v9616, %v9566
      %v9638 = vmul.f32 %v9616, %v9569
      %v9639 = vmul.f32 %v9616, %v9574
      %v9640 = vmul.f32 %v9616, %v9577
      %v9641 = vmul.f32 %v9616, %v9582
      %v9642 = vmul.f32 %v9616, %v9585
      %v9643 = vmul.f32 %v9616, %v9590
      %v9644 = vmul.f32 %v9616, %v9593
      %v9645 = vmul.f32 %v9616, %v9598
      %v9646 = vmul.f32 %v9616, %v9601
      %v9647 = vmul.f32 %v9616, %v9606
      %v9648 = vmul.f32 %v9616, %v9609
      %v9649 = vadd.f32 %v9617, %v4990
      %v9650 = vadd.f32 %v9618, %v4991
      %v9651 = vadd.f32 %v9619, %v4992
      %v9652 = vadd.f32 %v9620, %v4993
      %v9653 = vadd.f32 %v9621, %v4994
      %v9654 = vadd.f32 %v9622, %v4995
      %v9655 = vadd.f32 %v9623, %v4996
      %v9656 = vadd.f32 %v9624, %v4997
      %v9657 = vadd.f32 %v9625, %v4998
      %v9658 = vadd.f32 %v9626, %v4999
      %v9659 = vadd.f32 %v9627, %v5000
      %v9660 = vadd.f32 %v9628, %v5001
      %v9661 = vadd.f32 %v9629, %v5002
      %v9662 = vadd.f32 %v9630, %v5003
      %v9663 = vadd.f32 %v9631, %v5004
      %v9664 = vadd.f32 %v9632, %v5005
      %v9665 = vadd.f32 %v9633, %v5006
      %v9666 = vadd.f32 %v9634, %v5007
      %v9667 = vadd.f32 %v9635, %v5008
      %v9668 = vadd.f32 %v9636, %v5009
      %v9669 = vadd.f32 %v9637, %v5010
      %v9670 = vadd.f32 %v9638, %v5011
      %v9671 = vadd.f32 %v9639, %v5012
      %v9672 = vadd.f32 %v9640, %v5013
      %v9673 = vadd.f32 %v9641, %v5014
      %v9674 = vadd.f32 %v9642, %v5015
      %v9675 = vadd.f32 %v9643, %v5016
      %v9676 = vadd.f32 %v9644, %v5017
      %v9677 = vadd.f32 %v9645, %v5018
      %v9678 = vadd.f32 %v9646, %v5019
      %v9679 = vadd.f32 %v9647, %v5020
      %v9680 = vadd.f32 %v9648, %v5021
      %v9681 = vpack.c.bf16 %v9650, %v9649
      %v9682 = vpack.c.bf16 %v9652, %v9651
      %v9683 = vpack.c.bf16 %v9654, %v9653
      %v9684 = vpack.c.bf16 %v9656, %v9655
      %v9685 = vpack.c.bf16 %v9658, %v9657
      %v9686 = vpack.c.bf16 %v9660, %v9659
      %v9687 = vpack.c.bf16 %v9662, %v9661
      %v9688 = vpack.c.bf16 %v9664, %v9663
      %v9689 = vpack.c.bf16 %v9666, %v9665
      %v9690 = vpack.c.bf16 %v9668, %v9667
      %v9691 = vpack.c.bf16 %v9670, %v9669
      %v9692 = vpack.c.bf16 %v9672, %v9671
      %v9693 = vpack.c.bf16 %v9674, %v9673
      %v9694 = vpack.c.bf16 %v9676, %v9675
      %v9695 = vpack.c.bf16 %v9678, %v9677
      %v9696 = vpack.c.bf16 %v9680, %v9679
      %v9697 = vld [vmem:[%s4] sm:$0xf]
      %v9698 = vld [vmem:[%s4 + $0x4] sm:$0xf]
      %v9699 = vld [vmem:[%s4 + $0x8] sm:$0xf]
      %v9700 = vld [vmem:[%s4 + $0xc] sm:$0xf]
      %v9701 = vld [vmem:[%s5] sm:$0x1]
      %v9703 = vlaneseq
      %v9704 = vshrl.u32 %v9703, 7
      %v9705 = vsub.s32 0, %v9704
      %v9706 = vrot.slane %v9701, %v9705
      %v9712 = vunpack.c.l.b16 %v9697
      %v9713 = vunpack.c.l.b16 %v9698
      %v9714 = vunpack.c.l.b16 %v9699
      %v9715 = vunpack.c.l.b16 %v9700
      %v9716 = vpack.c.b16 %v9713, %v9712
      %v9717 = vpack.c.b16 %v9715, %v9714
      %v9721 = vsel %vm1885, %v9681, 0
      %v9724 = vsel %vm1885, %v9682, 0
      %v9727 = vsel %vm1885, %v9683, 0
      %v9730 = vsel %vm1885, %v9684, 0
      %v9733 = vsel %vm1885, %v9685, 0
      %v9736 = vsel %vm1885, %v9686, 0
      %v9739 = vsel %vm1885, %v9687, 0
      %v9742 = vsel %vm1885, %v9688, 0
      %v9745 = vsel %vm1885, %v9689, 0
      %v9748 = vsel %vm1885, %v9690, 0
      %v9751 = vsel %vm1885, %v9691, 0
      %v9754 = vsel %vm1885, %v9692, 0
      %v9757 = vsel %vm1885, %v9693, 0
      %v9760 = vsel %vm1885, %v9694, 0
      %v9763 = vsel %vm1885, %v9695, 0
      %v9766 = vsel %vm1885, %v9696, 0
      %9768 = vmatprep.subr.bf16.mxu0 0
      %9769 = vmatpush1.bf16.msra.mxu0 0
      %9770 = vmatprep.subr.bf16.mxu0 0
      %9771 = vmatpush1.bf16.msra.mxu0 0
      %9772 = vmatprep.subr.bf16.mxu0 0
      %9773 = vmatpush1.bf16.msra.mxu0 0
      %9774 = vmatprep.subr.bf16.mxu0 0
      %9775 = vmatpush1.bf16.msra.mxu0 0
      %9776 = vmatprep.subr.bf16.mxu0 0
      %9777 = vmatpush1.bf16.msra.mxu0 0
      %9778 = vmatprep.subr.bf16.mxu0 0
      %9779 = vmatpush1.bf16.msra.mxu0 0
      %9780 = vmatprep.subr.bf16.mxu0 0
      %9781 = vmatpush1.bf16.msra.mxu0 %v9717
      %9782 = vmatprep.subr.bf16.mxu0 0
      %9783 = vmatpush1.bf16.msra.mxu0 %v9716
      %9784 = vmatprep.subr.bf16.mxu0 0
      %9785 = vmatpush2.bf16.msra.mxu0 0
      %9786 = vmatprep.subr.bf16.mxu0 0
      %9787 = vmatpush2.bf16.msra.mxu0 0
      %9788 = vmatprep.subr.bf16.mxu0 0
      %9789 = vmatpush2.bf16.msra.mxu0 0
      %9790 = vmatprep.subr.bf16.mxu0 0
      %9791 = vmatpush2.bf16.msra.mxu0 0
      %9792 = vmatprep.subr.bf16.mxu0 0
      %9793 = vmatpush2.bf16.msra.mxu0 0
      %9794 = vmatprep.subr.bf16.mxu0 0
      %9795 = vmatpush2.bf16.msra.mxu0 0
      %9796 = vmatprep.subr.bf16.mxu0 0
      %9797 = vmatpush2.bf16.msra.mxu0 0
      %9798 = vmatprep.subr.bf16.mxu0 0
      %9799 = vmatpush2.bf16.msra.mxu0 0
      %9800 = vmatprep.mubr.bf16.mxu0 0
      %9801 = vmatmul.mubr.bf16.gmra.mxu0 %v9721
      %v9802 = vpop.f32.mrf.mxu0
      %v9803 = vadd.f32 %v9706, %v9802
      %v9804 = vpop.f32.mrf.mxu0
      %v9805 = vpop.f32.mrf.mxu0
      %v9806 = vadd.f32 %v9706, %v9805
      %v9807 = vpop.f32.mrf.mxu0
      %9808 = vmatprep.mubr.bf16.mxu0 0
      %9809 = vmatmul.mubr.bf16.gmra.mxu0 %v9724
      %v9810 = vpop.f32.mrf.mxu0
      %v9811 = vadd.f32 %v9706, %v9810
      %v9812 = vpop.f32.mrf.mxu0
      %v9813 = vpop.f32.mrf.mxu0
      %v9814 = vadd.f32 %v9706, %v9813
      %v9815 = vpop.f32.mrf.mxu0
      %9816 = vmatprep.mubr.bf16.mxu0 0
      %9817 = vmatmul.mubr.bf16.gmra.mxu0 %v9727
      %v9818 = vpop.f32.mrf.mxu0
      %v9819 = vadd.f32 %v9706, %v9818
      %v9820 = vpop.f32.mrf.mxu0
      %v9821 = vpop.f32.mrf.mxu0
      %v9822 = vadd.f32 %v9706, %v9821
      %v9823 = vpop.f32.mrf.mxu0
      %9824 = vmatprep.mubr.bf16.mxu0 0
      %9825 = vmatmul.mubr.bf16.gmra.mxu0 %v9730
      %v9826 = vpop.f32.mrf.mxu0
      %v9827 = vadd.f32 %v9706, %v9826
      %v9828 = vpop.f32.mrf.mxu0
      %v9829 = vpop.f32.mrf.mxu0
      %v9830 = vadd.f32 %v9706, %v9829
      %v9831 = vpop.f32.mrf.mxu0
      %9832 = vmatprep.mubr.bf16.mxu0 0
      %9833 = vmatmul.mubr.bf16.gmra.mxu0 %v9733
      %v9834 = vpop.f32.mrf.mxu0
      %v9835 = vadd.f32 %v9706, %v9834
      %v9836 = vpop.f32.mrf.mxu0
      %v9837 = vpop.f32.mrf.mxu0
      %v9838 = vadd.f32 %v9706, %v9837
      %v9839 = vpop.f32.mrf.mxu0
      %9840 = vmatprep.mubr.bf16.mxu0 0
      %9841 = vmatmul.mubr.bf16.gmra.mxu0 %v9736
      %v9842 = vpop.f32.mrf.mxu0
      %v9843 = vadd.f32 %v9706, %v9842
      %v9844 = vpop.f32.mrf.mxu0
      %v9845 = vpop.f32.mrf.mxu0
      %v9846 = vadd.f32 %v9706, %v9845
      %v9847 = vpop.f32.mrf.mxu0
      %9848 = vmatprep.mubr.bf16.mxu0 0
      %9849 = vmatmul.mubr.bf16.gmra.mxu0 %v9739
      %v9850 = vpop.f32.mrf.mxu0
      %v9851 = vadd.f32 %v9706, %v9850
      %v9852 = vpop.f32.mrf.mxu0
      %v9853 = vpop.f32.mrf.mxu0
      %v9854 = vadd.f32 %v9706, %v9853
      %v9855 = vpop.f32.mrf.mxu0
      %9856 = vmatprep.mubr.bf16.mxu0 0
      %9857 = vmatmul.mubr.bf16.gmra.mxu0 %v9742
      %v9858 = vpop.f32.mrf.mxu0
      %v9859 = vadd.f32 %v9706, %v9858
      %v9860 = vpop.f32.mrf.mxu0
      %v9861 = vpop.f32.mrf.mxu0
      %v9862 = vadd.f32 %v9706, %v9861
      %v9863 = vpop.f32.mrf.mxu0
      %9864 = vmatprep.mubr.bf16.mxu0 0
      %9865 = vmatmul.mubr.bf16.gmra.mxu0 %v9745
      %v9866 = vpop.f32.mrf.mxu0
      %v9867 = vadd.f32 %v9706, %v9866
      %v9868 = vpop.f32.mrf.mxu0
      %v9869 = vpop.f32.mrf.mxu0
      %v9870 = vadd.f32 %v9706, %v9869
      %v9871 = vpop.f32.mrf.mxu0
      %9872 = vmatprep.mubr.bf16.mxu0 0
      %9873 = vmatmul.mubr.bf16.gmra.mxu0 %v9748
      %v9874 = vpop.f32.mrf.mxu0
      %v9875 = vadd.f32 %v9706, %v9874
      %v9876 = vpop.f32.mrf.mxu0
      %v9877 = vpop.f32.mrf.mxu0
      %v9878 = vadd.f32 %v9706, %v9877
      %v9879 = vpop.f32.mrf.mxu0
      %9880 = vmatprep.mubr.bf16.mxu0 0
      %9881 = vmatmul.mubr.bf16.gmra.mxu0 %v9751
      %v9882 = vpop.f32.mrf.mxu0
      %v9883 = vadd.f32 %v9706, %v9882
      %v9884 = vpop.f32.mrf.mxu0
      %v9885 = vpop.f32.mrf.mxu0
      %v9886 = vadd.f32 %v9706, %v9885
      %v9887 = vpop.f32.mrf.mxu0
      %9888 = vmatprep.mubr.bf16.mxu0 0
      %9889 = vmatmul.mubr.bf16.gmra.mxu0 %v9754
      %v9890 = vpop.f32.mrf.mxu0
      %v9891 = vadd.f32 %v9706, %v9890
      %v9892 = vpop.f32.mrf.mxu0
      %v9893 = vpop.f32.mrf.mxu0
      %v9894 = vadd.f32 %v9706, %v9893
      %v9895 = vpop.f32.mrf.mxu0
      %9896 = vmatprep.mubr.bf16.mxu0 0
      %9897 = vmatmul.mubr.bf16.gmra.mxu0 %v9757
      %v9898 = vpop.f32.mrf.mxu0
      %v9899 = vadd.f32 %v9706, %v9898
      %v9900 = vpop.f32.mrf.mxu0
      %v9901 = vpop.f32.mrf.mxu0
      %v9902 = vadd.f32 %v9706, %v9901
      %v9903 = vpop.f32.mrf.mxu0
      %9904 = vmatprep.mubr.bf16.mxu0 0
      %9905 = vmatmul.mubr.bf16.gmra.mxu0 %v9760
      %v9906 = vpop.f32.mrf.mxu0
      %v9907 = vadd.f32 %v9706, %v9906
      %v9908 = vpop.f32.mrf.mxu0
      %v9909 = vpop.f32.mrf.mxu0
      %v9910 = vadd.f32 %v9706, %v9909
      %v9911 = vpop.f32.mrf.mxu0
      %9912 = vmatprep.mubr.bf16.mxu0 0
      %9913 = vmatmul.mubr.bf16.gmra.mxu0 %v9763
      %v9914 = vpop.f32.mrf.mxu0
      %v9915 = vadd.f32 %v9706, %v9914
      %v9916 = vpop.f32.mrf.mxu0
      %v9917 = vpop.f32.mrf.mxu0
      %v9918 = vadd.f32 %v9706, %v9917
      %v9919 = vpop.f32.mrf.mxu0
      %9920 = vmatprep.mubr.bf16.mxu0 0
      %9921 = vmatmul.mubr.bf16.gmra.mxu0 %v9766
      %v9922 = vpop.f32.mrf.mxu0
      %v9923 = vadd.f32 %v9706, %v9922
      %v9924 = vpop.f32.mrf.mxu0
      %v9925 = vpop.f32.mrf.mxu0
      %v9926 = vadd.f32 %v9706, %v9925
      %v9927 = vpop.f32.mrf.mxu0
      %9928 = vdwg.mxu0
      %9929 = vst.msk [vmem:[%s251] sm:$0xff] %vm1885, %v9803
      %9930 = vst.msk [vmem:[%s251 + $0x8] sm:$0xff] %vm1885, %v9806
      %9931 = vst.msk [vmem:[%s251 + $0x20] sm:$0xff] %vm1885, %v9811
      %9932 = vst.msk [vmem:[%s251 + $0x28] sm:$0xff] %vm1885, %v9814
      %9933 = vst.msk [vmem:[%s251 + $0x40] sm:$0xff] %vm1885, %v9819
      %9934 = vst.msk [vmem:[%s251 + $0x48] sm:$0xff] %vm1885, %v9822
      %9935 = vst.msk [vmem:[%s251 + $0x60] sm:$0xff] %vm1885, %v9827
      %9936 = vst.msk [vmem:[%s251 + $0x68] sm:$0xff] %vm1885, %v9830
      %9937 = vst.msk [vmem:[%s251 + $0x80] sm:$0xff] %vm1885, %v9835
      %9938 = vst.msk [vmem:[%s251 + $0x88] sm:$0xff] %vm1885, %v9838
      %9939 = vst.msk [vmem:[%s251 + $0xa0] sm:$0xff] %vm1885, %v9843
      %9940 = vst.msk [vmem:[%s251 + $0xa8] sm:$0xff] %vm1885, %v9846
      %9941 = vst.msk [vmem:[%s251 + $0xc0] sm:$0xff] %vm1885, %v9851
      %9942 = vst.msk [vmem:[%s251 + $0xc8] sm:$0xff] %vm1885, %v9854
      %9943 = vst.msk [vmem:[%s251 + $0xe0] sm:$0xff] %vm1885, %v9859
      %9944 = vst.msk [vmem:[%s251 + $0xe8] sm:$0xff] %vm1885, %v9862
      %9945 = vst.msk [vmem:[%s251 + $0x100] sm:$0xff] %vm1885, %v9867
      %9946 = vst.msk [vmem:[%s251 + $0x108] sm:$0xff] %vm1885, %v9870
      %9947 = vst.msk [vmem:[%s251 + $0x120] sm:$0xff] %vm1885, %v9875
      %9948 = vst.msk [vmem:[%s251 + $0x128] sm:$0xff] %vm1885, %v9878
      %9949 = vst.msk [vmem:[%s251 + $0x140] sm:$0xff] %vm1885, %v9883
      %9950 = vst.msk [vmem:[%s251 + $0x148] sm:$0xff] %vm1885, %v9886
      %9951 = vst.msk [vmem:[%s251 + $0x160] sm:$0xff] %vm1885, %v9891
      %9952 = vst.msk [vmem:[%s251 + $0x168] sm:$0xff] %vm1885, %v9894
      %9953 = vst.msk [vmem:[%s251 + $0x180] sm:$0xff] %vm1885, %v9899
      %9954 = vst.msk [vmem:[%s251 + $0x188] sm:$0xff] %vm1885, %v9902
      %9955 = vst.msk [vmem:[%s251 + $0x1a0] sm:$0xff] %vm1885, %v9907
      %9956 = vst.msk [vmem:[%s251 + $0x1a8] sm:$0xff] %vm1885, %v9910
      %9957 = vst.msk [vmem:[%s251 + $0x1c0] sm:$0xff] %vm1885, %v9915
      %9958 = vst.msk [vmem:[%s251 + $0x1c8] sm:$0xff] %vm1885, %v9918
      %9959 = vst.msk [vmem:[%s251 + $0x1e0] sm:$0xff] %vm1885, %v9923
      %9960 = vst.msk [vmem:[%s251 + $0x1e8] sm:$0xff] %vm1885, %v9926
      %s9961 = scalar_lea.vmem %s4, 16
      %v9962 = vld [vmem:[%s9961] sm:$0xf]
      %v9963 = vld [vmem:[%s9961 + $0x4] sm:$0xf]
      %v9964 = vld [vmem:[%s9961 + $0x8] sm:$0xf]
      %v9965 = vld [vmem:[%s9961 + $0xc] sm:$0xf]
      %v9966 = vld [vmem:[%s5] sm:$0x1]
      %v9968 = vlaneseq
      %v9969 = vshrl.u32 %v9968, 7
      %v9970 = vsub.s32 0, %v9969
      %v9971 = vrot.slane %v9966, %v9970
      %v9977 = vunpack.c.l.b16 %v9962
      %v9978 = vunpack.c.l.b16 %v9963
      %v9979 = vunpack.c.l.b16 %v9964
      %v9980 = vunpack.c.l.b16 %v9965
      %v9981 = vpack.c.b16 %v9978, %v9977
      %v9982 = vpack.c.b16 %v9980, %v9979
      %9985 = vmatprep.subr.bf16.mxu0 0
      %9986 = vmatpush1.bf16.msra.mxu0 0
      %9987 = vmatprep.subr.bf16.mxu0 0
      %9988 = vmatpush1.bf16.msra.mxu0 0
      %9989 = vmatprep.subr.bf16.mxu0 0
      %9990 = vmatpush1.bf16.msra.mxu0 0
      %9991 = vmatprep.subr.bf16.mxu0 0
      %9992 = vmatpush1.bf16.msra.mxu0 0
      %9993 = vmatprep.subr.bf16.mxu0 0
      %9994 = vmatpush1.bf16.msra.mxu0 0
      %9995 = vmatprep.subr.bf16.mxu0 0
      %9996 = vmatpush1.bf16.msra.mxu0 0
      %9997 = vmatprep.subr.bf16.mxu0 0
      %9998 = vmatpush1.bf16.msra.mxu0 %v9982
      %9999 = vmatprep.subr.bf16.mxu0 0
      %10000 = vmatpush1.bf16.msra.mxu0 %v9981
      %10001 = vmatprep.subr.bf16.mxu0 0
      %10002 = vmatpush2.bf16.msra.mxu0 0
      %10003 = vmatprep.subr.bf16.mxu0 0
      %10004 = vmatpush2.bf16.msra.mxu0 0
      %10005 = vmatprep.subr.bf16.mxu0 0
      %10006 = vmatpush2.bf16.msra.mxu0 0
      %10007 = vmatprep.subr.bf16.mxu0 0
      %10008 = vmatpush2.bf16.msra.mxu0 0
      %10009 = vmatprep.subr.bf16.mxu0 0
      %10010 = vmatpush2.bf16.msra.mxu0 0
      %10011 = vmatprep.subr.bf16.mxu0 0
      %10012 = vmatpush2.bf16.msra.mxu0 0
      %10013 = vmatprep.subr.bf16.mxu0 0
      %10014 = vmatpush2.bf16.msra.mxu0 0
      %10015 = vmatprep.subr.bf16.mxu0 0
      %10016 = vmatpush2.bf16.msra.mxu0 0
      %10017 = vmatprep.mubr.bf16.mxu0 0
      %10018 = vmatmul.mubr.bf16.gmra.mxu0 %v9721
      %v10019 = vpop.f32.mrf.mxu0
      %v10020 = vadd.f32 %v9971, %v10019
      %v10021 = vpop.f32.mrf.mxu0
      %v10022 = vpop.f32.mrf.mxu0
      %v10023 = vadd.f32 %v9971, %v10022
      %v10024 = vpop.f32.mrf.mxu0
      %10025 = vmatprep.mubr.bf16.mxu0 0
      %10026 = vmatmul.mubr.bf16.gmra.mxu0 %v9724
      %v10027 = vpop.f32.mrf.mxu0
      %v10028 = vadd.f32 %v9971, %v10027
      %v10029 = vpop.f32.mrf.mxu0
      %v10030 = vpop.f32.mrf.mxu0
      %v10031 = vadd.f32 %v9971, %v10030
      %v10032 = vpop.f32.mrf.mxu0
      %10033 = vmatprep.mubr.bf16.mxu0 0
      %10034 = vmatmul.mubr.bf16.gmra.mxu0 %v9727
      %v10035 = vpop.f32.mrf.mxu0
      %v10036 = vadd.f32 %v9971, %v10035
      %v10037 = vpop.f32.mrf.mxu0
      %v10038 = vpop.f32.mrf.mxu0
      %v10039 = vadd.f32 %v9971, %v10038
      %v10040 = vpop.f32.mrf.mxu0
      %10041 = vmatprep.mubr.bf16.mxu0 0
      %10042 = vmatmul.mubr.bf16.gmra.mxu0 %v9730
      %v10043 = vpop.f32.mrf.mxu0
      %v10044 = vadd.f32 %v9971, %v10043
      %v10045 = vpop.f32.mrf.mxu0
      %v10046 = vpop.f32.mrf.mxu0
      %v10047 = vadd.f32 %v9971, %v10046
      %v10048 = vpop.f32.mrf.mxu0
      %10049 = vmatprep.mubr.bf16.mxu0 0
      %10050 = vmatmul.mubr.bf16.gmra.mxu0 %v9733
      %v10051 = vpop.f32.mrf.mxu0
      %v10052 = vadd.f32 %v9971, %v10051
      %v10053 = vpop.f32.mrf.mxu0
      %v10054 = vpop.f32.mrf.mxu0
      %v10055 = vadd.f32 %v9971, %v10054
      %v10056 = vpop.f32.mrf.mxu0
      %10057 = vmatprep.mubr.bf16.mxu0 0
      %10058 = vmatmul.mubr.bf16.gmra.mxu0 %v9736
      %v10059 = vpop.f32.mrf.mxu0
      %v10060 = vadd.f32 %v9971, %v10059
      %v10061 = vpop.f32.mrf.mxu0
      %v10062 = vpop.f32.mrf.mxu0
      %v10063 = vadd.f32 %v9971, %v10062
      %v10064 = vpop.f32.mrf.mxu0
      %10065 = vmatprep.mubr.bf16.mxu0 0
      %10066 = vmatmul.mubr.bf16.gmra.mxu0 %v9739
      %v10067 = vpop.f32.mrf.mxu0
      %v10068 = vadd.f32 %v9971, %v10067
      %v10069 = vpop.f32.mrf.mxu0
      %v10070 = vpop.f32.mrf.mxu0
      %v10071 = vadd.f32 %v9971, %v10070
      %v10072 = vpop.f32.mrf.mxu0
      %10073 = vmatprep.mubr.bf16.mxu0 0
      %10074 = vmatmul.mubr.bf16.gmra.mxu0 %v9742
      %v10075 = vpop.f32.mrf.mxu0
      %v10076 = vadd.f32 %v9971, %v10075
      %v10077 = vpop.f32.mrf.mxu0
      %v10078 = vpop.f32.mrf.mxu0
      %v10079 = vadd.f32 %v9971, %v10078
      %v10080 = vpop.f32.mrf.mxu0
      %10081 = vmatprep.mubr.bf16.mxu0 0
      %10082 = vmatmul.mubr.bf16.gmra.mxu0 %v9745
      %v10083 = vpop.f32.mrf.mxu0
      %v10084 = vadd.f32 %v9971, %v10083
      %v10085 = vpop.f32.mrf.mxu0
      %v10086 = vpop.f32.mrf.mxu0
      %v10087 = vadd.f32 %v9971, %v10086
      %v10088 = vpop.f32.mrf.mxu0
      %10089 = vmatprep.mubr.bf16.mxu0 0
      %10090 = vmatmul.mubr.bf16.gmra.mxu0 %v9748
      %v10091 = vpop.f32.mrf.mxu0
      %v10092 = vadd.f32 %v9971, %v10091
      %v10093 = vpop.f32.mrf.mxu0
      %v10094 = vpop.f32.mrf.mxu0
      %v10095 = vadd.f32 %v9971, %v10094
      %v10096 = vpop.f32.mrf.mxu0
      %10097 = vmatprep.mubr.bf16.mxu0 0
      %10098 = vmatmul.mubr.bf16.gmra.mxu0 %v9751
      %v10099 = vpop.f32.mrf.mxu0
      %v10100 = vadd.f32 %v9971, %v10099
      %v10101 = vpop.f32.mrf.mxu0
      %v10102 = vpop.f32.mrf.mxu0
      %v10103 = vadd.f32 %v9971, %v10102
      %v10104 = vpop.f32.mrf.mxu0
      %10105 = vmatprep.mubr.bf16.mxu0 0
      %10106 = vmatmul.mubr.bf16.gmra.mxu0 %v9754
      %v10107 = vpop.f32.mrf.mxu0
      %v10108 = vadd.f32 %v9971, %v10107
      %v10109 = vpop.f32.mrf.mxu0
      %v10110 = vpop.f32.mrf.mxu0
      %v10111 = vadd.f32 %v9971, %v10110
      %v10112 = vpop.f32.mrf.mxu0
      %10113 = vmatprep.mubr.bf16.mxu0 0
      %10114 = vmatmul.mubr.bf16.gmra.mxu0 %v9757
      %v10115 = vpop.f32.mrf.mxu0
      %v10116 = vadd.f32 %v9971, %v10115
      %v10117 = vpop.f32.mrf.mxu0
      %v10118 = vpop.f32.mrf.mxu0
      %v10119 = vadd.f32 %v9971, %v10118
      %v10120 = vpop.f32.mrf.mxu0
      %10121 = vmatprep.mubr.bf16.mxu0 0
      %10122 = vmatmul.mubr.bf16.gmra.mxu0 %v9760
      %v10123 = vpop.f32.mrf.mxu0
      %v10124 = vadd.f32 %v9971, %v10123
      %v10125 = vpop.f32.mrf.mxu0
      %v10126 = vpop.f32.mrf.mxu0
      %v10127 = vadd.f32 %v9971, %v10126
      %v10128 = vpop.f32.mrf.mxu0
      %10129 = vmatprep.mubr.bf16.mxu0 0
      %10130 = vmatmul.mubr.bf16.gmra.mxu0 %v9763
      %v10131 = vpop.f32.mrf.mxu0
      %v10132 = vadd.f32 %v9971, %v10131
      %v10133 = vpop.f32.mrf.mxu0
      %v10134 = vpop.f32.mrf.mxu0
      %v10135 = vadd.f32 %v9971, %v10134
      %v10136 = vpop.f32.mrf.mxu0
      %10137 = vmatprep.mubr.bf16.mxu0 0
      %10138 = vmatmul.mubr.bf16.gmra.mxu0 %v9766
      %v10139 = vpop.f32.mrf.mxu0
      %v10140 = vadd.f32 %v9971, %v10139
      %v10141 = vpop.f32.mrf.mxu0
      %v10142 = vpop.f32.mrf.mxu0
      %v10143 = vadd.f32 %v9971, %v10142
      %v10144 = vpop.f32.mrf.mxu0
      %10145 = vdwg.mxu0
      %10146 = vst.msk [vmem:[%s251 + $0x10] sm:$0xff] %vm1885, %v10020
      %10147 = vst.msk [vmem:[%s251 + $0x18] sm:$0xff] %vm1885, %v10023
      %10148 = vst.msk [vmem:[%s251 + $0x30] sm:$0xff] %vm1885, %v10028
      %10149 = vst.msk [vmem:[%s251 + $0x38] sm:$0xff] %vm1885, %v10031
      %10150 = vst.msk [vmem:[%s251 + $0x50] sm:$0xff] %vm1885, %v10036
      %10151 = vst.msk [vmem:[%s251 + $0x58] sm:$0xff] %vm1885, %v10039
      %10152 = vst.msk [vmem:[%s251 + $0x70] sm:$0xff] %vm1885, %v10044
      %10153 = vst.msk [vmem:[%s251 + $0x78] sm:$0xff] %vm1885, %v10047
      %10154 = vst.msk [vmem:[%s251 + $0x90] sm:$0xff] %vm1885, %v10052
      %10155 = vst.msk [vmem:[%s251 + $0x98] sm:$0xff] %vm1885, %v10055
      %10156 = vst.msk [vmem:[%s251 + $0xb0] sm:$0xff] %vm1885, %v10060
      %10157 = vst.msk [vmem:[%s251 + $0xb8] sm:$0xff] %vm1885, %v10063
      %10158 = vst.msk [vmem:[%s251 + $0xd0] sm:$0xff] %vm1885, %v10068
      %10159 = vst.msk [vmem:[%s251 + $0xd8] sm:$0xff] %vm1885, %v10071
      %10160 = vst.msk [vmem:[%s251 + $0xf0] sm:$0xff] %vm1885, %v10076
      %10161 = vst.msk [vmem:[%s251 + $0xf8] sm:$0xff] %vm1885, %v10079
      %10162 = vst.msk [vmem:[%s251 + $0x110] sm:$0xff] %vm1885, %v10084
      %10163 = vst.msk [vmem:[%s251 + $0x118] sm:$0xff] %vm1885, %v10087
      %10164 = vst.msk [vmem:[%s251 + $0x130] sm:$0xff] %vm1885, %v10092
      %10165 = vst.msk [vmem:[%s251 + $0x138] sm:$0xff] %vm1885, %v10095
      %10166 = vst.msk [vmem:[%s251 + $0x150] sm:$0xff] %vm1885, %v10100
      %10167 = vst.msk [vmem:[%s251 + $0x158] sm:$0xff] %vm1885, %v10103
      %10168 = vst.msk [vmem:[%s251 + $0x170] sm:$0xff] %vm1885, %v10108
      %10169 = vst.msk [vmem:[%s251 + $0x178] sm:$0xff] %vm1885, %v10111
      %10170 = vst.msk [vmem:[%s251 + $0x190] sm:$0xff] %vm1885, %v10116
      %10171 = vst.msk [vmem:[%s251 + $0x198] sm:$0xff] %vm1885, %v10119
      %10172 = vst.msk [vmem:[%s251 + $0x1b0] sm:$0xff] %vm1885, %v10124
      %10173 = vst.msk [vmem:[%s251 + $0x1b8] sm:$0xff] %vm1885, %v10127
      %10174 = vst.msk [vmem:[%s251 + $0x1d0] sm:$0xff] %vm1885, %v10132
      %10175 = vst.msk [vmem:[%s251 + $0x1d8] sm:$0xff] %vm1885, %v10135
      %10176 = vst.msk [vmem:[%s251 + $0x1f0] sm:$0xff] %vm1885, %v10140
      %10177 = vst.msk [vmem:[%s251 + $0x1f8] sm:$0xff] %vm1885, %v10143
      %p10178 = scmp.lt.s32.totalorder %s17, 1
      %s10179 = scalar_select %p10178, %s17, 1
      %s10180 = smul.addr %s10179, 64
      %s10181 = smul.addr %s10180, 8
      %s10182 = scalar_lea.vmem %s6, %s10181
      // Predicated region
      $region49: #{res_upsample_forward.1} parent=43 // pred_check
        %p10183 = pneg %p166
      $region50: #{res_upsample_forward.1} parent=43 // pred_check_branch
        %10185 = sbr.rel (%p10183) target = $region52
      $region51: #{res_upsample_forward.1} parent=43 // pred_region
        _
      $region52: #{res_upsample_forward.1} parent=43 // pred_fallthru
        _
    $region44: #{res_upsample_forward.1} parent=5 // pred_fallthru
      _
    %p10186 = scmp.le.s32.totalorder 2, %s12
    // Predicated region
    $region53: #{res_upsample_forward.1} parent=5 // pred_check
      %p10187 = pneg %p10186
    $region54: #{res_upsample_forward.1} parent=5 // pred_check_branch
      %10189 = sbr.rel (%p10187) target = $region56
    $region55: #{res_upsample_forward.1} parent=5 // pred_region
      %s10190 = ssub.s32 %s12, 2
      // Predicated region
      $region57: #{res_upsample_forward.1} parent=55 // pred_check
        %p10191 = pneg %p172
      $region58: #{res_upsample_forward.1} parent=55 // pred_check_branch
        %10193 = sbr.rel (%p10191) target = $region60
      $region59: #{res_upsample_forward.1} parent=55 // pred_region
        %p10194 = scmp.lt.s32.totalorder %s18, 1
        %s10195 = scalar_select %p10194, %s18, 1
        %s10196 = smul.addr %s10195, 64
        %s10197 = smul.addr %s10196, 8
        %s10198 = scalar_lea.vmem %s6, %s10197
      $region60: #{res_upsample_forward.1} parent=55 // pred_fallthru
        _
    $region56: #{res_upsample_forward.1} parent=5 // pred_fallthru
      _
  $region6: #{res_upsample_forward.1} parent=0 // loop_footer
    %s16 = sadd.s32 1, %s12
  $region7: #{res_upsample_forward.1} parent=0 // loop_footer_branch
    %11 = sbr.rel target = $region3
  $region8: #{res_upsample_forward.1} parent=0 // loop_exit
    _

</llo_original>
